<compile_context>
chip_gen: v7x
topology: tpu7x:2x2x1
jax: 0.10.0
libtpu: 0.0.40
codegen_flags: <defaults>
</compile_context>

<pallas_src>
import functools

import jax
import jax.numpy as jnp
from jax import lax
from jax.experimental import pallas as pl
from jax.experimental.pallas import tpu as pltpu


# ---------------------------------------------------------------------------
# Fused Pallas kernel
# ---------------------------------------------------------------------------
def _basic_block_kernel(x_ref, w1_ref, b1_ref, w2_ref, b2_ref, out_ref, xpad):
    """Fused conv1+bn1+relu -> conv2+bn2+residual+relu for one output row block.

    x_ref   : (1, H, W, C)   full (unpadded) input image, NHWC
    w1_ref  : (3, 3*C, C)    conv1 taps (kh, kw*C+ci, co), BN1 scale folded
    b1_ref  : (1, C)         folded BN1 bias
    w2_ref  : (3, 3*C, C)    conv2 taps, BN2 scale folded
    b2_ref  : (1, C)         folded BN2 bias
    out_ref : (1, TH, W, C)  output row block
    xpad    : (H+4, W+4, C)  f32 VMEM scratch: image zero-padded by 2
    """
    TH, W, C = out_ref.shape[1], out_ref.shape[2], out_ref.shape[3]
    H = x_ref.shape[1]
    r0 = pl.multiple_of(pl.program_id(1) * TH, TH)  # first output row of block

    # Populate the padded image once per image.  The row grid axis is
    # "arbitrary" (sequential, in-order), so every later row block of this
    # image reuses the scratch without re-reading HBM.
    @pl.when(pl.program_id(1) == 0)
    def _():
        xf = x_ref[0].astype(jnp.float32)                    # (H, W, C)
        zr = jnp.zeros((2, W, C), jnp.float32)
        zc = jnp.zeros((H + 4, 2, C), jnp.float32)
        body = jnp.concatenate([zr, xf, zr], axis=0)         # (H+4, W, C)
        xpad[...] = jnp.concatenate([zc, body, zc], axis=1)  # (H+4, W+4, C)

    def conv3x3_valid(x, w_ref):
        # x: (R+2, Cc+2, K) f32 value; w_ref: (3, 3K, Co) Ref.
        # 'valid' 3x3 conv: per kh the three kw-shifted windows are stacked
        # along channels -> one MXU dot with K = 3*Cin per kh.
        R, Cc = x.shape[0] - 2, x.shape[1] - 2
        Co = w_ref.shape[2]
        acc = jnp.zeros((R, Cc, Co), jnp.float32)
        for kh in range(3):
            rows = x[kh:kh + R, :, :]                        # (R, Cc+2, K)
            patch = jnp.concatenate(
                [rows[:, kw:kw + Cc, :] for kw in range(3)], axis=-1)
            acc = acc + lax.dot_general(
                patch, w_ref[kh],
                dimension_numbers=(((2,), (0,)), ((), ())),
                preferred_element_type=jnp.float32)
        return acc

    # ---- conv1 + bn1 + relu on padded rows [r0, r0+TH+4), kept on-chip ------
    # NOTE: matmuls kept in f32 to match the f32 reference closely; cast
    # patch / taps to bf16 here for ~2x MXU rate on v6e/v7x if tolerable.
    xwin = xpad[pl.ds(r0, TH + 4), :, :]
    h = conv3x3_valid(xwin, w1_ref) + b1_ref[0][None, None, :]
    h = jnp.maximum(h, 0.0)                                  # (TH+2, W+2, C)

    # Zero conv2's padding ring of h (positions outside the valid image):
    # conv1-of-padded-x is NOT zero there because of bias1 / ReLU.
    row = lax.broadcasted_iota(jnp.int32, (TH + 2, W + 2, C), 0) + r0
    col = lax.broadcasted_iota(jnp.int32, (TH + 2, W + 2, C), 1)
    valid = (row >= 1) & (row <= H) & (col >= 1) & (col <= W)
    h = jnp.where(valid, h, 0.0)

    # ---- conv2 + bn2 + residual + relu --------------------------------------
    y = conv3x3_valid(h, w2_ref) + b2_ref[0][None, None, :]  # (TH, W, C)
    res = x_ref[0, pl.ds(r0, TH), :, :].astype(jnp.float32)
    out_ref[0] = jnp.maximum(y + res, 0.0).astype(out_ref.dtype)


# ---------------------------------------------------------------------------
# pallas_call wrapper (NHWC)
# ---------------------------------------------------------------------------
def _pick_row_tile(H, W, C):
    """Largest power-of-two-divisor row tile whose fused f32 intermediates
    (conv window, im2col patches, accumulators) stay within a few MiB."""
    per_row = 12 * (W + 4) * max(C, 1) * 4          # rough f32 temp bytes / row
    cap = max((8 << 20) // per_row, 8)
    th = H
    while th > cap and th % 2 == 0:
        th //= 2
    return th


def _basic_block_pallas(x_nhwc, w1p, bias1, w2p, bias2, row_tile=None):
    N, H, W, C = x_nhwc.shape
    if w1p.shape[-1] != C:
        raise NotImplementedError(
            "residual path requires inplanes == planes (no downsample)")
    TH = _pick_row_tile(H, W, C) if row_tile is None else row_tile
    assert H % TH == 0, "row_tile must divide H"
    grid = (N, H // TH)

    # VMEM budget: double-buffered input/output blocks + padded-image scratch
    # + (double-buffered) packed weights + per-step f32 intermediates.
    itemsize = x_nhwc.dtype.itemsize
    x_bytes = H * W * C * itemsize
    out_bytes = TH * W * C * itemsize
    pad_bytes = (H + 4) * (W + 4) * C * 4
    w_bytes = 2 * (3 * 3 * C * C * 4 + C * 4)
    step_bytes = 12 * (TH + 4) * (W + 4) * C * 4
    working_set = 2 * (x_bytes + out_bytes) + pad_bytes + 2 * w_bytes + step_bytes
    vmem_limit = int(min(max(2 * working_set + (8 << 20), 16 << 20), 32 << 20))

    return pl.pallas_call(
        _basic_block_kernel,
        out_shape=jax.ShapeDtypeStruct((N, H, W, C), x_nhwc.dtype),
        grid_spec=pltpu.PrefetchScalarGridSpec(
            num_scalar_prefetch=0,
            grid=grid,
            in_specs=[
                # Full unpadded image per n: re-DMA'd only when n changes.
                pl.BlockSpec((1, H, W, C), lambda n, r: (n, 0, 0, 0)),
                pl.BlockSpec((3, 3 * C, C), lambda n, r: (0, 0, 0)),
                pl.BlockSpec((1, C), lambda n, r: (0, 0)),
                pl.BlockSpec((3, 3 * C, C), lambda n, r: (0, 0, 0)),
                pl.BlockSpec((1, C), lambda n, r: (0, 0)),
            ],
            out_specs=pl.BlockSpec((1, TH, W, C), lambda n, r: (n, r, 0, 0)),
            scratch_shapes=[pltpu.VMEM((H + 4, W + 4, C), jnp.float32)],
        ),
        compiler_params=pltpu.CompilerParams(
            # batch axis parallel (megacore); row axis sequential so the
            # per-image padded scratch is always populated before reuse.
            dimension_semantics=("parallel", "arbitrary"),
            vmem_limit_bytes=vmem_limit),
    )(x_nhwc, w1p, bias1, w2p, bias2)


# ---------------------------------------------------------------------------
# Parameter handling (BN folding + weight repacking)
# ---------------------------------------------------------------------------
def init_basic_block_params(key, inplanes, planes, eps=1e-5):
    ks = jax.random.split(key, 8)
    w1 = jax.random.normal(ks[0], (planes, inplanes, 3, 3), jnp.float32) * 0.1
    w2 = jax.random.normal(ks[1], (planes, planes, 3, 3), jnp.float32) * 0.1
    g1 = 1.0 + 0.1 * jax.random.normal(ks[2], (planes,), jnp.float32)
    b1 = 0.1 * jax.random.normal(ks[3], (planes,), jnp.float32)
    m1 = 0.1 * jax.random.normal(ks[4], (planes,), jnp.float32)
    v1 = jnp.abs(jax.random.normal(ks[5], (planes,), jnp.float32)) + 0.5
    g2 = 1.0 + 0.1 * jax.random.normal(ks[6], (planes,), jnp.float32)
    b2 = 0.1 * jax.random.normal(ks[7], (planes,), jnp.float32)
    m2 = jnp.zeros((planes,), jnp.float32)
    v2 = jnp.ones((planes,), jnp.float32)
    return dict(w1=w1, w2=w2, g1=g1, b1=b1, m1=m1, v1=v1,
                g2=g2, b2=b2, m2=m2, v2=v2, eps=eps)


def _fold_bn(gamma, beta, mean, var, eps):
    scale = gamma / jnp.sqrt(var + eps)
    bias = beta - mean * scale
    return scale, bias


def _pack_conv_bn(w_oihw, scale):
    # OIHW (Co, Ci, 3, 3) -> (kh, kw*Ci + ci, co) with the BN scale folded in.
    co, ci = w_oihw.shape[0], w_oihw.shape[1]
    w = jnp.transpose(w_oihw, (2, 3, 1, 0)).reshape(3, 3 * ci, co)
    return w * scale[None, None, :]


# ---------------------------------------------------------------------------
# Forward
# ---------------------------------------------------------------------------
@functools.partial(jax.jit, static_argnames=("row_tile",))
def basic_block_forward_nhwc(x_nhwc, params, row_tile=None):
    """BasicBlock forward, NHWC in/out (preferred path: no edge transposes)."""
    s1, bias1 = _fold_bn(params["g1"], params["b1"], params["m1"],
                         params["v1"], params["eps"])
    s2, bias2 = _fold_bn(params["g2"], params["b2"], params["m2"],
                         params["v2"], params["eps"])
    w1p = _pack_conv_bn(params["w1"], s1)
    w2p = _pack_conv_bn(params["w2"], s2)
    return _basic_block_pallas(x_nhwc, w1p, bias1[None, :], w2p, bias2[None, :],
                               row_tile=row_tile)


@functools.partial(jax.jit, static_argnames=("row_tile",))
def basic_block_forward(x_nchw, params, row_tile=None):
    """BasicBlock forward with PyTorch-style NCHW input/output."""
    x_nhwc = jnp.transpose(x_nchw, (0, 2, 3, 1))
    y = basic_block_forward_nhwc(x_nhwc, params, row_tile=row_tile)
    return jnp.transpose(y, (0, 3, 1, 2))


# ---------------------------------------------------------------------------
# Pure-JAX reference (for correctness check)
# ---------------------------------------------------------------------------
def _reference_forward(x_nchw, params):
    def conv(x, w):
        return lax.conv_general_dilated(
            x, w, window_strides=(1, 1), padding=((1, 1), (1, 1)),
            dimension_numbers=("NCHW", "OIHW", "NCHW"))

    def bn(x, g, b, m, v, eps):
        return (x - m[None, :, None, None]) / jnp.sqrt(
            v[None, :, None, None] + eps) * g[None, :, None, None] + \
            b[None, :, None, None]

    out = conv(x_nchw, params["w1"])
    out = bn(out, params["g1"], params["b1"], params["m1"], params["v1"],
             params["eps"])
    out = jnp.maximum(out, 0.0)
    out = conv(out, params["w2"])
    out = bn(out, params["g2"], params["b2"], params["m2"], params["v2"],
             params["eps"])
    out = out + x_nchw
    return jnp.maximum(out, 0.0)


if __name__ == "__main__":
    key = jax.random.PRNGKey(0)
    kx, kp = jax.random.split(key)

    N, C, H, W = 2, 4, 16, 16          # inplanes = planes = 4, stride = 1
    x = jax.random.normal(kx, (N, C, H, W), jnp.float32)
    params = init_basic_block_params(kp, inplanes=C, planes=C)

    ref = jax.block_until_ready(_reference_forward(x, params))

    # Default tiling (whole image per step at this small size).
    out = jax.block_until_ready(basic_block_forward(x, params))
    assert out.shape == (N, C, H, W)
    assert jnp.allclose(out, ref, atol=1e-4, rtol=1e-4), "mismatch (default)"

    # Force several row blocks per image to also exercise the padded-scratch
    # reuse path (r > 0) and the halo masking at block boundaries.
    out_t = jax.block_until_ready(basic_block_forward(x, params, row_tile=4))
    assert jnp.allclose(out_t, ref, atol=1e-4, rtol=1e-4), "mismatch (tiled)"

    print("KERNEL_OK")
</pallas_src>

<mosaic_0001>
module attributes {stable_mosaic.version = 11 : i64} {
  func.func @_basic_block_kernel(%arg0: i32, %arg1: i32, %arg2: memref<1x16x16x4xf32, #tpu.memory_space<vmem>>, %arg3: memref<3x12x4xf32, #tpu.memory_space<vmem>>, %arg4: memref<1x4xf32, #tpu.memory_space<vmem>>, %arg5: memref<3x12x4xf32, #tpu.memory_space<vmem>>, %arg6: memref<1x4xf32, #tpu.memory_space<vmem>>, %arg7: memref<1x16x16x4xf32, #tpu.memory_space<vmem>>, %arg8: memref<20x20x4xf32, #tpu.memory_space<vmem>>) attributes {dimension_semantics = [#tpu.dimension_semantics<parallel>, #tpu.dimension_semantics<arbitrary>], iteration_bounds = array<i64: 2, 1>, scalar_prefetch = 0 : i64, scratch_operands = 1 : i64, tpu.core_type = #tpu.core_type<tc>, window_params = [{transform_indices = @transform_0, window_bounds = array<i64: 1, 16, 16, 4>}, {pipeline_mode = #tpu.pipeline_mode<synchronous>, transform_indices = @transform_1, window_bounds = array<i64: 3, 12, 4>}, {pipeline_mode = #tpu.pipeline_mode<synchronous>, transform_indices = @transform_2, window_bounds = array<i64: 1, 4>}, {pipeline_mode = #tpu.pipeline_mode<synchronous>, transform_indices = @transform_3, window_bounds = array<i64: 3, 12, 4>}, {pipeline_mode = #tpu.pipeline_mode<synchronous>, transform_indices = @transform_4, window_bounds = array<i64: 1, 4>}, {transform_indices = @transform_5, window_bounds = array<i64: 1, 16, 16, 4>}]} {
    %c16_i32 = arith.constant 16 : i32
    %0 = arith.muli %arg1, %c16_i32 : i32
    %1 = tpu.assume_multiple %0, 16 : i32
    %c0_i32 = arith.constant 0 : i32
    %2 = arith.cmpi eq, %arg1, %c0_i32 : i32
    %3 = arith.extui %2 : i1 to i32
    %c0_i32_0 = arith.constant 0 : i32
    %4 = arith.cmpi ne, %3, %c0_i32_0 : i32
    scf.if %4 {
      %c0_42 = arith.constant 0 : index
      %c0_43 = arith.constant 0 : index
      %c0_44 = arith.constant 0 : index
      %c0_45 = arith.constant 0 : index
      %101 = vector.load %arg2[%c0_42, %c0_43, %c0_44, %c0_45] : memref<1x16x16x4xf32, #tpu.memory_space<vmem>>, vector<1x16x16x4xf32>
      %102 = vector.shape_cast %101 : vector<1x16x16x4xf32> to vector<16x16x4xf32>
      %cst_46 = arith.constant 0.000000e+00 : f32
      %103 = vector.broadcast %cst_46 : f32 to vector<2x16x4xf32>
      %cst_47 = arith.constant 0.000000e+00 : f32
      %104 = vector.broadcast %cst_47 : f32 to vector<20x2x4xf32>
      %105 = tpu.concatenate %103, %102, %103 in 0 : vector<2x16x4xf32>, vector<16x16x4xf32>, vector<2x16x4xf32> -> vector<20x16x4xf32>
      %106 = tpu.concatenate %104, %105, %104 in 1 : vector<20x2x4xf32>, vector<20x16x4xf32>, vector<20x2x4xf32> -> vector<20x20x4xf32>
      %c0_48 = arith.constant 0 : index
      %c0_49 = arith.constant 0 : index
      %c0_50 = arith.constant 0 : index
      %107 = vector.load %arg8[%c0_48, %c0_49, %c0_50] : memref<20x20x4xf32, #tpu.memory_space<vmem>>, vector<20x20x4xf32>
      tpu.vector_store %arg8[%c0_48, %c0_49, %c0_50], %106 {strides = array<i32>} : memref<20x20x4xf32, #tpu.memory_space<vmem>>, vector<20x20x4xf32>,
    } else {
    }
    %5 = arith.index_cast %1 : i32 to index
    %c0 = arith.constant 0 : index
    %c0_1 = arith.constant 0 : index
    %6 = vector.load %arg8[%5, %c0, %c0_1] : memref<20x20x4xf32, #tpu.memory_space<vmem>>, vector<20x20x4xf32>
    %cst = arith.constant 0.000000e+00 : f32
    %7 = vector.broadcast %cst : f32 to vector<18x18x4xf32>
    %8 = vector.extract_strided_slice %6 {offsets = [0, 0, 0], sizes = [18, 20, 4], strides = [1, 1, 1]} : vector<20x20x4xf32> to vector<18x20x4xf32>
    %9 = vector.extract_strided_slice %8 {offsets = [0, 0, 0], sizes = [18, 18, 4], strides = [1, 1, 1]} : vector<18x20x4xf32> to vector<18x18x4xf32>
    %10 = vector.extract_strided_slice %8 {offsets = [0, 1, 0], sizes = [18, 18, 4], strides = [1, 1, 1]} : vector<18x20x4xf32> to vector<18x18x4xf32>
    %11 = vector.extract_strided_slice %8 {offsets = [0, 2, 0], sizes = [18, 18, 4], strides = [1, 1, 1]} : vector<18x20x4xf32> to vector<18x18x4xf32>
    %12 = tpu.concatenate %9, %10, %11 in 2 : vector<18x18x4xf32>, vector<18x18x4xf32>, vector<18x18x4xf32> -> vector<18x18x12xf32>
    %c0_2 = arith.constant 0 : index
    %c0_3 = arith.constant 0 : index
    %c0_4 = arith.constant 0 : index
    %13 = vector.load %arg3[%c0_2, %c0_3, %c0_4] : memref<3x12x4xf32, #tpu.memory_space<vmem>>, vector<1x12x4xf32>
    %14 = vector.shape_cast %13 : vector<1x12x4xf32> to vector<12x4xf32>
    %cst_5 = arith.constant dense<0.000000e+00> : vector<18x18x4xf32>
    %15 = tpu.matmul %12, %14, %cst_5 {dimension_numbers = #tpu.dot_dimension_numbers<[2], [0], [0, 1], [1], [0, 0, 0, 1, 1, 1], [], []>} : vector<18x18x12xf32>, vector<12x4xf32>, vector<18x18x4xf32> -> vector<18x18x4xf32>
    %16 = arith.addf %7, %15 : vector<18x18x4xf32>
    %17 = vector.extract_strided_slice %6 {offsets = [1, 0, 0], sizes = [18, 20, 4], strides = [1, 1, 1]} : vector<20x20x4xf32> to vector<18x20x4xf32>
    %18 = vector.extract_strided_slice %17 {offsets = [0, 0, 0], sizes = [18, 18, 4], strides = [1, 1, 1]} : vector<18x20x4xf32> to vector<18x18x4xf32>
    %19 = vector.extract_strided_slice %17 {offsets = [0, 1, 0], sizes = [18, 18, 4], strides = [1, 1, 1]} : vector<18x20x4xf32> to vector<18x18x4xf32>
    %20 = vector.extract_strided_slice %17 {offsets = [0, 2, 0], sizes = [18, 18, 4], strides = [1, 1, 1]} : vector<18x20x4xf32> to vector<18x18x4xf32>
    %21 = tpu.concatenate %18, %19, %20 in 2 : vector<18x18x4xf32>, vector<18x18x4xf32>, vector<18x18x4xf32> -> vector<18x18x12xf32>
    %c1 = arith.constant 1 : index
    %c0_6 = arith.constant 0 : index
    %c0_7 = arith.constant 0 : index
    %22 = vector.load %arg3[%c1, %c0_6, %c0_7] : memref<3x12x4xf32, #tpu.memory_space<vmem>>, vector<1x12x4xf32>
    %23 = vector.shape_cast %22 : vector<1x12x4xf32> to vector<12x4xf32>
    %cst_8 = arith.constant dense<0.000000e+00> : vector<18x18x4xf32>
    %24 = tpu.matmul %21, %23, %cst_8 {dimension_numbers = #tpu.dot_dimension_numbers<[2], [0], [0, 1], [1], [0, 0, 0, 1, 1, 1], [], []>} : vector<18x18x12xf32>, vector<12x4xf32>, vector<18x18x4xf32> -> vector<18x18x4xf32>
    %25 = arith.addf %16, %24 : vector<18x18x4xf32>
    %26 = vector.extract_strided_slice %6 {offsets = [2, 0, 0], sizes = [18, 20, 4], strides = [1, 1, 1]} : vector<20x20x4xf32> to vector<18x20x4xf32>
    %27 = vector.extract_strided_slice %26 {offsets = [0, 0, 0], sizes = [18, 18, 4], strides = [1, 1, 1]} : vector<18x20x4xf32> to vector<18x18x4xf32>
    %28 = vector.extract_strided_slice %26 {offsets = [0, 1, 0], sizes = [18, 18, 4], strides = [1, 1, 1]} : vector<18x20x4xf32> to vector<18x18x4xf32>
    %29 = vector.extract_strided_slice %26 {offsets = [0, 2, 0], sizes = [18, 18, 4], strides = [1, 1, 1]} : vector<18x20x4xf32> to vector<18x18x4xf32>
    %30 = tpu.concatenate %27, %28, %29 in 2 : vector<18x18x4xf32>, vector<18x18x4xf32>, vector<18x18x4xf32> -> vector<18x18x12xf32>
    %c2 = arith.constant 2 : index
    %c0_9 = arith.constant 0 : index
    %c0_10 = arith.constant 0 : index
    %31 = vector.load %arg3[%c2, %c0_9, %c0_10] : memref<3x12x4xf32, #tpu.memory_space<vmem>>, vector<1x12x4xf32>
    %32 = vector.shape_cast %31 : vector<1x12x4xf32> to vector<12x4xf32>
    %cst_11 = arith.constant dense<0.000000e+00> : vector<18x18x4xf32>
    %33 = tpu.matmul %30, %32, %cst_11 {dimension_numbers = #tpu.dot_dimension_numbers<[2], [0], [0, 1], [1], [0, 0, 0, 1, 1, 1], [], []>} : vector<18x18x12xf32>, vector<12x4xf32>, vector<18x18x4xf32> -> vector<18x18x4xf32>
    %34 = arith.addf %25, %33 : vector<18x18x4xf32>
    %c0_12 = arith.constant 0 : index
    %c0_13 = arith.constant 0 : index
    %35 = vector.load %arg4[%c0_12, %c0_13] : memref<1x4xf32, #tpu.memory_space<vmem>>, vector<1x4xf32>
    %36 = vector.shape_cast %35 : vector<1x4xf32> to vector<4xf32>
    %37 = vector.shape_cast %36 : vector<4xf32> to vector<1x1x4xf32>
    %38 = vector.broadcast %37 : vector<1x1x4xf32> to vector<18x18x4xf32>
    %39 = arith.addf %34, %38 : vector<18x18x4xf32>
    %cst_14 = arith.constant 0.000000e+00 : f32
    %40 = vector.broadcast %cst_14 : f32 to vector<18x18x4xf32>
    %41 = arith.maximumf %39, %40 : vector<18x18x4xf32>
    %42 = tpu.iota {dimensions = array<i32: 0>} : vector<18x18x4xi32>
    %43 = vector.broadcast %1 : i32 to vector<18x18x4xi32>
    %44 = arith.addi %42, %43 : vector<18x18x4xi32>
    %45 = tpu.iota {dimensions = array<i32: 1>} : vector<18x18x4xi32>
    %c1_i32 = arith.constant 1 : i32
    %46 = vector.broadcast %c1_i32 : i32 to vector<18x18x4xi32>
    %47 = arith.cmpi sge, %44, %46 : vector<18x18x4xi32>
    %c16_i32_15 = arith.constant 16 : i32
    %48 = vector.broadcast %c16_i32_15 : i32 to vector<18x18x4xi32>
    %49 = arith.cmpi sle, %44, %48 : vector<18x18x4xi32>
    %50 = arith.andi %47, %49 : vector<18x18x4xi1>
    %c1_i32_16 = arith.constant 1 : i32
    %51 = vector.broadcast %c1_i32_16 : i32 to vector<18x18x4xi32>
    %52 = arith.cmpi sge, %45, %51 : vector<18x18x4xi32>
    %53 = arith.andi %50, %52 : vector<18x18x4xi1>
    %c16_i32_17 = arith.constant 16 : i32
    %54 = vector.broadcast %c16_i32_17 : i32 to vector<18x18x4xi32>
    %55 = arith.cmpi sle, %45, %54 : vector<18x18x4xi32>
    %56 = arith.andi %53, %55 : vector<18x18x4xi1>
    %cst_18 = arith.constant 0.000000e+00 : f32
    %57 = vector.broadcast %cst_18 : f32 to vector<18x18x4xf32>
    %58 = arith.select %56, %41, %57 : vector<18x18x4xi1>, vector<18x18x4xf32>
    %cst_19 = arith.constant 0.000000e+00 : f32
    %59 = vector.broadcast %cst_19 : f32 to vector<16x16x4xf32>
    %60 = vector.extract_strided_slice %58 {offsets = [0, 0, 0], sizes = [16, 18, 4], strides = [1, 1, 1]} : vector<18x18x4xf32> to vector<16x18x4xf32>
    %61 = vector.extract_strided_slice %60 {offsets = [0, 0, 0], sizes = [16, 16, 4], strides = [1, 1, 1]} : vector<16x18x4xf32> to vector<16x16x4xf32>
    %62 = vector.extract_strided_slice %60 {offsets = [0, 1, 0], sizes = [16, 16, 4], strides = [1, 1, 1]} : vector<16x18x4xf32> to vector<16x16x4xf32>
    %63 = vector.extract_strided_slice %60 {offsets = [0, 2, 0], sizes = [16, 16, 4], strides = [1, 1, 1]} : vector<16x18x4xf32> to vector<16x16x4xf32>
    %64 = tpu.concatenate %61, %62, %63 in 2 : vector<16x16x4xf32>, vector<16x16x4xf32>, vector<16x16x4xf32> -> vector<16x16x12xf32>
    %c0_20 = arith.constant 0 : index
    %c0_21 = arith.constant 0 : index
    %c0_22 = arith.constant 0 : index
    %65 = vector.load %arg5[%c0_20, %c0_21, %c0_22] : memref<3x12x4xf32, #tpu.memory_space<vmem>>, vector<1x12x4xf32>
    %66 = vector.shape_cast %65 : vector<1x12x4xf32> to vector<12x4xf32>
    %cst_23 = arith.constant dense<0.000000e+00> : vector<16x16x4xf32>
    %67 = tpu.matmul %64, %66, %cst_23 {dimension_numbers = #tpu.dot_dimension_numbers<[2], [0], [0, 1], [1], [0, 0, 0, 1, 1, 1], [], []>} : vector<16x16x12xf32>, vector<12x4xf32>, vector<16x16x4xf32> -> vector<16x16x4xf32>
    %68 = arith.addf %59, %67 : vector<16x16x4xf32>
    %69 = vector.extract_strided_slice %58 {offsets = [1, 0, 0], sizes = [16, 18, 4], strides = [1, 1, 1]} : vector<18x18x4xf32> to vector<16x18x4xf32>
    %70 = vector.extract_strided_slice %69 {offsets = [0, 0, 0], sizes = [16, 16, 4], strides = [1, 1, 1]} : vector<16x18x4xf32> to vector<16x16x4xf32>
    %71 = vector.extract_strided_slice %69 {offsets = [0, 1, 0], sizes = [16, 16, 4], strides = [1, 1, 1]} : vector<16x18x4xf32> to vector<16x16x4xf32>
    %72 = vector.extract_strided_slice %69 {offsets = [0, 2, 0], sizes = [16, 16, 4], strides = [1, 1, 1]} : vector<16x18x4xf32> to vector<16x16x4xf32>
    %73 = tpu.concatenate %70, %71, %72 in 2 : vector<16x16x4xf32>, vector<16x16x4xf32>, vector<16x16x4xf32> -> vector<16x16x12xf32>
    %c1_24 = arith.constant 1 : index
    %c0_25 = arith.constant 0 : index
    %c0_26 = arith.constant 0 : index
    %74 = vector.load %arg5[%c1_24, %c0_25, %c0_26] : memref<3x12x4xf32, #tpu.memory_space<vmem>>, vector<1x12x4xf32>
    %75 = vector.shape_cast %74 : vector<1x12x4xf32> to vector<12x4xf32>
    %cst_27 = arith.constant dense<0.000000e+00> : vector<16x16x4xf32>
    %76 = tpu.matmul %73, %75, %cst_27 {dimension_numbers = #tpu.dot_dimension_numbers<[2], [0], [0, 1], [1], [0, 0, 0, 1, 1, 1], [], []>} : vector<16x16x12xf32>, vector<12x4xf32>, vector<16x16x4xf32> -> vector<16x16x4xf32>
    %77 = arith.addf %68, %76 : vector<16x16x4xf32>
    %78 = vector.extract_strided_slice %58 {offsets = [2, 0, 0], sizes = [16, 18, 4], strides = [1, 1, 1]} : vector<18x18x4xf32> to vector<16x18x4xf32>
    %79 = vector.extract_strided_slice %78 {offsets = [0, 0, 0], sizes = [16, 16, 4], strides = [1, 1, 1]} : vector<16x18x4xf32> to vector<16x16x4xf32>
    %80 = vector.extract_strided_slice %78 {offsets = [0, 1, 0], sizes = [16, 16, 4], strides = [1, 1, 1]} : vector<16x18x4xf32> to vector<16x16x4xf32>
    %81 = vector.extract_strided_slice %78 {offsets = [0, 2, 0], sizes = [16, 16, 4], strides = [1, 1, 1]} : vector<16x18x4xf32> to vector<16x16x4xf32>
    %82 = tpu.concatenate %79, %80, %81 in 2 : vector<16x16x4xf32>, vector<16x16x4xf32>, vector<16x16x4xf32> -> vector<16x16x12xf32>
    %c2_28 = arith.constant 2 : index
    %c0_29 = arith.constant 0 : index
    %c0_30 = arith.constant 0 : index
    %83 = vector.load %arg5[%c2_28, %c0_29, %c0_30] : memref<3x12x4xf32, #tpu.memory_space<vmem>>, vector<1x12x4xf32>
    %84 = vector.shape_cast %83 : vector<1x12x4xf32> to vector<12x4xf32>
    %cst_31 = arith.constant dense<0.000000e+00> : vector<16x16x4xf32>
    %85 = tpu.matmul %82, %84, %cst_31 {dimension_numbers = #tpu.dot_dimension_numbers<[2], [0], [0, 1], [1], [0, 0, 0, 1, 1, 1], [], []>} : vector<16x16x12xf32>, vector<12x4xf32>, vector<16x16x4xf32> -> vector<16x16x4xf32>
    %86 = arith.addf %77, %85 : vector<16x16x4xf32>
    %c0_32 = arith.constant 0 : index
    %c0_33 = arith.constant 0 : index
    %87 = vector.load %arg6[%c0_32, %c0_33] : memref<1x4xf32, #tpu.memory_space<vmem>>, vector<1x4xf32>
    %88 = vector.shape_cast %87 : vector<1x4xf32> to vector<4xf32>
    %89 = vector.shape_cast %88 : vector<4xf32> to vector<1x1x4xf32>
    %90 = vector.broadcast %89 : vector<1x1x4xf32> to vector<16x16x4xf32>
    %91 = arith.addf %86, %90 : vector<16x16x4xf32>
    %c0_34 = arith.constant 0 : index
    %92 = arith.index_cast %1 : i32 to index
    %c0_35 = arith.constant 0 : index
    %c0_36 = arith.constant 0 : index
    %93 = vector.load %arg2[%c0_34, %92, %c0_35, %c0_36] : memref<1x16x16x4xf32, #tpu.memory_space<vmem>>, vector<1x16x16x4xf32>
    %94 = vector.shape_cast %93 : vector<1x16x16x4xf32> to vector<16x16x4xf32>
    %95 = arith.addf %91, %94 : vector<16x16x4xf32>
    %cst_37 = arith.constant 0.000000e+00 : f32
    %96 = vector.broadcast %cst_37 : f32 to vector<16x16x4xf32>
    %97 = arith.maximumf %95, %96 : vector<16x16x4xf32>
    %c0_38 = arith.constant 0 : index
    %c0_39 = arith.constant 0 : index
    %c0_40 = arith.constant 0 : index
    %c0_41 = arith.constant 0 : index
    %98 = vector.load %arg7[%c0_38, %c0_39, %c0_40, %c0_41] : memref<1x16x16x4xf32, #tpu.memory_space<vmem>>, vector<1x16x16x4xf32>
    %99 = vector.shape_cast %98 : vector<1x16x16x4xf32> to vector<16x16x4xf32>
    %100 = vector.shape_cast %97 : vector<16x16x4xf32> to vector<1x16x16x4xf32>
    tpu.vector_store %arg7[%c0_38, %c0_39, %c0_40, %c0_41], %100 {strides = array<i32>} : memref<1x16x16x4xf32, #tpu.memory_space<vmem>>, vector<1x16x16x4xf32>,
    return
  }
  func.func @transform_0(%arg0: i32, %arg1: i32) -> (i32, i32, i32, i32) {
    %c0_i32 = arith.constant 0 : i32
    %c0_i32_0 = arith.constant 0 : i32
    %c0_i32_1 = arith.constant 0 : i32
    %c0_i32_2 = arith.constant 0 : i32
    return %arg0, %c0_i32, %c0_i32_0, %c0_i32_1 : i32, i32, i32, i32
  }
  func.func @transform_1(%arg0: i32, %arg1: i32) -> (i32, i32, i32) {
    %c0_i32 = arith.constant 0 : i32
    %c0_i32_0 = arith.constant 0 : i32
    %c0_i32_1 = arith.constant 0 : i32
    %c0_i32_2 = arith.constant 0 : i32
    return %c0_i32, %c0_i32_0, %c0_i32_1 : i32, i32, i32
  }
  func.func @transform_2(%arg0: i32, %arg1: i32) -> (i32, i32) {
    %c0_i32 = arith.constant 0 : i32
    %c0_i32_0 = arith.constant 0 : i32
    %c0_i32_1 = arith.constant 0 : i32
    return %c0_i32, %c0_i32_0 : i32, i32
  }
  func.func @transform_3(%arg0: i32, %arg1: i32) -> (i32, i32, i32) {
    %c0_i32 = arith.constant 0 : i32
    %c0_i32_0 = arith.constant 0 : i32
    %c0_i32_1 = arith.constant 0 : i32
    %c0_i32_2 = arith.constant 0 : i32
    return %c0_i32, %c0_i32_0, %c0_i32_1 : i32, i32, i32
  }
  func.func @transform_4(%arg0: i32, %arg1: i32) -> (i32, i32) {
    %c0_i32 = arith.constant 0 : i32
    %c0_i32_0 = arith.constant 0 : i32
    %c0_i32_1 = arith.constant 0 : i32
    return %c0_i32, %c0_i32_0 : i32, i32
  }
  func.func @transform_5(%arg0: i32, %arg1: i32) -> (i32, i32, i32, i32) {
    %c0_i32 = arith.constant 0 : i32
    %c0_i32_0 = arith.constant 0 : i32
    %c0_i32_1 = arith.constant 0 : i32
    return %arg0, %arg1, %c0_i32, %c0_i32_0 : i32, i32, i32, i32
  }
}

</mosaic_0001>

<llo_original>
// kernel: basic_block_forward_nhwc.1
$region0: #{basic_block_forward_nhwc.1}
  #allocation0 [shape = 'u32[]', space=smem, size = 0x4, offset = 0x4, fixed_abs, tag = 'smem constant byte address 0x4 - core index']
  #allocation1 [shape = 'u32[144,128]{1,0:T(1,128)}', space=vmem, size = 0x12000, scoped, tag = 'internal scratch']
  #allocation2 [shape = 'f32[20,20,4]{2,1,0:T(8,128)}', space=vmem, size = 0x3c000, scoped, tag = 'scratch operand']
  %s0 = inlined_call_operand.vmem [shape: f32[2,16,16,4], index: 0, kind: input, shape index: {}]
  %s1 = inlined_call_operand.vmem [shape: f32[3,12,4], index: 1, kind: input, shape index: {}]
  %s2 = inlined_call_operand.vmem [shape: f32[1,4], index: 2, kind: input, shape index: {}]
  %s3 = inlined_call_operand.vmem [shape: f32[3,12,4], index: 3, kind: input, shape index: {}]
  %s4 = inlined_call_operand.vmem [shape: f32[1,4], index: 4, kind: input, shape index: {}]
  %s5 = inlined_call_operand.vmem [shape: f32[2,16,16,4], index: 5, kind: output, shape index: {}]
  %s6 = sld [smem:[#allocation0]]
  $region57: #{basic_block_forward_nhwc.1} parent=0
    _
  %s8 = ssub.s32 1, %s6
  %s9 = scalar_select 0, %s8, %s6
  loop: start=0, step=1, limit=4
  $region2: #{basic_block_forward_nhwc.1} parent=0 // loop_pre_header
    _
  $region3: #{basic_block_forward_nhwc.1} parent=0 // loop_header
    %s11 = sphi 0, %s15
    %p12 = scmp.ge.s32.totalorder %s11, 4
    %s18 = sphi 0, %s30
    %s19 = sphi 0, %s26
    %s20 = sphi 0, %s18
    %s21 = sphi 0, %s19
    %s22 = sphi 0, %s20
    %s23 = sphi 0, %s21
    %s33 = sphi 0, %s35
    %s36 = sphi 0, %s33
    %s37 = sphi 0, %s36
    %s53 = sphi 0, %s37
    %s57 = sphi 0, %s57
    %s59 = sphi 0, %s57
    %s60 = sphi 0, %s59
    %s74 = sphi 0, %s60
    %s78 = sphi 0, %s78
    %s80 = sphi 0, %s78
    %s81 = sphi 0, %s80
    %s95 = sphi 0, %s81
    %s99 = sphi 0, %s99
    %s101 = sphi 0, %s99
    %s102 = sphi 0, %s101
    %s116 = sphi 0, %s102
    %s120 = sphi 0, %s120
    %s122 = sphi 0, %s120
    %s123 = sphi 0, %s122
    %s137 = sphi 0, %s123
    %s145 = sphi 0, %s147
    %s148 = sphi 0, %s145
    %s149 = sphi 0, %s148
    %s165 = sphi 0, %s149
  $region4: #{basic_block_forward_nhwc.1} parent=0 // loop_header_branch
    %14 = sbr.rel (%p12) target = $region8
  $region5: #{basic_block_forward_nhwc.1} parent=0 // loop_body
    %s16 = ssub.s32 %s11, 1
    %s17 = ssub.s32 %s11, 2
    %s24 = sadd.s32 1, %s19
    %p25 = scmp.ge.s32.totalorder %s24, 1
    %s26 = scalar_select %p25, 0, %s24
    %s27 = sadd.s32 1, %s18
    %s28 = scalar_select %p25, %s27, %s18
    %p29 = scmp.ge.s32.totalorder %s28, 2
    %s30 = scalar_select %p29, 0, %s28
    %s31 = ssub.s32 %s18, %s30
    %p32 = scmp.eq.s32.totalorder %s31, 0
    %s34 = sadd.s32 %s33, 1
    %s35 = scalar_select %p32, %s33, %s34
    %p38 = pneg %p32
    %p39 = scmp.eq.s32.totalorder %s11, 1
    %p40 = por %p38, %p39
    %p41 = scmp.ne.s32.totalorder %s33, %s36
    %p42 = scmp.eq.s32.totalorder %s11, 0
    %p43 = por %p41, %p42
    %p44 = scmp.ne.s32.totalorder %s33, %s36
    %p45 = scmp.eq.s32.totalorder %s16, 1
    %p46 = por %p44, %p45
    %p47 = scmp.ne.s32.totalorder %s36, %s37
    %p48 = scmp.eq.s32.totalorder %s16, 0
    %p49 = por %p47, %p48
    %p50 = scmp.ne.s32.totalorder %s36, %s37
    %p51 = scmp.eq.s32.totalorder %s17, 1
    %p52 = por %p50, %p51
    %p54 = scmp.ne.s32.totalorder %s37, %s53
    %p55 = scmp.eq.s32.totalorder %s17, 0
    %p56 = por %p54, %p55
    %s58 = sadd.s32 %s57, 1
    %p61 = scmp.eq.s32.totalorder %s11, 1
    %p62 = scmp.ne.s32.totalorder %s57, %s59
    %p63 = scmp.eq.s32.totalorder %s11, 0
    %p64 = por %p62, %p63
    %p65 = scmp.ne.s32.totalorder %s57, %s59
    %p66 = scmp.eq.s32.totalorder %s16, 1
    %p67 = por %p65, %p66
    %p68 = scmp.ne.s32.totalorder %s59, %s60
    %p69 = scmp.eq.s32.totalorder %s16, 0
    %p70 = por %p68, %p69
    %p71 = scmp.ne.s32.totalorder %s59, %s60
    %p72 = scmp.eq.s32.totalorder %s17, 1
    %p73 = por %p71, %p72
    %p75 = scmp.ne.s32.totalorder %s60, %s74
    %p76 = scmp.eq.s32.totalorder %s17, 0
    %p77 = por %p75, %p76
    %s79 = sadd.s32 %s78, 1
    %p82 = scmp.eq.s32.totalorder %s11, 1
    %p83 = scmp.ne.s32.totalorder %s78, %s80
    %p84 = scmp.eq.s32.totalorder %s11, 0
    %p85 = por %p83, %p84
    %p86 = scmp.ne.s32.totalorder %s78, %s80
    %p87 = scmp.eq.s32.totalorder %s16, 1
    %p88 = por %p86, %p87
    %p89 = scmp.ne.s32.totalorder %s80, %s81
    %p90 = scmp.eq.s32.totalorder %s16, 0
    %p91 = por %p89, %p90
    %p92 = scmp.ne.s32.totalorder %s80, %s81
    %p93 = scmp.eq.s32.totalorder %s17, 1
    %p94 = por %p92, %p93
    %p96 = scmp.ne.s32.totalorder %s81, %s95
    %p97 = scmp.eq.s32.totalorder %s17, 0
    %p98 = por %p96, %p97
    %s100 = sadd.s32 %s99, 1
    %p103 = scmp.eq.s32.totalorder %s11, 1
    %p104 = scmp.ne.s32.totalorder %s99, %s101
    %p105 = scmp.eq.s32.totalorder %s11, 0
    %p106 = por %p104, %p105
    %p107 = scmp.ne.s32.totalorder %s99, %s101
    %p108 = scmp.eq.s32.totalorder %s16, 1
    %p109 = por %p107, %p108
    %p110 = scmp.ne.s32.totalorder %s101, %s102
    %p111 = scmp.eq.s32.totalorder %s16, 0
    %p112 = por %p110, %p111
    %p113 = scmp.ne.s32.totalorder %s101, %s102
    %p114 = scmp.eq.s32.totalorder %s17, 1
    %p115 = por %p113, %p114
    %p117 = scmp.ne.s32.totalorder %s102, %s116
    %p118 = scmp.eq.s32.totalorder %s17, 0
    %p119 = por %p117, %p118
    %s121 = sadd.s32 %s120, 1
    %p124 = scmp.eq.s32.totalorder %s11, 1
    %p125 = scmp.ne.s32.totalorder %s120, %s122
    %p126 = scmp.eq.s32.totalorder %s11, 0
    %p127 = por %p125, %p126
    %p128 = scmp.ne.s32.totalorder %s120, %s122
    %p129 = scmp.eq.s32.totalorder %s16, 1
    %p130 = por %p128, %p129
    %p131 = scmp.ne.s32.totalorder %s122, %s123
    %p132 = scmp.eq.s32.totalorder %s16, 0
    %p133 = por %p131, %p132
    %p134 = scmp.ne.s32.totalorder %s122, %s123
    %p135 = scmp.eq.s32.totalorder %s17, 1
    %p136 = por %p134, %p135
    %p138 = scmp.ne.s32.totalorder %s123, %s137
    %p139 = scmp.eq.s32.totalorder %s17, 0
    %p140 = por %p138, %p139
    %s141 = ssub.s32 %s18, %s30
    %s142 = ssub.s32 %s19, %s26
    %s143 = sor.u32 %s141, %s142
    %p144 = scmp.eq.s32.totalorder %s143, 0
    %s146 = sadd.s32 %s145, 1
    %s147 = scalar_select %p144, %s145, %s146
    %p150 = pneg %p144
    %p151 = scmp.eq.s32.totalorder %s11, 1
    %p152 = por %p150, %p151
    %p153 = scmp.ne.s32.totalorder %s145, %s148
    %p154 = scmp.eq.s32.totalorder %s11, 0
    %p155 = por %p153, %p154
    %p156 = scmp.ne.s32.totalorder %s145, %s148
    %p157 = scmp.eq.s32.totalorder %s16, 1
    %p158 = por %p156, %p157
    %p159 = scmp.ne.s32.totalorder %s148, %s149
    %p160 = scmp.eq.s32.totalorder %s16, 0
    %p161 = por %p159, %p160
    %p162 = scmp.ne.s32.totalorder %s148, %s149
    %p163 = scmp.eq.s32.totalorder %s17, 1
    %p164 = por %p162, %p163
    %p166 = scmp.ne.s32.totalorder %s149, %s165
    %p167 = scmp.eq.s32.totalorder %s17, 0
    %p168 = por %p166, %p167
    %p169 = scmp.le.s32.totalorder 1, %s11
    %p170 = scmp.lt.s32.totalorder %s11, 3
    %p171 = pnand %p169, %p170
    %p172 = pneg %p171
    // Predicated region
    $region9: #{basic_block_forward_nhwc.1} parent=5 // pred_check
      _
    $region10: #{basic_block_forward_nhwc.1} parent=5 // pred_check_branch
      %174 = sbr.rel (%p171) target = $region12
    $region11: #{basic_block_forward_nhwc.1} parent=5 // pred_region
      %s175 = ssub.s32 %s11, 1
      // Predicated region
      $region13: #{basic_block_forward_nhwc.1} parent=11 // pred_check
        %p176 = pneg %p70
      $region14: #{basic_block_forward_nhwc.1} parent=11 // pred_check_branch
        %178 = sbr.rel (%p176) target = $region16
      $region15: #{basic_block_forward_nhwc.1} parent=11 // pred_region
        _
      $region16: #{basic_block_forward_nhwc.1} parent=11 // pred_fallthru
        _
      // Predicated region
      $region17: #{basic_block_forward_nhwc.1} parent=11 // pred_check
        %p179 = pneg %p91
      $region18: #{basic_block_forward_nhwc.1} parent=11 // pred_check_branch
        %181 = sbr.rel (%p179) target = $region20
      $region19: #{basic_block_forward_nhwc.1} parent=11 // pred_region
        _
      $region20: #{basic_block_forward_nhwc.1} parent=11 // pred_fallthru
        _
      // Predicated region
      $region21: #{basic_block_forward_nhwc.1} parent=11 // pred_check
        %p182 = pneg %p112
      $region22: #{basic_block_forward_nhwc.1} parent=11 // pred_check_branch
        %184 = sbr.rel (%p182) target = $region24
      $region23: #{basic_block_forward_nhwc.1} parent=11 // pred_region
        _
      $region24: #{basic_block_forward_nhwc.1} parent=11 // pred_fallthru
        _
      // Predicated region
      $region25: #{basic_block_forward_nhwc.1} parent=11 // pred_check
        %p185 = pneg %p133
      $region26: #{basic_block_forward_nhwc.1} parent=11 // pred_check_branch
        %187 = sbr.rel (%p185) target = $region28
      $region27: #{basic_block_forward_nhwc.1} parent=11 // pred_region
        _
      $region28: #{basic_block_forward_nhwc.1} parent=11 // pred_fallthru
        _
    $region12: #{basic_block_forward_nhwc.1} parent=5 // pred_fallthru
      _
    %p188 = scmp.lt.s32.totalorder %s11, 2
    // Predicated region
    $region29: #{basic_block_forward_nhwc.1} parent=5 // pred_check
      %p189 = pneg %p188
    $region30: #{basic_block_forward_nhwc.1} parent=5 // pred_check_branch
      %191 = sbr.rel (%p189) target = $region32
    $region31: #{basic_block_forward_nhwc.1} parent=5 // pred_region
      // Predicated region
      $region33: #{basic_block_forward_nhwc.1} parent=31 // pred_check
        %p192 = pneg %p43
      $region34: #{basic_block_forward_nhwc.1} parent=31 // pred_check_branch
        %194 = sbr.rel (%p192) target = $region36
      $region35: #{basic_block_forward_nhwc.1} parent=31 // pred_region
        %p195 = scmp.lt.s32.totalorder %s18, 1
        %s196 = scalar_select %p195, %s18, 1
        %s197 = smul.addr %s196, 32
        %s198 = smul.addr %s197, 8
        %s199 = scalar_lea.vmem %s0, %s198
      $region36: #{basic_block_forward_nhwc.1} parent=31 // pred_fallthru
        _
    $region32: #{basic_block_forward_nhwc.1} parent=5 // pred_fallthru
      _
    %p200 = scmp.le.s32.totalorder 1, %s11
    %p201 = scmp.lt.s32.totalorder %s11, 3
    %p202 = pnand %p200, %p201
    %p203 = pneg %p202
    // Predicated region
    $region37: #{basic_block_forward_nhwc.1} parent=5 // pred_check
      _
    $region38: #{basic_block_forward_nhwc.1} parent=5 // pred_check_branch
      %205 = sbr.rel (%p202) target = $region40
    $region39: #{basic_block_forward_nhwc.1} parent=5 // pred_region
      %s206 = ssub.s32 %s11, 1
      %p207 = scmp.lt.s32.totalorder %s20, 1
      %s208 = scalar_select %p207, %s20, 1
      %s209 = smul.addr %s208, 32
      %s210 = smul.addr %s209, 8
      %s211 = scalar_lea.vmem %s0, %s210
      %p212 = pneg %p49
      %p213 = pneg %p46
      %p214 = pneg %p70
      %p215 = pneg %p67
      %p216 = pneg %p91
      %p217 = pneg %p88
      %p218 = pneg %p112
      %p219 = pneg %p109
      %p220 = pneg %p133
      %p221 = pneg %p130
      %p222 = pneg %p161
      %p223 = pneg %p158
      %s224 = smul.u32 16, %s21
      %p225 = scmp.lt.s32.totalorder %s20, 1
      %s226 = scalar_select %p225, %s20, 1
      %p227 = scmp.lt.s32.totalorder %s224, 15
      %s228 = scalar_select %p227, %s224, 15
      %s229 = smul.addr %s228, 2
      %s230 = smul.addr %s226, 32
      %s231 = sadd.s32 %s229, %s230
      %s232 = smul.addr %s231, 8
      %s233 = scalar_lea.vmem %s5, %s232
      %p234 = scmp.lt.s32.totalorder %s20, 1
      %s235 = scalar_select %p234, %s20, 1
      %s236 = smul.addr %s235, 32
      %s237 = smul.addr %s236, 8
      %s238 = scalar_lea.vmem %s0, %s237
      %s239 = smul.u32 16, %s21
      %p240 = scmp.lt.s32.totalorder %s20, 1
      %s241 = scalar_select %p240, %s20, 1
      %p242 = scmp.lt.s32.totalorder %s239, 15
      %s243 = scalar_select %p242, %s239, 15
      %s244 = smul.addr %s243, 2
      %s245 = smul.addr %s241, 32
      %s246 = sadd.s32 %s244, %s245
      %s247 = smul.addr %s246, 8
      %s248 = scalar_lea.vmem %s5, %s247
      %s249 = smul.u32 16, %s21
      %s250 = smul.u32 %s21, 16
      %p251 = scmp.eq.s32.totalorder %s21, 0
      // Predicated region
      $region41: #{basic_block_forward_nhwc.1} parent=39 // pred_check
        %p252 = pneg %p251
      $region42: #{basic_block_forward_nhwc.1} parent=39 // pred_check_branch
        %254 = sbr.rel (%p252) target = $region44
      $region43: #{basic_block_forward_nhwc.1} parent=39 // pred_region
        %v255 = vld [vmem:[%s238] sm:$0xff]
        %v256 = vld [vmem:[%s238 + $0x8] sm:$0xff]
        %v257 = vld [vmem:[%s238 + $0x10] sm:$0xff]
        %v258 = vld [vmem:[%s238 + $0x18] sm:$0xff]
        %v259 = vld [vmem:[%s238 + $0x20] sm:$0xff]
        %v260 = vld [vmem:[%s238 + $0x28] sm:$0xff]
        %v261 = vld [vmem:[%s238 + $0x30] sm:$0xff]
        %v262 = vld [vmem:[%s238 + $0x38] sm:$0xff]
        %v263 = vld [vmem:[%s238 + $0x40] sm:$0xff]
        %v264 = vld [vmem:[%s238 + $0x48] sm:$0xff]
        %v265 = vld [vmem:[%s238 + $0x50] sm:$0xff]
        %v266 = vld [vmem:[%s238 + $0x58] sm:$0xff]
        %v267 = vld [vmem:[%s238 + $0x60] sm:$0xff]
        %v268 = vld [vmem:[%s238 + $0x68] sm:$0xff]
        %v269 = vld [vmem:[%s238 + $0x70] sm:$0xff]
        %v270 = vld [vmem:[%s238 + $0x78] sm:$0xff]
        %v271 = vld [vmem:[%s238 + $0x80] sm:$0xff]
        %v272 = vld [vmem:[%s238 + $0x88] sm:$0xff]
        %v273 = vld [vmem:[%s238 + $0x90] sm:$0xff]
        %v274 = vld [vmem:[%s238 + $0x98] sm:$0xff]
        %v275 = vld [vmem:[%s238 + $0xa0] sm:$0xff]
        %v276 = vld [vmem:[%s238 + $0xa8] sm:$0xff]
        %v277 = vld [vmem:[%s238 + $0xb0] sm:$0xff]
        %v278 = vld [vmem:[%s238 + $0xb8] sm:$0xff]
        %v279 = vld [vmem:[%s238 + $0xc0] sm:$0xff]
        %v280 = vld [vmem:[%s238 + $0xc8] sm:$0xff]
        %v281 = vld [vmem:[%s238 + $0xd0] sm:$0xff]
        %v282 = vld [vmem:[%s238 + $0xd8] sm:$0xff]
        %v283 = vld [vmem:[%s238 + $0xe0] sm:$0xff]
        %v284 = vld [vmem:[%s238 + $0xe8] sm:$0xff]
        %v285 = vld [vmem:[%s238 + $0xf0] sm:$0xff]
        %v286 = vld [vmem:[%s238 + $0xf8] sm:$0xff]
        %vm320 = vcmask 1041408
        %v321 = vrot.slane 0.0, 6
        %v322 = vsel %vm320, %v321, %v321
        %v323 = vrot.slane %v255, 6
        %v324 = vrot.slane %v256, 6
        %v325 = vsel %vm320, %v323, %v324
        %v326 = vrot.slane %v257, 6
        %v327 = vrot.slane %v258, 6
        %v328 = vsel %vm320, %v326, %v327
        %v329 = vrot.slane %v259, 6
        %v330 = vrot.slane %v260, 6
        %v331 = vsel %vm320, %v329, %v330
        %v332 = vrot.slane %v261, 6
        %v333 = vrot.slane %v262, 6
        %v334 = vsel %vm320, %v332, %v333
        %v335 = vrot.slane %v263, 6
        %v336 = vrot.slane %v264, 6
        %v337 = vsel %vm320, %v335, %v336
        %v338 = vrot.slane %v265, 6
        %v339 = vrot.slane %v266, 6
        %v340 = vsel %vm320, %v338, %v339
        %v341 = vrot.slane %v267, 6
        %v342 = vrot.slane %v268, 6
        %v343 = vsel %vm320, %v341, %v342
        %v344 = vrot.slane %v269, 6
        %v345 = vrot.slane %v270, 6
        %v346 = vsel %vm320, %v344, %v345
        %v347 = vrot.slane %v271, 6
        %v348 = vrot.slane %v272, 6
        %v349 = vsel %vm320, %v347, %v348
        %v350 = vrot.slane %v273, 6
        %v351 = vrot.slane %v274, 6
        %v352 = vsel %vm320, %v350, %v351
        %v353 = vrot.slane %v275, 6
        %v354 = vrot.slane %v276, 6
        %v355 = vsel %vm320, %v353, %v354
        %v356 = vrot.slane %v277, 6
        %v357 = vrot.slane %v278, 6
        %v358 = vsel %vm320, %v356, %v357
        %v359 = vrot.slane %v279, 6
        %v360 = vrot.slane %v280, 6
        %v361 = vsel %vm320, %v359, %v360
        %v362 = vrot.slane %v281, 6
        %v363 = vrot.slane %v282, 6
        %v364 = vsel %vm320, %v362, %v363
        %v365 = vrot.slane %v283, 6
        %v366 = vrot.slane %v284, 6
        %v367 = vsel %vm320, %v365, %v366
        %v368 = vrot.slane %v285, 6
        %v369 = vrot.slane %v286, 6
        %v370 = vsel %vm320, %v368, %v369
        %v421 = vsel %vm320, 0.0, %v321
        %v422 = vsel %vm320, 0.0, %v323
        %v423 = vsel %vm320, 0.0, %v326
        %v424 = vsel %vm320, 0.0, %v329
        %v425 = vsel %vm320, 0.0, %v332
        %v426 = vsel %vm320, 0.0, %v335
        %v427 = vsel %vm320, 0.0, %v338
        %v428 = vsel %vm320, 0.0, %v341
        %v429 = vsel %vm320, 0.0, %v344
        %v430 = vsel %vm320, 0.0, %v347
        %v431 = vsel %vm320, 0.0, %v350
        %v432 = vsel %vm320, 0.0, %v353
        %v433 = vsel %vm320, 0.0, %v356
        %v434 = vsel %vm320, 0.0, %v359
        %v435 = vsel %vm320, 0.0, %v362
        %v436 = vsel %vm320, 0.0, %v365
        %v437 = vsel %vm320, 0.0, %v368
        %v438 = vsel %vm320, %v321, 0.0
        %v439 = vsel %vm320, %v324, 0.0
        %v440 = vsel %vm320, %v327, 0.0
        %v441 = vsel %vm320, %v330, 0.0
        %v442 = vsel %vm320, %v333, 0.0
        %v443 = vsel %vm320, %v336, 0.0
        %v444 = vsel %vm320, %v339, 0.0
        %v445 = vsel %vm320, %v342, 0.0
        %v446 = vsel %vm320, %v345, 0.0
        %v447 = vsel %vm320, %v348, 0.0
        %v448 = vsel %vm320, %v351, 0.0
        %v449 = vsel %vm320, %v354, 0.0
        %v450 = vsel %vm320, %v357, 0.0
        %v451 = vsel %vm320, %v360, 0.0
        %v452 = vsel %vm320, %v363, 0.0
        %v453 = vsel %vm320, %v366, 0.0
        %v454 = vsel %vm320, %v369, 0.0
        %vm455 = vcmask 31744
        %456 = vst.msk [vmem:[#allocation2] sm:$0xff] %vm455, %v421
        %457 = vst.msk [vmem:[#allocation2 + $0x8] sm:$0xff] %vm455, %v322
        %vm458 = vcmask 27648
        %459 = vst.msk [vmem:[#allocation2 + $0x10] sm:$0xf] %vm458, %v438
        %460 = vst.msk [vmem:[#allocation2 + $0x18] sm:$0xff] %vm455, %v421
        %461 = vst.msk [vmem:[#allocation2 + $0x20] sm:$0xff] %vm455, %v322
        %462 = vst.msk [vmem:[#allocation2 + $0x28] sm:$0xf] %vm458, %v438
        %463 = vst.msk [vmem:[#allocation2 + $0x30] sm:$0xff] %vm455, %v422
        %464 = vst.msk [vmem:[#allocation2 + $0x38] sm:$0xff] %vm455, %v325
        %465 = vst.msk [vmem:[#allocation2 + $0x40] sm:$0xf] %vm458, %v439
        %466 = vst.msk [vmem:[#allocation2 + $0x48] sm:$0xff] %vm455, %v423
        %467 = vst.msk [vmem:[#allocation2 + $0x50] sm:$0xff] %vm455, %v328
        %468 = vst.msk [vmem:[#allocation2 + $0x58] sm:$0xf] %vm458, %v440
        %469 = vst.msk [vmem:[#allocation2 + $0x60] sm:$0xff] %vm455, %v424
        %470 = vst.msk [vmem:[#allocation2 + $0x68] sm:$0xff] %vm455, %v331
        %471 = vst.msk [vmem:[#allocation2 + $0x70] sm:$0xf] %vm458, %v441
        %472 = vst.msk [vmem:[#allocation2 + $0x78] sm:$0xff] %vm455, %v425
        %473 = vst.msk [vmem:[#allocation2 + $0x80] sm:$0xff] %vm455, %v334
        %474 = vst.msk [vmem:[#allocation2 + $0x88] sm:$0xf] %vm458, %v442
        %475 = vst.msk [vmem:[#allocation2 + $0x90] sm:$0xff] %vm455, %v426
        %476 = vst.msk [vmem:[#allocation2 + $0x98] sm:$0xff] %vm455, %v337
        %477 = vst.msk [vmem:[#allocation2 + $0xa0] sm:$0xf] %vm458, %v443
        %478 = vst.msk [vmem:[#allocation2 + $0xa8] sm:$0xff] %vm455, %v427
        %479 = vst.msk [vmem:[#allocation2 + $0xb0] sm:$0xff] %vm455, %v340
        %480 = vst.msk [vmem:[#allocation2 + $0xb8] sm:$0xf] %vm458, %v444
        %481 = vst.msk [vmem:[#allocation2 + $0xc0] sm:$0xff] %vm455, %v428
        %482 = vst.msk [vmem:[#allocation2 + $0xc8] sm:$0xff] %vm455, %v343
        %483 = vst.msk [vmem:[#allocation2 + $0xd0] sm:$0xf] %vm458, %v445
        %484 = vst.msk [vmem:[#allocation2 + $0xd8] sm:$0xff] %vm455, %v429
        %485 = vst.msk [vmem:[#allocation2 + $0xe0] sm:$0xff] %vm455, %v346
        %486 = vst.msk [vmem:[#allocation2 + $0xe8] sm:$0xf] %vm458, %v446
        %487 = vst.msk [vmem:[#allocation2 + $0xf0] sm:$0xff] %vm455, %v430
        %488 = vst.msk [vmem:[#allocation2 + $0xf8] sm:$0xff] %vm455, %v349
        %489 = vst.msk [vmem:[#allocation2 + $0x100] sm:$0xf] %vm458, %v447
        %490 = vst.msk [vmem:[#allocation2 + $0x108] sm:$0xff] %vm455, %v431
        %491 = vst.msk [vmem:[#allocation2 + $0x110] sm:$0xff] %vm455, %v352
        %492 = vst.msk [vmem:[#allocation2 + $0x118] sm:$0xf] %vm458, %v448
        %493 = vst.msk [vmem:[#allocation2 + $0x120] sm:$0xff] %vm455, %v432
        %494 = vst.msk [vmem:[#allocation2 + $0x128] sm:$0xff] %vm455, %v355
        %495 = vst.msk [vmem:[#allocation2 + $0x130] sm:$0xf] %vm458, %v449
        %496 = vst.msk [vmem:[#allocation2 + $0x138] sm:$0xff] %vm455, %v433
        %497 = vst.msk [vmem:[#allocation2 + $0x140] sm:$0xff] %vm455, %v358
        %498 = vst.msk [vmem:[#allocation2 + $0x148] sm:$0xf] %vm458, %v450
        %499 = vst.msk [vmem:[#allocation2 + $0x150] sm:$0xff] %vm455, %v434
        %500 = vst.msk [vmem:[#allocation2 + $0x158] sm:$0xff] %vm455, %v361
        %501 = vst.msk [vmem:[#allocation2 + $0x160] sm:$0xf] %vm458, %v451
        %502 = vst.msk [vmem:[#allocation2 + $0x168] sm:$0xff] %vm455, %v435
        %503 = vst.msk [vmem:[#allocation2 + $0x170] sm:$0xff] %vm455, %v364
        %504 = vst.msk [vmem:[#allocation2 + $0x178] sm:$0xf] %vm458, %v452
        %505 = vst.msk [vmem:[#allocation2 + $0x180] sm:$0xff] %vm455, %v436
        %506 = vst.msk [vmem:[#allocation2 + $0x188] sm:$0xff] %vm455, %v367
        %507 = vst.msk [vmem:[#allocation2 + $0x190] sm:$0xf] %vm458, %v453
        %508 = vst.msk [vmem:[#allocation2 + $0x198] sm:$0xff] %vm455, %v437
        %509 = vst.msk [vmem:[#allocation2 + $0x1a0] sm:$0xff] %vm455, %v370
        %510 = vst.msk [vmem:[#allocation2 + $0x1a8] sm:$0xf] %vm458, %v454
        %511 = vst.msk [vmem:[#allocation2 + $0x1b0] sm:$0xff] %vm455, %v421
        %512 = vst.msk [vmem:[#allocation2 + $0x1b8] sm:$0xff] %vm455, %v322
        %513 = vst.msk [vmem:[#allocation2 + $0x1c0] sm:$0xf] %vm458, %v438
        %514 = vst.msk [vmem:[#allocation2 + $0x1c8] sm:$0xff] %vm455, %v421
        %515 = vst.msk [vmem:[#allocation2 + $0x1d0] sm:$0xff] %vm455, %v322
        %516 = vst.msk [vmem:[#allocation2 + $0x1d8] sm:$0xf] %vm458, %v438
      $region44: #{basic_block_forward_nhwc.1} parent=39 // pred_fallthru
        _
      %s517 = smul.u32 %s250, 24
      %s518 = scalar_lea.vmem [#allocation2], %s517
      %v519 = vld [vmem:[%s518] sm:$0xff]
      %v520 = vld [vmem:[%s518 + $0x8] sm:$0xff]
      %v521 = vld [vmem:[%s518 + $0x10] sm:$0xf]
      %v522 = vld [vmem:[%s518 + $0x18] sm:$0xff]
      %v523 = vld [vmem:[%s518 + $0x20] sm:$0xff]
      %v524 = vld [vmem:[%s518 + $0x28] sm:$0xf]
      %v525 = vld [vmem:[%s518 + $0x30] sm:$0xff]
      %v526 = vld [vmem:[%s518 + $0x38] sm:$0xff]
      %v527 = vld [vmem:[%s518 + $0x40] sm:$0xf]
      %v528 = vld [vmem:[%s518 + $0x48] sm:$0xff]
      %v529 = vld [vmem:[%s518 + $0x50] sm:$0xff]
      %v530 = vld [vmem:[%s518 + $0x58] sm:$0xf]
      %v531 = vld [vmem:[%s518 + $0x60] sm:$0xff]
      %v532 = vld [vmem:[%s518 + $0x68] sm:$0xff]
      %v533 = vld [vmem:[%s518 + $0x70] sm:$0xf]
      %v534 = vld [vmem:[%s518 + $0x78] sm:$0xff]
      %v535 = vld [vmem:[%s518 + $0x80] sm:$0xff]
      %v536 = vld [vmem:[%s518 + $0x88] sm:$0xf]
      %v537 = vld [vmem:[%s518 + $0x90] sm:$0xff]
      %v538 = vld [vmem:[%s518 + $0x98] sm:$0xff]
      %v539 = vld [vmem:[%s518 + $0xa0] sm:$0xf]
      %v540 = vld [vmem:[%s518 + $0xa8] sm:$0xff]
      %v541 = vld [vmem:[%s518 + $0xb0] sm:$0xff]
      %v542 = vld [vmem:[%s518 + $0xb8] sm:$0xf]
      %v543 = vld [vmem:[%s518 + $0xc0] sm:$0xff]
      %v544 = vld [vmem:[%s518 + $0xc8] sm:$0xff]
      %v545 = vld [vmem:[%s518 + $0xd0] sm:$0xf]
      %v546 = vld [vmem:[%s518 + $0xd8] sm:$0xff]
      %v547 = vld [vmem:[%s518 + $0xe0] sm:$0xff]
      %v548 = vld [vmem:[%s518 + $0xe8] sm:$0xf]
      %v549 = vld [vmem:[%s518 + $0xf0] sm:$0xff]
      %v550 = vld [vmem:[%s518 + $0xf8] sm:$0xff]
      %v551 = vld [vmem:[%s518 + $0x100] sm:$0xf]
      %v552 = vld [vmem:[%s518 + $0x108] sm:$0xff]
      %v553 = vld [vmem:[%s518 + $0x110] sm:$0xff]
      %v554 = vld [vmem:[%s518 + $0x118] sm:$0xf]
      %v555 = vld [vmem:[%s518 + $0x120] sm:$0xff]
      %v556 = vld [vmem:[%s518 + $0x128] sm:$0xff]
      %v557 = vld [vmem:[%s518 + $0x130] sm:$0xf]
      %v558 = vld [vmem:[%s518 + $0x138] sm:$0xff]
      %v559 = vld [vmem:[%s518 + $0x140] sm:$0xff]
      %v560 = vld [vmem:[%s518 + $0x148] sm:$0xf]
      %v561 = vld [vmem:[%s518 + $0x150] sm:$0xff]
      %v562 = vld [vmem:[%s518 + $0x158] sm:$0xff]
      %v563 = vld [vmem:[%s518 + $0x160] sm:$0xf]
      %v564 = vld [vmem:[%s518 + $0x168] sm:$0xff]
      %v565 = vld [vmem:[%s518 + $0x170] sm:$0xff]
      %v566 = vld [vmem:[%s518 + $0x178] sm:$0xf]
      %v567 = vld [vmem:[%s518 + $0x180] sm:$0xff]
      %v568 = vld [vmem:[%s518 + $0x188] sm:$0xff]
      %v569 = vld [vmem:[%s518 + $0x190] sm:$0xf]
      %v570 = vld [vmem:[%s518 + $0x198] sm:$0xff]
      %v571 = vld [vmem:[%s518 + $0x1a0] sm:$0xff]
      %v572 = vld [vmem:[%s518 + $0x1a8] sm:$0xf]
      %v573 = vld [vmem:[%s518 + $0x1b0] sm:$0xff]
      %v574 = vld [vmem:[%s518 + $0x1b8] sm:$0xff]
      %v575 = vld [vmem:[%s518 + $0x1c0] sm:$0xf]
      %v576 = vld [vmem:[%s518 + $0x1c8] sm:$0xff]
      %v577 = vld [vmem:[%s518 + $0x1d0] sm:$0xff]
      %v578 = vld [vmem:[%s518 + $0x1d8] sm:$0xf]
      %vm633 = vcmask 1046528
      %v634 = vrot.slane %v519, 1
      %v635 = vrot.slane %v520, 1
      %v636 = vsel %vm633, %v634, %v635
      %v637 = vrot.slane %v521, 1
      %v638 = vsel %vm633, %v635, %v637
      %v639 = vrot.slane %v522, 1
      %v640 = vrot.slane %v523, 1
      %v641 = vsel %vm633, %v639, %v640
      %v642 = vrot.slane %v524, 1
      %v643 = vsel %vm633, %v640, %v642
      %v644 = vrot.slane %v525, 1
      %v645 = vrot.slane %v526, 1
      %v646 = vsel %vm633, %v644, %v645
      %v647 = vrot.slane %v527, 1
      %v648 = vsel %vm633, %v645, %v647
      %v649 = vrot.slane %v528, 1
      %v650 = vrot.slane %v529, 1
      %v651 = vsel %vm633, %v649, %v650
      %v652 = vrot.slane %v530, 1
      %v653 = vsel %vm633, %v650, %v652
      %v654 = vrot.slane %v531, 1
      %v655 = vrot.slane %v532, 1
      %v656 = vsel %vm633, %v654, %v655
      %v657 = vrot.slane %v533, 1
      %v658 = vsel %vm633, %v655, %v657
      %v659 = vrot.slane %v534, 1
      %v660 = vrot.slane %v535, 1
      %v661 = vsel %vm633, %v659, %v660
      %v662 = vrot.slane %v536, 1
      %v663 = vsel %vm633, %v660, %v662
      %v664 = vrot.slane %v537, 1
      %v665 = vrot.slane %v538, 1
      %v666 = vsel %vm633, %v664, %v665
      %v667 = vrot.slane %v539, 1
      %v668 = vsel %vm633, %v665, %v667
      %v669 = vrot.slane %v540, 1
      %v670 = vrot.slane %v541, 1
      %v671 = vsel %vm633, %v669, %v670
      %v672 = vrot.slane %v542, 1
      %v673 = vsel %vm633, %v670, %v672
      %v674 = vrot.slane %v543, 1
      %v675 = vrot.slane %v544, 1
      %v676 = vsel %vm633, %v674, %v675
      %v677 = vrot.slane %v545, 1
      %v678 = vsel %vm633, %v675, %v677
      %v679 = vrot.slane %v546, 1
      %v680 = vrot.slane %v547, 1
      %v681 = vsel %vm633, %v679, %v680
      %v682 = vrot.slane %v548, 1
      %v683 = vsel %vm633, %v680, %v682
      %v684 = vrot.slane %v549, 1
      %v685 = vrot.slane %v550, 1
      %v686 = vsel %vm633, %v684, %v685
      %v687 = vrot.slane %v551, 1
      %v688 = vsel %vm633, %v685, %v687
      %v689 = vrot.slane %v552, 1
      %v690 = vrot.slane %v553, 1
      %v691 = vsel %vm633, %v689, %v690
      %v692 = vrot.slane %v554, 1
      %v693 = vsel %vm633, %v690, %v692
      %v694 = vrot.slane %v555, 1
      %v695 = vrot.slane %v556, 1
      %v696 = vsel %vm633, %v694, %v695
      %v697 = vrot.slane %v557, 1
      %v698 = vsel %vm633, %v695, %v697
      %v699 = vrot.slane %v558, 1
      %v700 = vrot.slane %v559, 1
      %v701 = vsel %vm633, %v699, %v700
      %v702 = vrot.slane %v560, 1
      %v703 = vsel %vm633, %v700, %v702
      %v704 = vrot.slane %v561, 1
      %v705 = vrot.slane %v562, 1
      %v706 = vsel %vm633, %v704, %v705
      %v707 = vrot.slane %v563, 1
      %v708 = vsel %vm633, %v705, %v707
      %v709 = vrot.slane %v564, 1
      %v710 = vrot.slane %v565, 1
      %v711 = vsel %vm633, %v709, %v710
      %v712 = vrot.slane %v566, 1
      %v713 = vsel %vm633, %v710, %v712
      %v714 = vrot.slane %v567, 1
      %v715 = vrot.slane %v568, 1
      %v716 = vsel %vm633, %v714, %v715
      %v717 = vrot.slane %v569, 1
      %v718 = vsel %vm633, %v715, %v717
      %v719 = vrot.slane %v570, 1
      %v720 = vrot.slane %v571, 1
      %v721 = vsel %vm633, %v719, %v720
      %v722 = vrot.slane %v572, 1
      %v723 = vsel %vm633, %v720, %v722
      %724 = vrot.lane.b32.xlu0 %v636, 4
      %v725 = vpop.permute.xlu0 %724
      %726 = vrot.lane.b32.xlu0 %v638, 4
      %v727 = vpop.permute.xlu0 %726
      %728 = vrot.lane.b32.xlu0 %v637, 4
      %v729 = vpop.permute.xlu0 %728
      %730 = vrot.lane.b32.xlu0 %v641, 4
      %v731 = vpop.permute.xlu0 %730
      %732 = vrot.lane.b32.xlu0 %v643, 4
      %v733 = vpop.permute.xlu0 %732
      %734 = vrot.lane.b32.xlu0 %v642, 4
      %v735 = vpop.permute.xlu0 %734
      %736 = vrot.lane.b32.xlu0 %v646, 4
      %v737 = vpop.permute.xlu0 %736
      %738 = vrot.lane.b32.xlu0 %v648, 4
      %v739 = vpop.permute.xlu0 %738
      %740 = vrot.lane.b32.xlu0 %v647, 4
      %v741 = vpop.permute.xlu0 %740
      %742 = vrot.lane.b32.xlu0 %v651, 4
      %v743 = vpop.permute.xlu0 %742
      %744 = vrot.lane.b32.xlu0 %v653, 4
      %v745 = vpop.permute.xlu0 %744
      %746 = vrot.lane.b32.xlu0 %v652, 4
      %v747 = vpop.permute.xlu0 %746
      %748 = vrot.lane.b32.xlu0 %v656, 4
      %v749 = vpop.permute.xlu0 %748
      %750 = vrot.lane.b32.xlu0 %v658, 4
      %v751 = vpop.permute.xlu0 %750
      %752 = vrot.lane.b32.xlu0 %v657, 4
      %v753 = vpop.permute.xlu0 %752
      %754 = vrot.lane.b32.xlu0 %v661, 4
      %v755 = vpop.permute.xlu0 %754
      %756 = vrot.lane.b32.xlu0 %v663, 4
      %v757 = vpop.permute.xlu0 %756
      %758 = vrot.lane.b32.xlu0 %v662, 4
      %v759 = vpop.permute.xlu0 %758
      %760 = vrot.lane.b32.xlu0 %v666, 4
      %v761 = vpop.permute.xlu0 %760
      %762 = vrot.lane.b32.xlu0 %v668, 4
      %v763 = vpop.permute.xlu0 %762
      %764 = vrot.lane.b32.xlu0 %v667, 4
      %v765 = vpop.permute.xlu0 %764
      %766 = vrot.lane.b32.xlu0 %v671, 4
      %v767 = vpop.permute.xlu0 %766
      %768 = vrot.lane.b32.xlu0 %v673, 4
      %v769 = vpop.permute.xlu0 %768
      %770 = vrot.lane.b32.xlu0 %v672, 4
      %v771 = vpop.permute.xlu0 %770
      %772 = vrot.lane.b32.xlu0 %v676, 4
      %v773 = vpop.permute.xlu0 %772
      %774 = vrot.lane.b32.xlu0 %v678, 4
      %v775 = vpop.permute.xlu0 %774
      %776 = vrot.lane.b32.xlu0 %v677, 4
      %v777 = vpop.permute.xlu0 %776
      %778 = vrot.lane.b32.xlu0 %v681, 4
      %v779 = vpop.permute.xlu0 %778
      %780 = vrot.lane.b32.xlu0 %v683, 4
      %v781 = vpop.permute.xlu0 %780
      %782 = vrot.lane.b32.xlu0 %v682, 4
      %v783 = vpop.permute.xlu0 %782
      %784 = vrot.lane.b32.xlu0 %v686, 4
      %v785 = vpop.permute.xlu0 %784
      %786 = vrot.lane.b32.xlu0 %v688, 4
      %v787 = vpop.permute.xlu0 %786
      %788 = vrot.lane.b32.xlu0 %v687, 4
      %v789 = vpop.permute.xlu0 %788
      %790 = vrot.lane.b32.xlu0 %v691, 4
      %v791 = vpop.permute.xlu0 %790
      %792 = vrot.lane.b32.xlu0 %v693, 4
      %v793 = vpop.permute.xlu0 %792
      %794 = vrot.lane.b32.xlu0 %v692, 4
      %v795 = vpop.permute.xlu0 %794
      %796 = vrot.lane.b32.xlu0 %v696, 4
      %v797 = vpop.permute.xlu0 %796
      %798 = vrot.lane.b32.xlu0 %v698, 4
      %v799 = vpop.permute.xlu0 %798
      %800 = vrot.lane.b32.xlu0 %v697, 4
      %v801 = vpop.permute.xlu0 %800
      %802 = vrot.lane.b32.xlu0 %v701, 4
      %v803 = vpop.permute.xlu0 %802
      %804 = vrot.lane.b32.xlu0 %v703, 4
      %v805 = vpop.permute.xlu0 %804
      %806 = vrot.lane.b32.xlu0 %v702, 4
      %v807 = vpop.permute.xlu0 %806
      %808 = vrot.lane.b32.xlu0 %v706, 4
      %v809 = vpop.permute.xlu0 %808
      %810 = vrot.lane.b32.xlu0 %v708, 4
      %v811 = vpop.permute.xlu0 %810
      %812 = vrot.lane.b32.xlu0 %v707, 4
      %v813 = vpop.permute.xlu0 %812
      %814 = vrot.lane.b32.xlu0 %v711, 4
      %v815 = vpop.permute.xlu0 %814
      %816 = vrot.lane.b32.xlu0 %v713, 4
      %v817 = vpop.permute.xlu0 %816
      %818 = vrot.lane.b32.xlu0 %v712, 4
      %v819 = vpop.permute.xlu0 %818
      %820 = vrot.lane.b32.xlu0 %v716, 4
      %v821 = vpop.permute.xlu0 %820
      %822 = vrot.lane.b32.xlu0 %v718, 4
      %v823 = vpop.permute.xlu0 %822
      %824 = vrot.lane.b32.xlu0 %v717, 4
      %v825 = vpop.permute.xlu0 %824
      %826 = vrot.lane.b32.xlu0 %v721, 4
      %v827 = vpop.permute.xlu0 %826
      %828 = vrot.lane.b32.xlu0 %v723, 4
      %v829 = vpop.permute.xlu0 %828
      %830 = vrot.lane.b32.xlu0 %v722, 4
      %v831 = vpop.permute.xlu0 %830
      %vm886 = vcmask 1045504
      %v887 = vrot.slane %v519, 2
      %v888 = vrot.slane %v520, 2
      %v889 = vsel %vm886, %v887, %v888
      %v890 = vrot.slane %v521, 2
      %v891 = vsel %vm886, %v888, %v890
      %v892 = vrot.slane %v522, 2
      %v893 = vrot.slane %v523, 2
      %v894 = vsel %vm886, %v892, %v893
      %v895 = vrot.slane %v524, 2
      %v896 = vsel %vm886, %v893, %v895
      %v897 = vrot.slane %v525, 2
      %v898 = vrot.slane %v526, 2
      %v899 = vsel %vm886, %v897, %v898
      %v900 = vrot.slane %v527, 2
      %v901 = vsel %vm886, %v898, %v900
      %v902 = vrot.slane %v528, 2
      %v903 = vrot.slane %v529, 2
      %v904 = vsel %vm886, %v902, %v903
      %v905 = vrot.slane %v530, 2
      %v906 = vsel %vm886, %v903, %v905
      %v907 = vrot.slane %v531, 2
      %v908 = vrot.slane %v532, 2
      %v909 = vsel %vm886, %v907, %v908
      %v910 = vrot.slane %v533, 2
      %v911 = vsel %vm886, %v908, %v910
      %v912 = vrot.slane %v534, 2
      %v913 = vrot.slane %v535, 2
      %v914 = vsel %vm886, %v912, %v913
      %v915 = vrot.slane %v536, 2
      %v916 = vsel %vm886, %v913, %v915
      %v917 = vrot.slane %v537, 2
      %v918 = vrot.slane %v538, 2
      %v919 = vsel %vm886, %v917, %v918
      %v920 = vrot.slane %v539, 2
      %v921 = vsel %vm886, %v918, %v920
      %v922 = vrot.slane %v540, 2
      %v923 = vrot.slane %v541, 2
      %v924 = vsel %vm886, %v922, %v923
      %v925 = vrot.slane %v542, 2
      %v926 = vsel %vm886, %v923, %v925
      %v927 = vrot.slane %v543, 2
      %v928 = vrot.slane %v544, 2
      %v929 = vsel %vm886, %v927, %v928
      %v930 = vrot.slane %v545, 2
      %v931 = vsel %vm886, %v928, %v930
      %v932 = vrot.slane %v546, 2
      %v933 = vrot.slane %v547, 2
      %v934 = vsel %vm886, %v932, %v933
      %v935 = vrot.slane %v548, 2
      %v936 = vsel %vm886, %v933, %v935
      %v937 = vrot.slane %v549, 2
      %v938 = vrot.slane %v550, 2
      %v939 = vsel %vm886, %v937, %v938
      %v940 = vrot.slane %v551, 2
      %v941 = vsel %vm886, %v938, %v940
      %v942 = vrot.slane %v552, 2
      %v943 = vrot.slane %v553, 2
      %v944 = vsel %vm886, %v942, %v943
      %v945 = vrot.slane %v554, 2
      %v946 = vsel %vm886, %v943, %v945
      %v947 = vrot.slane %v555, 2
      %v948 = vrot.slane %v556, 2
      %v949 = vsel %vm886, %v947, %v948
      %v950 = vrot.slane %v557, 2
      %v951 = vsel %vm886, %v948, %v950
      %v952 = vrot.slane %v558, 2
      %v953 = vrot.slane %v559, 2
      %v954 = vsel %vm886, %v952, %v953
      %v955 = vrot.slane %v560, 2
      %v956 = vsel %vm886, %v953, %v955
      %v957 = vrot.slane %v561, 2
      %v958 = vrot.slane %v562, 2
      %v959 = vsel %vm886, %v957, %v958
      %v960 = vrot.slane %v563, 2
      %v961 = vsel %vm886, %v958, %v960
      %v962 = vrot.slane %v564, 2
      %v963 = vrot.slane %v565, 2
      %v964 = vsel %vm886, %v962, %v963
      %v965 = vrot.slane %v566, 2
      %v966 = vsel %vm886, %v963, %v965
      %v967 = vrot.slane %v567, 2
      %v968 = vrot.slane %v568, 2
      %v969 = vsel %vm886, %v967, %v968
      %v970 = vrot.slane %v569, 2
      %v971 = vsel %vm886, %v968, %v970
      %v972 = vrot.slane %v570, 2
      %v973 = vrot.slane %v571, 2
      %v974 = vsel %vm886, %v972, %v973
      %v975 = vrot.slane %v572, 2
      %v976 = vsel %vm886, %v973, %v975
      %977 = vrot.lane.b32.xlu0 %v889, 8
      %v978 = vpop.permute.xlu0 %977
      %979 = vrot.lane.b32.xlu0 %v891, 8
      %v980 = vpop.permute.xlu0 %979
      %981 = vrot.lane.b32.xlu0 %v890, 8
      %v982 = vpop.permute.xlu0 %981
      %983 = vrot.lane.b32.xlu0 %v894, 8
      %v984 = vpop.permute.xlu0 %983
      %985 = vrot.lane.b32.xlu0 %v896, 8
      %v986 = vpop.permute.xlu0 %985
      %987 = vrot.lane.b32.xlu0 %v895, 8
      %v988 = vpop.permute.xlu0 %987
      %989 = vrot.lane.b32.xlu0 %v899, 8
      %v990 = vpop.permute.xlu0 %989
      %991 = vrot.lane.b32.xlu0 %v901, 8
      %v992 = vpop.permute.xlu0 %991
      %993 = vrot.lane.b32.xlu0 %v900, 8
      %v994 = vpop.permute.xlu0 %993
      %995 = vrot.lane.b32.xlu0 %v904, 8
      %v996 = vpop.permute.xlu0 %995
      %997 = vrot.lane.b32.xlu0 %v906, 8
      %v998 = vpop.permute.xlu0 %997
      %999 = vrot.lane.b32.xlu0 %v905, 8
      %v1000 = vpop.permute.xlu0 %999
      %1001 = vrot.lane.b32.xlu0 %v909, 8
      %v1002 = vpop.permute.xlu0 %1001
      %1003 = vrot.lane.b32.xlu0 %v911, 8
      %v1004 = vpop.permute.xlu0 %1003
      %1005 = vrot.lane.b32.xlu0 %v910, 8
      %v1006 = vpop.permute.xlu0 %1005
      %1007 = vrot.lane.b32.xlu0 %v914, 8
      %v1008 = vpop.permute.xlu0 %1007
      %1009 = vrot.lane.b32.xlu0 %v916, 8
      %v1010 = vpop.permute.xlu0 %1009
      %1011 = vrot.lane.b32.xlu0 %v915, 8
      %v1012 = vpop.permute.xlu0 %1011
      %1013 = vrot.lane.b32.xlu0 %v919, 8
      %v1014 = vpop.permute.xlu0 %1013
      %1015 = vrot.lane.b32.xlu0 %v921, 8
      %v1016 = vpop.permute.xlu0 %1015
      %1017 = vrot.lane.b32.xlu0 %v920, 8
      %v1018 = vpop.permute.xlu0 %1017
      %1019 = vrot.lane.b32.xlu0 %v924, 8
      %v1020 = vpop.permute.xlu0 %1019
      %1021 = vrot.lane.b32.xlu0 %v926, 8
      %v1022 = vpop.permute.xlu0 %1021
      %1023 = vrot.lane.b32.xlu0 %v925, 8
      %v1024 = vpop.permute.xlu0 %1023
      %1025 = vrot.lane.b32.xlu0 %v929, 8
      %v1026 = vpop.permute.xlu0 %1025
      %1027 = vrot.lane.b32.xlu0 %v931, 8
      %v1028 = vpop.permute.xlu0 %1027
      %1029 = vrot.lane.b32.xlu0 %v930, 8
      %v1030 = vpop.permute.xlu0 %1029
      %1031 = vrot.lane.b32.xlu0 %v934, 8
      %v1032 = vpop.permute.xlu0 %1031
      %1033 = vrot.lane.b32.xlu0 %v936, 8
      %v1034 = vpop.permute.xlu0 %1033
      %1035 = vrot.lane.b32.xlu0 %v935, 8
      %v1036 = vpop.permute.xlu0 %1035
      %1037 = vrot.lane.b32.xlu0 %v939, 8
      %v1038 = vpop.permute.xlu0 %1037
      %1039 = vrot.lane.b32.xlu0 %v941, 8
      %v1040 = vpop.permute.xlu0 %1039
      %1041 = vrot.lane.b32.xlu0 %v940, 8
      %v1042 = vpop.permute.xlu0 %1041
      %1043 = vrot.lane.b32.xlu0 %v944, 8
      %v1044 = vpop.permute.xlu0 %1043
      %1045 = vrot.lane.b32.xlu0 %v946, 8
      %v1046 = vpop.permute.xlu0 %1045
      %1047 = vrot.lane.b32.xlu0 %v945, 8
      %v1048 = vpop.permute.xlu0 %1047
      %1049 = vrot.lane.b32.xlu0 %v949, 8
      %v1050 = vpop.permute.xlu0 %1049
      %1051 = vrot.lane.b32.xlu0 %v951, 8
      %v1052 = vpop.permute.xlu0 %1051
      %1053 = vrot.lane.b32.xlu0 %v950, 8
      %v1054 = vpop.permute.xlu0 %1053
      %1055 = vrot.lane.b32.xlu0 %v954, 8
      %v1056 = vpop.permute.xlu0 %1055
      %1057 = vrot.lane.b32.xlu0 %v956, 8
      %v1058 = vpop.permute.xlu0 %1057
      %1059 = vrot.lane.b32.xlu0 %v955, 8
      %v1060 = vpop.permute.xlu0 %1059
      %1061 = vrot.lane.b32.xlu0 %v959, 8
      %v1062 = vpop.permute.xlu0 %1061
      %1063 = vrot.lane.b32.xlu0 %v961, 8
      %v1064 = vpop.permute.xlu0 %1063
      %1065 = vrot.lane.b32.xlu0 %v960, 8
      %v1066 = vpop.permute.xlu0 %1065
      %1067 = vrot.lane.b32.xlu0 %v964, 8
      %v1068 = vpop.permute.xlu0 %1067
      %1069 = vrot.lane.b32.xlu0 %v966, 8
      %v1070 = vpop.permute.xlu0 %1069
      %1071 = vrot.lane.b32.xlu0 %v965, 8
      %v1072 = vpop.permute.xlu0 %1071
      %1073 = vrot.lane.b32.xlu0 %v969, 8
      %v1074 = vpop.permute.xlu0 %1073
      %1075 = vrot.lane.b32.xlu0 %v971, 8
      %v1076 = vpop.permute.xlu0 %1075
      %1077 = vrot.lane.b32.xlu0 %v970, 8
      %v1078 = vpop.permute.xlu0 %1077
      %1079 = vrot.lane.b32.xlu0 %v974, 8
      %v1080 = vpop.permute.xlu0 %1079
      %1081 = vrot.lane.b32.xlu0 %v976, 8
      %v1082 = vpop.permute.xlu0 %1081
      %1083 = vrot.lane.b32.xlu0 %v975, 8
      %v1084 = vpop.permute.xlu0 %1083
      %vm1139 = vcmask 31744
      %v1140 = vsel %vm1139, %v519, %v725
      %v1141 = vsel %vm1139, %v520, %v727
      %v1142 = vsel %vm1139, %v521, %v729
      %v1143 = vsel %vm1139, %v522, %v731
      %v1144 = vsel %vm1139, %v523, %v733
      %v1145 = vsel %vm1139, %v524, %v735
      %v1146 = vsel %vm1139, %v525, %v737
      %v1147 = vsel %vm1139, %v526, %v739
      %v1148 = vsel %vm1139, %v527, %v741
      %v1149 = vsel %vm1139, %v528, %v743
      %v1150 = vsel %vm1139, %v529, %v745
      %v1151 = vsel %vm1139, %v530, %v747
      %v1152 = vsel %vm1139, %v531, %v749
      %v1153 = vsel %vm1139, %v532, %v751
      %v1154 = vsel %vm1139, %v533, %v753
      %v1155 = vsel %vm1139, %v534, %v755
      %v1156 = vsel %vm1139, %v535, %v757
      %v1157 = vsel %vm1139, %v536, %v759
      %v1158 = vsel %vm1139, %v537, %v761
      %v1159 = vsel %vm1139, %v538, %v763
      %v1160 = vsel %vm1139, %v539, %v765
      %v1161 = vsel %vm1139, %v540, %v767
      %v1162 = vsel %vm1139, %v541, %v769
      %v1163 = vsel %vm1139, %v542, %v771
      %v1164 = vsel %vm1139, %v543, %v773
      %v1165 = vsel %vm1139, %v544, %v775
      %v1166 = vsel %vm1139, %v545, %v777
      %v1167 = vsel %vm1139, %v546, %v779
      %v1168 = vsel %vm1139, %v547, %v781
      %v1169 = vsel %vm1139, %v548, %v783
      %v1170 = vsel %vm1139, %v549, %v785
      %v1171 = vsel %vm1139, %v550, %v787
      %v1172 = vsel %vm1139, %v551, %v789
      %v1173 = vsel %vm1139, %v552, %v791
      %v1174 = vsel %vm1139, %v553, %v793
      %v1175 = vsel %vm1139, %v554, %v795
      %v1176 = vsel %vm1139, %v555, %v797
      %v1177 = vsel %vm1139, %v556, %v799
      %v1178 = vsel %vm1139, %v557, %v801
      %v1179 = vsel %vm1139, %v558, %v803
      %v1180 = vsel %vm1139, %v559, %v805
      %v1181 = vsel %vm1139, %v560, %v807
      %v1182 = vsel %vm1139, %v561, %v809
      %v1183 = vsel %vm1139, %v562, %v811
      %v1184 = vsel %vm1139, %v563, %v813
      %v1185 = vsel %vm1139, %v564, %v815
      %v1186 = vsel %vm1139, %v565, %v817
      %v1187 = vsel %vm1139, %v566, %v819
      %v1188 = vsel %vm1139, %v567, %v821
      %v1189 = vsel %vm1139, %v568, %v823
      %v1190 = vsel %vm1139, %v569, %v825
      %v1191 = vsel %vm1139, %v570, %v827
      %v1192 = vsel %vm1139, %v571, %v829
      %v1193 = vsel %vm1139, %v572, %v831
      %vm1194 = vcmask 64512
      %v1195 = vsel %vm1194, %v1140, %v978
      %v1196 = vsel %vm1194, %v1141, %v980
      %v1197 = vsel %vm1194, %v1142, %v982
      %v1198 = vsel %vm1194, %v1143, %v984
      %v1199 = vsel %vm1194, %v1144, %v986
      %v1200 = vsel %vm1194, %v1145, %v988
      %v1201 = vsel %vm1194, %v1146, %v990
      %v1202 = vsel %vm1194, %v1147, %v992
      %v1203 = vsel %vm1194, %v1148, %v994
      %v1204 = vsel %vm1194, %v1149, %v996
      %v1205 = vsel %vm1194, %v1150, %v998
      %v1206 = vsel %vm1194, %v1151, %v1000
      %v1207 = vsel %vm1194, %v1152, %v1002
      %v1208 = vsel %vm1194, %v1153, %v1004
      %v1209 = vsel %vm1194, %v1154, %v1006
      %v1210 = vsel %vm1194, %v1155, %v1008
      %v1211 = vsel %vm1194, %v1156, %v1010
      %v1212 = vsel %vm1194, %v1157, %v1012
      %v1213 = vsel %vm1194, %v1158, %v1014
      %v1214 = vsel %vm1194, %v1159, %v1016
      %v1215 = vsel %vm1194, %v1160, %v1018
      %v1216 = vsel %vm1194, %v1161, %v1020
      %v1217 = vsel %vm1194, %v1162, %v1022
      %v1218 = vsel %vm1194, %v1163, %v1024
      %v1219 = vsel %vm1194, %v1164, %v1026
      %v1220 = vsel %vm1194, %v1165, %v1028
      %v1221 = vsel %vm1194, %v1166, %v1030
      %v1222 = vsel %vm1194, %v1167, %v1032
      %v1223 = vsel %vm1194, %v1168, %v1034
      %v1224 = vsel %vm1194, %v1169, %v1036
      %v1225 = vsel %vm1194, %v1170, %v1038
      %v1226 = vsel %vm1194, %v1171, %v1040
      %v1227 = vsel %vm1194, %v1172, %v1042
      %v1228 = vsel %vm1194, %v1173, %v1044
      %v1229 = vsel %vm1194, %v1174, %v1046
      %v1230 = vsel %vm1194, %v1175, %v1048
      %v1231 = vsel %vm1194, %v1176, %v1050
      %v1232 = vsel %vm1194, %v1177, %v1052
      %v1233 = vsel %vm1194, %v1178, %v1054
      %v1234 = vsel %vm1194, %v1179, %v1056
      %v1235 = vsel %vm1194, %v1180, %v1058
      %v1236 = vsel %vm1194, %v1181, %v1060
      %v1237 = vsel %vm1194, %v1182, %v1062
      %v1238 = vsel %vm1194, %v1183, %v1064
      %v1239 = vsel %vm1194, %v1184, %v1066
      %v1240 = vsel %vm1194, %v1185, %v1068
      %v1241 = vsel %vm1194, %v1186, %v1070
      %v1242 = vsel %vm1194, %v1187, %v1072
      %v1243 = vsel %vm1194, %v1188, %v1074
      %v1244 = vsel %vm1194, %v1189, %v1076
      %v1245 = vsel %vm1194, %v1190, %v1078
      %v1246 = vsel %vm1194, %v1191, %v1080
      %v1247 = vsel %vm1194, %v1192, %v1082
      %v1248 = vsel %vm1194, %v1193, %v1084
      %v1249 = vld [vmem:[%s1] sm:$0xff]
      %v1250 = vld [vmem:[%s1 + $0x8] sm:$0xf]
      %v1254 = vrot.slane %v573, 1
      %v1255 = vrot.slane %v574, 1
      %v1256 = vsel %vm633, %v1254, %v1255
      %v1257 = vrot.slane %v575, 1
      %v1258 = vsel %vm633, %v1255, %v1257
      %1259 = vrot.lane.b32.xlu0 %v1256, 4
      %v1260 = vpop.permute.xlu0 %1259
      %1261 = vrot.lane.b32.xlu0 %v1258, 4
      %v1262 = vpop.permute.xlu0 %1261
      %1263 = vrot.lane.b32.xlu0 %v1257, 4
      %v1264 = vpop.permute.xlu0 %1263
      %v1268 = vrot.slane %v573, 2
      %v1269 = vrot.slane %v574, 2
      %v1270 = vsel %vm886, %v1268, %v1269
      %v1271 = vrot.slane %v575, 2
      %v1272 = vsel %vm886, %v1269, %v1271
      %1273 = vrot.lane.b32.xlu0 %v1270, 8
      %v1274 = vpop.permute.xlu0 %1273
      %1275 = vrot.lane.b32.xlu0 %v1272, 8
      %v1276 = vpop.permute.xlu0 %1275
      %1277 = vrot.lane.b32.xlu0 %v1271, 8
      %v1278 = vpop.permute.xlu0 %1277
      %v1282 = vsel %vm1139, %v573, %v1260
      %v1283 = vsel %vm1139, %v574, %v1262
      %v1284 = vsel %vm1139, %v575, %v1264
      %v1285 = vsel %vm1194, %v1282, %v1274
      %v1286 = vsel %vm1194, %v1283, %v1276
      %v1287 = vsel %vm1194, %v1284, %v1278
      %s1288 = scalar_lea.vmem %s1, 16
      %v1289 = vld [vmem:[%s1288] sm:$0xff]
      %v1290 = vld [vmem:[%s1288 + $0x8] sm:$0xf]
      %v1345 = vcombine.high %v1198, %v1198
      %v1347 = vunpack.c.l.s4 1983009808
      %v1348 = vunpack.c.0.s8 %v1347
      %v1349 = vlaneseq
      %v1350 = vshrl.u32 %v1349, 7
      %v1351 = vsub.s32 %v1348, %v1350
      %v1352 = vrot.slane %v1198, %v1351
      %v1354 = vunpack.c.l.s4 1983009808
      %v1355 = vunpack.c.0.s8 %v1354
      %v1356 = vlaneseq
      %v1357 = vshrl.u32 %v1356, 7
      %v1358 = vsub.s32 %v1355, %v1357
      %v1359 = vrot.slane %v1345, %v1358
      %v1360 = vcombine.high %v1352, %v1352
      %v1361 = vcombine.high %v1359, %v1359
      %v1362 = vcombine.high %v1199, %v1199
      %v1364 = vunpack.c.l.s4 1983009808
      %v1365 = vunpack.c.0.s8 %v1364
      %v1366 = vlaneseq
      %v1367 = vshrl.u32 %v1366, 7
      %v1368 = vsub.s32 %v1365, %v1367
      %v1369 = vrot.slane %v1199, %v1368
      %v1371 = vunpack.c.l.s4 1983009808
      %v1372 = vunpack.c.0.s8 %v1371
      %v1373 = vlaneseq
      %v1374 = vshrl.u32 %v1373, 7
      %v1375 = vsub.s32 %v1372, %v1374
      %v1376 = vrot.slane %v1362, %v1375
      %v1377 = vcombine.high %v1369, %v1369
      %v1378 = vcombine.high %v1376, %v1376
      %v1380 = vunpack.c.l.s4 1983009808
      %v1381 = vunpack.c.0.s8 %v1380
      %v1382 = vlaneseq
      %v1383 = vshrl.u32 %v1382, 7
      %v1384 = vsub.s32 %v1381, %v1383
      %v1385 = vrot.slane %v1200, %v1384
      %v1386 = vcombine.high %v1201, %v1201
      %v1388 = vunpack.c.l.s4 1983009808
      %v1389 = vunpack.c.0.s8 %v1388
      %v1390 = vlaneseq
      %v1391 = vshrl.u32 %v1390, 7
      %v1392 = vsub.s32 %v1389, %v1391
      %v1393 = vrot.slane %v1201, %v1392
      %v1395 = vunpack.c.l.s4 1983009808
      %v1396 = vunpack.c.0.s8 %v1395
      %v1397 = vlaneseq
      %v1398 = vshrl.u32 %v1397, 7
      %v1399 = vsub.s32 %v1396, %v1398
      %v1400 = vrot.slane %v1386, %v1399
      %v1401 = vcombine.high %v1393, %v1393
      %v1402 = vcombine.high %v1400, %v1400
      %v1403 = vcombine.high %v1202, %v1202
      %v1405 = vunpack.c.l.s4 1983009808
      %v1406 = vunpack.c.0.s8 %v1405
      %v1407 = vlaneseq
      %v1408 = vshrl.u32 %v1407, 7
      %v1409 = vsub.s32 %v1406, %v1408
      %v1410 = vrot.slane %v1202, %v1409
      %v1412 = vunpack.c.l.s4 1983009808
      %v1413 = vunpack.c.0.s8 %v1412
      %v1414 = vlaneseq
      %v1415 = vshrl.u32 %v1414, 7
      %v1416 = vsub.s32 %v1413, %v1415
      %v1417 = vrot.slane %v1403, %v1416
      %v1418 = vcombine.high %v1410, %v1410
      %v1419 = vcombine.high %v1417, %v1417
      %v1421 = vunpack.c.l.s4 1983009808
      %v1422 = vunpack.c.0.s8 %v1421
      %v1423 = vlaneseq
      %v1424 = vshrl.u32 %v1423, 7
      %v1425 = vsub.s32 %v1422, %v1424
      %v1426 = vrot.slane %v1203, %v1425
      %v1427 = vcombine.high %v1204, %v1204
      %v1429 = vunpack.c.l.s4 1983009808
      %v1430 = vunpack.c.0.s8 %v1429
      %v1431 = vlaneseq
      %v1432 = vshrl.u32 %v1431, 7
      %v1433 = vsub.s32 %v1430, %v1432
      %v1434 = vrot.slane %v1204, %v1433
      %v1436 = vunpack.c.l.s4 1983009808
      %v1437 = vunpack.c.0.s8 %v1436
      %v1438 = vlaneseq
      %v1439 = vshrl.u32 %v1438, 7
      %v1440 = vsub.s32 %v1437, %v1439
      %v1441 = vrot.slane %v1427, %v1440
      %v1442 = vcombine.high %v1434, %v1434
      %v1443 = vcombine.high %v1441, %v1441
      %v1444 = vcombine.high %v1205, %v1205
      %v1446 = vunpack.c.l.s4 1983009808
      %v1447 = vunpack.c.0.s8 %v1446
      %v1448 = vlaneseq
      %v1449 = vshrl.u32 %v1448, 7
      %v1450 = vsub.s32 %v1447, %v1449
      %v1451 = vrot.slane %v1205, %v1450
      %v1453 = vunpack.c.l.s4 1983009808
      %v1454 = vunpack.c.0.s8 %v1453
      %v1455 = vlaneseq
      %v1456 = vshrl.u32 %v1455, 7
      %v1457 = vsub.s32 %v1454, %v1456
      %v1458 = vrot.slane %v1444, %v1457
      %v1459 = vcombine.high %v1451, %v1451
      %v1460 = vcombine.high %v1458, %v1458
      %v1462 = vunpack.c.l.s4 1983009808
      %v1463 = vunpack.c.0.s8 %v1462
      %v1464 = vlaneseq
      %v1465 = vshrl.u32 %v1464, 7
      %v1466 = vsub.s32 %v1463, %v1465
      %v1467 = vrot.slane %v1206, %v1466
      %v1468 = vcombine.high %v1207, %v1207
      %v1470 = vunpack.c.l.s4 1983009808
      %v1471 = vunpack.c.0.s8 %v1470
      %v1472 = vlaneseq
      %v1473 = vshrl.u32 %v1472, 7
      %v1474 = vsub.s32 %v1471, %v1473
      %v1475 = vrot.slane %v1207, %v1474
      %v1477 = vunpack.c.l.s4 1983009808
      %v1478 = vunpack.c.0.s8 %v1477
      %v1479 = vlaneseq
      %v1480 = vshrl.u32 %v1479, 7
      %v1481 = vsub.s32 %v1478, %v1480
      %v1482 = vrot.slane %v1468, %v1481
      %v1483 = vcombine.high %v1475, %v1475
      %v1484 = vcombine.high %v1482, %v1482
      %v1485 = vcombine.high %v1208, %v1208
      %v1487 = vunpack.c.l.s4 1983009808
      %v1488 = vunpack.c.0.s8 %v1487
      %v1489 = vlaneseq
      %v1490 = vshrl.u32 %v1489, 7
      %v1491 = vsub.s32 %v1488, %v1490
      %v1492 = vrot.slane %v1208, %v1491
      %v1494 = vunpack.c.l.s4 1983009808
      %v1495 = vunpack.c.0.s8 %v1494
      %v1496 = vlaneseq
      %v1497 = vshrl.u32 %v1496, 7
      %v1498 = vsub.s32 %v1495, %v1497
      %v1499 = vrot.slane %v1485, %v1498
      %v1500 = vcombine.high %v1492, %v1492
      %v1501 = vcombine.high %v1499, %v1499
      %v1503 = vunpack.c.l.s4 1983009808
      %v1504 = vunpack.c.0.s8 %v1503
      %v1505 = vlaneseq
      %v1506 = vshrl.u32 %v1505, 7
      %v1507 = vsub.s32 %v1504, %v1506
      %v1508 = vrot.slane %v1209, %v1507
      %v1509 = vcombine.high %v1210, %v1210
      %v1511 = vunpack.c.l.s4 1983009808
      %v1512 = vunpack.c.0.s8 %v1511
      %v1513 = vlaneseq
      %v1514 = vshrl.u32 %v1513, 7
      %v1515 = vsub.s32 %v1512, %v1514
      %v1516 = vrot.slane %v1210, %v1515
      %v1518 = vunpack.c.l.s4 1983009808
      %v1519 = vunpack.c.0.s8 %v1518
      %v1520 = vlaneseq
      %v1521 = vshrl.u32 %v1520, 7
      %v1522 = vsub.s32 %v1519, %v1521
      %v1523 = vrot.slane %v1509, %v1522
      %v1524 = vcombine.high %v1516, %v1516
      %v1525 = vcombine.high %v1523, %v1523
      %v1526 = vcombine.high %v1211, %v1211
      %v1528 = vunpack.c.l.s4 1983009808
      %v1529 = vunpack.c.0.s8 %v1528
      %v1530 = vlaneseq
      %v1531 = vshrl.u32 %v1530, 7
      %v1532 = vsub.s32 %v1529, %v1531
      %v1533 = vrot.slane %v1211, %v1532
      %v1535 = vunpack.c.l.s4 1983009808
      %v1536 = vunpack.c.0.s8 %v1535
      %v1537 = vlaneseq
      %v1538 = vshrl.u32 %v1537, 7
      %v1539 = vsub.s32 %v1536, %v1538
      %v1540 = vrot.slane %v1526, %v1539
      %v1541 = vcombine.high %v1533, %v1533
      %v1542 = vcombine.high %v1540, %v1540
      %v1544 = vunpack.c.l.s4 1983009808
      %v1545 = vunpack.c.0.s8 %v1544
      %v1546 = vlaneseq
      %v1547 = vshrl.u32 %v1546, 7
      %v1548 = vsub.s32 %v1545, %v1547
      %v1549 = vrot.slane %v1212, %v1548
      %v1550 = vcombine.high %v1213, %v1213
      %v1552 = vunpack.c.l.s4 1983009808
      %v1553 = vunpack.c.0.s8 %v1552
      %v1554 = vlaneseq
      %v1555 = vshrl.u32 %v1554, 7
      %v1556 = vsub.s32 %v1553, %v1555
      %v1557 = vrot.slane %v1213, %v1556
      %v1559 = vunpack.c.l.s4 1983009808
      %v1560 = vunpack.c.0.s8 %v1559
      %v1561 = vlaneseq
      %v1562 = vshrl.u32 %v1561, 7
      %v1563 = vsub.s32 %v1560, %v1562
      %v1564 = vrot.slane %v1550, %v1563
      %v1565 = vcombine.high %v1557, %v1557
      %v1566 = vcombine.high %v1564, %v1564
      %v1567 = vcombine.high %v1214, %v1214
      %v1569 = vunpack.c.l.s4 1983009808
      %v1570 = vunpack.c.0.s8 %v1569
      %v1571 = vlaneseq
      %v1572 = vshrl.u32 %v1571, 7
      %v1573 = vsub.s32 %v1570, %v1572
      %v1574 = vrot.slane %v1214, %v1573
      %v1576 = vunpack.c.l.s4 1983009808
      %v1577 = vunpack.c.0.s8 %v1576
      %v1578 = vlaneseq
      %v1579 = vshrl.u32 %v1578, 7
      %v1580 = vsub.s32 %v1577, %v1579
      %v1581 = vrot.slane %v1567, %v1580
      %v1582 = vcombine.high %v1574, %v1574
      %v1583 = vcombine.high %v1581, %v1581
      %v1585 = vunpack.c.l.s4 1983009808
      %v1586 = vunpack.c.0.s8 %v1585
      %v1587 = vlaneseq
      %v1588 = vshrl.u32 %v1587, 7
      %v1589 = vsub.s32 %v1586, %v1588
      %v1590 = vrot.slane %v1215, %v1589
      %v1591 = vcombine.high %v1216, %v1216
      %v1593 = vunpack.c.l.s4 1983009808
      %v1594 = vunpack.c.0.s8 %v1593
      %v1595 = vlaneseq
      %v1596 = vshrl.u32 %v1595, 7
      %v1597 = vsub.s32 %v1594, %v1596
      %v1598 = vrot.slane %v1216, %v1597
      %v1600 = vunpack.c.l.s4 1983009808
      %v1601 = vunpack.c.0.s8 %v1600
      %v1602 = vlaneseq
      %v1603 = vshrl.u32 %v1602, 7
      %v1604 = vsub.s32 %v1601, %v1603
      %v1605 = vrot.slane %v1591, %v1604
      %v1606 = vcombine.high %v1598, %v1598
      %v1607 = vcombine.high %v1605, %v1605
      %v1608 = vcombine.high %v1217, %v1217
      %v1610 = vunpack.c.l.s4 1983009808
      %v1611 = vunpack.c.0.s8 %v1610
      %v1612 = vlaneseq
      %v1613 = vshrl.u32 %v1612, 7
      %v1614 = vsub.s32 %v1611, %v1613
      %v1615 = vrot.slane %v1217, %v1614
      %v1617 = vunpack.c.l.s4 1983009808
      %v1618 = vunpack.c.0.s8 %v1617
      %v1619 = vlaneseq
      %v1620 = vshrl.u32 %v1619, 7
      %v1621 = vsub.s32 %v1618, %v1620
      %v1622 = vrot.slane %v1608, %v1621
      %v1623 = vcombine.high %v1615, %v1615
      %v1624 = vcombine.high %v1622, %v1622
      %v1626 = vunpack.c.l.s4 1983009808
      %v1627 = vunpack.c.0.s8 %v1626
      %v1628 = vlaneseq
      %v1629 = vshrl.u32 %v1628, 7
      %v1630 = vsub.s32 %v1627, %v1629
      %v1631 = vrot.slane %v1218, %v1630
      %v1632 = vcombine.high %v1219, %v1219
      %v1634 = vunpack.c.l.s4 1983009808
      %v1635 = vunpack.c.0.s8 %v1634
      %v1636 = vlaneseq
      %v1637 = vshrl.u32 %v1636, 7
      %v1638 = vsub.s32 %v1635, %v1637
      %v1639 = vrot.slane %v1219, %v1638
      %v1641 = vunpack.c.l.s4 1983009808
      %v1642 = vunpack.c.0.s8 %v1641
      %v1643 = vlaneseq
      %v1644 = vshrl.u32 %v1643, 7
      %v1645 = vsub.s32 %v1642, %v1644
      %v1646 = vrot.slane %v1632, %v1645
      %v1647 = vcombine.high %v1639, %v1639
      %v1648 = vcombine.high %v1646, %v1646
      %v1649 = vcombine.high %v1220, %v1220
      %v1651 = vunpack.c.l.s4 1983009808
      %v1652 = vunpack.c.0.s8 %v1651
      %v1653 = vlaneseq
      %v1654 = vshrl.u32 %v1653, 7
      %v1655 = vsub.s32 %v1652, %v1654
      %v1656 = vrot.slane %v1220, %v1655
      %v1658 = vunpack.c.l.s4 1983009808
      %v1659 = vunpack.c.0.s8 %v1658
      %v1660 = vlaneseq
      %v1661 = vshrl.u32 %v1660, 7
      %v1662 = vsub.s32 %v1659, %v1661
      %v1663 = vrot.slane %v1649, %v1662
      %v1664 = vcombine.high %v1656, %v1656
      %v1665 = vcombine.high %v1663, %v1663
      %v1667 = vunpack.c.l.s4 1983009808
      %v1668 = vunpack.c.0.s8 %v1667
      %v1669 = vlaneseq
      %v1670 = vshrl.u32 %v1669, 7
      %v1671 = vsub.s32 %v1668, %v1670
      %v1672 = vrot.slane %v1221, %v1671
      %v1673 = vcombine.high %v1222, %v1222
      %v1675 = vunpack.c.l.s4 1983009808
      %v1676 = vunpack.c.0.s8 %v1675
      %v1677 = vlaneseq
      %v1678 = vshrl.u32 %v1677, 7
      %v1679 = vsub.s32 %v1676, %v1678
      %v1680 = vrot.slane %v1222, %v1679
      %v1682 = vunpack.c.l.s4 1983009808
      %v1683 = vunpack.c.0.s8 %v1682
      %v1684 = vlaneseq
      %v1685 = vshrl.u32 %v1684, 7
      %v1686 = vsub.s32 %v1683, %v1685
      %v1687 = vrot.slane %v1673, %v1686
      %v1688 = vcombine.high %v1680, %v1680
      %v1689 = vcombine.high %v1687, %v1687
      %v1690 = vcombine.high %v1223, %v1223
      %v1692 = vunpack.c.l.s4 1983009808
      %v1693 = vunpack.c.0.s8 %v1692
      %v1694 = vlaneseq
      %v1695 = vshrl.u32 %v1694, 7
      %v1696 = vsub.s32 %v1693, %v1695
      %v1697 = vrot.slane %v1223, %v1696
      %v1699 = vunpack.c.l.s4 1983009808
      %v1700 = vunpack.c.0.s8 %v1699
      %v1701 = vlaneseq
      %v1702 = vshrl.u32 %v1701, 7
      %v1703 = vsub.s32 %v1700, %v1702
      %v1704 = vrot.slane %v1690, %v1703
      %v1705 = vcombine.high %v1697, %v1697
      %v1706 = vcombine.high %v1704, %v1704
      %v1708 = vunpack.c.l.s4 1983009808
      %v1709 = vunpack.c.0.s8 %v1708
      %v1710 = vlaneseq
      %v1711 = vshrl.u32 %v1710, 7
      %v1712 = vsub.s32 %v1709, %v1711
      %v1713 = vrot.slane %v1224, %v1712
      %v1714 = vcombine.high %v1225, %v1225
      %v1716 = vunpack.c.l.s4 1983009808
      %v1717 = vunpack.c.0.s8 %v1716
      %v1718 = vlaneseq
      %v1719 = vshrl.u32 %v1718, 7
      %v1720 = vsub.s32 %v1717, %v1719
      %v1721 = vrot.slane %v1225, %v1720
      %v1723 = vunpack.c.l.s4 1983009808
      %v1724 = vunpack.c.0.s8 %v1723
      %v1725 = vlaneseq
      %v1726 = vshrl.u32 %v1725, 7
      %v1727 = vsub.s32 %v1724, %v1726
      %v1728 = vrot.slane %v1714, %v1727
      %v1729 = vcombine.high %v1721, %v1721
      %v1730 = vcombine.high %v1728, %v1728
      %v1731 = vcombine.high %v1226, %v1226
      %v1733 = vunpack.c.l.s4 1983009808
      %v1734 = vunpack.c.0.s8 %v1733
      %v1735 = vlaneseq
      %v1736 = vshrl.u32 %v1735, 7
      %v1737 = vsub.s32 %v1734, %v1736
      %v1738 = vrot.slane %v1226, %v1737
      %v1740 = vunpack.c.l.s4 1983009808
      %v1741 = vunpack.c.0.s8 %v1740
      %v1742 = vlaneseq
      %v1743 = vshrl.u32 %v1742, 7
      %v1744 = vsub.s32 %v1741, %v1743
      %v1745 = vrot.slane %v1731, %v1744
      %v1746 = vcombine.high %v1738, %v1738
      %v1747 = vcombine.high %v1745, %v1745
      %v1749 = vunpack.c.l.s4 1983009808
      %v1750 = vunpack.c.0.s8 %v1749
      %v1751 = vlaneseq
      %v1752 = vshrl.u32 %v1751, 7
      %v1753 = vsub.s32 %v1750, %v1752
      %v1754 = vrot.slane %v1227, %v1753
      %v1755 = vcombine.high %v1228, %v1228
      %v1757 = vunpack.c.l.s4 1983009808
      %v1758 = vunpack.c.0.s8 %v1757
      %v1759 = vlaneseq
      %v1760 = vshrl.u32 %v1759, 7
      %v1761 = vsub.s32 %v1758, %v1760
      %v1762 = vrot.slane %v1228, %v1761
      %v1764 = vunpack.c.l.s4 1983009808
      %v1765 = vunpack.c.0.s8 %v1764
      %v1766 = vlaneseq
      %v1767 = vshrl.u32 %v1766, 7
      %v1768 = vsub.s32 %v1765, %v1767
      %v1769 = vrot.slane %v1755, %v1768
      %v1770 = vcombine.high %v1762, %v1762
      %v1771 = vcombine.high %v1769, %v1769
      %v1772 = vcombine.high %v1229, %v1229
      %v1774 = vunpack.c.l.s4 1983009808
      %v1775 = vunpack.c.0.s8 %v1774
      %v1776 = vlaneseq
      %v1777 = vshrl.u32 %v1776, 7
      %v1778 = vsub.s32 %v1775, %v1777
      %v1779 = vrot.slane %v1229, %v1778
      %v1781 = vunpack.c.l.s4 1983009808
      %v1782 = vunpack.c.0.s8 %v1781
      %v1783 = vlaneseq
      %v1784 = vshrl.u32 %v1783, 7
      %v1785 = vsub.s32 %v1782, %v1784
      %v1786 = vrot.slane %v1772, %v1785
      %v1787 = vcombine.high %v1779, %v1779
      %v1788 = vcombine.high %v1786, %v1786
      %v1790 = vunpack.c.l.s4 1983009808
      %v1791 = vunpack.c.0.s8 %v1790
      %v1792 = vlaneseq
      %v1793 = vshrl.u32 %v1792, 7
      %v1794 = vsub.s32 %v1791, %v1793
      %v1795 = vrot.slane %v1230, %v1794
      %v1796 = vcombine.high %v1231, %v1231
      %v1798 = vunpack.c.l.s4 1983009808
      %v1799 = vunpack.c.0.s8 %v1798
      %v1800 = vlaneseq
      %v1801 = vshrl.u32 %v1800, 7
      %v1802 = vsub.s32 %v1799, %v1801
      %v1803 = vrot.slane %v1231, %v1802
      %v1805 = vunpack.c.l.s4 1983009808
      %v1806 = vunpack.c.0.s8 %v1805
      %v1807 = vlaneseq
      %v1808 = vshrl.u32 %v1807, 7
      %v1809 = vsub.s32 %v1806, %v1808
      %v1810 = vrot.slane %v1796, %v1809
      %v1811 = vcombine.high %v1803, %v1803
      %v1812 = vcombine.high %v1810, %v1810
      %v1813 = vcombine.high %v1232, %v1232
      %v1815 = vunpack.c.l.s4 1983009808
      %v1816 = vunpack.c.0.s8 %v1815
      %v1817 = vlaneseq
      %v1818 = vshrl.u32 %v1817, 7
      %v1819 = vsub.s32 %v1816, %v1818
      %v1820 = vrot.slane %v1232, %v1819
      %v1822 = vunpack.c.l.s4 1983009808
      %v1823 = vunpack.c.0.s8 %v1822
      %v1824 = vlaneseq
      %v1825 = vshrl.u32 %v1824, 7
      %v1826 = vsub.s32 %v1823, %v1825
      %v1827 = vrot.slane %v1813, %v1826
      %v1828 = vcombine.high %v1820, %v1820
      %v1829 = vcombine.high %v1827, %v1827
      %v1831 = vunpack.c.l.s4 1983009808
      %v1832 = vunpack.c.0.s8 %v1831
      %v1833 = vlaneseq
      %v1834 = vshrl.u32 %v1833, 7
      %v1835 = vsub.s32 %v1832, %v1834
      %v1836 = vrot.slane %v1233, %v1835
      %v1837 = vcombine.high %v1234, %v1234
      %v1839 = vunpack.c.l.s4 1983009808
      %v1840 = vunpack.c.0.s8 %v1839
      %v1841 = vlaneseq
      %v1842 = vshrl.u32 %v1841, 7
      %v1843 = vsub.s32 %v1840, %v1842
      %v1844 = vrot.slane %v1234, %v1843
      %v1846 = vunpack.c.l.s4 1983009808
      %v1847 = vunpack.c.0.s8 %v1846
      %v1848 = vlaneseq
      %v1849 = vshrl.u32 %v1848, 7
      %v1850 = vsub.s32 %v1847, %v1849
      %v1851 = vrot.slane %v1837, %v1850
      %v1852 = vcombine.high %v1844, %v1844
      %v1853 = vcombine.high %v1851, %v1851
      %v1854 = vcombine.high %v1235, %v1235
      %v1856 = vunpack.c.l.s4 1983009808
      %v1857 = vunpack.c.0.s8 %v1856
      %v1858 = vlaneseq
      %v1859 = vshrl.u32 %v1858, 7
      %v1860 = vsub.s32 %v1857, %v1859
      %v1861 = vrot.slane %v1235, %v1860
      %v1863 = vunpack.c.l.s4 1983009808
      %v1864 = vunpack.c.0.s8 %v1863
      %v1865 = vlaneseq
      %v1866 = vshrl.u32 %v1865, 7
      %v1867 = vsub.s32 %v1864, %v1866
      %v1868 = vrot.slane %v1854, %v1867
      %v1869 = vcombine.high %v1861, %v1861
      %v1870 = vcombine.high %v1868, %v1868
      %v1872 = vunpack.c.l.s4 1983009808
      %v1873 = vunpack.c.0.s8 %v1872
      %v1874 = vlaneseq
      %v1875 = vshrl.u32 %v1874, 7
      %v1876 = vsub.s32 %v1873, %v1875
      %v1877 = vrot.slane %v1236, %v1876
      %v1878 = vcombine.high %v1237, %v1237
      %v1880 = vunpack.c.l.s4 1983009808
      %v1881 = vunpack.c.0.s8 %v1880
      %v1882 = vlaneseq
      %v1883 = vshrl.u32 %v1882, 7
      %v1884 = vsub.s32 %v1881, %v1883
      %v1885 = vrot.slane %v1237, %v1884
      %v1887 = vunpack.c.l.s4 1983009808
      %v1888 = vunpack.c.0.s8 %v1887
      %v1889 = vlaneseq
      %v1890 = vshrl.u32 %v1889, 7
      %v1891 = vsub.s32 %v1888, %v1890
      %v1892 = vrot.slane %v1878, %v1891
      %v1893 = vcombine.high %v1885, %v1885
      %v1894 = vcombine.high %v1892, %v1892
      %v1895 = vcombine.high %v1238, %v1238
      %v1897 = vunpack.c.l.s4 1983009808
      %v1898 = vunpack.c.0.s8 %v1897
      %v1899 = vlaneseq
      %v1900 = vshrl.u32 %v1899, 7
      %v1901 = vsub.s32 %v1898, %v1900
      %v1902 = vrot.slane %v1238, %v1901
      %v1904 = vunpack.c.l.s4 1983009808
      %v1905 = vunpack.c.0.s8 %v1904
      %v1906 = vlaneseq
      %v1907 = vshrl.u32 %v1906, 7
      %v1908 = vsub.s32 %v1905, %v1907
      %v1909 = vrot.slane %v1895, %v1908
      %v1910 = vcombine.high %v1902, %v1902
      %v1911 = vcombine.high %v1909, %v1909
      %v1913 = vunpack.c.l.s4 1983009808
      %v1914 = vunpack.c.0.s8 %v1913
      %v1915 = vlaneseq
      %v1916 = vshrl.u32 %v1915, 7
      %v1917 = vsub.s32 %v1914, %v1916
      %v1918 = vrot.slane %v1239, %v1917
      %v1919 = vcombine.high %v1240, %v1240
      %v1921 = vunpack.c.l.s4 1983009808
      %v1922 = vunpack.c.0.s8 %v1921
      %v1923 = vlaneseq
      %v1924 = vshrl.u32 %v1923, 7
      %v1925 = vsub.s32 %v1922, %v1924
      %v1926 = vrot.slane %v1240, %v1925
      %v1928 = vunpack.c.l.s4 1983009808
      %v1929 = vunpack.c.0.s8 %v1928
      %v1930 = vlaneseq
      %v1931 = vshrl.u32 %v1930, 7
      %v1932 = vsub.s32 %v1929, %v1931
      %v1933 = vrot.slane %v1919, %v1932
      %v1934 = vcombine.high %v1926, %v1926
      %v1935 = vcombine.high %v1933, %v1933
      %v1936 = vcombine.high %v1241, %v1241
      %v1938 = vunpack.c.l.s4 1983009808
      %v1939 = vunpack.c.0.s8 %v1938
      %v1940 = vlaneseq
      %v1941 = vshrl.u32 %v1940, 7
      %v1942 = vsub.s32 %v1939, %v1941
      %v1943 = vrot.slane %v1241, %v1942
      %v1945 = vunpack.c.l.s4 1983009808
      %v1946 = vunpack.c.0.s8 %v1945
      %v1947 = vlaneseq
      %v1948 = vshrl.u32 %v1947, 7
      %v1949 = vsub.s32 %v1946, %v1948
      %v1950 = vrot.slane %v1936, %v1949
      %v1951 = vcombine.high %v1943, %v1943
      %v1952 = vcombine.high %v1950, %v1950
      %v1954 = vunpack.c.l.s4 1983009808
      %v1955 = vunpack.c.0.s8 %v1954
      %v1956 = vlaneseq
      %v1957 = vshrl.u32 %v1956, 7
      %v1958 = vsub.s32 %v1955, %v1957
      %v1959 = vrot.slane %v1242, %v1958
      %v1960 = vcombine.high %v1243, %v1243
      %v1962 = vunpack.c.l.s4 1983009808
      %v1963 = vunpack.c.0.s8 %v1962
      %v1964 = vlaneseq
      %v1965 = vshrl.u32 %v1964, 7
      %v1966 = vsub.s32 %v1963, %v1965
      %v1967 = vrot.slane %v1243, %v1966
      %v1969 = vunpack.c.l.s4 1983009808
      %v1970 = vunpack.c.0.s8 %v1969
      %v1971 = vlaneseq
      %v1972 = vshrl.u32 %v1971, 7
      %v1973 = vsub.s32 %v1970, %v1972
      %v1974 = vrot.slane %v1960, %v1973
      %v1975 = vcombine.high %v1967, %v1967
      %v1976 = vcombine.high %v1974, %v1974
      %v1977 = vcombine.high %v1244, %v1244
      %v1979 = vunpack.c.l.s4 1983009808
      %v1980 = vunpack.c.0.s8 %v1979
      %v1981 = vlaneseq
      %v1982 = vshrl.u32 %v1981, 7
      %v1983 = vsub.s32 %v1980, %v1982
      %v1984 = vrot.slane %v1244, %v1983
      %v1986 = vunpack.c.l.s4 1983009808
      %v1987 = vunpack.c.0.s8 %v1986
      %v1988 = vlaneseq
      %v1989 = vshrl.u32 %v1988, 7
      %v1990 = vsub.s32 %v1987, %v1989
      %v1991 = vrot.slane %v1977, %v1990
      %v1992 = vcombine.high %v1984, %v1984
      %v1993 = vcombine.high %v1991, %v1991
      %v1995 = vunpack.c.l.s4 1983009808
      %v1996 = vunpack.c.0.s8 %v1995
      %v1997 = vlaneseq
      %v1998 = vshrl.u32 %v1997, 7
      %v1999 = vsub.s32 %v1996, %v1998
      %v2000 = vrot.slane %v1245, %v1999
      %v2001 = vcombine.high %v1246, %v1246
      %v2003 = vunpack.c.l.s4 1983009808
      %v2004 = vunpack.c.0.s8 %v2003
      %v2005 = vlaneseq
      %v2006 = vshrl.u32 %v2005, 7
      %v2007 = vsub.s32 %v2004, %v2006
      %v2008 = vrot.slane %v1246, %v2007
      %v2010 = vunpack.c.l.s4 1983009808
      %v2011 = vunpack.c.0.s8 %v2010
      %v2012 = vlaneseq
      %v2013 = vshrl.u32 %v2012, 7
      %v2014 = vsub.s32 %v2011, %v2013
      %v2015 = vrot.slane %v2001, %v2014
      %v2016 = vcombine.high %v2008, %v2008
      %v2017 = vcombine.high %v2015, %v2015
      %v2018 = vcombine.high %v1247, %v1247
      %v2020 = vunpack.c.l.s4 1983009808
      %v2021 = vunpack.c.0.s8 %v2020
      %v2022 = vlaneseq
      %v2023 = vshrl.u32 %v2022, 7
      %v2024 = vsub.s32 %v2021, %v2023
      %v2025 = vrot.slane %v1247, %v2024
      %v2027 = vunpack.c.l.s4 1983009808
      %v2028 = vunpack.c.0.s8 %v2027
      %v2029 = vlaneseq
      %v2030 = vshrl.u32 %v2029, 7
      %v2031 = vsub.s32 %v2028, %v2030
      %v2032 = vrot.slane %v2018, %v2031
      %v2033 = vcombine.high %v2025, %v2025
      %v2034 = vcombine.high %v2032, %v2032
      %v2036 = vunpack.c.l.s4 1983009808
      %v2037 = vunpack.c.0.s8 %v2036
      %v2038 = vlaneseq
      %v2039 = vshrl.u32 %v2038, 7
      %v2040 = vsub.s32 %v2037, %v2039
      %v2041 = vrot.slane %v1248, %v2040
      %v2042 = vcombine.high %v1285, %v1285
      %v2044 = vunpack.c.l.s4 1983009808
      %v2045 = vunpack.c.0.s8 %v2044
      %v2046 = vlaneseq
      %v2047 = vshrl.u32 %v2046, 7
      %v2048 = vsub.s32 %v2045, %v2047
      %v2049 = vrot.slane %v1285, %v2048
      %v2051 = vunpack.c.l.s4 1983009808
      %v2052 = vunpack.c.0.s8 %v2051
      %v2053 = vlaneseq
      %v2054 = vshrl.u32 %v2053, 7
      %v2055 = vsub.s32 %v2052, %v2054
      %v2056 = vrot.slane %v2042, %v2055
      %v2057 = vcombine.high %v2049, %v2049
      %v2058 = vcombine.high %v2056, %v2056
      %v2059 = vcombine.high %v1286, %v1286
      %v2061 = vunpack.c.l.s4 1983009808
      %v2062 = vunpack.c.0.s8 %v2061
      %v2063 = vlaneseq
      %v2064 = vshrl.u32 %v2063, 7
      %v2065 = vsub.s32 %v2062, %v2064
      %v2066 = vrot.slane %v1286, %v2065
      %v2068 = vunpack.c.l.s4 1983009808
      %v2069 = vunpack.c.0.s8 %v2068
      %v2070 = vlaneseq
      %v2071 = vshrl.u32 %v2070, 7
      %v2072 = vsub.s32 %v2069, %v2071
      %v2073 = vrot.slane %v2059, %v2072
      %v2074 = vcombine.high %v2066, %v2066
      %v2075 = vcombine.high %v2073, %v2073
      %v2077 = vunpack.c.l.s4 1983009808
      %v2078 = vunpack.c.0.s8 %v2077
      %v2079 = vlaneseq
      %v2080 = vshrl.u32 %v2079, 7
      %v2081 = vsub.s32 %v2078, %v2080
      %v2082 = vrot.slane %v1287, %v2081
      %v2083 = vcombine.low %v1352, %v1360
      %v2084 = vcombine.low %v1359, %v1361
      %v2086 = vunpack.c.l.s4 1983009808
      %v2087 = vunpack.c.0.s8 %v2086
      %v2088 = vlaneseq
      %v2089 = vshrl.u32 %v2088, 7
      %v2090 = vsub.s32 %v2087, %v2089
      %v2091 = vrot.slane %v2083, %v2090
      %v2093 = vunpack.c.l.s4 1983009808
      %v2094 = vunpack.c.0.s8 %v2093
      %v2095 = vlaneseq
      %v2096 = vshrl.u32 %v2095, 7
      %v2097 = vsub.s32 %v2094, %v2096
      %v2098 = vrot.slane %v2084, %v2097
      %v2099 = vcombine.low %v2091, %v2098
      %v2100 = vcombine.low %v1369, %v1377
      %v2101 = vcombine.low %v1376, %v1378
      %v2103 = vunpack.c.l.s4 1983009808
      %v2104 = vunpack.c.0.s8 %v2103
      %v2105 = vlaneseq
      %v2106 = vshrl.u32 %v2105, 7
      %v2107 = vsub.s32 %v2104, %v2106
      %v2108 = vrot.slane %v2100, %v2107
      %v2110 = vunpack.c.l.s4 1983009808
      %v2111 = vunpack.c.0.s8 %v2110
      %v2112 = vlaneseq
      %v2113 = vshrl.u32 %v2112, 7
      %v2114 = vsub.s32 %v2111, %v2113
      %v2115 = vrot.slane %v2101, %v2114
      %v2116 = vcombine.low %v2108, %v2115
      %v2117 = vcombine.low %v1385, %v1393
      %v2118 = vcombine.low %v1401, %v1400
      %v2120 = vunpack.c.l.s4 1983009808
      %v2121 = vunpack.c.0.s8 %v2120
      %v2122 = vlaneseq
      %v2123 = vshrl.u32 %v2122, 7
      %v2124 = vsub.s32 %v2121, %v2123
      %v2125 = vrot.slane %v2117, %v2124
      %v2127 = vunpack.c.l.s4 1983009808
      %v2128 = vunpack.c.0.s8 %v2127
      %v2129 = vlaneseq
      %v2130 = vshrl.u32 %v2129, 7
      %v2131 = vsub.s32 %v2128, %v2130
      %v2132 = vrot.slane %v2118, %v2131
      %v2133 = vcombine.low %v2125, %v2132
      %v2134 = vcombine.low %v1402, %v1410
      %v2135 = vcombine.low %v1418, %v1417
      %v2137 = vunpack.c.l.s4 1983009808
      %v2138 = vunpack.c.0.s8 %v2137
      %v2139 = vlaneseq
      %v2140 = vshrl.u32 %v2139, 7
      %v2141 = vsub.s32 %v2138, %v2140
      %v2142 = vrot.slane %v2134, %v2141
      %v2144 = vunpack.c.l.s4 1983009808
      %v2145 = vunpack.c.0.s8 %v2144
      %v2146 = vlaneseq
      %v2147 = vshrl.u32 %v2146, 7
      %v2148 = vsub.s32 %v2145, %v2147
      %v2149 = vrot.slane %v2135, %v2148
      %v2150 = vcombine.low %v2142, %v2149
      %v2151 = vcombine.low %v1419, %v1426
      %v2152 = vcombine.low %v1434, %v1442
      %v2154 = vunpack.c.l.s4 1983009808
      %v2155 = vunpack.c.0.s8 %v2154
      %v2156 = vlaneseq
      %v2157 = vshrl.u32 %v2156, 7
      %v2158 = vsub.s32 %v2155, %v2157
      %v2159 = vrot.slane %v2151, %v2158
      %v2161 = vunpack.c.l.s4 1983009808
      %v2162 = vunpack.c.0.s8 %v2161
      %v2163 = vlaneseq
      %v2164 = vshrl.u32 %v2163, 7
      %v2165 = vsub.s32 %v2162, %v2164
      %v2166 = vrot.slane %v2152, %v2165
      %v2167 = vcombine.low %v2159, %v2166
      %v2168 = vcombine.low %v1441, %v1443
      %v2169 = vcombine.low %v1451, %v1459
      %v2171 = vunpack.c.l.s4 1983009808
      %v2172 = vunpack.c.0.s8 %v2171
      %v2173 = vlaneseq
      %v2174 = vshrl.u32 %v2173, 7
      %v2175 = vsub.s32 %v2172, %v2174
      %v2176 = vrot.slane %v2168, %v2175
      %v2178 = vunpack.c.l.s4 1983009808
      %v2179 = vunpack.c.0.s8 %v2178
      %v2180 = vlaneseq
      %v2181 = vshrl.u32 %v2180, 7
      %v2182 = vsub.s32 %v2179, %v2181
      %v2183 = vrot.slane %v2169, %v2182
      %v2184 = vcombine.low %v2176, %v2183
      %v2185 = vcombine.low %v1458, %v1460
      %v2186 = vcombine.low %v1467, %v1475
      %v2188 = vunpack.c.l.s4 1983009808
      %v2189 = vunpack.c.0.s8 %v2188
      %v2190 = vlaneseq
      %v2191 = vshrl.u32 %v2190, 7
      %v2192 = vsub.s32 %v2189, %v2191
      %v2193 = vrot.slane %v2185, %v2192
      %v2195 = vunpack.c.l.s4 1983009808
      %v2196 = vunpack.c.0.s8 %v2195
      %v2197 = vlaneseq
      %v2198 = vshrl.u32 %v2197, 7
      %v2199 = vsub.s32 %v2196, %v2198
      %v2200 = vrot.slane %v2186, %v2199
      %v2201 = vcombine.low %v2193, %v2200
      %v2202 = vcombine.low %v1483, %v1482
      %v2203 = vcombine.low %v1484, %v1492
      %v2205 = vunpack.c.l.s4 1983009808
      %v2206 = vunpack.c.0.s8 %v2205
      %v2207 = vlaneseq
      %v2208 = vshrl.u32 %v2207, 7
      %v2209 = vsub.s32 %v2206, %v2208
      %v2210 = vrot.slane %v2202, %v2209
      %v2212 = vunpack.c.l.s4 1983009808
      %v2213 = vunpack.c.0.s8 %v2212
      %v2214 = vlaneseq
      %v2215 = vshrl.u32 %v2214, 7
      %v2216 = vsub.s32 %v2213, %v2215
      %v2217 = vrot.slane %v2203, %v2216
      %v2218 = vcombine.low %v2210, %v2217
      %v2219 = vcombine.low %v1500, %v1499
      %v2220 = vcombine.low %v1501, %v1508
      %v2222 = vunpack.c.l.s4 1983009808
      %v2223 = vunpack.c.0.s8 %v2222
      %v2224 = vlaneseq
      %v2225 = vshrl.u32 %v2224, 7
      %v2226 = vsub.s32 %v2223, %v2225
      %v2227 = vrot.slane %v2219, %v2226
      %v2229 = vunpack.c.l.s4 1983009808
      %v2230 = vunpack.c.0.s8 %v2229
      %v2231 = vlaneseq
      %v2232 = vshrl.u32 %v2231, 7
      %v2233 = vsub.s32 %v2230, %v2232
      %v2234 = vrot.slane %v2220, %v2233
      %v2235 = vcombine.low %v2227, %v2234
      %v2236 = vcombine.low %v1516, %v1524
      %v2237 = vcombine.low %v1523, %v1525
      %v2239 = vunpack.c.l.s4 1983009808
      %v2240 = vunpack.c.0.s8 %v2239
      %v2241 = vlaneseq
      %v2242 = vshrl.u32 %v2241, 7
      %v2243 = vsub.s32 %v2240, %v2242
      %v2244 = vrot.slane %v2236, %v2243
      %v2246 = vunpack.c.l.s4 1983009808
      %v2247 = vunpack.c.0.s8 %v2246
      %v2248 = vlaneseq
      %v2249 = vshrl.u32 %v2248, 7
      %v2250 = vsub.s32 %v2247, %v2249
      %v2251 = vrot.slane %v2237, %v2250
      %v2252 = vcombine.low %v2244, %v2251
      %v2253 = vcombine.low %v1533, %v1541
      %v2254 = vcombine.low %v1540, %v1542
      %v2256 = vunpack.c.l.s4 1983009808
      %v2257 = vunpack.c.0.s8 %v2256
      %v2258 = vlaneseq
      %v2259 = vshrl.u32 %v2258, 7
      %v2260 = vsub.s32 %v2257, %v2259
      %v2261 = vrot.slane %v2253, %v2260
      %v2263 = vunpack.c.l.s4 1983009808
      %v2264 = vunpack.c.0.s8 %v2263
      %v2265 = vlaneseq
      %v2266 = vshrl.u32 %v2265, 7
      %v2267 = vsub.s32 %v2264, %v2266
      %v2268 = vrot.slane %v2254, %v2267
      %v2269 = vcombine.low %v2261, %v2268
      %v2270 = vcombine.low %v1549, %v1557
      %v2271 = vcombine.low %v1565, %v1564
      %v2273 = vunpack.c.l.s4 1983009808
      %v2274 = vunpack.c.0.s8 %v2273
      %v2275 = vlaneseq
      %v2276 = vshrl.u32 %v2275, 7
      %v2277 = vsub.s32 %v2274, %v2276
      %v2278 = vrot.slane %v2270, %v2277
      %v2280 = vunpack.c.l.s4 1983009808
      %v2281 = vunpack.c.0.s8 %v2280
      %v2282 = vlaneseq
      %v2283 = vshrl.u32 %v2282, 7
      %v2284 = vsub.s32 %v2281, %v2283
      %v2285 = vrot.slane %v2271, %v2284
      %v2286 = vcombine.low %v2278, %v2285
      %v2287 = vcombine.low %v1566, %v1574
      %v2288 = vcombine.low %v1582, %v1581
      %v2290 = vunpack.c.l.s4 1983009808
      %v2291 = vunpack.c.0.s8 %v2290
      %v2292 = vlaneseq
      %v2293 = vshrl.u32 %v2292, 7
      %v2294 = vsub.s32 %v2291, %v2293
      %v2295 = vrot.slane %v2287, %v2294
      %v2297 = vunpack.c.l.s4 1983009808
      %v2298 = vunpack.c.0.s8 %v2297
      %v2299 = vlaneseq
      %v2300 = vshrl.u32 %v2299, 7
      %v2301 = vsub.s32 %v2298, %v2300
      %v2302 = vrot.slane %v2288, %v2301
      %v2303 = vcombine.low %v2295, %v2302
      %v2304 = vcombine.low %v1583, %v1590
      %v2305 = vcombine.low %v1598, %v1606
      %v2307 = vunpack.c.l.s4 1983009808
      %v2308 = vunpack.c.0.s8 %v2307
      %v2309 = vlaneseq
      %v2310 = vshrl.u32 %v2309, 7
      %v2311 = vsub.s32 %v2308, %v2310
      %v2312 = vrot.slane %v2304, %v2311
      %v2314 = vunpack.c.l.s4 1983009808
      %v2315 = vunpack.c.0.s8 %v2314
      %v2316 = vlaneseq
      %v2317 = vshrl.u32 %v2316, 7
      %v2318 = vsub.s32 %v2315, %v2317
      %v2319 = vrot.slane %v2305, %v2318
      %v2320 = vcombine.low %v2312, %v2319
      %v2321 = vcombine.low %v1605, %v1607
      %v2322 = vcombine.low %v1615, %v1623
      %v2324 = vunpack.c.l.s4 1983009808
      %v2325 = vunpack.c.0.s8 %v2324
      %v2326 = vlaneseq
      %v2327 = vshrl.u32 %v2326, 7
      %v2328 = vsub.s32 %v2325, %v2327
      %v2329 = vrot.slane %v2321, %v2328
      %v2331 = vunpack.c.l.s4 1983009808
      %v2332 = vunpack.c.0.s8 %v2331
      %v2333 = vlaneseq
      %v2334 = vshrl.u32 %v2333, 7
      %v2335 = vsub.s32 %v2332, %v2334
      %v2336 = vrot.slane %v2322, %v2335
      %v2337 = vcombine.low %v2329, %v2336
      %v2338 = vcombine.low %v1622, %v1624
      %v2339 = vcombine.low %v1631, %v1639
      %v2341 = vunpack.c.l.s4 1983009808
      %v2342 = vunpack.c.0.s8 %v2341
      %v2343 = vlaneseq
      %v2344 = vshrl.u32 %v2343, 7
      %v2345 = vsub.s32 %v2342, %v2344
      %v2346 = vrot.slane %v2338, %v2345
      %v2348 = vunpack.c.l.s4 1983009808
      %v2349 = vunpack.c.0.s8 %v2348
      %v2350 = vlaneseq
      %v2351 = vshrl.u32 %v2350, 7
      %v2352 = vsub.s32 %v2349, %v2351
      %v2353 = vrot.slane %v2339, %v2352
      %v2354 = vcombine.low %v2346, %v2353
      %v2355 = vcombine.low %v1647, %v1646
      %v2356 = vcombine.low %v1648, %v1656
      %v2358 = vunpack.c.l.s4 1983009808
      %v2359 = vunpack.c.0.s8 %v2358
      %v2360 = vlaneseq
      %v2361 = vshrl.u32 %v2360, 7
      %v2362 = vsub.s32 %v2359, %v2361
      %v2363 = vrot.slane %v2355, %v2362
      %v2365 = vunpack.c.l.s4 1983009808
      %v2366 = vunpack.c.0.s8 %v2365
      %v2367 = vlaneseq
      %v2368 = vshrl.u32 %v2367, 7
      %v2369 = vsub.s32 %v2366, %v2368
      %v2370 = vrot.slane %v2356, %v2369
      %v2371 = vcombine.low %v2363, %v2370
      %v2372 = vcombine.low %v1664, %v1663
      %v2373 = vcombine.low %v1665, %v1672
      %v2375 = vunpack.c.l.s4 1983009808
      %v2376 = vunpack.c.0.s8 %v2375
      %v2377 = vlaneseq
      %v2378 = vshrl.u32 %v2377, 7
      %v2379 = vsub.s32 %v2376, %v2378
      %v2380 = vrot.slane %v2372, %v2379
      %v2382 = vunpack.c.l.s4 1983009808
      %v2383 = vunpack.c.0.s8 %v2382
      %v2384 = vlaneseq
      %v2385 = vshrl.u32 %v2384, 7
      %v2386 = vsub.s32 %v2383, %v2385
      %v2387 = vrot.slane %v2373, %v2386
      %v2388 = vcombine.low %v2380, %v2387
      %v2389 = vcombine.low %v1680, %v1688
      %v2390 = vcombine.low %v1687, %v1689
      %v2392 = vunpack.c.l.s4 1983009808
      %v2393 = vunpack.c.0.s8 %v2392
      %v2394 = vlaneseq
      %v2395 = vshrl.u32 %v2394, 7
      %v2396 = vsub.s32 %v2393, %v2395
      %v2397 = vrot.slane %v2389, %v2396
      %v2399 = vunpack.c.l.s4 1983009808
      %v2400 = vunpack.c.0.s8 %v2399
      %v2401 = vlaneseq
      %v2402 = vshrl.u32 %v2401, 7
      %v2403 = vsub.s32 %v2400, %v2402
      %v2404 = vrot.slane %v2390, %v2403
      %v2405 = vcombine.low %v2397, %v2404
      %v2406 = vcombine.low %v1697, %v1705
      %v2407 = vcombine.low %v1704, %v1706
      %v2409 = vunpack.c.l.s4 1983009808
      %v2410 = vunpack.c.0.s8 %v2409
      %v2411 = vlaneseq
      %v2412 = vshrl.u32 %v2411, 7
      %v2413 = vsub.s32 %v2410, %v2412
      %v2414 = vrot.slane %v2406, %v2413
      %v2416 = vunpack.c.l.s4 1983009808
      %v2417 = vunpack.c.0.s8 %v2416
      %v2418 = vlaneseq
      %v2419 = vshrl.u32 %v2418, 7
      %v2420 = vsub.s32 %v2417, %v2419
      %v2421 = vrot.slane %v2407, %v2420
      %v2422 = vcombine.low %v2414, %v2421
      %v2423 = vcombine.low %v1713, %v1721
      %v2424 = vcombine.low %v1729, %v1728
      %v2426 = vunpack.c.l.s4 1983009808
      %v2427 = vunpack.c.0.s8 %v2426
      %v2428 = vlaneseq
      %v2429 = vshrl.u32 %v2428, 7
      %v2430 = vsub.s32 %v2427, %v2429
      %v2431 = vrot.slane %v2423, %v2430
      %v2433 = vunpack.c.l.s4 1983009808
      %v2434 = vunpack.c.0.s8 %v2433
      %v2435 = vlaneseq
      %v2436 = vshrl.u32 %v2435, 7
      %v2437 = vsub.s32 %v2434, %v2436
      %v2438 = vrot.slane %v2424, %v2437
      %v2439 = vcombine.low %v2431, %v2438
      %v2440 = vcombine.low %v1730, %v1738
      %v2441 = vcombine.low %v1746, %v1745
      %v2443 = vunpack.c.l.s4 1983009808
      %v2444 = vunpack.c.0.s8 %v2443
      %v2445 = vlaneseq
      %v2446 = vshrl.u32 %v2445, 7
      %v2447 = vsub.s32 %v2444, %v2446
      %v2448 = vrot.slane %v2440, %v2447
      %v2450 = vunpack.c.l.s4 1983009808
      %v2451 = vunpack.c.0.s8 %v2450
      %v2452 = vlaneseq
      %v2453 = vshrl.u32 %v2452, 7
      %v2454 = vsub.s32 %v2451, %v2453
      %v2455 = vrot.slane %v2441, %v2454
      %v2456 = vcombine.low %v2448, %v2455
      %v2457 = vcombine.low %v1747, %v1754
      %v2458 = vcombine.low %v1762, %v1770
      %v2460 = vunpack.c.l.s4 1983009808
      %v2461 = vunpack.c.0.s8 %v2460
      %v2462 = vlaneseq
      %v2463 = vshrl.u32 %v2462, 7
      %v2464 = vsub.s32 %v2461, %v2463
      %v2465 = vrot.slane %v2457, %v2464
      %v2467 = vunpack.c.l.s4 1983009808
      %v2468 = vunpack.c.0.s8 %v2467
      %v2469 = vlaneseq
      %v2470 = vshrl.u32 %v2469, 7
      %v2471 = vsub.s32 %v2468, %v2470
      %v2472 = vrot.slane %v2458, %v2471
      %v2473 = vcombine.low %v2465, %v2472
      %v2474 = vcombine.low %v1769, %v1771
      %v2475 = vcombine.low %v1779, %v1787
      %v2477 = vunpack.c.l.s4 1983009808
      %v2478 = vunpack.c.0.s8 %v2477
      %v2479 = vlaneseq
      %v2480 = vshrl.u32 %v2479, 7
      %v2481 = vsub.s32 %v2478, %v2480
      %v2482 = vrot.slane %v2474, %v2481
      %v2484 = vunpack.c.l.s4 1983009808
      %v2485 = vunpack.c.0.s8 %v2484
      %v2486 = vlaneseq
      %v2487 = vshrl.u32 %v2486, 7
      %v2488 = vsub.s32 %v2485, %v2487
      %v2489 = vrot.slane %v2475, %v2488
      %v2490 = vcombine.low %v2482, %v2489
      %v2491 = vcombine.low %v1786, %v1788
      %v2492 = vcombine.low %v1795, %v1803
      %v2494 = vunpack.c.l.s4 1983009808
      %v2495 = vunpack.c.0.s8 %v2494
      %v2496 = vlaneseq
      %v2497 = vshrl.u32 %v2496, 7
      %v2498 = vsub.s32 %v2495, %v2497
      %v2499 = vrot.slane %v2491, %v2498
      %v2501 = vunpack.c.l.s4 1983009808
      %v2502 = vunpack.c.0.s8 %v2501
      %v2503 = vlaneseq
      %v2504 = vshrl.u32 %v2503, 7
      %v2505 = vsub.s32 %v2502, %v2504
      %v2506 = vrot.slane %v2492, %v2505
      %v2507 = vcombine.low %v2499, %v2506
      %v2508 = vcombine.low %v1811, %v1810
      %v2509 = vcombine.low %v1812, %v1820
      %v2511 = vunpack.c.l.s4 1983009808
      %v2512 = vunpack.c.0.s8 %v2511
      %v2513 = vlaneseq
      %v2514 = vshrl.u32 %v2513, 7
      %v2515 = vsub.s32 %v2512, %v2514
      %v2516 = vrot.slane %v2508, %v2515
      %v2518 = vunpack.c.l.s4 1983009808
      %v2519 = vunpack.c.0.s8 %v2518
      %v2520 = vlaneseq
      %v2521 = vshrl.u32 %v2520, 7
      %v2522 = vsub.s32 %v2519, %v2521
      %v2523 = vrot.slane %v2509, %v2522
      %v2524 = vcombine.low %v2516, %v2523
      %v2525 = vcombine.low %v1828, %v1827
      %v2526 = vcombine.low %v1829, %v1836
      %v2528 = vunpack.c.l.s4 1983009808
      %v2529 = vunpack.c.0.s8 %v2528
      %v2530 = vlaneseq
      %v2531 = vshrl.u32 %v2530, 7
      %v2532 = vsub.s32 %v2529, %v2531
      %v2533 = vrot.slane %v2525, %v2532
      %v2535 = vunpack.c.l.s4 1983009808
      %v2536 = vunpack.c.0.s8 %v2535
      %v2537 = vlaneseq
      %v2538 = vshrl.u32 %v2537, 7
      %v2539 = vsub.s32 %v2536, %v2538
      %v2540 = vrot.slane %v2526, %v2539
      %v2541 = vcombine.low %v2533, %v2540
      %v2542 = vcombine.low %v1844, %v1852
      %v2543 = vcombine.low %v1851, %v1853
      %v2545 = vunpack.c.l.s4 1983009808
      %v2546 = vunpack.c.0.s8 %v2545
      %v2547 = vlaneseq
      %v2548 = vshrl.u32 %v2547, 7
      %v2549 = vsub.s32 %v2546, %v2548
      %v2550 = vrot.slane %v2542, %v2549
      %v2552 = vunpack.c.l.s4 1983009808
      %v2553 = vunpack.c.0.s8 %v2552
      %v2554 = vlaneseq
      %v2555 = vshrl.u32 %v2554, 7
      %v2556 = vsub.s32 %v2553, %v2555
      %v2557 = vrot.slane %v2543, %v2556
      %v2558 = vcombine.low %v2550, %v2557
      %v2559 = vcombine.low %v1861, %v1869
      %v2560 = vcombine.low %v1868, %v1870
      %v2562 = vunpack.c.l.s4 1983009808
      %v2563 = vunpack.c.0.s8 %v2562
      %v2564 = vlaneseq
      %v2565 = vshrl.u32 %v2564, 7
      %v2566 = vsub.s32 %v2563, %v2565
      %v2567 = vrot.slane %v2559, %v2566
      %v2569 = vunpack.c.l.s4 1983009808
      %v2570 = vunpack.c.0.s8 %v2569
      %v2571 = vlaneseq
      %v2572 = vshrl.u32 %v2571, 7
      %v2573 = vsub.s32 %v2570, %v2572
      %v2574 = vrot.slane %v2560, %v2573
      %v2575 = vcombine.low %v2567, %v2574
      %v2576 = vcombine.low %v1877, %v1885
      %v2577 = vcombine.low %v1893, %v1892
      %v2579 = vunpack.c.l.s4 1983009808
      %v2580 = vunpack.c.0.s8 %v2579
      %v2581 = vlaneseq
      %v2582 = vshrl.u32 %v2581, 7
      %v2583 = vsub.s32 %v2580, %v2582
      %v2584 = vrot.slane %v2576, %v2583
      %v2586 = vunpack.c.l.s4 1983009808
      %v2587 = vunpack.c.0.s8 %v2586
      %v2588 = vlaneseq
      %v2589 = vshrl.u32 %v2588, 7
      %v2590 = vsub.s32 %v2587, %v2589
      %v2591 = vrot.slane %v2577, %v2590
      %v2592 = vcombine.low %v2584, %v2591
      %v2593 = vcombine.low %v1894, %v1902
      %v2594 = vcombine.low %v1910, %v1909
      %v2596 = vunpack.c.l.s4 1983009808
      %v2597 = vunpack.c.0.s8 %v2596
      %v2598 = vlaneseq
      %v2599 = vshrl.u32 %v2598, 7
      %v2600 = vsub.s32 %v2597, %v2599
      %v2601 = vrot.slane %v2593, %v2600
      %v2603 = vunpack.c.l.s4 1983009808
      %v2604 = vunpack.c.0.s8 %v2603
      %v2605 = vlaneseq
      %v2606 = vshrl.u32 %v2605, 7
      %v2607 = vsub.s32 %v2604, %v2606
      %v2608 = vrot.slane %v2594, %v2607
      %v2609 = vcombine.low %v2601, %v2608
      %v2610 = vcombine.low %v1911, %v1918
      %v2611 = vcombine.low %v1926, %v1934
      %v2613 = vunpack.c.l.s4 1983009808
      %v2614 = vunpack.c.0.s8 %v2613
      %v2615 = vlaneseq
      %v2616 = vshrl.u32 %v2615, 7
      %v2617 = vsub.s32 %v2614, %v2616
      %v2618 = vrot.slane %v2610, %v2617
      %v2620 = vunpack.c.l.s4 1983009808
      %v2621 = vunpack.c.0.s8 %v2620
      %v2622 = vlaneseq
      %v2623 = vshrl.u32 %v2622, 7
      %v2624 = vsub.s32 %v2621, %v2623
      %v2625 = vrot.slane %v2611, %v2624
      %v2626 = vcombine.low %v2618, %v2625
      %v2627 = vcombine.low %v1933, %v1935
      %v2628 = vcombine.low %v1943, %v1951
      %v2630 = vunpack.c.l.s4 1983009808
      %v2631 = vunpack.c.0.s8 %v2630
      %v2632 = vlaneseq
      %v2633 = vshrl.u32 %v2632, 7
      %v2634 = vsub.s32 %v2631, %v2633
      %v2635 = vrot.slane %v2627, %v2634
      %v2637 = vunpack.c.l.s4 1983009808
      %v2638 = vunpack.c.0.s8 %v2637
      %v2639 = vlaneseq
      %v2640 = vshrl.u32 %v2639, 7
      %v2641 = vsub.s32 %v2638, %v2640
      %v2642 = vrot.slane %v2628, %v2641
      %v2643 = vcombine.low %v2635, %v2642
      %v2644 = vcombine.low %v1950, %v1952
      %v2645 = vcombine.low %v1959, %v1967
      %v2647 = vunpack.c.l.s4 1983009808
      %v2648 = vunpack.c.0.s8 %v2647
      %v2649 = vlaneseq
      %v2650 = vshrl.u32 %v2649, 7
      %v2651 = vsub.s32 %v2648, %v2650
      %v2652 = vrot.slane %v2644, %v2651
      %v2654 = vunpack.c.l.s4 1983009808
      %v2655 = vunpack.c.0.s8 %v2654
      %v2656 = vlaneseq
      %v2657 = vshrl.u32 %v2656, 7
      %v2658 = vsub.s32 %v2655, %v2657
      %v2659 = vrot.slane %v2645, %v2658
      %v2660 = vcombine.low %v2652, %v2659
      %v2661 = vcombine.low %v1975, %v1974
      %v2662 = vcombine.low %v1976, %v1984
      %v2664 = vunpack.c.l.s4 1983009808
      %v2665 = vunpack.c.0.s8 %v2664
      %v2666 = vlaneseq
      %v2667 = vshrl.u32 %v2666, 7
      %v2668 = vsub.s32 %v2665, %v2667
      %v2669 = vrot.slane %v2661, %v2668
      %v2671 = vunpack.c.l.s4 1983009808
      %v2672 = vunpack.c.0.s8 %v2671
      %v2673 = vlaneseq
      %v2674 = vshrl.u32 %v2673, 7
      %v2675 = vsub.s32 %v2672, %v2674
      %v2676 = vrot.slane %v2662, %v2675
      %v2677 = vcombine.low %v2669, %v2676
      %v2678 = vcombine.low %v1992, %v1991
      %v2679 = vcombine.low %v1993, %v2000
      %v2681 = vunpack.c.l.s4 1983009808
      %v2682 = vunpack.c.0.s8 %v2681
      %v2683 = vlaneseq
      %v2684 = vshrl.u32 %v2683, 7
      %v2685 = vsub.s32 %v2682, %v2684
      %v2686 = vrot.slane %v2678, %v2685
      %v2688 = vunpack.c.l.s4 1983009808
      %v2689 = vunpack.c.0.s8 %v2688
      %v2690 = vlaneseq
      %v2691 = vshrl.u32 %v2690, 7
      %v2692 = vsub.s32 %v2689, %v2691
      %v2693 = vrot.slane %v2679, %v2692
      %v2694 = vcombine.low %v2686, %v2693
      %v2695 = vcombine.low %v2008, %v2016
      %v2696 = vcombine.low %v2015, %v2017
      %v2698 = vunpack.c.l.s4 1983009808
      %v2699 = vunpack.c.0.s8 %v2698
      %v2700 = vlaneseq
      %v2701 = vshrl.u32 %v2700, 7
      %v2702 = vsub.s32 %v2699, %v2701
      %v2703 = vrot.slane %v2695, %v2702
      %v2705 = vunpack.c.l.s4 1983009808
      %v2706 = vunpack.c.0.s8 %v2705
      %v2707 = vlaneseq
      %v2708 = vshrl.u32 %v2707, 7
      %v2709 = vsub.s32 %v2706, %v2708
      %v2710 = vrot.slane %v2696, %v2709
      %v2711 = vcombine.low %v2703, %v2710
      %v2712 = vcombine.low %v2025, %v2033
      %v2713 = vcombine.low %v2032, %v2034
      %v2715 = vunpack.c.l.s4 1983009808
      %v2716 = vunpack.c.0.s8 %v2715
      %v2717 = vlaneseq
      %v2718 = vshrl.u32 %v2717, 7
      %v2719 = vsub.s32 %v2716, %v2718
      %v2720 = vrot.slane %v2712, %v2719
      %v2722 = vunpack.c.l.s4 1983009808
      %v2723 = vunpack.c.0.s8 %v2722
      %v2724 = vlaneseq
      %v2725 = vshrl.u32 %v2724, 7
      %v2726 = vsub.s32 %v2723, %v2725
      %v2727 = vrot.slane %v2713, %v2726
      %v2728 = vcombine.low %v2720, %v2727
      %v2729 = vcombine.low %v2041, %v2049
      %v2730 = vcombine.low %v2057, %v2056
      %v2732 = vunpack.c.l.s4 1983009808
      %v2733 = vunpack.c.0.s8 %v2732
      %v2734 = vlaneseq
      %v2735 = vshrl.u32 %v2734, 7
      %v2736 = vsub.s32 %v2733, %v2735
      %v2737 = vrot.slane %v2729, %v2736
      %v2739 = vunpack.c.l.s4 1983009808
      %v2740 = vunpack.c.0.s8 %v2739
      %v2741 = vlaneseq
      %v2742 = vshrl.u32 %v2741, 7
      %v2743 = vsub.s32 %v2740, %v2742
      %v2744 = vrot.slane %v2730, %v2743
      %v2745 = vcombine.low %v2737, %v2744
      %v2746 = vcombine.low %v2058, %v2066
      %v2747 = vcombine.low %v2074, %v2073
      %v2749 = vunpack.c.l.s4 1983009808
      %v2750 = vunpack.c.0.s8 %v2749
      %v2751 = vlaneseq
      %v2752 = vshrl.u32 %v2751, 7
      %v2753 = vsub.s32 %v2750, %v2752
      %v2754 = vrot.slane %v2746, %v2753
      %v2756 = vunpack.c.l.s4 1983009808
      %v2757 = vunpack.c.0.s8 %v2756
      %v2758 = vlaneseq
      %v2759 = vshrl.u32 %v2758, 7
      %v2760 = vsub.s32 %v2757, %v2759
      %v2761 = vrot.slane %v2747, %v2760
      %v2762 = vcombine.low %v2754, %v2761
      %v2763 = vcombine.low %v2075, %v2082
      %v2765 = vunpack.c.l.s4 1983009808
      %v2766 = vunpack.c.0.s8 %v2765
      %v2767 = vlaneseq
      %v2768 = vshrl.u32 %v2767, 7
      %v2769 = vsub.s32 %v2766, %v2768
      %v2770 = vrot.slane %v2763, %v2769
      %vm2771 = vcmask 97280
      %v2772 = vsel %vm2771, %v2099, 0
      %v2774 = vsel %vm2771, %v2116, 0
      %v2776 = vsel %vm2771, %v2133, 0
      %v2778 = vsel %vm2771, %v2150, 0
      %v2780 = vsel %vm2771, %v2167, 0
      %v2782 = vsel %vm2771, %v2184, 0
      %v2784 = vsel %vm2771, %v2201, 0
      %v2786 = vsel %vm2771, %v2218, 0
      %v2788 = vsel %vm2771, %v2235, 0
      %v2790 = vsel %vm2771, %v2252, 0
      %v2792 = vsel %vm2771, %v2269, 0
      %v2794 = vsel %vm2771, %v2286, 0
      %v2796 = vsel %vm2771, %v2303, 0
      %v2798 = vsel %vm2771, %v2320, 0
      %v2800 = vsel %vm2771, %v2337, 0
      %v2802 = vsel %vm2771, %v2354, 0
      %v2804 = vsel %vm2771, %v2371, 0
      %v2806 = vsel %vm2771, %v2388, 0
      %v2808 = vsel %vm2771, %v2405, 0
      %v2810 = vsel %vm2771, %v2422, 0
      %v2812 = vsel %vm2771, %v2439, 0
      %v2814 = vsel %vm2771, %v2456, 0
      %v2816 = vsel %vm2771, %v2473, 0
      %v2818 = vsel %vm2771, %v2490, 0
      %v2820 = vsel %vm2771, %v2507, 0
      %v2822 = vsel %vm2771, %v2524, 0
      %v2824 = vsel %vm2771, %v2541, 0
      %v2826 = vsel %vm2771, %v2558, 0
      %v2828 = vsel %vm2771, %v2575, 0
      %v2830 = vsel %vm2771, %v2592, 0
      %v2832 = vsel %vm2771, %v2609, 0
      %v2834 = vsel %vm2771, %v2626, 0
      %v2836 = vsel %vm2771, %v2643, 0
      %v2838 = vsel %vm2771, %v2660, 0
      %v2840 = vsel %vm2771, %v2677, 0
      %v2842 = vsel %vm2771, %v2694, 0
      %v2844 = vsel %vm2771, %v2711, 0
      %v2846 = vsel %vm2771, %v2728, 0
      %v2848 = vsel %vm2771, %v2745, 0
      %v2850 = vsel %vm2771, %v2762, 0
      %v2852 = vsel %vm2771, %v2770, 0
      %vm2854 = vcmask 1043456
      %v2856 = vsel %vm2854, %v1290, 0
      %2858 = vmatprep.subr.mxu0 0.0
      %2859 = vmatpush1.msra.mxu0 %v1289
      %2860 = vmatprep.subr.mxu0 0.0
      %2861 = vmatpush1.msra.mxu0 %v2856
      %2862 = vmatprep.subr.mxu0 0.0
      %2863 = vmatpush1.msra.mxu0 0.0
      %2864 = vmatprep.subr.mxu0 0.0
      %2865 = vmatpush1.msra.mxu0 0.0
      %2866 = vmatprep.subr.mxu0 0.0
      %2867 = vmatpush1.msra.mxu0 0.0
      %2868 = vmatprep.subr.mxu0 0.0
      %2869 = vmatpush1.msra.mxu0 0.0
      %2870 = vmatprep.subr.mxu0 0.0
      %2871 = vmatpush1.msra.mxu0 0.0
      %2872 = vmatprep.subr.mxu0 0.0
      %2873 = vmatpush1.msra.mxu0 0.0
      %2874 = vmatprep.subr.mxu0 0.0
      %2875 = vmatpush1.msra.mxu0 0.0
      %2876 = vmatprep.subr.mxu0 0.0
      %2877 = vmatpush1.msra.mxu0 0.0
      %2878 = vmatprep.subr.mxu0 0.0
      %2879 = vmatpush1.msra.mxu0 0.0
      %2880 = vmatprep.subr.mxu0 0.0
      %2881 = vmatpush1.msra.mxu0 0.0
      %2882 = vmatprep.subr.mxu0 0.0
      %2883 = vmatpush1.msra.mxu0 0.0
      %2884 = vmatprep.subr.mxu0 0.0
      %2885 = vmatpush1.msra.mxu0 0.0
      %2886 = vmatprep.subr.mxu0 0.0
      %2887 = vmatpush1.msra.mxu0 0.0
      %2888 = vmatprep.subr.mxu0 0.0
      %2889 = vmatpush1.msra.mxu0 0.0
      %2890 = vmatprep.subr.mxu0 0.0
      %2891 = vmatpush1.msra.mxu0 0.0
      %2892 = vmatprep.subr.mxu0 0.0
      %2893 = vmatpush1.msra.mxu0 0.0
      %2894 = vmatprep.subr.mxu0 0.0
      %2895 = vmatpush1.msra.mxu0 0.0
      %2896 = vmatprep.subr.mxu0 0.0
      %2897 = vmatpush1.msra.mxu0 0.0
      %2898 = vmatprep.subr.mxu0 0.0
      %2899 = vmatpush1.msra.mxu0 0.0
      %2900 = vmatprep.subr.mxu0 0.0
      %2901 = vmatpush1.msra.mxu0 0.0
      %2902 = vmatprep.subr.mxu0 0.0
      %2903 = vmatpush1.msra.mxu0 0.0
      %2904 = vmatprep.subr.mxu0 0.0
      %2905 = vmatpush1.msra.mxu0 0.0
      %2906 = vmatprep.subr.mxu0 0.0
      %2907 = vmatpush1.msra.mxu0 0.0
      %2908 = vmatprep.subr.mxu0 0.0
      %2909 = vmatpush1.msra.mxu0 0.0
      %2910 = vmatprep.subr.mxu0 0.0
      %2911 = vmatpush1.msra.mxu0 0.0
      %2912 = vmatprep.subr.mxu0 0.0
      %2913 = vmatpush1.msra.mxu0 0.0
      %2914 = vmatprep.subr.mxu0 0.0
      %2915 = vmatpush1.msra.mxu0 0.0
      %2916 = vmatprep.subr.mxu0 0.0
      %2917 = vmatpush1.msra.mxu0 0.0
      %2918 = vmatprep.subr.mxu0 0.0
      %2919 = vmatpush1.msra.mxu0 0.0
      %2920 = vmatprep.subr.mxu0 0.0
      %2921 = vmatpush1.msra.mxu0 0.0
      %2922 = vmatprep.mubr.f32.mxu0 0.0
      %2923 = vmatmul.mubr.f32.gmra.mrb[0].mxu0 %v2772
      %v2924 = vpop.f32.mrb[0].mxu0
      %v2925 = vadd.f32 0.0, %v2924
      %v2926 = vpop.f32.mrb[0].mxu0
      %2927 = vmatprep.mubr.f32.mxu0 0.0
      %2928 = vmatmul.mubr.f32.gmra.mrb[0].mxu0 %v2774
      %v2929 = vpop.f32.mrb[0].mxu0
      %v2930 = vadd.f32 0.0, %v2929
      %v2931 = vpop.f32.mrb[0].mxu0
      %2932 = vmatprep.mubr.f32.mxu0 0.0
      %2933 = vmatmul.mubr.f32.gmra.mrb[0].mxu0 %v2776
      %v2934 = vpop.f32.mrb[0].mxu0
      %v2935 = vadd.f32 0.0, %v2934
      %v2936 = vpop.f32.mrb[0].mxu0
      %2937 = vmatprep.mubr.f32.mxu0 0.0
      %2938 = vmatmul.mubr.f32.gmra.mrb[0].mxu0 %v2778
      %v2939 = vpop.f32.mrb[0].mxu0
      %v2940 = vadd.f32 0.0, %v2939
      %v2941 = vpop.f32.mrb[0].mxu0
      %2942 = vmatprep.mubr.f32.mxu0 0.0
      %2943 = vmatmul.mubr.f32.gmra.mrb[0].mxu0 %v2780
      %v2944 = vpop.f32.mrb[0].mxu0
      %v2945 = vadd.f32 0.0, %v2944
      %v2946 = vpop.f32.mrb[0].mxu0
      %2947 = vmatprep.mubr.f32.mxu0 0.0
      %2948 = vmatmul.mubr.f32.gmra.mrb[0].mxu0 %v2782
      %v2949 = vpop.f32.mrb[0].mxu0
      %v2950 = vadd.f32 0.0, %v2949
      %v2951 = vpop.f32.mrb[0].mxu0
      %2952 = vmatprep.mubr.f32.mxu0 0.0
      %2953 = vmatmul.mubr.f32.gmra.mrb[0].mxu0 %v2784
      %v2954 = vpop.f32.mrb[0].mxu0
      %v2955 = vadd.f32 0.0, %v2954
      %v2956 = vpop.f32.mrb[0].mxu0
      %2957 = vmatprep.mubr.f32.mxu0 0.0
      %2958 = vmatmul.mubr.f32.gmra.mrb[0].mxu0 %v2786
      %v2959 = vpop.f32.mrb[0].mxu0
      %v2960 = vadd.f32 0.0, %v2959
      %v2961 = vpop.f32.mrb[0].mxu0
      %2962 = vmatprep.mubr.f32.mxu0 0.0
      %2963 = vmatmul.mubr.f32.gmra.mrb[0].mxu0 %v2788
      %v2964 = vpop.f32.mrb[0].mxu0
      %v2965 = vadd.f32 0.0, %v2964
      %v2966 = vpop.f32.mrb[0].mxu0
      %2967 = vmatprep.mubr.f32.mxu0 0.0
      %2968 = vmatmul.mubr.f32.gmra.mrb[0].mxu0 %v2790
      %v2969 = vpop.f32.mrb[0].mxu0
      %v2970 = vadd.f32 0.0, %v2969
      %v2971 = vpop.f32.mrb[0].mxu0
      %2972 = vmatprep.mubr.f32.mxu0 0.0
      %2973 = vmatmul.mubr.f32.gmra.mrb[0].mxu0 %v2792
      %v2974 = vpop.f32.mrb[0].mxu0
      %v2975 = vadd.f32 0.0, %v2974
      %v2976 = vpop.f32.mrb[0].mxu0
      %2977 = vmatprep.mubr.f32.mxu0 0.0
      %2978 = vmatmul.mubr.f32.gmra.mrb[0].mxu0 %v2794
      %v2979 = vpop.f32.mrb[0].mxu0
      %v2980 = vadd.f32 0.0, %v2979
      %v2981 = vpop.f32.mrb[0].mxu0
      %2982 = vmatprep.mubr.f32.mxu0 0.0
      %2983 = vmatmul.mubr.f32.gmra.mrb[0].mxu0 %v2796
      %v2984 = vpop.f32.mrb[0].mxu0
      %v2985 = vadd.f32 0.0, %v2984
      %v2986 = vpop.f32.mrb[0].mxu0
      %2987 = vmatprep.mubr.f32.mxu0 0.0
      %2988 = vmatmul.mubr.f32.gmra.mrb[0].mxu0 %v2798
      %v2989 = vpop.f32.mrb[0].mxu0
      %v2990 = vadd.f32 0.0, %v2989
      %v2991 = vpop.f32.mrb[0].mxu0
      %2992 = vmatprep.mubr.f32.mxu0 0.0
      %2993 = vmatmul.mubr.f32.gmra.mrb[0].mxu0 %v2800
      %v2994 = vpop.f32.mrb[0].mxu0
      %v2995 = vadd.f32 0.0, %v2994
      %v2996 = vpop.f32.mrb[0].mxu0
      %2997 = vmatprep.mubr.f32.mxu0 0.0
      %2998 = vmatmul.mubr.f32.gmra.mrb[0].mxu0 %v2802
      %v2999 = vpop.f32.mrb[0].mxu0
      %v3000 = vadd.f32 0.0, %v2999
      %v3001 = vpop.f32.mrb[0].mxu0
      %3002 = vmatprep.mubr.f32.mxu0 0.0
      %3003 = vmatmul.mubr.f32.gmra.mrb[0].mxu0 %v2804
      %v3004 = vpop.f32.mrb[0].mxu0
      %v3005 = vadd.f32 0.0, %v3004
      %v3006 = vpop.f32.mrb[0].mxu0
      %3007 = vmatprep.mubr.f32.mxu0 0.0
      %3008 = vmatmul.mubr.f32.gmra.mrb[0].mxu0 %v2806
      %v3009 = vpop.f32.mrb[0].mxu0
      %v3010 = vadd.f32 0.0, %v3009
      %v3011 = vpop.f32.mrb[0].mxu0
      %3012 = vmatprep.mubr.f32.mxu0 0.0
      %3013 = vmatmul.mubr.f32.gmra.mrb[0].mxu0 %v2808
      %v3014 = vpop.f32.mrb[0].mxu0
      %v3015 = vadd.f32 0.0, %v3014
      %v3016 = vpop.f32.mrb[0].mxu0
      %3017 = vmatprep.mubr.f32.mxu0 0.0
      %3018 = vmatmul.mubr.f32.gmra.mrb[0].mxu0 %v2810
      %v3019 = vpop.f32.mrb[0].mxu0
      %v3020 = vadd.f32 0.0, %v3019
      %v3021 = vpop.f32.mrb[0].mxu0
      %3022 = vmatprep.mubr.f32.mxu0 0.0
      %3023 = vmatmul.mubr.f32.gmra.mrb[0].mxu0 %v2812
      %v3024 = vpop.f32.mrb[0].mxu0
      %v3025 = vadd.f32 0.0, %v3024
      %v3026 = vpop.f32.mrb[0].mxu0
      %3027 = vmatprep.mubr.f32.mxu0 0.0
      %3028 = vmatmul.mubr.f32.gmra.mrb[0].mxu0 %v2814
      %v3029 = vpop.f32.mrb[0].mxu0
      %v3030 = vadd.f32 0.0, %v3029
      %v3031 = vpop.f32.mrb[0].mxu0
      %3032 = vmatprep.mubr.f32.mxu0 0.0
      %3033 = vmatmul.mubr.f32.gmra.mrb[0].mxu0 %v2816
      %v3034 = vpop.f32.mrb[0].mxu0
      %v3035 = vadd.f32 0.0, %v3034
      %v3036 = vpop.f32.mrb[0].mxu0
      %3037 = vmatprep.mubr.f32.mxu0 0.0
      %3038 = vmatmul.mubr.f32.gmra.mrb[0].mxu0 %v2818
      %v3039 = vpop.f32.mrb[0].mxu0
      %v3040 = vadd.f32 0.0, %v3039
      %v3041 = vpop.f32.mrb[0].mxu0
      %3042 = vmatprep.mubr.f32.mxu0 0.0
      %3043 = vmatmul.mubr.f32.gmra.mrb[0].mxu0 %v2820
      %v3044 = vpop.f32.mrb[0].mxu0
      %v3045 = vadd.f32 0.0, %v3044
      %v3046 = vpop.f32.mrb[0].mxu0
      %3047 = vmatprep.mubr.f32.mxu0 0.0
      %3048 = vmatmul.mubr.f32.gmra.mrb[0].mxu0 %v2822
      %v3049 = vpop.f32.mrb[0].mxu0
      %v3050 = vadd.f32 0.0, %v3049
      %v3051 = vpop.f32.mrb[0].mxu0
      %3052 = vmatprep.mubr.f32.mxu0 0.0
      %3053 = vmatmul.mubr.f32.gmra.mrb[0].mxu0 %v2824
      %v3054 = vpop.f32.mrb[0].mxu0
      %v3055 = vadd.f32 0.0, %v3054
      %v3056 = vpop.f32.mrb[0].mxu0
      %3057 = vmatprep.mubr.f32.mxu0 0.0
      %3058 = vmatmul.mubr.f32.gmra.mrb[0].mxu0 %v2826
      %v3059 = vpop.f32.mrb[0].mxu0
      %v3060 = vadd.f32 0.0, %v3059
      %v3061 = vpop.f32.mrb[0].mxu0
      %3062 = vmatprep.mubr.f32.mxu0 0.0
      %3063 = vmatmul.mubr.f32.gmra.mrb[0].mxu0 %v2828
      %v3064 = vpop.f32.mrb[0].mxu0
      %v3065 = vadd.f32 0.0, %v3064
      %v3066 = vpop.f32.mrb[0].mxu0
      %3067 = vmatprep.mubr.f32.mxu0 0.0
      %3068 = vmatmul.mubr.f32.gmra.mrb[0].mxu0 %v2830
      %v3069 = vpop.f32.mrb[0].mxu0
      %v3070 = vadd.f32 0.0, %v3069
      %v3071 = vpop.f32.mrb[0].mxu0
      %3072 = vmatprep.mubr.f32.mxu0 0.0
      %3073 = vmatmul.mubr.f32.gmra.mrb[0].mxu0 %v2832
      %v3074 = vpop.f32.mrb[0].mxu0
      %v3075 = vadd.f32 0.0, %v3074
      %v3076 = vpop.f32.mrb[0].mxu0
      %3077 = vmatprep.mubr.f32.mxu0 0.0
      %3078 = vmatmul.mubr.f32.gmra.mrb[0].mxu0 %v2834
      %v3079 = vpop.f32.mrb[0].mxu0
      %v3080 = vadd.f32 0.0, %v3079
      %v3081 = vpop.f32.mrb[0].mxu0
      %3082 = vmatprep.mubr.f32.mxu0 0.0
      %3083 = vmatmul.mubr.f32.gmra.mrb[0].mxu0 %v2836
      %v3084 = vpop.f32.mrb[0].mxu0
      %v3085 = vadd.f32 0.0, %v3084
      %v3086 = vpop.f32.mrb[0].mxu0
      %3087 = vmatprep.mubr.f32.mxu0 0.0
      %3088 = vmatmul.mubr.f32.gmra.mrb[0].mxu0 %v2838
      %v3089 = vpop.f32.mrb[0].mxu0
      %v3090 = vadd.f32 0.0, %v3089
      %v3091 = vpop.f32.mrb[0].mxu0
      %3092 = vmatprep.mubr.f32.mxu0 0.0
      %3093 = vmatmul.mubr.f32.gmra.mrb[0].mxu0 %v2840
      %v3094 = vpop.f32.mrb[0].mxu0
      %v3095 = vadd.f32 0.0, %v3094
      %v3096 = vpop.f32.mrb[0].mxu0
      %3097 = vmatprep.mubr.f32.mxu0 0.0
      %3098 = vmatmul.mubr.f32.gmra.mrb[0].mxu0 %v2842
      %v3099 = vpop.f32.mrb[0].mxu0
      %v3100 = vadd.f32 0.0, %v3099
      %v3101 = vpop.f32.mrb[0].mxu0
      %3102 = vmatprep.mubr.f32.mxu0 0.0
      %3103 = vmatmul.mubr.f32.gmra.mrb[0].mxu0 %v2844
      %v3104 = vpop.f32.mrb[0].mxu0
      %v3105 = vadd.f32 0.0, %v3104
      %v3106 = vpop.f32.mrb[0].mxu0
      %3107 = vmatprep.mubr.f32.mxu0 0.0
      %3108 = vmatmul.mubr.f32.gmra.mrb[0].mxu0 %v2846
      %v3109 = vpop.f32.mrb[0].mxu0
      %v3110 = vadd.f32 0.0, %v3109
      %v3111 = vpop.f32.mrb[0].mxu0
      %3112 = vmatprep.mubr.f32.mxu0 0.0
      %3113 = vmatmul.mubr.f32.gmra.mrb[0].mxu0 %v2848
      %v3114 = vpop.f32.mrb[0].mxu0
      %v3115 = vadd.f32 0.0, %v3114
      %v3116 = vpop.f32.mrb[0].mxu0
      %3117 = vmatprep.mubr.f32.mxu0 0.0
      %3118 = vmatmul.mubr.f32.gmra.mrb[0].mxu0 %v2850
      %v3119 = vpop.f32.mrb[0].mxu0
      %v3120 = vadd.f32 0.0, %v3119
      %v3121 = vpop.f32.mrb[0].mxu0
      %3122 = vmatprep.mubr.f32.mxu0 0.0
      %3123 = vmatmul.mubr.f32.gmra.mrb[0].mxu0 %v2852
      %v3124 = vpop.f32.mrb[0].mxu0
      %v3125 = vadd.f32 0.0, %v3124
      %v3126 = vpop.f32.mrb[0].mxu0
      %3127 = vdwg.mxu0
      %v3131 = vcombine.high %v1195, %v1195
      %v3133 = vunpack.c.l.s4 1983009808
      %v3134 = vunpack.c.0.s8 %v3133
      %v3135 = vlaneseq
      %v3136 = vshrl.u32 %v3135, 7
      %v3137 = vsub.s32 %v3134, %v3136
      %v3138 = vrot.slane %v1195, %v3137
      %v3140 = vunpack.c.l.s4 1983009808
      %v3141 = vunpack.c.0.s8 %v3140
      %v3142 = vlaneseq
      %v3143 = vshrl.u32 %v3142, 7
      %v3144 = vsub.s32 %v3141, %v3143
      %v3145 = vrot.slane %v3131, %v3144
      %v3146 = vcombine.high %v3138, %v3138
      %v3147 = vcombine.high %v3145, %v3145
      %v3148 = vcombine.high %v1196, %v1196
      %v3150 = vunpack.c.l.s4 1983009808
      %v3151 = vunpack.c.0.s8 %v3150
      %v3152 = vlaneseq
      %v3153 = vshrl.u32 %v3152, 7
      %v3154 = vsub.s32 %v3151, %v3153
      %v3155 = vrot.slane %v1196, %v3154
      %v3157 = vunpack.c.l.s4 1983009808
      %v3158 = vunpack.c.0.s8 %v3157
      %v3159 = vlaneseq
      %v3160 = vshrl.u32 %v3159, 7
      %v3161 = vsub.s32 %v3158, %v3160
      %v3162 = vrot.slane %v3148, %v3161
      %v3163 = vcombine.high %v3155, %v3155
      %v3164 = vcombine.high %v3162, %v3162
      %v3166 = vunpack.c.l.s4 1983009808
      %v3167 = vunpack.c.0.s8 %v3166
      %v3168 = vlaneseq
      %v3169 = vshrl.u32 %v3168, 7
      %v3170 = vsub.s32 %v3167, %v3169
      %v3171 = vrot.slane %v1197, %v3170
      %v3172 = vcombine.low %v3138, %v3146
      %v3173 = vcombine.low %v3145, %v3147
      %v3175 = vunpack.c.l.s4 1983009808
      %v3176 = vunpack.c.0.s8 %v3175
      %v3177 = vlaneseq
      %v3178 = vshrl.u32 %v3177, 7
      %v3179 = vsub.s32 %v3176, %v3178
      %v3180 = vrot.slane %v3172, %v3179
      %v3182 = vunpack.c.l.s4 1983009808
      %v3183 = vunpack.c.0.s8 %v3182
      %v3184 = vlaneseq
      %v3185 = vshrl.u32 %v3184, 7
      %v3186 = vsub.s32 %v3183, %v3185
      %v3187 = vrot.slane %v3173, %v3186
      %v3188 = vcombine.low %v3180, %v3187
      %v3189 = vcombine.low %v3155, %v3163
      %v3190 = vcombine.low %v3162, %v3164
      %v3192 = vunpack.c.l.s4 1983009808
      %v3193 = vunpack.c.0.s8 %v3192
      %v3194 = vlaneseq
      %v3195 = vshrl.u32 %v3194, 7
      %v3196 = vsub.s32 %v3193, %v3195
      %v3197 = vrot.slane %v3189, %v3196
      %v3199 = vunpack.c.l.s4 1983009808
      %v3200 = vunpack.c.0.s8 %v3199
      %v3201 = vlaneseq
      %v3202 = vshrl.u32 %v3201, 7
      %v3203 = vsub.s32 %v3200, %v3202
      %v3204 = vrot.slane %v3190, %v3203
      %v3205 = vcombine.low %v3197, %v3204
      %v3206 = vcombine.low %v3171, %v1352
      %v3207 = vcombine.low %v1360, %v1359
      %v3209 = vunpack.c.l.s4 1983009808
      %v3210 = vunpack.c.0.s8 %v3209
      %v3211 = vlaneseq
      %v3212 = vshrl.u32 %v3211, 7
      %v3213 = vsub.s32 %v3210, %v3212
      %v3214 = vrot.slane %v3206, %v3213
      %v3216 = vunpack.c.l.s4 1983009808
      %v3217 = vunpack.c.0.s8 %v3216
      %v3218 = vlaneseq
      %v3219 = vshrl.u32 %v3218, 7
      %v3220 = vsub.s32 %v3217, %v3219
      %v3221 = vrot.slane %v3207, %v3220
      %v3222 = vcombine.low %v3214, %v3221
      %v3223 = vcombine.low %v1361, %v1369
      %v3224 = vcombine.low %v1377, %v1376
      %v3226 = vunpack.c.l.s4 1983009808
      %v3227 = vunpack.c.0.s8 %v3226
      %v3228 = vlaneseq
      %v3229 = vshrl.u32 %v3228, 7
      %v3230 = vsub.s32 %v3227, %v3229
      %v3231 = vrot.slane %v3223, %v3230
      %v3233 = vunpack.c.l.s4 1983009808
      %v3234 = vunpack.c.0.s8 %v3233
      %v3235 = vlaneseq
      %v3236 = vshrl.u32 %v3235, 7
      %v3237 = vsub.s32 %v3234, %v3236
      %v3238 = vrot.slane %v3224, %v3237
      %v3239 = vcombine.low %v3231, %v3238
      %v3240 = vcombine.low %v1378, %v1385
      %v3241 = vcombine.low %v1393, %v1401
      %v3243 = vunpack.c.l.s4 1983009808
      %v3244 = vunpack.c.0.s8 %v3243
      %v3245 = vlaneseq
      %v3246 = vshrl.u32 %v3245, 7
      %v3247 = vsub.s32 %v3244, %v3246
      %v3248 = vrot.slane %v3240, %v3247
      %v3250 = vunpack.c.l.s4 1983009808
      %v3251 = vunpack.c.0.s8 %v3250
      %v3252 = vlaneseq
      %v3253 = vshrl.u32 %v3252, 7
      %v3254 = vsub.s32 %v3251, %v3253
      %v3255 = vrot.slane %v3241, %v3254
      %v3256 = vcombine.low %v3248, %v3255
      %v3257 = vcombine.low %v1400, %v1402
      %v3258 = vcombine.low %v1410, %v1418
      %v3260 = vunpack.c.l.s4 1983009808
      %v3261 = vunpack.c.0.s8 %v3260
      %v3262 = vlaneseq
      %v3263 = vshrl.u32 %v3262, 7
      %v3264 = vsub.s32 %v3261, %v3263
      %v3265 = vrot.slane %v3257, %v3264
      %v3267 = vunpack.c.l.s4 1983009808
      %v3268 = vunpack.c.0.s8 %v3267
      %v3269 = vlaneseq
      %v3270 = vshrl.u32 %v3269, 7
      %v3271 = vsub.s32 %v3268, %v3270
      %v3272 = vrot.slane %v3258, %v3271
      %v3273 = vcombine.low %v3265, %v3272
      %v3274 = vcombine.low %v1417, %v1419
      %v3275 = vcombine.low %v1426, %v1434
      %v3277 = vunpack.c.l.s4 1983009808
      %v3278 = vunpack.c.0.s8 %v3277
      %v3279 = vlaneseq
      %v3280 = vshrl.u32 %v3279, 7
      %v3281 = vsub.s32 %v3278, %v3280
      %v3282 = vrot.slane %v3274, %v3281
      %v3284 = vunpack.c.l.s4 1983009808
      %v3285 = vunpack.c.0.s8 %v3284
      %v3286 = vlaneseq
      %v3287 = vshrl.u32 %v3286, 7
      %v3288 = vsub.s32 %v3285, %v3287
      %v3289 = vrot.slane %v3275, %v3288
      %v3290 = vcombine.low %v3282, %v3289
      %v3291 = vcombine.low %v1442, %v1441
      %v3292 = vcombine.low %v1443, %v1451
      %v3294 = vunpack.c.l.s4 1983009808
      %v3295 = vunpack.c.0.s8 %v3294
      %v3296 = vlaneseq
      %v3297 = vshrl.u32 %v3296, 7
      %v3298 = vsub.s32 %v3295, %v3297
      %v3299 = vrot.slane %v3291, %v3298
      %v3301 = vunpack.c.l.s4 1983009808
      %v3302 = vunpack.c.0.s8 %v3301
      %v3303 = vlaneseq
      %v3304 = vshrl.u32 %v3303, 7
      %v3305 = vsub.s32 %v3302, %v3304
      %v3306 = vrot.slane %v3292, %v3305
      %v3307 = vcombine.low %v3299, %v3306
      %v3308 = vcombine.low %v1459, %v1458
      %v3309 = vcombine.low %v1460, %v1467
      %v3311 = vunpack.c.l.s4 1983009808
      %v3312 = vunpack.c.0.s8 %v3311
      %v3313 = vlaneseq
      %v3314 = vshrl.u32 %v3313, 7
      %v3315 = vsub.s32 %v3312, %v3314
      %v3316 = vrot.slane %v3308, %v3315
      %v3318 = vunpack.c.l.s4 1983009808
      %v3319 = vunpack.c.0.s8 %v3318
      %v3320 = vlaneseq
      %v3321 = vshrl.u32 %v3320, 7
      %v3322 = vsub.s32 %v3319, %v3321
      %v3323 = vrot.slane %v3309, %v3322
      %v3324 = vcombine.low %v3316, %v3323
      %v3325 = vcombine.low %v1475, %v1483
      %v3326 = vcombine.low %v1482, %v1484
      %v3328 = vunpack.c.l.s4 1983009808
      %v3329 = vunpack.c.0.s8 %v3328
      %v3330 = vlaneseq
      %v3331 = vshrl.u32 %v3330, 7
      %v3332 = vsub.s32 %v3329, %v3331
      %v3333 = vrot.slane %v3325, %v3332
      %v3335 = vunpack.c.l.s4 1983009808
      %v3336 = vunpack.c.0.s8 %v3335
      %v3337 = vlaneseq
      %v3338 = vshrl.u32 %v3337, 7
      %v3339 = vsub.s32 %v3336, %v3338
      %v3340 = vrot.slane %v3326, %v3339
      %v3341 = vcombine.low %v3333, %v3340
      %v3342 = vcombine.low %v1492, %v1500
      %v3343 = vcombine.low %v1499, %v1501
      %v3345 = vunpack.c.l.s4 1983009808
      %v3346 = vunpack.c.0.s8 %v3345
      %v3347 = vlaneseq
      %v3348 = vshrl.u32 %v3347, 7
      %v3349 = vsub.s32 %v3346, %v3348
      %v3350 = vrot.slane %v3342, %v3349
      %v3352 = vunpack.c.l.s4 1983009808
      %v3353 = vunpack.c.0.s8 %v3352
      %v3354 = vlaneseq
      %v3355 = vshrl.u32 %v3354, 7
      %v3356 = vsub.s32 %v3353, %v3355
      %v3357 = vrot.slane %v3343, %v3356
      %v3358 = vcombine.low %v3350, %v3357
      %v3359 = vcombine.low %v1508, %v1516
      %v3360 = vcombine.low %v1524, %v1523
      %v3362 = vunpack.c.l.s4 1983009808
      %v3363 = vunpack.c.0.s8 %v3362
      %v3364 = vlaneseq
      %v3365 = vshrl.u32 %v3364, 7
      %v3366 = vsub.s32 %v3363, %v3365
      %v3367 = vrot.slane %v3359, %v3366
      %v3369 = vunpack.c.l.s4 1983009808
      %v3370 = vunpack.c.0.s8 %v3369
      %v3371 = vlaneseq
      %v3372 = vshrl.u32 %v3371, 7
      %v3373 = vsub.s32 %v3370, %v3372
      %v3374 = vrot.slane %v3360, %v3373
      %v3375 = vcombine.low %v3367, %v3374
      %v3376 = vcombine.low %v1525, %v1533
      %v3377 = vcombine.low %v1541, %v1540
      %v3379 = vunpack.c.l.s4 1983009808
      %v3380 = vunpack.c.0.s8 %v3379
      %v3381 = vlaneseq
      %v3382 = vshrl.u32 %v3381, 7
      %v3383 = vsub.s32 %v3380, %v3382
      %v3384 = vrot.slane %v3376, %v3383
      %v3386 = vunpack.c.l.s4 1983009808
      %v3387 = vunpack.c.0.s8 %v3386
      %v3388 = vlaneseq
      %v3389 = vshrl.u32 %v3388, 7
      %v3390 = vsub.s32 %v3387, %v3389
      %v3391 = vrot.slane %v3377, %v3390
      %v3392 = vcombine.low %v3384, %v3391
      %v3393 = vcombine.low %v1542, %v1549
      %v3394 = vcombine.low %v1557, %v1565
      %v3396 = vunpack.c.l.s4 1983009808
      %v3397 = vunpack.c.0.s8 %v3396
      %v3398 = vlaneseq
      %v3399 = vshrl.u32 %v3398, 7
      %v3400 = vsub.s32 %v3397, %v3399
      %v3401 = vrot.slane %v3393, %v3400
      %v3403 = vunpack.c.l.s4 1983009808
      %v3404 = vunpack.c.0.s8 %v3403
      %v3405 = vlaneseq
      %v3406 = vshrl.u32 %v3405, 7
      %v3407 = vsub.s32 %v3404, %v3406
      %v3408 = vrot.slane %v3394, %v3407
      %v3409 = vcombine.low %v3401, %v3408
      %v3410 = vcombine.low %v1564, %v1566
      %v3411 = vcombine.low %v1574, %v1582
      %v3413 = vunpack.c.l.s4 1983009808
      %v3414 = vunpack.c.0.s8 %v3413
      %v3415 = vlaneseq
      %v3416 = vshrl.u32 %v3415, 7
      %v3417 = vsub.s32 %v3414, %v3416
      %v3418 = vrot.slane %v3410, %v3417
      %v3420 = vunpack.c.l.s4 1983009808
      %v3421 = vunpack.c.0.s8 %v3420
      %v3422 = vlaneseq
      %v3423 = vshrl.u32 %v3422, 7
      %v3424 = vsub.s32 %v3421, %v3423
      %v3425 = vrot.slane %v3411, %v3424
      %v3426 = vcombine.low %v3418, %v3425
      %v3427 = vcombine.low %v1581, %v1583
      %v3428 = vcombine.low %v1590, %v1598
      %v3430 = vunpack.c.l.s4 1983009808
      %v3431 = vunpack.c.0.s8 %v3430
      %v3432 = vlaneseq
      %v3433 = vshrl.u32 %v3432, 7
      %v3434 = vsub.s32 %v3431, %v3433
      %v3435 = vrot.slane %v3427, %v3434
      %v3437 = vunpack.c.l.s4 1983009808
      %v3438 = vunpack.c.0.s8 %v3437
      %v3439 = vlaneseq
      %v3440 = vshrl.u32 %v3439, 7
      %v3441 = vsub.s32 %v3438, %v3440
      %v3442 = vrot.slane %v3428, %v3441
      %v3443 = vcombine.low %v3435, %v3442
      %v3444 = vcombine.low %v1606, %v1605
      %v3445 = vcombine.low %v1607, %v1615
      %v3447 = vunpack.c.l.s4 1983009808
      %v3448 = vunpack.c.0.s8 %v3447
      %v3449 = vlaneseq
      %v3450 = vshrl.u32 %v3449, 7
      %v3451 = vsub.s32 %v3448, %v3450
      %v3452 = vrot.slane %v3444, %v3451
      %v3454 = vunpack.c.l.s4 1983009808
      %v3455 = vunpack.c.0.s8 %v3454
      %v3456 = vlaneseq
      %v3457 = vshrl.u32 %v3456, 7
      %v3458 = vsub.s32 %v3455, %v3457
      %v3459 = vrot.slane %v3445, %v3458
      %v3460 = vcombine.low %v3452, %v3459
      %v3461 = vcombine.low %v1623, %v1622
      %v3462 = vcombine.low %v1624, %v1631
      %v3464 = vunpack.c.l.s4 1983009808
      %v3465 = vunpack.c.0.s8 %v3464
      %v3466 = vlaneseq
      %v3467 = vshrl.u32 %v3466, 7
      %v3468 = vsub.s32 %v3465, %v3467
      %v3469 = vrot.slane %v3461, %v3468
      %v3471 = vunpack.c.l.s4 1983009808
      %v3472 = vunpack.c.0.s8 %v3471
      %v3473 = vlaneseq
      %v3474 = vshrl.u32 %v3473, 7
      %v3475 = vsub.s32 %v3472, %v3474
      %v3476 = vrot.slane %v3462, %v3475
      %v3477 = vcombine.low %v3469, %v3476
      %v3478 = vcombine.low %v1639, %v1647
      %v3479 = vcombine.low %v1646, %v1648
      %v3481 = vunpack.c.l.s4 1983009808
      %v3482 = vunpack.c.0.s8 %v3481
      %v3483 = vlaneseq
      %v3484 = vshrl.u32 %v3483, 7
      %v3485 = vsub.s32 %v3482, %v3484
      %v3486 = vrot.slane %v3478, %v3485
      %v3488 = vunpack.c.l.s4 1983009808
      %v3489 = vunpack.c.0.s8 %v3488
      %v3490 = vlaneseq
      %v3491 = vshrl.u32 %v3490, 7
      %v3492 = vsub.s32 %v3489, %v3491
      %v3493 = vrot.slane %v3479, %v3492
      %v3494 = vcombine.low %v3486, %v3493
      %v3495 = vcombine.low %v1656, %v1664
      %v3496 = vcombine.low %v1663, %v1665
      %v3498 = vunpack.c.l.s4 1983009808
      %v3499 = vunpack.c.0.s8 %v3498
      %v3500 = vlaneseq
      %v3501 = vshrl.u32 %v3500, 7
      %v3502 = vsub.s32 %v3499, %v3501
      %v3503 = vrot.slane %v3495, %v3502
      %v3505 = vunpack.c.l.s4 1983009808
      %v3506 = vunpack.c.0.s8 %v3505
      %v3507 = vlaneseq
      %v3508 = vshrl.u32 %v3507, 7
      %v3509 = vsub.s32 %v3506, %v3508
      %v3510 = vrot.slane %v3496, %v3509
      %v3511 = vcombine.low %v3503, %v3510
      %v3512 = vcombine.low %v1672, %v1680
      %v3513 = vcombine.low %v1688, %v1687
      %v3515 = vunpack.c.l.s4 1983009808
      %v3516 = vunpack.c.0.s8 %v3515
      %v3517 = vlaneseq
      %v3518 = vshrl.u32 %v3517, 7
      %v3519 = vsub.s32 %v3516, %v3518
      %v3520 = vrot.slane %v3512, %v3519
      %v3522 = vunpack.c.l.s4 1983009808
      %v3523 = vunpack.c.0.s8 %v3522
      %v3524 = vlaneseq
      %v3525 = vshrl.u32 %v3524, 7
      %v3526 = vsub.s32 %v3523, %v3525
      %v3527 = vrot.slane %v3513, %v3526
      %v3528 = vcombine.low %v3520, %v3527
      %v3529 = vcombine.low %v1689, %v1697
      %v3530 = vcombine.low %v1705, %v1704
      %v3532 = vunpack.c.l.s4 1983009808
      %v3533 = vunpack.c.0.s8 %v3532
      %v3534 = vlaneseq
      %v3535 = vshrl.u32 %v3534, 7
      %v3536 = vsub.s32 %v3533, %v3535
      %v3537 = vrot.slane %v3529, %v3536
      %v3539 = vunpack.c.l.s4 1983009808
      %v3540 = vunpack.c.0.s8 %v3539
      %v3541 = vlaneseq
      %v3542 = vshrl.u32 %v3541, 7
      %v3543 = vsub.s32 %v3540, %v3542
      %v3544 = vrot.slane %v3530, %v3543
      %v3545 = vcombine.low %v3537, %v3544
      %v3546 = vcombine.low %v1706, %v1713
      %v3547 = vcombine.low %v1721, %v1729
      %v3549 = vunpack.c.l.s4 1983009808
      %v3550 = vunpack.c.0.s8 %v3549
      %v3551 = vlaneseq
      %v3552 = vshrl.u32 %v3551, 7
      %v3553 = vsub.s32 %v3550, %v3552
      %v3554 = vrot.slane %v3546, %v3553
      %v3556 = vunpack.c.l.s4 1983009808
      %v3557 = vunpack.c.0.s8 %v3556
      %v3558 = vlaneseq
      %v3559 = vshrl.u32 %v3558, 7
      %v3560 = vsub.s32 %v3557, %v3559
      %v3561 = vrot.slane %v3547, %v3560
      %v3562 = vcombine.low %v3554, %v3561
      %v3563 = vcombine.low %v1728, %v1730
      %v3564 = vcombine.low %v1738, %v1746
      %v3566 = vunpack.c.l.s4 1983009808
      %v3567 = vunpack.c.0.s8 %v3566
      %v3568 = vlaneseq
      %v3569 = vshrl.u32 %v3568, 7
      %v3570 = vsub.s32 %v3567, %v3569
      %v3571 = vrot.slane %v3563, %v3570
      %v3573 = vunpack.c.l.s4 1983009808
      %v3574 = vunpack.c.0.s8 %v3573
      %v3575 = vlaneseq
      %v3576 = vshrl.u32 %v3575, 7
      %v3577 = vsub.s32 %v3574, %v3576
      %v3578 = vrot.slane %v3564, %v3577
      %v3579 = vcombine.low %v3571, %v3578
      %v3580 = vcombine.low %v1745, %v1747
      %v3581 = vcombine.low %v1754, %v1762
      %v3583 = vunpack.c.l.s4 1983009808
      %v3584 = vunpack.c.0.s8 %v3583
      %v3585 = vlaneseq
      %v3586 = vshrl.u32 %v3585, 7
      %v3587 = vsub.s32 %v3584, %v3586
      %v3588 = vrot.slane %v3580, %v3587
      %v3590 = vunpack.c.l.s4 1983009808
      %v3591 = vunpack.c.0.s8 %v3590
      %v3592 = vlaneseq
      %v3593 = vshrl.u32 %v3592, 7
      %v3594 = vsub.s32 %v3591, %v3593
      %v3595 = vrot.slane %v3581, %v3594
      %v3596 = vcombine.low %v3588, %v3595
      %v3597 = vcombine.low %v1770, %v1769
      %v3598 = vcombine.low %v1771, %v1779
      %v3600 = vunpack.c.l.s4 1983009808
      %v3601 = vunpack.c.0.s8 %v3600
      %v3602 = vlaneseq
      %v3603 = vshrl.u32 %v3602, 7
      %v3604 = vsub.s32 %v3601, %v3603
      %v3605 = vrot.slane %v3597, %v3604
      %v3607 = vunpack.c.l.s4 1983009808
      %v3608 = vunpack.c.0.s8 %v3607
      %v3609 = vlaneseq
      %v3610 = vshrl.u32 %v3609, 7
      %v3611 = vsub.s32 %v3608, %v3610
      %v3612 = vrot.slane %v3598, %v3611
      %v3613 = vcombine.low %v3605, %v3612
      %v3614 = vcombine.low %v1787, %v1786
      %v3615 = vcombine.low %v1788, %v1795
      %v3617 = vunpack.c.l.s4 1983009808
      %v3618 = vunpack.c.0.s8 %v3617
      %v3619 = vlaneseq
      %v3620 = vshrl.u32 %v3619, 7
      %v3621 = vsub.s32 %v3618, %v3620
      %v3622 = vrot.slane %v3614, %v3621
      %v3624 = vunpack.c.l.s4 1983009808
      %v3625 = vunpack.c.0.s8 %v3624
      %v3626 = vlaneseq
      %v3627 = vshrl.u32 %v3626, 7
      %v3628 = vsub.s32 %v3625, %v3627
      %v3629 = vrot.slane %v3615, %v3628
      %v3630 = vcombine.low %v3622, %v3629
      %v3631 = vcombine.low %v1803, %v1811
      %v3632 = vcombine.low %v1810, %v1812
      %v3634 = vunpack.c.l.s4 1983009808
      %v3635 = vunpack.c.0.s8 %v3634
      %v3636 = vlaneseq
      %v3637 = vshrl.u32 %v3636, 7
      %v3638 = vsub.s32 %v3635, %v3637
      %v3639 = vrot.slane %v3631, %v3638
      %v3641 = vunpack.c.l.s4 1983009808
      %v3642 = vunpack.c.0.s8 %v3641
      %v3643 = vlaneseq
      %v3644 = vshrl.u32 %v3643, 7
      %v3645 = vsub.s32 %v3642, %v3644
      %v3646 = vrot.slane %v3632, %v3645
      %v3647 = vcombine.low %v3639, %v3646
      %v3648 = vcombine.low %v1820, %v1828
      %v3649 = vcombine.low %v1827, %v1829
      %v3651 = vunpack.c.l.s4 1983009808
      %v3652 = vunpack.c.0.s8 %v3651
      %v3653 = vlaneseq
      %v3654 = vshrl.u32 %v3653, 7
      %v3655 = vsub.s32 %v3652, %v3654
      %v3656 = vrot.slane %v3648, %v3655
      %v3658 = vunpack.c.l.s4 1983009808
      %v3659 = vunpack.c.0.s8 %v3658
      %v3660 = vlaneseq
      %v3661 = vshrl.u32 %v3660, 7
      %v3662 = vsub.s32 %v3659, %v3661
      %v3663 = vrot.slane %v3649, %v3662
      %v3664 = vcombine.low %v3656, %v3663
      %v3665 = vcombine.low %v1836, %v1844
      %v3666 = vcombine.low %v1852, %v1851
      %v3668 = vunpack.c.l.s4 1983009808
      %v3669 = vunpack.c.0.s8 %v3668
      %v3670 = vlaneseq
      %v3671 = vshrl.u32 %v3670, 7
      %v3672 = vsub.s32 %v3669, %v3671
      %v3673 = vrot.slane %v3665, %v3672
      %v3675 = vunpack.c.l.s4 1983009808
      %v3676 = vunpack.c.0.s8 %v3675
      %v3677 = vlaneseq
      %v3678 = vshrl.u32 %v3677, 7
      %v3679 = vsub.s32 %v3676, %v3678
      %v3680 = vrot.slane %v3666, %v3679
      %v3681 = vcombine.low %v3673, %v3680
      %v3682 = vcombine.low %v1853, %v1861
      %v3683 = vcombine.low %v1869, %v1868
      %v3685 = vunpack.c.l.s4 1983009808
      %v3686 = vunpack.c.0.s8 %v3685
      %v3687 = vlaneseq
      %v3688 = vshrl.u32 %v3687, 7
      %v3689 = vsub.s32 %v3686, %v3688
      %v3690 = vrot.slane %v3682, %v3689
      %v3692 = vunpack.c.l.s4 1983009808
      %v3693 = vunpack.c.0.s8 %v3692
      %v3694 = vlaneseq
      %v3695 = vshrl.u32 %v3694, 7
      %v3696 = vsub.s32 %v3693, %v3695
      %v3697 = vrot.slane %v3683, %v3696
      %v3698 = vcombine.low %v3690, %v3697
      %v3699 = vcombine.low %v1870, %v1877
      %v3700 = vcombine.low %v1885, %v1893
      %v3702 = vunpack.c.l.s4 1983009808
      %v3703 = vunpack.c.0.s8 %v3702
      %v3704 = vlaneseq
      %v3705 = vshrl.u32 %v3704, 7
      %v3706 = vsub.s32 %v3703, %v3705
      %v3707 = vrot.slane %v3699, %v3706
      %v3709 = vunpack.c.l.s4 1983009808
      %v3710 = vunpack.c.0.s8 %v3709
      %v3711 = vlaneseq
      %v3712 = vshrl.u32 %v3711, 7
      %v3713 = vsub.s32 %v3710, %v3712
      %v3714 = vrot.slane %v3700, %v3713
      %v3715 = vcombine.low %v3707, %v3714
      %v3716 = vcombine.low %v1892, %v1894
      %v3717 = vcombine.low %v1902, %v1910
      %v3719 = vunpack.c.l.s4 1983009808
      %v3720 = vunpack.c.0.s8 %v3719
      %v3721 = vlaneseq
      %v3722 = vshrl.u32 %v3721, 7
      %v3723 = vsub.s32 %v3720, %v3722
      %v3724 = vrot.slane %v3716, %v3723
      %v3726 = vunpack.c.l.s4 1983009808
      %v3727 = vunpack.c.0.s8 %v3726
      %v3728 = vlaneseq
      %v3729 = vshrl.u32 %v3728, 7
      %v3730 = vsub.s32 %v3727, %v3729
      %v3731 = vrot.slane %v3717, %v3730
      %v3732 = vcombine.low %v3724, %v3731
      %v3733 = vcombine.low %v1909, %v1911
      %v3734 = vcombine.low %v1918, %v1926
      %v3736 = vunpack.c.l.s4 1983009808
      %v3737 = vunpack.c.0.s8 %v3736
      %v3738 = vlaneseq
      %v3739 = vshrl.u32 %v3738, 7
      %v3740 = vsub.s32 %v3737, %v3739
      %v3741 = vrot.slane %v3733, %v3740
      %v3743 = vunpack.c.l.s4 1983009808
      %v3744 = vunpack.c.0.s8 %v3743
      %v3745 = vlaneseq
      %v3746 = vshrl.u32 %v3745, 7
      %v3747 = vsub.s32 %v3744, %v3746
      %v3748 = vrot.slane %v3734, %v3747
      %v3749 = vcombine.low %v3741, %v3748
      %v3750 = vcombine.low %v1934, %v1933
      %v3751 = vcombine.low %v1935, %v1943
      %v3753 = vunpack.c.l.s4 1983009808
      %v3754 = vunpack.c.0.s8 %v3753
      %v3755 = vlaneseq
      %v3756 = vshrl.u32 %v3755, 7
      %v3757 = vsub.s32 %v3754, %v3756
      %v3758 = vrot.slane %v3750, %v3757
      %v3760 = vunpack.c.l.s4 1983009808
      %v3761 = vunpack.c.0.s8 %v3760
      %v3762 = vlaneseq
      %v3763 = vshrl.u32 %v3762, 7
      %v3764 = vsub.s32 %v3761, %v3763
      %v3765 = vrot.slane %v3751, %v3764
      %v3766 = vcombine.low %v3758, %v3765
      %v3767 = vcombine.low %v1951, %v1950
      %v3768 = vcombine.low %v1952, %v1959
      %v3770 = vunpack.c.l.s4 1983009808
      %v3771 = vunpack.c.0.s8 %v3770
      %v3772 = vlaneseq
      %v3773 = vshrl.u32 %v3772, 7
      %v3774 = vsub.s32 %v3771, %v3773
      %v3775 = vrot.slane %v3767, %v3774
      %v3777 = vunpack.c.l.s4 1983009808
      %v3778 = vunpack.c.0.s8 %v3777
      %v3779 = vlaneseq
      %v3780 = vshrl.u32 %v3779, 7
      %v3781 = vsub.s32 %v3778, %v3780
      %v3782 = vrot.slane %v3768, %v3781
      %v3783 = vcombine.low %v3775, %v3782
      %v3784 = vcombine.low %v1967, %v1975
      %v3785 = vcombine.low %v1974, %v1976
      %v3787 = vunpack.c.l.s4 1983009808
      %v3788 = vunpack.c.0.s8 %v3787
      %v3789 = vlaneseq
      %v3790 = vshrl.u32 %v3789, 7
      %v3791 = vsub.s32 %v3788, %v3790
      %v3792 = vrot.slane %v3784, %v3791
      %v3794 = vunpack.c.l.s4 1983009808
      %v3795 = vunpack.c.0.s8 %v3794
      %v3796 = vlaneseq
      %v3797 = vshrl.u32 %v3796, 7
      %v3798 = vsub.s32 %v3795, %v3797
      %v3799 = vrot.slane %v3785, %v3798
      %v3800 = vcombine.low %v3792, %v3799
      %v3801 = vcombine.low %v1984, %v1992
      %v3802 = vcombine.low %v1991, %v1993
      %v3804 = vunpack.c.l.s4 1983009808
      %v3805 = vunpack.c.0.s8 %v3804
      %v3806 = vlaneseq
      %v3807 = vshrl.u32 %v3806, 7
      %v3808 = vsub.s32 %v3805, %v3807
      %v3809 = vrot.slane %v3801, %v3808
      %v3811 = vunpack.c.l.s4 1983009808
      %v3812 = vunpack.c.0.s8 %v3811
      %v3813 = vlaneseq
      %v3814 = vshrl.u32 %v3813, 7
      %v3815 = vsub.s32 %v3812, %v3814
      %v3816 = vrot.slane %v3802, %v3815
      %v3817 = vcombine.low %v3809, %v3816
      %v3818 = vcombine.low %v2000, %v2008
      %v3819 = vcombine.low %v2016, %v2015
      %v3821 = vunpack.c.l.s4 1983009808
      %v3822 = vunpack.c.0.s8 %v3821
      %v3823 = vlaneseq
      %v3824 = vshrl.u32 %v3823, 7
      %v3825 = vsub.s32 %v3822, %v3824
      %v3826 = vrot.slane %v3818, %v3825
      %v3828 = vunpack.c.l.s4 1983009808
      %v3829 = vunpack.c.0.s8 %v3828
      %v3830 = vlaneseq
      %v3831 = vshrl.u32 %v3830, 7
      %v3832 = vsub.s32 %v3829, %v3831
      %v3833 = vrot.slane %v3819, %v3832
      %v3834 = vcombine.low %v3826, %v3833
      %v3835 = vcombine.low %v2017, %v2025
      %v3836 = vcombine.low %v2033, %v2032
      %v3838 = vunpack.c.l.s4 1983009808
      %v3839 = vunpack.c.0.s8 %v3838
      %v3840 = vlaneseq
      %v3841 = vshrl.u32 %v3840, 7
      %v3842 = vsub.s32 %v3839, %v3841
      %v3843 = vrot.slane %v3835, %v3842
      %v3845 = vunpack.c.l.s4 1983009808
      %v3846 = vunpack.c.0.s8 %v3845
      %v3847 = vlaneseq
      %v3848 = vshrl.u32 %v3847, 7
      %v3849 = vsub.s32 %v3846, %v3848
      %v3850 = vrot.slane %v3836, %v3849
      %v3851 = vcombine.low %v3843, %v3850
      %v3852 = vcombine.low %v2034, %v2041
      %v3854 = vunpack.c.l.s4 1983009808
      %v3855 = vunpack.c.0.s8 %v3854
      %v3856 = vlaneseq
      %v3857 = vshrl.u32 %v3856, 7
      %v3858 = vsub.s32 %v3855, %v3857
      %v3859 = vrot.slane %v3852, %v3858
      %v3860 = vsel %vm2771, %v3188, 0
      %v3862 = vsel %vm2771, %v3205, 0
      %v3864 = vsel %vm2771, %v3222, 0
      %v3866 = vsel %vm2771, %v3239, 0
      %v3868 = vsel %vm2771, %v3256, 0
      %v3870 = vsel %vm2771, %v3273, 0
      %v3872 = vsel %vm2771, %v3290, 0
      %v3874 = vsel %vm2771, %v3307, 0
      %v3876 = vsel %vm2771, %v3324, 0
      %v3878 = vsel %vm2771, %v3341, 0
      %v3880 = vsel %vm2771, %v3358, 0
      %v3882 = vsel %vm2771, %v3375, 0
      %v3884 = vsel %vm2771, %v3392, 0
      %v3886 = vsel %vm2771, %v3409, 0
      %v3888 = vsel %vm2771, %v3426, 0
      %v3890 = vsel %vm2771, %v3443, 0
      %v3892 = vsel %vm2771, %v3460, 0
      %v3894 = vsel %vm2771, %v3477, 0
      %v3896 = vsel %vm2771, %v3494, 0
      %v3898 = vsel %vm2771, %v3511, 0
      %v3900 = vsel %vm2771, %v3528, 0
      %v3902 = vsel %vm2771, %v3545, 0
      %v3904 = vsel %vm2771, %v3562, 0
      %v3906 = vsel %vm2771, %v3579, 0
      %v3908 = vsel %vm2771, %v3596, 0
      %v3910 = vsel %vm2771, %v3613, 0
      %v3912 = vsel %vm2771, %v3630, 0
      %v3914 = vsel %vm2771, %v3647, 0
      %v3916 = vsel %vm2771, %v3664, 0
      %v3918 = vsel %vm2771, %v3681, 0
      %v3920 = vsel %vm2771, %v3698, 0
      %v3922 = vsel %vm2771, %v3715, 0
      %v3924 = vsel %vm2771, %v3732, 0
      %v3926 = vsel %vm2771, %v3749, 0
      %v3928 = vsel %vm2771, %v3766, 0
      %v3930 = vsel %vm2771, %v3783, 0
      %v3932 = vsel %vm2771, %v3800, 0
      %v3934 = vsel %vm2771, %v3817, 0
      %v3936 = vsel %vm2771, %v3834, 0
      %v3938 = vsel %vm2771, %v3851, 0
      %v3940 = vsel %vm2771, %v3859, 0
      %v3943 = vsel %vm2854, %v1250, 0
      %3945 = vmatprep.subr.mxu0 0.0
      %3946 = vmatpush1.msra.mxu0 %v1249
      %3947 = vmatprep.subr.mxu0 0.0
      %3948 = vmatpush1.msra.mxu0 %v3943
      %3949 = vmatprep.subr.mxu0 0.0
      %3950 = vmatpush1.msra.mxu0 0.0
      %3951 = vmatprep.subr.mxu0 0.0
      %3952 = vmatpush1.msra.mxu0 0.0
      %3953 = vmatprep.subr.mxu0 0.0
      %3954 = vmatpush1.msra.mxu0 0.0
      %3955 = vmatprep.subr.mxu0 0.0
      %3956 = vmatpush1.msra.mxu0 0.0
      %3957 = vmatprep.subr.mxu0 0.0
      %3958 = vmatpush1.msra.mxu0 0.0
      %3959 = vmatprep.subr.mxu0 0.0
      %3960 = vmatpush1.msra.mxu0 0.0
      %3961 = vmatprep.subr.mxu0 0.0
      %3962 = vmatpush1.msra.mxu0 0.0
      %3963 = vmatprep.subr.mxu0 0.0
      %3964 = vmatpush1.msra.mxu0 0.0
      %3965 = vmatprep.subr.mxu0 0.0
      %3966 = vmatpush1.msra.mxu0 0.0
      %3967 = vmatprep.subr.mxu0 0.0
      %3968 = vmatpush1.msra.mxu0 0.0
      %3969 = vmatprep.subr.mxu0 0.0
      %3970 = vmatpush1.msra.mxu0 0.0
      %3971 = vmatprep.subr.mxu0 0.0
      %3972 = vmatpush1.msra.mxu0 0.0
      %3973 = vmatprep.subr.mxu0 0.0
      %3974 = vmatpush1.msra.mxu0 0.0
      %3975 = vmatprep.subr.mxu0 0.0
      %3976 = vmatpush1.msra.mxu0 0.0
      %3977 = vmatprep.subr.mxu0 0.0
      %3978 = vmatpush1.msra.mxu0 0.0
      %3979 = vmatprep.subr.mxu0 0.0
      %3980 = vmatpush1.msra.mxu0 0.0
      %3981 = vmatprep.subr.mxu0 0.0
      %3982 = vmatpush1.msra.mxu0 0.0
      %3983 = vmatprep.subr.mxu0 0.0
      %3984 = vmatpush1.msra.mxu0 0.0
      %3985 = vmatprep.subr.mxu0 0.0
      %3986 = vmatpush1.msra.mxu0 0.0
      %3987 = vmatprep.subr.mxu0 0.0
      %3988 = vmatpush1.msra.mxu0 0.0
      %3989 = vmatprep.subr.mxu0 0.0
      %3990 = vmatpush1.msra.mxu0 0.0
      %3991 = vmatprep.subr.mxu0 0.0
      %3992 = vmatpush1.msra.mxu0 0.0
      %3993 = vmatprep.subr.mxu0 0.0
      %3994 = vmatpush1.msra.mxu0 0.0
      %3995 = vmatprep.subr.mxu0 0.0
      %3996 = vmatpush1.msra.mxu0 0.0
      %3997 = vmatprep.subr.mxu0 0.0
      %3998 = vmatpush1.msra.mxu0 0.0
      %3999 = vmatprep.subr.mxu0 0.0
      %4000 = vmatpush1.msra.mxu0 0.0
      %4001 = vmatprep.subr.mxu0 0.0
      %4002 = vmatpush1.msra.mxu0 0.0
      %4003 = vmatprep.subr.mxu0 0.0
      %4004 = vmatpush1.msra.mxu0 0.0
      %4005 = vmatprep.subr.mxu0 0.0
      %4006 = vmatpush1.msra.mxu0 0.0
      %4007 = vmatprep.subr.mxu0 0.0
      %4008 = vmatpush1.msra.mxu0 0.0
      %4009 = vmatprep.mubr.f32.mxu0 0.0
      %4010 = vmatmul.mubr.f32.gmra.mrb[0].mxu0 %v3860
      %v4011 = vpop.f32.mrb[0].mxu0
      %v4012 = vadd.f32 %v2925, %v4011
      %v4013 = vpop.f32.mrb[0].mxu0
      %4014 = vmatprep.mubr.f32.mxu0 0.0
      %4015 = vmatmul.mubr.f32.gmra.mrb[0].mxu0 %v3862
      %v4016 = vpop.f32.mrb[0].mxu0
      %v4017 = vadd.f32 %v2930, %v4016
      %v4018 = vpop.f32.mrb[0].mxu0
      %4019 = vmatprep.mubr.f32.mxu0 0.0
      %4020 = vmatmul.mubr.f32.gmra.mrb[0].mxu0 %v3864
      %v4021 = vpop.f32.mrb[0].mxu0
      %v4022 = vadd.f32 %v2935, %v4021
      %v4023 = vpop.f32.mrb[0].mxu0
      %4024 = vmatprep.mubr.f32.mxu0 0.0
      %4025 = vmatmul.mubr.f32.gmra.mrb[0].mxu0 %v3866
      %v4026 = vpop.f32.mrb[0].mxu0
      %v4027 = vadd.f32 %v2940, %v4026
      %v4028 = vpop.f32.mrb[0].mxu0
      %4029 = vmatprep.mubr.f32.mxu0 0.0
      %4030 = vmatmul.mubr.f32.gmra.mrb[0].mxu0 %v3868
      %v4031 = vpop.f32.mrb[0].mxu0
      %v4032 = vadd.f32 %v2945, %v4031
      %v4033 = vpop.f32.mrb[0].mxu0
      %4034 = vmatprep.mubr.f32.mxu0 0.0
      %4035 = vmatmul.mubr.f32.gmra.mrb[0].mxu0 %v3870
      %v4036 = vpop.f32.mrb[0].mxu0
      %v4037 = vadd.f32 %v2950, %v4036
      %v4038 = vpop.f32.mrb[0].mxu0
      %4039 = vmatprep.mubr.f32.mxu0 0.0
      %4040 = vmatmul.mubr.f32.gmra.mrb[0].mxu0 %v3872
      %v4041 = vpop.f32.mrb[0].mxu0
      %v4042 = vadd.f32 %v2955, %v4041
      %v4043 = vpop.f32.mrb[0].mxu0
      %4044 = vmatprep.mubr.f32.mxu0 0.0
      %4045 = vmatmul.mubr.f32.gmra.mrb[0].mxu0 %v3874
      %v4046 = vpop.f32.mrb[0].mxu0
      %v4047 = vadd.f32 %v2960, %v4046
      %v4048 = vpop.f32.mrb[0].mxu0
      %4049 = vmatprep.mubr.f32.mxu0 0.0
      %4050 = vmatmul.mubr.f32.gmra.mrb[0].mxu0 %v3876
      %v4051 = vpop.f32.mrb[0].mxu0
      %v4052 = vadd.f32 %v2965, %v4051
      %v4053 = vpop.f32.mrb[0].mxu0
      %4054 = vmatprep.mubr.f32.mxu0 0.0
      %4055 = vmatmul.mubr.f32.gmra.mrb[0].mxu0 %v3878
      %v4056 = vpop.f32.mrb[0].mxu0
      %v4057 = vadd.f32 %v2970, %v4056
      %v4058 = vpop.f32.mrb[0].mxu0
      %4059 = vmatprep.mubr.f32.mxu0 0.0
      %4060 = vmatmul.mubr.f32.gmra.mrb[0].mxu0 %v3880
      %v4061 = vpop.f32.mrb[0].mxu0
      %v4062 = vadd.f32 %v2975, %v4061
      %v4063 = vpop.f32.mrb[0].mxu0
      %4064 = vmatprep.mubr.f32.mxu0 0.0
      %4065 = vmatmul.mubr.f32.gmra.mrb[0].mxu0 %v3882
      %v4066 = vpop.f32.mrb[0].mxu0
      %v4067 = vadd.f32 %v2980, %v4066
      %v4068 = vpop.f32.mrb[0].mxu0
      %4069 = vmatprep.mubr.f32.mxu0 0.0
      %4070 = vmatmul.mubr.f32.gmra.mrb[0].mxu0 %v3884
      %v4071 = vpop.f32.mrb[0].mxu0
      %v4072 = vadd.f32 %v2985, %v4071
      %v4073 = vpop.f32.mrb[0].mxu0
      %4074 = vmatprep.mubr.f32.mxu0 0.0
      %4075 = vmatmul.mubr.f32.gmra.mrb[0].mxu0 %v3886
      %v4076 = vpop.f32.mrb[0].mxu0
      %v4077 = vadd.f32 %v2990, %v4076
      %v4078 = vpop.f32.mrb[0].mxu0
      %4079 = vmatprep.mubr.f32.mxu0 0.0
      %4080 = vmatmul.mubr.f32.gmra.mrb[0].mxu0 %v3888
      %v4081 = vpop.f32.mrb[0].mxu0
      %v4082 = vadd.f32 %v2995, %v4081
      %v4083 = vpop.f32.mrb[0].mxu0
      %4084 = vmatprep.mubr.f32.mxu0 0.0
      %4085 = vmatmul.mubr.f32.gmra.mrb[0].mxu0 %v3890
      %v4086 = vpop.f32.mrb[0].mxu0
      %v4087 = vadd.f32 %v3000, %v4086
      %v4088 = vpop.f32.mrb[0].mxu0
      %4089 = vmatprep.mubr.f32.mxu0 0.0
      %4090 = vmatmul.mubr.f32.gmra.mrb[0].mxu0 %v3892
      %v4091 = vpop.f32.mrb[0].mxu0
      %v4092 = vadd.f32 %v3005, %v4091
      %v4093 = vpop.f32.mrb[0].mxu0
      %4094 = vmatprep.mubr.f32.mxu0 0.0
      %4095 = vmatmul.mubr.f32.gmra.mrb[0].mxu0 %v3894
      %v4096 = vpop.f32.mrb[0].mxu0
      %v4097 = vadd.f32 %v3010, %v4096
      %v4098 = vpop.f32.mrb[0].mxu0
      %4099 = vmatprep.mubr.f32.mxu0 0.0
      %4100 = vmatmul.mubr.f32.gmra.mrb[0].mxu0 %v3896
      %v4101 = vpop.f32.mrb[0].mxu0
      %v4102 = vadd.f32 %v3015, %v4101
      %v4103 = vpop.f32.mrb[0].mxu0
      %4104 = vmatprep.mubr.f32.mxu0 0.0
      %4105 = vmatmul.mubr.f32.gmra.mrb[0].mxu0 %v3898
      %v4106 = vpop.f32.mrb[0].mxu0
      %v4107 = vadd.f32 %v3020, %v4106
      %v4108 = vpop.f32.mrb[0].mxu0
      %4109 = vmatprep.mubr.f32.mxu0 0.0
      %4110 = vmatmul.mubr.f32.gmra.mrb[0].mxu0 %v3900
      %v4111 = vpop.f32.mrb[0].mxu0
      %v4112 = vadd.f32 %v3025, %v4111
      %v4113 = vpop.f32.mrb[0].mxu0
      %4114 = vmatprep.mubr.f32.mxu0 0.0
      %4115 = vmatmul.mubr.f32.gmra.mrb[0].mxu0 %v3902
      %v4116 = vpop.f32.mrb[0].mxu0
      %v4117 = vadd.f32 %v3030, %v4116
      %v4118 = vpop.f32.mrb[0].mxu0
      %4119 = vmatprep.mubr.f32.mxu0 0.0
      %4120 = vmatmul.mubr.f32.gmra.mrb[0].mxu0 %v3904
      %v4121 = vpop.f32.mrb[0].mxu0
      %v4122 = vadd.f32 %v3035, %v4121
      %v4123 = vpop.f32.mrb[0].mxu0
      %4124 = vmatprep.mubr.f32.mxu0 0.0
      %4125 = vmatmul.mubr.f32.gmra.mrb[0].mxu0 %v3906
      %v4126 = vpop.f32.mrb[0].mxu0
      %v4127 = vadd.f32 %v3040, %v4126
      %v4128 = vpop.f32.mrb[0].mxu0
      %4129 = vmatprep.mubr.f32.mxu0 0.0
      %4130 = vmatmul.mubr.f32.gmra.mrb[0].mxu0 %v3908
      %v4131 = vpop.f32.mrb[0].mxu0
      %v4132 = vadd.f32 %v3045, %v4131
      %v4133 = vpop.f32.mrb[0].mxu0
      %4134 = vmatprep.mubr.f32.mxu0 0.0
      %4135 = vmatmul.mubr.f32.gmra.mrb[0].mxu0 %v3910
      %v4136 = vpop.f32.mrb[0].mxu0
      %v4137 = vadd.f32 %v3050, %v4136
      %v4138 = vpop.f32.mrb[0].mxu0
      %4139 = vmatprep.mubr.f32.mxu0 0.0
      %4140 = vmatmul.mubr.f32.gmra.mrb[0].mxu0 %v3912
      %v4141 = vpop.f32.mrb[0].mxu0
      %v4142 = vadd.f32 %v3055, %v4141
      %v4143 = vpop.f32.mrb[0].mxu0
      %4144 = vmatprep.mubr.f32.mxu0 0.0
      %4145 = vmatmul.mubr.f32.gmra.mrb[0].mxu0 %v3914
      %v4146 = vpop.f32.mrb[0].mxu0
      %v4147 = vadd.f32 %v3060, %v4146
      %v4148 = vpop.f32.mrb[0].mxu0
      %4149 = vmatprep.mubr.f32.mxu0 0.0
      %4150 = vmatmul.mubr.f32.gmra.mrb[0].mxu0 %v3916
      %v4151 = vpop.f32.mrb[0].mxu0
      %v4152 = vadd.f32 %v3065, %v4151
      %v4153 = vpop.f32.mrb[0].mxu0
      %4154 = vmatprep.mubr.f32.mxu0 0.0
      %4155 = vmatmul.mubr.f32.gmra.mrb[0].mxu0 %v3918
      %v4156 = vpop.f32.mrb[0].mxu0
      %v4157 = vadd.f32 %v3070, %v4156
      %v4158 = vpop.f32.mrb[0].mxu0
      %4159 = vmatprep.mubr.f32.mxu0 0.0
      %4160 = vmatmul.mubr.f32.gmra.mrb[0].mxu0 %v3920
      %v4161 = vpop.f32.mrb[0].mxu0
      %v4162 = vadd.f32 %v3075, %v4161
      %v4163 = vpop.f32.mrb[0].mxu0
      %4164 = vmatprep.mubr.f32.mxu0 0.0
      %4165 = vmatmul.mubr.f32.gmra.mrb[0].mxu0 %v3922
      %v4166 = vpop.f32.mrb[0].mxu0
      %v4167 = vadd.f32 %v3080, %v4166
      %v4168 = vpop.f32.mrb[0].mxu0
      %4169 = vmatprep.mubr.f32.mxu0 0.0
      %4170 = vmatmul.mubr.f32.gmra.mrb[0].mxu0 %v3924
      %v4171 = vpop.f32.mrb[0].mxu0
      %v4172 = vadd.f32 %v3085, %v4171
      %v4173 = vpop.f32.mrb[0].mxu0
      %4174 = vmatprep.mubr.f32.mxu0 0.0
      %4175 = vmatmul.mubr.f32.gmra.mrb[0].mxu0 %v3926
      %v4176 = vpop.f32.mrb[0].mxu0
      %v4177 = vadd.f32 %v3090, %v4176
      %v4178 = vpop.f32.mrb[0].mxu0
      %4179 = vmatprep.mubr.f32.mxu0 0.0
      %4180 = vmatmul.mubr.f32.gmra.mrb[0].mxu0 %v3928
      %v4181 = vpop.f32.mrb[0].mxu0
      %v4182 = vadd.f32 %v3095, %v4181
      %v4183 = vpop.f32.mrb[0].mxu0
      %4184 = vmatprep.mubr.f32.mxu0 0.0
      %4185 = vmatmul.mubr.f32.gmra.mrb[0].mxu0 %v3930
      %v4186 = vpop.f32.mrb[0].mxu0
      %v4187 = vadd.f32 %v3100, %v4186
      %v4188 = vpop.f32.mrb[0].mxu0
      %4189 = vmatprep.mubr.f32.mxu0 0.0
      %4190 = vmatmul.mubr.f32.gmra.mrb[0].mxu0 %v3932
      %v4191 = vpop.f32.mrb[0].mxu0
      %v4192 = vadd.f32 %v3105, %v4191
      %v4193 = vpop.f32.mrb[0].mxu0
      %4194 = vmatprep.mubr.f32.mxu0 0.0
      %4195 = vmatmul.mubr.f32.gmra.mrb[0].mxu0 %v3934
      %v4196 = vpop.f32.mrb[0].mxu0
      %v4197 = vadd.f32 %v3110, %v4196
      %v4198 = vpop.f32.mrb[0].mxu0
      %4199 = vmatprep.mubr.f32.mxu0 0.0
      %4200 = vmatmul.mubr.f32.gmra.mrb[0].mxu0 %v3936
      %v4201 = vpop.f32.mrb[0].mxu0
      %v4202 = vadd.f32 %v3115, %v4201
      %v4203 = vpop.f32.mrb[0].mxu0
      %4204 = vmatprep.mubr.f32.mxu0 0.0
      %4205 = vmatmul.mubr.f32.gmra.mrb[0].mxu0 %v3938
      %v4206 = vpop.f32.mrb[0].mxu0
      %v4207 = vadd.f32 %v3120, %v4206
      %v4208 = vpop.f32.mrb[0].mxu0
      %4209 = vmatprep.mubr.f32.mxu0 0.0
      %4210 = vmatmul.mubr.f32.gmra.mrb[0].mxu0 %v3940
      %v4211 = vpop.f32.mrb[0].mxu0
      %v4212 = vadd.f32 %v3125, %v4211
      %v4213 = vpop.f32.mrb[0].mxu0
      %4214 = vdwg.mxu0
      %v4256 = vcombine.high %v4012, %v4012
      %v4258 = vunpack.c.l.s4 1983009808
      %v4259 = vunpack.c.0.s8 %v4258
      %v4260 = vlaneseq
      %v4261 = vshrl.u32 %v4260, 7
      %v4262 = vsub.s32 %v4259, %v4261
      %v4263 = vrot.slane %v4012, %v4262
      %v4265 = vunpack.c.l.s4 1983009808
      %v4266 = vunpack.c.0.s8 %v4265
      %v4267 = vlaneseq
      %v4268 = vshrl.u32 %v4267, 7
      %v4269 = vsub.s32 %v4266, %v4268
      %v4270 = vrot.slane %v4256, %v4269
      %v4271 = vcombine.high %v4263, %v4263
      %v4272 = vcombine.high %v4270, %v4270
      %v4273 = vcombine.high %v4017, %v4017
      %v4275 = vunpack.c.l.s4 1983009808
      %v4276 = vunpack.c.0.s8 %v4275
      %v4277 = vlaneseq
      %v4278 = vshrl.u32 %v4277, 7
      %v4279 = vsub.s32 %v4276, %v4278
      %v4280 = vrot.slane %v4017, %v4279
      %v4282 = vunpack.c.l.s4 1983009808
      %v4283 = vunpack.c.0.s8 %v4282
      %v4284 = vlaneseq
      %v4285 = vshrl.u32 %v4284, 7
      %v4286 = vsub.s32 %v4283, %v4285
      %v4287 = vrot.slane %v4273, %v4286
      %v4288 = vcombine.high %v4280, %v4280
      %v4289 = vcombine.high %v4287, %v4287
      %v4290 = vcombine.high %v4022, %v4022
      %v4292 = vunpack.c.l.s4 1983009808
      %v4293 = vunpack.c.0.s8 %v4292
      %v4294 = vlaneseq
      %v4295 = vshrl.u32 %v4294, 7
      %v4296 = vsub.s32 %v4293, %v4295
      %v4297 = vrot.slane %v4022, %v4296
      %v4299 = vunpack.c.l.s4 1983009808
      %v4300 = vunpack.c.0.s8 %v4299
      %v4301 = vlaneseq
      %v4302 = vshrl.u32 %v4301, 7
      %v4303 = vsub.s32 %v4300, %v4302
      %v4304 = vrot.slane %v4290, %v4303
      %v4305 = vcombine.high %v4297, %v4297
      %v4306 = vcombine.high %v4304, %v4304
      %v4307 = vcombine.high %v4027, %v4027
      %v4309 = vunpack.c.l.s4 1983009808
      %v4310 = vunpack.c.0.s8 %v4309
      %v4311 = vlaneseq
      %v4312 = vshrl.u32 %v4311, 7
      %v4313 = vsub.s32 %v4310, %v4312
      %v4314 = vrot.slane %v4027, %v4313
      %v4316 = vunpack.c.l.s4 1983009808
      %v4317 = vunpack.c.0.s8 %v4316
      %v4318 = vlaneseq
      %v4319 = vshrl.u32 %v4318, 7
      %v4320 = vsub.s32 %v4317, %v4319
      %v4321 = vrot.slane %v4307, %v4320
      %v4322 = vcombine.high %v4314, %v4314
      %v4323 = vcombine.high %v4321, %v4321
      %v4324 = vcombine.high %v4032, %v4032
      %v4326 = vunpack.c.l.s4 1983009808
      %v4327 = vunpack.c.0.s8 %v4326
      %v4328 = vlaneseq
      %v4329 = vshrl.u32 %v4328, 7
      %v4330 = vsub.s32 %v4327, %v4329
      %v4331 = vrot.slane %v4032, %v4330
      %v4333 = vunpack.c.l.s4 1983009808
      %v4334 = vunpack.c.0.s8 %v4333
      %v4335 = vlaneseq
      %v4336 = vshrl.u32 %v4335, 7
      %v4337 = vsub.s32 %v4334, %v4336
      %v4338 = vrot.slane %v4324, %v4337
      %v4339 = vcombine.high %v4331, %v4331
      %v4340 = vcombine.high %v4338, %v4338
      %v4341 = vcombine.high %v4037, %v4037
      %v4343 = vunpack.c.l.s4 1983009808
      %v4344 = vunpack.c.0.s8 %v4343
      %v4345 = vlaneseq
      %v4346 = vshrl.u32 %v4345, 7
      %v4347 = vsub.s32 %v4344, %v4346
      %v4348 = vrot.slane %v4037, %v4347
      %v4350 = vunpack.c.l.s4 1983009808
      %v4351 = vunpack.c.0.s8 %v4350
      %v4352 = vlaneseq
      %v4353 = vshrl.u32 %v4352, 7
      %v4354 = vsub.s32 %v4351, %v4353
      %v4355 = vrot.slane %v4341, %v4354
      %v4356 = vcombine.high %v4348, %v4348
      %v4357 = vcombine.high %v4355, %v4355
      %v4358 = vcombine.high %v4042, %v4042
      %v4360 = vunpack.c.l.s4 1983009808
      %v4361 = vunpack.c.0.s8 %v4360
      %v4362 = vlaneseq
      %v4363 = vshrl.u32 %v4362, 7
      %v4364 = vsub.s32 %v4361, %v4363
      %v4365 = vrot.slane %v4042, %v4364
      %v4367 = vunpack.c.l.s4 1983009808
      %v4368 = vunpack.c.0.s8 %v4367
      %v4369 = vlaneseq
      %v4370 = vshrl.u32 %v4369, 7
      %v4371 = vsub.s32 %v4368, %v4370
      %v4372 = vrot.slane %v4358, %v4371
      %v4373 = vcombine.high %v4365, %v4365
      %v4374 = vcombine.high %v4372, %v4372
      %v4375 = vcombine.high %v4047, %v4047
      %v4377 = vunpack.c.l.s4 1983009808
      %v4378 = vunpack.c.0.s8 %v4377
      %v4379 = vlaneseq
      %v4380 = vshrl.u32 %v4379, 7
      %v4381 = vsub.s32 %v4378, %v4380
      %v4382 = vrot.slane %v4047, %v4381
      %v4384 = vunpack.c.l.s4 1983009808
      %v4385 = vunpack.c.0.s8 %v4384
      %v4386 = vlaneseq
      %v4387 = vshrl.u32 %v4386, 7
      %v4388 = vsub.s32 %v4385, %v4387
      %v4389 = vrot.slane %v4375, %v4388
      %v4390 = vcombine.high %v4382, %v4382
      %v4391 = vcombine.high %v4389, %v4389
      %v4392 = vcombine.high %v4052, %v4052
      %v4394 = vunpack.c.l.s4 1983009808
      %v4395 = vunpack.c.0.s8 %v4394
      %v4396 = vlaneseq
      %v4397 = vshrl.u32 %v4396, 7
      %v4398 = vsub.s32 %v4395, %v4397
      %v4399 = vrot.slane %v4052, %v4398
      %v4401 = vunpack.c.l.s4 1983009808
      %v4402 = vunpack.c.0.s8 %v4401
      %v4403 = vlaneseq
      %v4404 = vshrl.u32 %v4403, 7
      %v4405 = vsub.s32 %v4402, %v4404
      %v4406 = vrot.slane %v4392, %v4405
      %v4407 = vcombine.high %v4399, %v4399
      %v4408 = vcombine.high %v4406, %v4406
      %v4409 = vcombine.high %v4057, %v4057
      %v4411 = vunpack.c.l.s4 1983009808
      %v4412 = vunpack.c.0.s8 %v4411
      %v4413 = vlaneseq
      %v4414 = vshrl.u32 %v4413, 7
      %v4415 = vsub.s32 %v4412, %v4414
      %v4416 = vrot.slane %v4057, %v4415
      %v4418 = vunpack.c.l.s4 1983009808
      %v4419 = vunpack.c.0.s8 %v4418
      %v4420 = vlaneseq
      %v4421 = vshrl.u32 %v4420, 7
      %v4422 = vsub.s32 %v4419, %v4421
      %v4423 = vrot.slane %v4409, %v4422
      %v4424 = vcombine.high %v4416, %v4416
      %v4425 = vcombine.high %v4423, %v4423
      %v4426 = vcombine.high %v4062, %v4062
      %v4428 = vunpack.c.l.s4 1983009808
      %v4429 = vunpack.c.0.s8 %v4428
      %v4430 = vlaneseq
      %v4431 = vshrl.u32 %v4430, 7
      %v4432 = vsub.s32 %v4429, %v4431
      %v4433 = vrot.slane %v4062, %v4432
      %v4435 = vunpack.c.l.s4 1983009808
      %v4436 = vunpack.c.0.s8 %v4435
      %v4437 = vlaneseq
      %v4438 = vshrl.u32 %v4437, 7
      %v4439 = vsub.s32 %v4436, %v4438
      %v4440 = vrot.slane %v4426, %v4439
      %v4441 = vcombine.high %v4433, %v4433
      %v4442 = vcombine.high %v4440, %v4440
      %v4443 = vcombine.high %v4067, %v4067
      %v4445 = vunpack.c.l.s4 1983009808
      %v4446 = vunpack.c.0.s8 %v4445
      %v4447 = vlaneseq
      %v4448 = vshrl.u32 %v4447, 7
      %v4449 = vsub.s32 %v4446, %v4448
      %v4450 = vrot.slane %v4067, %v4449
      %v4452 = vunpack.c.l.s4 1983009808
      %v4453 = vunpack.c.0.s8 %v4452
      %v4454 = vlaneseq
      %v4455 = vshrl.u32 %v4454, 7
      %v4456 = vsub.s32 %v4453, %v4455
      %v4457 = vrot.slane %v4443, %v4456
      %v4458 = vcombine.high %v4450, %v4450
      %v4459 = vcombine.high %v4457, %v4457
      %v4460 = vcombine.high %v4072, %v4072
      %v4462 = vunpack.c.l.s4 1983009808
      %v4463 = vunpack.c.0.s8 %v4462
      %v4464 = vlaneseq
      %v4465 = vshrl.u32 %v4464, 7
      %v4466 = vsub.s32 %v4463, %v4465
      %v4467 = vrot.slane %v4072, %v4466
      %v4469 = vunpack.c.l.s4 1983009808
      %v4470 = vunpack.c.0.s8 %v4469
      %v4471 = vlaneseq
      %v4472 = vshrl.u32 %v4471, 7
      %v4473 = vsub.s32 %v4470, %v4472
      %v4474 = vrot.slane %v4460, %v4473
      %v4475 = vcombine.high %v4467, %v4467
      %v4476 = vcombine.high %v4474, %v4474
      %v4477 = vcombine.high %v4077, %v4077
      %v4479 = vunpack.c.l.s4 1983009808
      %v4480 = vunpack.c.0.s8 %v4479
      %v4481 = vlaneseq
      %v4482 = vshrl.u32 %v4481, 7
      %v4483 = vsub.s32 %v4480, %v4482
      %v4484 = vrot.slane %v4077, %v4483
      %v4486 = vunpack.c.l.s4 1983009808
      %v4487 = vunpack.c.0.s8 %v4486
      %v4488 = vlaneseq
      %v4489 = vshrl.u32 %v4488, 7
      %v4490 = vsub.s32 %v4487, %v4489
      %v4491 = vrot.slane %v4477, %v4490
      %v4492 = vcombine.high %v4484, %v4484
      %v4493 = vcombine.high %v4491, %v4491
      %v4494 = vcombine.high %v4082, %v4082
      %v4496 = vunpack.c.l.s4 1983009808
      %v4497 = vunpack.c.0.s8 %v4496
      %v4498 = vlaneseq
      %v4499 = vshrl.u32 %v4498, 7
      %v4500 = vsub.s32 %v4497, %v4499
      %v4501 = vrot.slane %v4082, %v4500
      %v4503 = vunpack.c.l.s4 1983009808
      %v4504 = vunpack.c.0.s8 %v4503
      %v4505 = vlaneseq
      %v4506 = vshrl.u32 %v4505, 7
      %v4507 = vsub.s32 %v4504, %v4506
      %v4508 = vrot.slane %v4494, %v4507
      %v4509 = vcombine.high %v4501, %v4501
      %v4510 = vcombine.high %v4508, %v4508
      %v4511 = vcombine.high %v4087, %v4087
      %v4513 = vunpack.c.l.s4 1983009808
      %v4514 = vunpack.c.0.s8 %v4513
      %v4515 = vlaneseq
      %v4516 = vshrl.u32 %v4515, 7
      %v4517 = vsub.s32 %v4514, %v4516
      %v4518 = vrot.slane %v4087, %v4517
      %v4520 = vunpack.c.l.s4 1983009808
      %v4521 = vunpack.c.0.s8 %v4520
      %v4522 = vlaneseq
      %v4523 = vshrl.u32 %v4522, 7
      %v4524 = vsub.s32 %v4521, %v4523
      %v4525 = vrot.slane %v4511, %v4524
      %v4526 = vcombine.high %v4518, %v4518
      %v4527 = vcombine.high %v4525, %v4525
      %v4528 = vcombine.high %v4092, %v4092
      %v4530 = vunpack.c.l.s4 1983009808
      %v4531 = vunpack.c.0.s8 %v4530
      %v4532 = vlaneseq
      %v4533 = vshrl.u32 %v4532, 7
      %v4534 = vsub.s32 %v4531, %v4533
      %v4535 = vrot.slane %v4092, %v4534
      %v4537 = vunpack.c.l.s4 1983009808
      %v4538 = vunpack.c.0.s8 %v4537
      %v4539 = vlaneseq
      %v4540 = vshrl.u32 %v4539, 7
      %v4541 = vsub.s32 %v4538, %v4540
      %v4542 = vrot.slane %v4528, %v4541
      %v4543 = vcombine.high %v4535, %v4535
      %v4544 = vcombine.high %v4542, %v4542
      %v4545 = vcombine.high %v4097, %v4097
      %v4547 = vunpack.c.l.s4 1983009808
      %v4548 = vunpack.c.0.s8 %v4547
      %v4549 = vlaneseq
      %v4550 = vshrl.u32 %v4549, 7
      %v4551 = vsub.s32 %v4548, %v4550
      %v4552 = vrot.slane %v4097, %v4551
      %v4554 = vunpack.c.l.s4 1983009808
      %v4555 = vunpack.c.0.s8 %v4554
      %v4556 = vlaneseq
      %v4557 = vshrl.u32 %v4556, 7
      %v4558 = vsub.s32 %v4555, %v4557
      %v4559 = vrot.slane %v4545, %v4558
      %v4560 = vcombine.high %v4552, %v4552
      %v4561 = vcombine.high %v4559, %v4559
      %v4562 = vcombine.high %v4102, %v4102
      %v4564 = vunpack.c.l.s4 1983009808
      %v4565 = vunpack.c.0.s8 %v4564
      %v4566 = vlaneseq
      %v4567 = vshrl.u32 %v4566, 7
      %v4568 = vsub.s32 %v4565, %v4567
      %v4569 = vrot.slane %v4102, %v4568
      %v4571 = vunpack.c.l.s4 1983009808
      %v4572 = vunpack.c.0.s8 %v4571
      %v4573 = vlaneseq
      %v4574 = vshrl.u32 %v4573, 7
      %v4575 = vsub.s32 %v4572, %v4574
      %v4576 = vrot.slane %v4562, %v4575
      %v4577 = vcombine.high %v4569, %v4569
      %v4578 = vcombine.high %v4576, %v4576
      %v4579 = vcombine.high %v4107, %v4107
      %v4581 = vunpack.c.l.s4 1983009808
      %v4582 = vunpack.c.0.s8 %v4581
      %v4583 = vlaneseq
      %v4584 = vshrl.u32 %v4583, 7
      %v4585 = vsub.s32 %v4582, %v4584
      %v4586 = vrot.slane %v4107, %v4585
      %v4588 = vunpack.c.l.s4 1983009808
      %v4589 = vunpack.c.0.s8 %v4588
      %v4590 = vlaneseq
      %v4591 = vshrl.u32 %v4590, 7
      %v4592 = vsub.s32 %v4589, %v4591
      %v4593 = vrot.slane %v4579, %v4592
      %v4594 = vcombine.high %v4586, %v4586
      %v4595 = vcombine.high %v4593, %v4593
      %v4596 = vcombine.high %v4112, %v4112
      %v4598 = vunpack.c.l.s4 1983009808
      %v4599 = vunpack.c.0.s8 %v4598
      %v4600 = vlaneseq
      %v4601 = vshrl.u32 %v4600, 7
      %v4602 = vsub.s32 %v4599, %v4601
      %v4603 = vrot.slane %v4112, %v4602
      %v4605 = vunpack.c.l.s4 1983009808
      %v4606 = vunpack.c.0.s8 %v4605
      %v4607 = vlaneseq
      %v4608 = vshrl.u32 %v4607, 7
      %v4609 = vsub.s32 %v4606, %v4608
      %v4610 = vrot.slane %v4596, %v4609
      %v4611 = vcombine.high %v4603, %v4603
      %v4612 = vcombine.high %v4610, %v4610
      %v4613 = vcombine.high %v4117, %v4117
      %v4615 = vunpack.c.l.s4 1983009808
      %v4616 = vunpack.c.0.s8 %v4615
      %v4617 = vlaneseq
      %v4618 = vshrl.u32 %v4617, 7
      %v4619 = vsub.s32 %v4616, %v4618
      %v4620 = vrot.slane %v4117, %v4619
      %v4622 = vunpack.c.l.s4 1983009808
      %v4623 = vunpack.c.0.s8 %v4622
      %v4624 = vlaneseq
      %v4625 = vshrl.u32 %v4624, 7
      %v4626 = vsub.s32 %v4623, %v4625
      %v4627 = vrot.slane %v4613, %v4626
      %v4628 = vcombine.high %v4620, %v4620
      %v4629 = vcombine.high %v4627, %v4627
      %v4630 = vcombine.high %v4122, %v4122
      %v4632 = vunpack.c.l.s4 1983009808
      %v4633 = vunpack.c.0.s8 %v4632
      %v4634 = vlaneseq
      %v4635 = vshrl.u32 %v4634, 7
      %v4636 = vsub.s32 %v4633, %v4635
      %v4637 = vrot.slane %v4122, %v4636
      %v4639 = vunpack.c.l.s4 1983009808
      %v4640 = vunpack.c.0.s8 %v4639
      %v4641 = vlaneseq
      %v4642 = vshrl.u32 %v4641, 7
      %v4643 = vsub.s32 %v4640, %v4642
      %v4644 = vrot.slane %v4630, %v4643
      %v4645 = vcombine.high %v4637, %v4637
      %v4646 = vcombine.high %v4644, %v4644
      %v4647 = vcombine.high %v4127, %v4127
      %v4649 = vunpack.c.l.s4 1983009808
      %v4650 = vunpack.c.0.s8 %v4649
      %v4651 = vlaneseq
      %v4652 = vshrl.u32 %v4651, 7
      %v4653 = vsub.s32 %v4650, %v4652
      %v4654 = vrot.slane %v4127, %v4653
      %v4656 = vunpack.c.l.s4 1983009808
      %v4657 = vunpack.c.0.s8 %v4656
      %v4658 = vlaneseq
      %v4659 = vshrl.u32 %v4658, 7
      %v4660 = vsub.s32 %v4657, %v4659
      %v4661 = vrot.slane %v4647, %v4660
      %v4662 = vcombine.high %v4654, %v4654
      %v4663 = vcombine.high %v4661, %v4661
      %v4664 = vcombine.high %v4132, %v4132
      %v4666 = vunpack.c.l.s4 1983009808
      %v4667 = vunpack.c.0.s8 %v4666
      %v4668 = vlaneseq
      %v4669 = vshrl.u32 %v4668, 7
      %v4670 = vsub.s32 %v4667, %v4669
      %v4671 = vrot.slane %v4132, %v4670
      %v4673 = vunpack.c.l.s4 1983009808
      %v4674 = vunpack.c.0.s8 %v4673
      %v4675 = vlaneseq
      %v4676 = vshrl.u32 %v4675, 7
      %v4677 = vsub.s32 %v4674, %v4676
      %v4678 = vrot.slane %v4664, %v4677
      %v4679 = vcombine.high %v4671, %v4671
      %v4680 = vcombine.high %v4678, %v4678
      %v4681 = vcombine.high %v4137, %v4137
      %v4683 = vunpack.c.l.s4 1983009808
      %v4684 = vunpack.c.0.s8 %v4683
      %v4685 = vlaneseq
      %v4686 = vshrl.u32 %v4685, 7
      %v4687 = vsub.s32 %v4684, %v4686
      %v4688 = vrot.slane %v4137, %v4687
      %v4690 = vunpack.c.l.s4 1983009808
      %v4691 = vunpack.c.0.s8 %v4690
      %v4692 = vlaneseq
      %v4693 = vshrl.u32 %v4692, 7
      %v4694 = vsub.s32 %v4691, %v4693
      %v4695 = vrot.slane %v4681, %v4694
      %v4696 = vcombine.high %v4688, %v4688
      %v4697 = vcombine.high %v4695, %v4695
      %v4698 = vcombine.high %v4142, %v4142
      %v4700 = vunpack.c.l.s4 1983009808
      %v4701 = vunpack.c.0.s8 %v4700
      %v4702 = vlaneseq
      %v4703 = vshrl.u32 %v4702, 7
      %v4704 = vsub.s32 %v4701, %v4703
      %v4705 = vrot.slane %v4142, %v4704
      %v4707 = vunpack.c.l.s4 1983009808
      %v4708 = vunpack.c.0.s8 %v4707
      %v4709 = vlaneseq
      %v4710 = vshrl.u32 %v4709, 7
      %v4711 = vsub.s32 %v4708, %v4710
      %v4712 = vrot.slane %v4698, %v4711
      %v4713 = vcombine.high %v4705, %v4705
      %v4714 = vcombine.high %v4712, %v4712
      %v4715 = vcombine.high %v4147, %v4147
      %v4717 = vunpack.c.l.s4 1983009808
      %v4718 = vunpack.c.0.s8 %v4717
      %v4719 = vlaneseq
      %v4720 = vshrl.u32 %v4719, 7
      %v4721 = vsub.s32 %v4718, %v4720
      %v4722 = vrot.slane %v4147, %v4721
      %v4724 = vunpack.c.l.s4 1983009808
      %v4725 = vunpack.c.0.s8 %v4724
      %v4726 = vlaneseq
      %v4727 = vshrl.u32 %v4726, 7
      %v4728 = vsub.s32 %v4725, %v4727
      %v4729 = vrot.slane %v4715, %v4728
      %v4730 = vcombine.high %v4722, %v4722
      %v4731 = vcombine.high %v4729, %v4729
      %v4732 = vcombine.high %v4152, %v4152
      %v4734 = vunpack.c.l.s4 1983009808
      %v4735 = vunpack.c.0.s8 %v4734
      %v4736 = vlaneseq
      %v4737 = vshrl.u32 %v4736, 7
      %v4738 = vsub.s32 %v4735, %v4737
      %v4739 = vrot.slane %v4152, %v4738
      %v4741 = vunpack.c.l.s4 1983009808
      %v4742 = vunpack.c.0.s8 %v4741
      %v4743 = vlaneseq
      %v4744 = vshrl.u32 %v4743, 7
      %v4745 = vsub.s32 %v4742, %v4744
      %v4746 = vrot.slane %v4732, %v4745
      %v4747 = vcombine.high %v4739, %v4739
      %v4748 = vcombine.high %v4746, %v4746
      %v4749 = vcombine.high %v4157, %v4157
      %v4751 = vunpack.c.l.s4 1983009808
      %v4752 = vunpack.c.0.s8 %v4751
      %v4753 = vlaneseq
      %v4754 = vshrl.u32 %v4753, 7
      %v4755 = vsub.s32 %v4752, %v4754
      %v4756 = vrot.slane %v4157, %v4755
      %v4758 = vunpack.c.l.s4 1983009808
      %v4759 = vunpack.c.0.s8 %v4758
      %v4760 = vlaneseq
      %v4761 = vshrl.u32 %v4760, 7
      %v4762 = vsub.s32 %v4759, %v4761
      %v4763 = vrot.slane %v4749, %v4762
      %v4764 = vcombine.high %v4756, %v4756
      %v4765 = vcombine.high %v4763, %v4763
      %v4766 = vcombine.high %v4162, %v4162
      %v4768 = vunpack.c.l.s4 1983009808
      %v4769 = vunpack.c.0.s8 %v4768
      %v4770 = vlaneseq
      %v4771 = vshrl.u32 %v4770, 7
      %v4772 = vsub.s32 %v4769, %v4771
      %v4773 = vrot.slane %v4162, %v4772
      %v4775 = vunpack.c.l.s4 1983009808
      %v4776 = vunpack.c.0.s8 %v4775
      %v4777 = vlaneseq
      %v4778 = vshrl.u32 %v4777, 7
      %v4779 = vsub.s32 %v4776, %v4778
      %v4780 = vrot.slane %v4766, %v4779
      %v4781 = vcombine.high %v4773, %v4773
      %v4782 = vcombine.high %v4780, %v4780
      %v4783 = vcombine.high %v4167, %v4167
      %v4785 = vunpack.c.l.s4 1983009808
      %v4786 = vunpack.c.0.s8 %v4785
      %v4787 = vlaneseq
      %v4788 = vshrl.u32 %v4787, 7
      %v4789 = vsub.s32 %v4786, %v4788
      %v4790 = vrot.slane %v4167, %v4789
      %v4792 = vunpack.c.l.s4 1983009808
      %v4793 = vunpack.c.0.s8 %v4792
      %v4794 = vlaneseq
      %v4795 = vshrl.u32 %v4794, 7
      %v4796 = vsub.s32 %v4793, %v4795
      %v4797 = vrot.slane %v4783, %v4796
      %v4798 = vcombine.high %v4790, %v4790
      %v4799 = vcombine.high %v4797, %v4797
      %v4800 = vcombine.high %v4172, %v4172
      %v4802 = vunpack.c.l.s4 1983009808
      %v4803 = vunpack.c.0.s8 %v4802
      %v4804 = vlaneseq
      %v4805 = vshrl.u32 %v4804, 7
      %v4806 = vsub.s32 %v4803, %v4805
      %v4807 = vrot.slane %v4172, %v4806
      %v4809 = vunpack.c.l.s4 1983009808
      %v4810 = vunpack.c.0.s8 %v4809
      %v4811 = vlaneseq
      %v4812 = vshrl.u32 %v4811, 7
      %v4813 = vsub.s32 %v4810, %v4812
      %v4814 = vrot.slane %v4800, %v4813
      %v4815 = vcombine.high %v4807, %v4807
      %v4816 = vcombine.high %v4814, %v4814
      %v4817 = vcombine.high %v4177, %v4177
      %v4819 = vunpack.c.l.s4 1983009808
      %v4820 = vunpack.c.0.s8 %v4819
      %v4821 = vlaneseq
      %v4822 = vshrl.u32 %v4821, 7
      %v4823 = vsub.s32 %v4820, %v4822
      %v4824 = vrot.slane %v4177, %v4823
      %v4826 = vunpack.c.l.s4 1983009808
      %v4827 = vunpack.c.0.s8 %v4826
      %v4828 = vlaneseq
      %v4829 = vshrl.u32 %v4828, 7
      %v4830 = vsub.s32 %v4827, %v4829
      %v4831 = vrot.slane %v4817, %v4830
      %v4832 = vcombine.high %v4824, %v4824
      %v4833 = vcombine.high %v4831, %v4831
      %v4834 = vcombine.high %v4182, %v4182
      %v4836 = vunpack.c.l.s4 1983009808
      %v4837 = vunpack.c.0.s8 %v4836
      %v4838 = vlaneseq
      %v4839 = vshrl.u32 %v4838, 7
      %v4840 = vsub.s32 %v4837, %v4839
      %v4841 = vrot.slane %v4182, %v4840
      %v4843 = vunpack.c.l.s4 1983009808
      %v4844 = vunpack.c.0.s8 %v4843
      %v4845 = vlaneseq
      %v4846 = vshrl.u32 %v4845, 7
      %v4847 = vsub.s32 %v4844, %v4846
      %v4848 = vrot.slane %v4834, %v4847
      %v4849 = vcombine.high %v4841, %v4841
      %v4850 = vcombine.high %v4848, %v4848
      %v4851 = vcombine.high %v4187, %v4187
      %v4853 = vunpack.c.l.s4 1983009808
      %v4854 = vunpack.c.0.s8 %v4853
      %v4855 = vlaneseq
      %v4856 = vshrl.u32 %v4855, 7
      %v4857 = vsub.s32 %v4854, %v4856
      %v4858 = vrot.slane %v4187, %v4857
      %v4860 = vunpack.c.l.s4 1983009808
      %v4861 = vunpack.c.0.s8 %v4860
      %v4862 = vlaneseq
      %v4863 = vshrl.u32 %v4862, 7
      %v4864 = vsub.s32 %v4861, %v4863
      %v4865 = vrot.slane %v4851, %v4864
      %v4866 = vcombine.high %v4858, %v4858
      %v4867 = vcombine.high %v4865, %v4865
      %v4868 = vcombine.high %v4192, %v4192
      %v4870 = vunpack.c.l.s4 1983009808
      %v4871 = vunpack.c.0.s8 %v4870
      %v4872 = vlaneseq
      %v4873 = vshrl.u32 %v4872, 7
      %v4874 = vsub.s32 %v4871, %v4873
      %v4875 = vrot.slane %v4192, %v4874
      %v4877 = vunpack.c.l.s4 1983009808
      %v4878 = vunpack.c.0.s8 %v4877
      %v4879 = vlaneseq
      %v4880 = vshrl.u32 %v4879, 7
      %v4881 = vsub.s32 %v4878, %v4880
      %v4882 = vrot.slane %v4868, %v4881
      %v4883 = vcombine.high %v4875, %v4875
      %v4884 = vcombine.high %v4882, %v4882
      %v4885 = vcombine.high %v4197, %v4197
      %v4887 = vunpack.c.l.s4 1983009808
      %v4888 = vunpack.c.0.s8 %v4887
      %v4889 = vlaneseq
      %v4890 = vshrl.u32 %v4889, 7
      %v4891 = vsub.s32 %v4888, %v4890
      %v4892 = vrot.slane %v4197, %v4891
      %v4894 = vunpack.c.l.s4 1983009808
      %v4895 = vunpack.c.0.s8 %v4894
      %v4896 = vlaneseq
      %v4897 = vshrl.u32 %v4896, 7
      %v4898 = vsub.s32 %v4895, %v4897
      %v4899 = vrot.slane %v4885, %v4898
      %v4900 = vcombine.high %v4892, %v4892
      %v4901 = vcombine.high %v4899, %v4899
      %v4902 = vcombine.high %v4202, %v4202
      %v4904 = vunpack.c.l.s4 1983009808
      %v4905 = vunpack.c.0.s8 %v4904
      %v4906 = vlaneseq
      %v4907 = vshrl.u32 %v4906, 7
      %v4908 = vsub.s32 %v4905, %v4907
      %v4909 = vrot.slane %v4202, %v4908
      %v4911 = vunpack.c.l.s4 1983009808
      %v4912 = vunpack.c.0.s8 %v4911
      %v4913 = vlaneseq
      %v4914 = vshrl.u32 %v4913, 7
      %v4915 = vsub.s32 %v4912, %v4914
      %v4916 = vrot.slane %v4902, %v4915
      %v4917 = vcombine.high %v4909, %v4909
      %v4918 = vcombine.high %v4916, %v4916
      %v4919 = vcombine.high %v4207, %v4207
      %v4921 = vunpack.c.l.s4 1983009808
      %v4922 = vunpack.c.0.s8 %v4921
      %v4923 = vlaneseq
      %v4924 = vshrl.u32 %v4923, 7
      %v4925 = vsub.s32 %v4922, %v4924
      %v4926 = vrot.slane %v4207, %v4925
      %v4928 = vunpack.c.l.s4 1983009808
      %v4929 = vunpack.c.0.s8 %v4928
      %v4930 = vlaneseq
      %v4931 = vshrl.u32 %v4930, 7
      %v4932 = vsub.s32 %v4929, %v4931
      %v4933 = vrot.slane %v4919, %v4932
      %v4934 = vcombine.high %v4926, %v4926
      %v4935 = vcombine.high %v4933, %v4933
      %v4937 = vunpack.c.l.s4 1983009808
      %v4938 = vunpack.c.0.s8 %v4937
      %v4939 = vlaneseq
      %v4940 = vshrl.u32 %v4939, 7
      %v4941 = vsub.s32 %v4938, %v4940
      %v4942 = vrot.slane %v4212, %v4941
      %v4943 = vcombine.high %v4942, %v4942
      %v5109 = vrot.slane %v576, 1
      %v5110 = vrot.slane %v577, 1
      %v5111 = vsel %vm633, %v5109, %v5110
      %v5112 = vrot.slane %v578, 1
      %v5113 = vsel %vm633, %v5110, %v5112
      %5114 = vrot.lane.b32.xlu0 %v5111, 4
      %v5115 = vpop.permute.xlu0 %5114
      %5116 = vrot.lane.b32.xlu0 %v5113, 4
      %v5117 = vpop.permute.xlu0 %5116
      %5118 = vrot.lane.b32.xlu0 %v5112, 4
      %v5119 = vpop.permute.xlu0 %5118
      %v5123 = vrot.slane %v576, 2
      %v5124 = vrot.slane %v577, 2
      %v5125 = vsel %vm886, %v5123, %v5124
      %v5126 = vrot.slane %v578, 2
      %v5127 = vsel %vm886, %v5124, %v5126
      %5128 = vrot.lane.b32.xlu0 %v5125, 8
      %v5129 = vpop.permute.xlu0 %5128
      %5130 = vrot.lane.b32.xlu0 %v5127, 8
      %v5131 = vpop.permute.xlu0 %5130
      %5132 = vrot.lane.b32.xlu0 %v5126, 8
      %v5133 = vpop.permute.xlu0 %5132
      %v5137 = vsel %vm1139, %v576, %v5115
      %v5138 = vsel %vm1139, %v577, %v5117
      %v5139 = vsel %vm1139, %v578, %v5119
      %v5140 = vsel %vm1194, %v5137, %v5129
      %v5141 = vsel %vm1194, %v5138, %v5131
      %v5142 = vsel %vm1194, %v5139, %v5133
      %s5143 = scalar_lea.vmem %s1, 32
      %v5144 = vld [vmem:[%s5143] sm:$0xff]
      %v5145 = vld [vmem:[%s5143 + $0x8] sm:$0xf]
      %v5149 = vcombine.high %v5140, %v5140
      %v5151 = vunpack.c.l.s4 1983009808
      %v5152 = vunpack.c.0.s8 %v5151
      %v5153 = vlaneseq
      %v5154 = vshrl.u32 %v5153, 7
      %v5155 = vsub.s32 %v5152, %v5154
      %v5156 = vrot.slane %v5140, %v5155
      %v5158 = vunpack.c.l.s4 1983009808
      %v5159 = vunpack.c.0.s8 %v5158
      %v5160 = vlaneseq
      %v5161 = vshrl.u32 %v5160, 7
      %v5162 = vsub.s32 %v5159, %v5161
      %v5163 = vrot.slane %v5149, %v5162
      %v5164 = vcombine.high %v5156, %v5156
      %v5165 = vcombine.high %v5163, %v5163
      %v5166 = vcombine.high %v5141, %v5141
      %v5168 = vunpack.c.l.s4 1983009808
      %v5169 = vunpack.c.0.s8 %v5168
      %v5170 = vlaneseq
      %v5171 = vshrl.u32 %v5170, 7
      %v5172 = vsub.s32 %v5169, %v5171
      %v5173 = vrot.slane %v5141, %v5172
      %v5175 = vunpack.c.l.s4 1983009808
      %v5176 = vunpack.c.0.s8 %v5175
      %v5177 = vlaneseq
      %v5178 = vshrl.u32 %v5177, 7
      %v5179 = vsub.s32 %v5176, %v5178
      %v5180 = vrot.slane %v5166, %v5179
      %v5181 = vcombine.high %v5173, %v5173
      %v5182 = vcombine.high %v5180, %v5180
      %v5184 = vunpack.c.l.s4 1983009808
      %v5185 = vunpack.c.0.s8 %v5184
      %v5186 = vlaneseq
      %v5187 = vshrl.u32 %v5186, 7
      %v5188 = vsub.s32 %v5185, %v5187
      %v5189 = vrot.slane %v5142, %v5188
      %v5190 = vcombine.low %v3255, %v3265
      %v5191 = vcombine.low %v3272, %v3282
      %v5192 = vcombine.low %v3289, %v3299
      %v5193 = vcombine.low %v3306, %v3316
      %v5194 = vcombine.low %v3323, %v3333
      %v5195 = vcombine.low %v3340, %v3350
      %v5196 = vcombine.low %v3357, %v3367
      %v5197 = vcombine.low %v3374, %v3384
      %v5198 = vcombine.low %v3391, %v3401
      %v5199 = vcombine.low %v3408, %v3418
      %v5200 = vcombine.low %v3425, %v3435
      %v5201 = vcombine.low %v3442, %v3452
      %v5202 = vcombine.low %v3459, %v3469
      %v5203 = vcombine.low %v3476, %v3486
      %v5204 = vcombine.low %v3493, %v3503
      %v5205 = vcombine.low %v3510, %v3520
      %v5206 = vcombine.low %v3527, %v3537
      %v5207 = vcombine.low %v3544, %v3554
      %v5208 = vcombine.low %v3561, %v3571
      %v5209 = vcombine.low %v3578, %v3588
      %v5210 = vcombine.low %v3595, %v3605
      %v5211 = vcombine.low %v3612, %v3622
      %v5212 = vcombine.low %v3629, %v3639
      %v5213 = vcombine.low %v3646, %v3656
      %v5214 = vcombine.low %v3663, %v3673
      %v5215 = vcombine.low %v3680, %v3690
      %v5216 = vcombine.low %v3697, %v3707
      %v5217 = vcombine.low %v3714, %v3724
      %v5218 = vcombine.low %v3731, %v3741
      %v5219 = vcombine.low %v3748, %v3758
      %v5220 = vcombine.low %v3765, %v3775
      %v5221 = vcombine.low %v3782, %v3792
      %v5222 = vcombine.low %v3799, %v3809
      %v5223 = vcombine.low %v3816, %v3826
      %v5224 = vcombine.low %v3833, %v3843
      %v5225 = vcombine.low %v3850, %v3859
      %v5226 = vcombine.low %v2049, %v2057
      %v5227 = vcombine.low %v2056, %v2058
      %v5229 = vunpack.c.l.s4 1983009808
      %v5230 = vunpack.c.0.s8 %v5229
      %v5231 = vlaneseq
      %v5232 = vshrl.u32 %v5231, 7
      %v5233 = vsub.s32 %v5230, %v5232
      %v5234 = vrot.slane %v5226, %v5233
      %v5236 = vunpack.c.l.s4 1983009808
      %v5237 = vunpack.c.0.s8 %v5236
      %v5238 = vlaneseq
      %v5239 = vshrl.u32 %v5238, 7
      %v5240 = vsub.s32 %v5237, %v5239
      %v5241 = vrot.slane %v5227, %v5240
      %v5242 = vcombine.low %v5234, %v5241
      %v5243 = vcombine.low %v2066, %v2074
      %v5244 = vcombine.low %v2073, %v2075
      %v5246 = vunpack.c.l.s4 1983009808
      %v5247 = vunpack.c.0.s8 %v5246
      %v5248 = vlaneseq
      %v5249 = vshrl.u32 %v5248, 7
      %v5250 = vsub.s32 %v5247, %v5249
      %v5251 = vrot.slane %v5243, %v5250
      %v5253 = vunpack.c.l.s4 1983009808
      %v5254 = vunpack.c.0.s8 %v5253
      %v5255 = vlaneseq
      %v5256 = vshrl.u32 %v5255, 7
      %v5257 = vsub.s32 %v5254, %v5256
      %v5258 = vrot.slane %v5244, %v5257
      %v5259 = vcombine.low %v5251, %v5258
      %v5260 = vcombine.low %v2082, %v5156
      %v5261 = vcombine.low %v5164, %v5163
      %v5263 = vunpack.c.l.s4 1983009808
      %v5264 = vunpack.c.0.s8 %v5263
      %v5265 = vlaneseq
      %v5266 = vshrl.u32 %v5265, 7
      %v5267 = vsub.s32 %v5264, %v5266
      %v5268 = vrot.slane %v5260, %v5267
      %v5270 = vunpack.c.l.s4 1983009808
      %v5271 = vunpack.c.0.s8 %v5270
      %v5272 = vlaneseq
      %v5273 = vshrl.u32 %v5272, 7
      %v5274 = vsub.s32 %v5271, %v5273
      %v5275 = vrot.slane %v5261, %v5274
      %v5276 = vcombine.low %v5268, %v5275
      %v5277 = vcombine.low %v5165, %v5173
      %v5278 = vcombine.low %v5181, %v5180
      %v5280 = vunpack.c.l.s4 1983009808
      %v5281 = vunpack.c.0.s8 %v5280
      %v5282 = vlaneseq
      %v5283 = vshrl.u32 %v5282, 7
      %v5284 = vsub.s32 %v5281, %v5283
      %v5285 = vrot.slane %v5277, %v5284
      %v5287 = vunpack.c.l.s4 1983009808
      %v5288 = vunpack.c.0.s8 %v5287
      %v5289 = vlaneseq
      %v5290 = vshrl.u32 %v5289, 7
      %v5291 = vsub.s32 %v5288, %v5290
      %v5292 = vrot.slane %v5278, %v5291
      %v5293 = vcombine.low %v5285, %v5292
      %v5294 = vcombine.low %v5182, %v5189
      %v5296 = vunpack.c.l.s4 1983009808
      %v5297 = vunpack.c.0.s8 %v5296
      %v5298 = vlaneseq
      %v5299 = vshrl.u32 %v5298, 7
      %v5300 = vsub.s32 %v5297, %v5299
      %v5301 = vrot.slane %v5294, %v5300
      %v5302 = vsel %vm2771, %v5190, 0
      %v5304 = vsel %vm2771, %v5191, 0
      %v5306 = vsel %vm2771, %v5192, 0
      %v5308 = vsel %vm2771, %v5193, 0
      %v5310 = vsel %vm2771, %v5194, 0
      %v5312 = vsel %vm2771, %v5195, 0
      %v5314 = vsel %vm2771, %v5196, 0
      %v5316 = vsel %vm2771, %v5197, 0
      %v5318 = vsel %vm2771, %v5198, 0
      %v5320 = vsel %vm2771, %v5199, 0
      %v5322 = vsel %vm2771, %v5200, 0
      %v5324 = vsel %vm2771, %v5201, 0
      %v5326 = vsel %vm2771, %v5202, 0
      %v5328 = vsel %vm2771, %v5203, 0
      %v5330 = vsel %vm2771, %v5204, 0
      %v5332 = vsel %vm2771, %v5205, 0
      %v5334 = vsel %vm2771, %v5206, 0
      %v5336 = vsel %vm2771, %v5207, 0
      %v5338 = vsel %vm2771, %v5208, 0
      %v5340 = vsel %vm2771, %v5209, 0
      %v5342 = vsel %vm2771, %v5210, 0
      %v5344 = vsel %vm2771, %v5211, 0
      %v5346 = vsel %vm2771, %v5212, 0
      %v5348 = vsel %vm2771, %v5213, 0
      %v5350 = vsel %vm2771, %v5214, 0
      %v5352 = vsel %vm2771, %v5215, 0
      %v5354 = vsel %vm2771, %v5216, 0
      %v5356 = vsel %vm2771, %v5217, 0
      %v5358 = vsel %vm2771, %v5218, 0
      %v5360 = vsel %vm2771, %v5219, 0
      %v5362 = vsel %vm2771, %v5220, 0
      %v5364 = vsel %vm2771, %v5221, 0
      %v5366 = vsel %vm2771, %v5222, 0
      %v5368 = vsel %vm2771, %v5223, 0
      %v5370 = vsel %vm2771, %v5224, 0
      %v5372 = vsel %vm2771, %v5225, 0
      %v5374 = vsel %vm2771, %v5242, 0
      %v5376 = vsel %vm2771, %v5259, 0
      %v5378 = vsel %vm2771, %v5276, 0
      %v5380 = vsel %vm2771, %v5293, 0
      %v5382 = vsel %vm2771, %v5301, 0
      %v5385 = vsel %vm2854, %v5145, 0
      %5387 = vmatprep.subr.mxu0 0.0
      %5388 = vmatpush1.msra.mxu0 %v5144
      %5389 = vmatprep.subr.mxu0 0.0
      %5390 = vmatpush1.msra.mxu0 %v5385
      %5391 = vmatprep.subr.mxu0 0.0
      %5392 = vmatpush1.msra.mxu0 0.0
      %5393 = vmatprep.subr.mxu0 0.0
      %5394 = vmatpush1.msra.mxu0 0.0
      %5395 = vmatprep.subr.mxu0 0.0
      %5396 = vmatpush1.msra.mxu0 0.0
      %5397 = vmatprep.subr.mxu0 0.0
      %5398 = vmatpush1.msra.mxu0 0.0
      %5399 = vmatprep.subr.mxu0 0.0
      %5400 = vmatpush1.msra.mxu0 0.0
      %5401 = vmatprep.subr.mxu0 0.0
      %5402 = vmatpush1.msra.mxu0 0.0
      %5403 = vmatprep.subr.mxu0 0.0
      %5404 = vmatpush1.msra.mxu0 0.0
      %5405 = vmatprep.subr.mxu0 0.0
      %5406 = vmatpush1.msra.mxu0 0.0
      %5407 = vmatprep.subr.mxu0 0.0
      %5408 = vmatpush1.msra.mxu0 0.0
      %5409 = vmatprep.subr.mxu0 0.0
      %5410 = vmatpush1.msra.mxu0 0.0
      %5411 = vmatprep.subr.mxu0 0.0
      %5412 = vmatpush1.msra.mxu0 0.0
      %5413 = vmatprep.subr.mxu0 0.0
      %5414 = vmatpush1.msra.mxu0 0.0
      %5415 = vmatprep.subr.mxu0 0.0
      %5416 = vmatpush1.msra.mxu0 0.0
      %5417 = vmatprep.subr.mxu0 0.0
      %5418 = vmatpush1.msra.mxu0 0.0
      %5419 = vmatprep.subr.mxu0 0.0
      %5420 = vmatpush1.msra.mxu0 0.0
      %5421 = vmatprep.subr.mxu0 0.0
      %5422 = vmatpush1.msra.mxu0 0.0
      %5423 = vmatprep.subr.mxu0 0.0
      %5424 = vmatpush1.msra.mxu0 0.0
      %5425 = vmatprep.subr.mxu0 0.0
      %5426 = vmatpush1.msra.mxu0 0.0
      %5427 = vmatprep.subr.mxu0 0.0
      %5428 = vmatpush1.msra.mxu0 0.0
      %5429 = vmatprep.subr.mxu0 0.0
      %5430 = vmatpush1.msra.mxu0 0.0
      %5431 = vmatprep.subr.mxu0 0.0
      %5432 = vmatpush1.msra.mxu0 0.0
      %5433 = vmatprep.subr.mxu0 0.0
      %5434 = vmatpush1.msra.mxu0 0.0
      %5435 = vmatprep.subr.mxu0 0.0
      %5436 = vmatpush1.msra.mxu0 0.0
      %5437 = vmatprep.subr.mxu0 0.0
      %5438 = vmatpush1.msra.mxu0 0.0
      %5439 = vmatprep.subr.mxu0 0.0
      %5440 = vmatpush1.msra.mxu0 0.0
      %5441 = vmatprep.subr.mxu0 0.0
      %5442 = vmatpush1.msra.mxu0 0.0
      %5443 = vmatprep.subr.mxu0 0.0
      %5444 = vmatpush1.msra.mxu0 0.0
      %5445 = vmatprep.subr.mxu0 0.0
      %5446 = vmatpush1.msra.mxu0 0.0
      %5447 = vmatprep.subr.mxu0 0.0
      %5448 = vmatpush1.msra.mxu0 0.0
      %5449 = vmatprep.subr.mxu0 0.0
      %5450 = vmatpush1.msra.mxu0 0.0
      %5451 = vmatprep.mubr.f32.mxu0 0.0
      %5452 = vmatmul.mubr.f32.gmra.mrb[0].mxu0 %v5302
      %v5453 = vpop.f32.mrb[0].mxu0
      %v5454 = vadd.f32 0.0, %v5453
      %v5455 = vpop.f32.mrb[0].mxu0
      %5456 = vmatprep.mubr.f32.mxu0 0.0
      %5457 = vmatmul.mubr.f32.gmra.mrb[0].mxu0 %v5304
      %v5458 = vpop.f32.mrb[0].mxu0
      %v5459 = vadd.f32 0.0, %v5458
      %v5460 = vpop.f32.mrb[0].mxu0
      %5461 = vmatprep.mubr.f32.mxu0 0.0
      %5462 = vmatmul.mubr.f32.gmra.mrb[0].mxu0 %v5306
      %v5463 = vpop.f32.mrb[0].mxu0
      %v5464 = vadd.f32 0.0, %v5463
      %v5465 = vpop.f32.mrb[0].mxu0
      %5466 = vmatprep.mubr.f32.mxu0 0.0
      %5467 = vmatmul.mubr.f32.gmra.mrb[0].mxu0 %v5308
      %v5468 = vpop.f32.mrb[0].mxu0
      %v5469 = vadd.f32 0.0, %v5468
      %v5470 = vpop.f32.mrb[0].mxu0
      %5471 = vmatprep.mubr.f32.mxu0 0.0
      %5472 = vmatmul.mubr.f32.gmra.mrb[0].mxu0 %v5310
      %v5473 = vpop.f32.mrb[0].mxu0
      %v5474 = vadd.f32 0.0, %v5473
      %v5475 = vpop.f32.mrb[0].mxu0
      %5476 = vmatprep.mubr.f32.mxu0 0.0
      %5477 = vmatmul.mubr.f32.gmra.mrb[0].mxu0 %v5312
      %v5478 = vpop.f32.mrb[0].mxu0
      %v5479 = vadd.f32 0.0, %v5478
      %v5480 = vpop.f32.mrb[0].mxu0
      %5481 = vmatprep.mubr.f32.mxu0 0.0
      %5482 = vmatmul.mubr.f32.gmra.mrb[0].mxu0 %v5314
      %v5483 = vpop.f32.mrb[0].mxu0
      %v5484 = vadd.f32 0.0, %v5483
      %v5485 = vpop.f32.mrb[0].mxu0
      %5486 = vmatprep.mubr.f32.mxu0 0.0
      %5487 = vmatmul.mubr.f32.gmra.mrb[0].mxu0 %v5316
      %v5488 = vpop.f32.mrb[0].mxu0
      %v5489 = vadd.f32 0.0, %v5488
      %v5490 = vpop.f32.mrb[0].mxu0
      %5491 = vmatprep.mubr.f32.mxu0 0.0
      %5492 = vmatmul.mubr.f32.gmra.mrb[0].mxu0 %v5318
      %v5493 = vpop.f32.mrb[0].mxu0
      %v5494 = vadd.f32 0.0, %v5493
      %v5495 = vpop.f32.mrb[0].mxu0
      %5496 = vmatprep.mubr.f32.mxu0 0.0
      %5497 = vmatmul.mubr.f32.gmra.mrb[0].mxu0 %v5320
      %v5498 = vpop.f32.mrb[0].mxu0
      %v5499 = vadd.f32 0.0, %v5498
      %v5500 = vpop.f32.mrb[0].mxu0
      %5501 = vmatprep.mubr.f32.mxu0 0.0
      %5502 = vmatmul.mubr.f32.gmra.mrb[0].mxu0 %v5322
      %v5503 = vpop.f32.mrb[0].mxu0
      %v5504 = vadd.f32 0.0, %v5503
      %v5505 = vpop.f32.mrb[0].mxu0
      %5506 = vmatprep.mubr.f32.mxu0 0.0
      %5507 = vmatmul.mubr.f32.gmra.mrb[0].mxu0 %v5324
      %v5508 = vpop.f32.mrb[0].mxu0
      %v5509 = vadd.f32 0.0, %v5508
      %v5510 = vpop.f32.mrb[0].mxu0
      %5511 = vmatprep.mubr.f32.mxu0 0.0
      %5512 = vmatmul.mubr.f32.gmra.mrb[0].mxu0 %v5326
      %v5513 = vpop.f32.mrb[0].mxu0
      %v5514 = vadd.f32 0.0, %v5513
      %v5515 = vpop.f32.mrb[0].mxu0
      %5516 = vmatprep.mubr.f32.mxu0 0.0
      %5517 = vmatmul.mubr.f32.gmra.mrb[0].mxu0 %v5328
      %v5518 = vpop.f32.mrb[0].mxu0
      %v5519 = vadd.f32 0.0, %v5518
      %v5520 = vpop.f32.mrb[0].mxu0
      %5521 = vmatprep.mubr.f32.mxu0 0.0
      %5522 = vmatmul.mubr.f32.gmra.mrb[0].mxu0 %v5330
      %v5523 = vpop.f32.mrb[0].mxu0
      %v5524 = vadd.f32 0.0, %v5523
      %v5525 = vpop.f32.mrb[0].mxu0
      %5526 = vmatprep.mubr.f32.mxu0 0.0
      %5527 = vmatmul.mubr.f32.gmra.mrb[0].mxu0 %v5332
      %v5528 = vpop.f32.mrb[0].mxu0
      %v5529 = vadd.f32 0.0, %v5528
      %v5530 = vpop.f32.mrb[0].mxu0
      %5531 = vmatprep.mubr.f32.mxu0 0.0
      %5532 = vmatmul.mubr.f32.gmra.mrb[0].mxu0 %v5334
      %v5533 = vpop.f32.mrb[0].mxu0
      %v5534 = vadd.f32 0.0, %v5533
      %v5535 = vpop.f32.mrb[0].mxu0
      %5536 = vmatprep.mubr.f32.mxu0 0.0
      %5537 = vmatmul.mubr.f32.gmra.mrb[0].mxu0 %v5336
      %v5538 = vpop.f32.mrb[0].mxu0
      %v5539 = vadd.f32 0.0, %v5538
      %v5540 = vpop.f32.mrb[0].mxu0
      %5541 = vmatprep.mubr.f32.mxu0 0.0
      %5542 = vmatmul.mubr.f32.gmra.mrb[0].mxu0 %v5338
      %v5543 = vpop.f32.mrb[0].mxu0
      %v5544 = vadd.f32 0.0, %v5543
      %v5545 = vpop.f32.mrb[0].mxu0
      %5546 = vmatprep.mubr.f32.mxu0 0.0
      %5547 = vmatmul.mubr.f32.gmra.mrb[0].mxu0 %v5340
      %v5548 = vpop.f32.mrb[0].mxu0
      %v5549 = vadd.f32 0.0, %v5548
      %v5550 = vpop.f32.mrb[0].mxu0
      %5551 = vmatprep.mubr.f32.mxu0 0.0
      %5552 = vmatmul.mubr.f32.gmra.mrb[0].mxu0 %v5342
      %v5553 = vpop.f32.mrb[0].mxu0
      %v5554 = vadd.f32 0.0, %v5553
      %v5555 = vpop.f32.mrb[0].mxu0
      %5556 = vmatprep.mubr.f32.mxu0 0.0
      %5557 = vmatmul.mubr.f32.gmra.mrb[0].mxu0 %v5344
      %v5558 = vpop.f32.mrb[0].mxu0
      %v5559 = vadd.f32 0.0, %v5558
      %v5560 = vpop.f32.mrb[0].mxu0
      %5561 = vmatprep.mubr.f32.mxu0 0.0
      %5562 = vmatmul.mubr.f32.gmra.mrb[0].mxu0 %v5346
      %v5563 = vpop.f32.mrb[0].mxu0
      %v5564 = vadd.f32 0.0, %v5563
      %v5565 = vpop.f32.mrb[0].mxu0
      %5566 = vmatprep.mubr.f32.mxu0 0.0
      %5567 = vmatmul.mubr.f32.gmra.mrb[0].mxu0 %v5348
      %v5568 = vpop.f32.mrb[0].mxu0
      %v5569 = vadd.f32 0.0, %v5568
      %v5570 = vpop.f32.mrb[0].mxu0
      %5571 = vmatprep.mubr.f32.mxu0 0.0
      %5572 = vmatmul.mubr.f32.gmra.mrb[0].mxu0 %v5350
      %v5573 = vpop.f32.mrb[0].mxu0
      %v5574 = vadd.f32 0.0, %v5573
      %v5575 = vpop.f32.mrb[0].mxu0
      %5576 = vmatprep.mubr.f32.mxu0 0.0
      %5577 = vmatmul.mubr.f32.gmra.mrb[0].mxu0 %v5352
      %v5578 = vpop.f32.mrb[0].mxu0
      %v5579 = vadd.f32 0.0, %v5578
      %v5580 = vpop.f32.mrb[0].mxu0
      %5581 = vmatprep.mubr.f32.mxu0 0.0
      %5582 = vmatmul.mubr.f32.gmra.mrb[0].mxu0 %v5354
      %v5583 = vpop.f32.mrb[0].mxu0
      %v5584 = vadd.f32 0.0, %v5583
      %v5585 = vpop.f32.mrb[0].mxu0
      %5586 = vmatprep.mubr.f32.mxu0 0.0
      %5587 = vmatmul.mubr.f32.gmra.mrb[0].mxu0 %v5356
      %v5588 = vpop.f32.mrb[0].mxu0
      %v5589 = vadd.f32 0.0, %v5588
      %v5590 = vpop.f32.mrb[0].mxu0
      %5591 = vmatprep.mubr.f32.mxu0 0.0
      %5592 = vmatmul.mubr.f32.gmra.mrb[0].mxu0 %v5358
      %v5593 = vpop.f32.mrb[0].mxu0
      %v5594 = vadd.f32 0.0, %v5593
      %v5595 = vpop.f32.mrb[0].mxu0
      %5596 = vmatprep.mubr.f32.mxu0 0.0
      %5597 = vmatmul.mubr.f32.gmra.mrb[0].mxu0 %v5360
      %v5598 = vpop.f32.mrb[0].mxu0
      %v5599 = vadd.f32 0.0, %v5598
      %v5600 = vpop.f32.mrb[0].mxu0
      %5601 = vmatprep.mubr.f32.mxu0 0.0
      %5602 = vmatmul.mubr.f32.gmra.mrb[0].mxu0 %v5362
      %v5603 = vpop.f32.mrb[0].mxu0
      %v5604 = vadd.f32 0.0, %v5603
      %v5605 = vpop.f32.mrb[0].mxu0
      %5606 = vmatprep.mubr.f32.mxu0 0.0
      %5607 = vmatmul.mubr.f32.gmra.mrb[0].mxu0 %v5364
      %v5608 = vpop.f32.mrb[0].mxu0
      %v5609 = vadd.f32 0.0, %v5608
      %v5610 = vpop.f32.mrb[0].mxu0
      %5611 = vmatprep.mubr.f32.mxu0 0.0
      %5612 = vmatmul.mubr.f32.gmra.mrb[0].mxu0 %v5366
      %v5613 = vpop.f32.mrb[0].mxu0
      %v5614 = vadd.f32 0.0, %v5613
      %v5615 = vpop.f32.mrb[0].mxu0
      %5616 = vmatprep.mubr.f32.mxu0 0.0
      %5617 = vmatmul.mubr.f32.gmra.mrb[0].mxu0 %v5368
      %v5618 = vpop.f32.mrb[0].mxu0
      %v5619 = vadd.f32 0.0, %v5618
      %v5620 = vpop.f32.mrb[0].mxu0
      %5621 = vmatprep.mubr.f32.mxu0 0.0
      %5622 = vmatmul.mubr.f32.gmra.mrb[0].mxu0 %v5370
      %v5623 = vpop.f32.mrb[0].mxu0
      %v5624 = vadd.f32 0.0, %v5623
      %v5625 = vpop.f32.mrb[0].mxu0
      %5626 = vmatprep.mubr.f32.mxu0 0.0
      %5627 = vmatmul.mubr.f32.gmra.mrb[0].mxu0 %v5372
      %v5628 = vpop.f32.mrb[0].mxu0
      %v5629 = vadd.f32 0.0, %v5628
      %v5630 = vpop.f32.mrb[0].mxu0
      %5631 = vmatprep.mubr.f32.mxu0 0.0
      %5632 = vmatmul.mubr.f32.gmra.mrb[0].mxu0 %v5374
      %v5633 = vpop.f32.mrb[0].mxu0
      %v5634 = vadd.f32 0.0, %v5633
      %v5635 = vpop.f32.mrb[0].mxu0
      %5636 = vmatprep.mubr.f32.mxu0 0.0
      %5637 = vmatmul.mubr.f32.gmra.mrb[0].mxu0 %v5376
      %v5638 = vpop.f32.mrb[0].mxu0
      %v5639 = vadd.f32 0.0, %v5638
      %v5640 = vpop.f32.mrb[0].mxu0
      %5641 = vmatprep.mubr.f32.mxu0 0.0
      %5642 = vmatmul.mubr.f32.gmra.mrb[0].mxu0 %v5378
      %v5643 = vpop.f32.mrb[0].mxu0
      %v5644 = vadd.f32 0.0, %v5643
      %v5645 = vpop.f32.mrb[0].mxu0
      %5646 = vmatprep.mubr.f32.mxu0 0.0
      %5647 = vmatmul.mubr.f32.gmra.mrb[0].mxu0 %v5380
      %v5648 = vpop.f32.mrb[0].mxu0
      %v5649 = vadd.f32 0.0, %v5648
      %v5650 = vpop.f32.mrb[0].mxu0
      %5651 = vmatprep.mubr.f32.mxu0 0.0
      %5652 = vmatmul.mubr.f32.gmra.mrb[0].mxu0 %v5382
      %v5653 = vpop.f32.mrb[0].mxu0
      %v5654 = vadd.f32 0.0, %v5653
      %v5655 = vpop.f32.mrb[0].mxu0
      %5656 = vdwg.mxu0
      %v5698 = vcombine.high %v5454, %v5454
      %v5700 = vunpack.c.l.s4 1983009808
      %v5701 = vunpack.c.0.s8 %v5700
      %v5702 = vlaneseq
      %v5703 = vshrl.u32 %v5702, 7
      %v5704 = vsub.s32 %v5701, %v5703
      %v5705 = vrot.slane %v5454, %v5704
      %v5707 = vunpack.c.l.s4 1983009808
      %v5708 = vunpack.c.0.s8 %v5707
      %v5709 = vlaneseq
      %v5710 = vshrl.u32 %v5709, 7
      %v5711 = vsub.s32 %v5708, %v5710
      %v5712 = vrot.slane %v5698, %v5711
      %v5713 = vcombine.high %v5705, %v5705
      %v5714 = vcombine.high %v5712, %v5712
      %v5715 = vcombine.high %v5459, %v5459
      %v5717 = vunpack.c.l.s4 1983009808
      %v5718 = vunpack.c.0.s8 %v5717
      %v5719 = vlaneseq
      %v5720 = vshrl.u32 %v5719, 7
      %v5721 = vsub.s32 %v5718, %v5720
      %v5722 = vrot.slane %v5459, %v5721
      %v5724 = vunpack.c.l.s4 1983009808
      %v5725 = vunpack.c.0.s8 %v5724
      %v5726 = vlaneseq
      %v5727 = vshrl.u32 %v5726, 7
      %v5728 = vsub.s32 %v5725, %v5727
      %v5729 = vrot.slane %v5715, %v5728
      %v5730 = vcombine.high %v5722, %v5722
      %v5731 = vcombine.high %v5729, %v5729
      %v5732 = vcombine.high %v5464, %v5464
      %v5734 = vunpack.c.l.s4 1983009808
      %v5735 = vunpack.c.0.s8 %v5734
      %v5736 = vlaneseq
      %v5737 = vshrl.u32 %v5736, 7
      %v5738 = vsub.s32 %v5735, %v5737
      %v5739 = vrot.slane %v5464, %v5738
      %v5741 = vunpack.c.l.s4 1983009808
      %v5742 = vunpack.c.0.s8 %v5741
      %v5743 = vlaneseq
      %v5744 = vshrl.u32 %v5743, 7
      %v5745 = vsub.s32 %v5742, %v5744
      %v5746 = vrot.slane %v5732, %v5745
      %v5747 = vcombine.high %v5739, %v5739
      %v5748 = vcombine.high %v5746, %v5746
      %v5749 = vcombine.high %v5469, %v5469
      %v5751 = vunpack.c.l.s4 1983009808
      %v5752 = vunpack.c.0.s8 %v5751
      %v5753 = vlaneseq
      %v5754 = vshrl.u32 %v5753, 7
      %v5755 = vsub.s32 %v5752, %v5754
      %v5756 = vrot.slane %v5469, %v5755
      %v5758 = vunpack.c.l.s4 1983009808
      %v5759 = vunpack.c.0.s8 %v5758
      %v5760 = vlaneseq
      %v5761 = vshrl.u32 %v5760, 7
      %v5762 = vsub.s32 %v5759, %v5761
      %v5763 = vrot.slane %v5749, %v5762
      %v5764 = vcombine.high %v5756, %v5756
      %v5765 = vcombine.high %v5763, %v5763
      %v5766 = vcombine.high %v5474, %v5474
      %v5768 = vunpack.c.l.s4 1983009808
      %v5769 = vunpack.c.0.s8 %v5768
      %v5770 = vlaneseq
      %v5771 = vshrl.u32 %v5770, 7
      %v5772 = vsub.s32 %v5769, %v5771
      %v5773 = vrot.slane %v5474, %v5772
      %v5775 = vunpack.c.l.s4 1983009808
      %v5776 = vunpack.c.0.s8 %v5775
      %v5777 = vlaneseq
      %v5778 = vshrl.u32 %v5777, 7
      %v5779 = vsub.s32 %v5776, %v5778
      %v5780 = vrot.slane %v5766, %v5779
      %v5781 = vcombine.high %v5773, %v5773
      %v5782 = vcombine.high %v5780, %v5780
      %v5783 = vcombine.high %v5479, %v5479
      %v5785 = vunpack.c.l.s4 1983009808
      %v5786 = vunpack.c.0.s8 %v5785
      %v5787 = vlaneseq
      %v5788 = vshrl.u32 %v5787, 7
      %v5789 = vsub.s32 %v5786, %v5788
      %v5790 = vrot.slane %v5479, %v5789
      %v5792 = vunpack.c.l.s4 1983009808
      %v5793 = vunpack.c.0.s8 %v5792
      %v5794 = vlaneseq
      %v5795 = vshrl.u32 %v5794, 7
      %v5796 = vsub.s32 %v5793, %v5795
      %v5797 = vrot.slane %v5783, %v5796
      %v5798 = vcombine.high %v5790, %v5790
      %v5799 = vcombine.high %v5797, %v5797
      %v5800 = vcombine.high %v5484, %v5484
      %v5802 = vunpack.c.l.s4 1983009808
      %v5803 = vunpack.c.0.s8 %v5802
      %v5804 = vlaneseq
      %v5805 = vshrl.u32 %v5804, 7
      %v5806 = vsub.s32 %v5803, %v5805
      %v5807 = vrot.slane %v5484, %v5806
      %v5809 = vunpack.c.l.s4 1983009808
      %v5810 = vunpack.c.0.s8 %v5809
      %v5811 = vlaneseq
      %v5812 = vshrl.u32 %v5811, 7
      %v5813 = vsub.s32 %v5810, %v5812
      %v5814 = vrot.slane %v5800, %v5813
      %v5815 = vcombine.high %v5807, %v5807
      %v5816 = vcombine.high %v5814, %v5814
      %v5817 = vcombine.high %v5489, %v5489
      %v5819 = vunpack.c.l.s4 1983009808
      %v5820 = vunpack.c.0.s8 %v5819
      %v5821 = vlaneseq
      %v5822 = vshrl.u32 %v5821, 7
      %v5823 = vsub.s32 %v5820, %v5822
      %v5824 = vrot.slane %v5489, %v5823
      %v5826 = vunpack.c.l.s4 1983009808
      %v5827 = vunpack.c.0.s8 %v5826
      %v5828 = vlaneseq
      %v5829 = vshrl.u32 %v5828, 7
      %v5830 = vsub.s32 %v5827, %v5829
      %v5831 = vrot.slane %v5817, %v5830
      %v5832 = vcombine.high %v5824, %v5824
      %v5833 = vcombine.high %v5831, %v5831
      %v5834 = vcombine.high %v5494, %v5494
      %v5836 = vunpack.c.l.s4 1983009808
      %v5837 = vunpack.c.0.s8 %v5836
      %v5838 = vlaneseq
      %v5839 = vshrl.u32 %v5838, 7
      %v5840 = vsub.s32 %v5837, %v5839
      %v5841 = vrot.slane %v5494, %v5840
      %v5843 = vunpack.c.l.s4 1983009808
      %v5844 = vunpack.c.0.s8 %v5843
      %v5845 = vlaneseq
      %v5846 = vshrl.u32 %v5845, 7
      %v5847 = vsub.s32 %v5844, %v5846
      %v5848 = vrot.slane %v5834, %v5847
      %v5849 = vcombine.high %v5841, %v5841
      %v5850 = vcombine.high %v5848, %v5848
      %v5851 = vcombine.high %v5499, %v5499
      %v5853 = vunpack.c.l.s4 1983009808
      %v5854 = vunpack.c.0.s8 %v5853
      %v5855 = vlaneseq
      %v5856 = vshrl.u32 %v5855, 7
      %v5857 = vsub.s32 %v5854, %v5856
      %v5858 = vrot.slane %v5499, %v5857
      %v5860 = vunpack.c.l.s4 1983009808
      %v5861 = vunpack.c.0.s8 %v5860
      %v5862 = vlaneseq
      %v5863 = vshrl.u32 %v5862, 7
      %v5864 = vsub.s32 %v5861, %v5863
      %v5865 = vrot.slane %v5851, %v5864
      %v5866 = vcombine.high %v5858, %v5858
      %v5867 = vcombine.high %v5865, %v5865
      %v5868 = vcombine.high %v5504, %v5504
      %v5870 = vunpack.c.l.s4 1983009808
      %v5871 = vunpack.c.0.s8 %v5870
      %v5872 = vlaneseq
      %v5873 = vshrl.u32 %v5872, 7
      %v5874 = vsub.s32 %v5871, %v5873
      %v5875 = vrot.slane %v5504, %v5874
      %v5877 = vunpack.c.l.s4 1983009808
      %v5878 = vunpack.c.0.s8 %v5877
      %v5879 = vlaneseq
      %v5880 = vshrl.u32 %v5879, 7
      %v5881 = vsub.s32 %v5878, %v5880
      %v5882 = vrot.slane %v5868, %v5881
      %v5883 = vcombine.high %v5875, %v5875
      %v5884 = vcombine.high %v5882, %v5882
      %v5885 = vcombine.high %v5509, %v5509
      %v5887 = vunpack.c.l.s4 1983009808
      %v5888 = vunpack.c.0.s8 %v5887
      %v5889 = vlaneseq
      %v5890 = vshrl.u32 %v5889, 7
      %v5891 = vsub.s32 %v5888, %v5890
      %v5892 = vrot.slane %v5509, %v5891
      %v5894 = vunpack.c.l.s4 1983009808
      %v5895 = vunpack.c.0.s8 %v5894
      %v5896 = vlaneseq
      %v5897 = vshrl.u32 %v5896, 7
      %v5898 = vsub.s32 %v5895, %v5897
      %v5899 = vrot.slane %v5885, %v5898
      %v5900 = vcombine.high %v5892, %v5892
      %v5901 = vcombine.high %v5899, %v5899
      %v5902 = vcombine.high %v5514, %v5514
      %v5904 = vunpack.c.l.s4 1983009808
      %v5905 = vunpack.c.0.s8 %v5904
      %v5906 = vlaneseq
      %v5907 = vshrl.u32 %v5906, 7
      %v5908 = vsub.s32 %v5905, %v5907
      %v5909 = vrot.slane %v5514, %v5908
      %v5911 = vunpack.c.l.s4 1983009808
      %v5912 = vunpack.c.0.s8 %v5911
      %v5913 = vlaneseq
      %v5914 = vshrl.u32 %v5913, 7
      %v5915 = vsub.s32 %v5912, %v5914
      %v5916 = vrot.slane %v5902, %v5915
      %v5917 = vcombine.high %v5909, %v5909
      %v5918 = vcombine.high %v5916, %v5916
      %v5919 = vcombine.high %v5519, %v5519
      %v5921 = vunpack.c.l.s4 1983009808
      %v5922 = vunpack.c.0.s8 %v5921
      %v5923 = vlaneseq
      %v5924 = vshrl.u32 %v5923, 7
      %v5925 = vsub.s32 %v5922, %v5924
      %v5926 = vrot.slane %v5519, %v5925
      %v5928 = vunpack.c.l.s4 1983009808
      %v5929 = vunpack.c.0.s8 %v5928
      %v5930 = vlaneseq
      %v5931 = vshrl.u32 %v5930, 7
      %v5932 = vsub.s32 %v5929, %v5931
      %v5933 = vrot.slane %v5919, %v5932
      %v5934 = vcombine.high %v5926, %v5926
      %v5935 = vcombine.high %v5933, %v5933
      %v5936 = vcombine.high %v5524, %v5524
      %v5938 = vunpack.c.l.s4 1983009808
      %v5939 = vunpack.c.0.s8 %v5938
      %v5940 = vlaneseq
      %v5941 = vshrl.u32 %v5940, 7
      %v5942 = vsub.s32 %v5939, %v5941
      %v5943 = vrot.slane %v5524, %v5942
      %v5945 = vunpack.c.l.s4 1983009808
      %v5946 = vunpack.c.0.s8 %v5945
      %v5947 = vlaneseq
      %v5948 = vshrl.u32 %v5947, 7
      %v5949 = vsub.s32 %v5946, %v5948
      %v5950 = vrot.slane %v5936, %v5949
      %v5951 = vcombine.high %v5943, %v5943
      %v5952 = vcombine.high %v5950, %v5950
      %v5953 = vcombine.high %v5529, %v5529
      %v5955 = vunpack.c.l.s4 1983009808
      %v5956 = vunpack.c.0.s8 %v5955
      %v5957 = vlaneseq
      %v5958 = vshrl.u32 %v5957, 7
      %v5959 = vsub.s32 %v5956, %v5958
      %v5960 = vrot.slane %v5529, %v5959
      %v5962 = vunpack.c.l.s4 1983009808
      %v5963 = vunpack.c.0.s8 %v5962
      %v5964 = vlaneseq
      %v5965 = vshrl.u32 %v5964, 7
      %v5966 = vsub.s32 %v5963, %v5965
      %v5967 = vrot.slane %v5953, %v5966
      %v5968 = vcombine.high %v5960, %v5960
      %v5969 = vcombine.high %v5967, %v5967
      %v5970 = vcombine.high %v5534, %v5534
      %v5972 = vunpack.c.l.s4 1983009808
      %v5973 = vunpack.c.0.s8 %v5972
      %v5974 = vlaneseq
      %v5975 = vshrl.u32 %v5974, 7
      %v5976 = vsub.s32 %v5973, %v5975
      %v5977 = vrot.slane %v5534, %v5976
      %v5979 = vunpack.c.l.s4 1983009808
      %v5980 = vunpack.c.0.s8 %v5979
      %v5981 = vlaneseq
      %v5982 = vshrl.u32 %v5981, 7
      %v5983 = vsub.s32 %v5980, %v5982
      %v5984 = vrot.slane %v5970, %v5983
      %v5985 = vcombine.high %v5977, %v5977
      %v5986 = vcombine.high %v5984, %v5984
      %v5987 = vcombine.high %v5539, %v5539
      %v5989 = vunpack.c.l.s4 1983009808
      %v5990 = vunpack.c.0.s8 %v5989
      %v5991 = vlaneseq
      %v5992 = vshrl.u32 %v5991, 7
      %v5993 = vsub.s32 %v5990, %v5992
      %v5994 = vrot.slane %v5539, %v5993
      %v5996 = vunpack.c.l.s4 1983009808
      %v5997 = vunpack.c.0.s8 %v5996
      %v5998 = vlaneseq
      %v5999 = vshrl.u32 %v5998, 7
      %v6000 = vsub.s32 %v5997, %v5999
      %v6001 = vrot.slane %v5987, %v6000
      %v6002 = vcombine.high %v5994, %v5994
      %v6003 = vcombine.high %v6001, %v6001
      %v6004 = vcombine.high %v5544, %v5544
      %v6006 = vunpack.c.l.s4 1983009808
      %v6007 = vunpack.c.0.s8 %v6006
      %v6008 = vlaneseq
      %v6009 = vshrl.u32 %v6008, 7
      %v6010 = vsub.s32 %v6007, %v6009
      %v6011 = vrot.slane %v5544, %v6010
      %v6013 = vunpack.c.l.s4 1983009808
      %v6014 = vunpack.c.0.s8 %v6013
      %v6015 = vlaneseq
      %v6016 = vshrl.u32 %v6015, 7
      %v6017 = vsub.s32 %v6014, %v6016
      %v6018 = vrot.slane %v6004, %v6017
      %v6019 = vcombine.high %v6011, %v6011
      %v6020 = vcombine.high %v6018, %v6018
      %v6021 = vcombine.high %v5549, %v5549
      %v6023 = vunpack.c.l.s4 1983009808
      %v6024 = vunpack.c.0.s8 %v6023
      %v6025 = vlaneseq
      %v6026 = vshrl.u32 %v6025, 7
      %v6027 = vsub.s32 %v6024, %v6026
      %v6028 = vrot.slane %v5549, %v6027
      %v6030 = vunpack.c.l.s4 1983009808
      %v6031 = vunpack.c.0.s8 %v6030
      %v6032 = vlaneseq
      %v6033 = vshrl.u32 %v6032, 7
      %v6034 = vsub.s32 %v6031, %v6033
      %v6035 = vrot.slane %v6021, %v6034
      %v6036 = vcombine.high %v6028, %v6028
      %v6037 = vcombine.high %v6035, %v6035
      %v6038 = vcombine.high %v5554, %v5554
      %v6040 = vunpack.c.l.s4 1983009808
      %v6041 = vunpack.c.0.s8 %v6040
      %v6042 = vlaneseq
      %v6043 = vshrl.u32 %v6042, 7
      %v6044 = vsub.s32 %v6041, %v6043
      %v6045 = vrot.slane %v5554, %v6044
      %v6047 = vunpack.c.l.s4 1983009808
      %v6048 = vunpack.c.0.s8 %v6047
      %v6049 = vlaneseq
      %v6050 = vshrl.u32 %v6049, 7
      %v6051 = vsub.s32 %v6048, %v6050
      %v6052 = vrot.slane %v6038, %v6051
      %v6053 = vcombine.high %v6045, %v6045
      %v6054 = vcombine.high %v6052, %v6052
      %v6055 = vcombine.high %v5559, %v5559
      %v6057 = vunpack.c.l.s4 1983009808
      %v6058 = vunpack.c.0.s8 %v6057
      %v6059 = vlaneseq
      %v6060 = vshrl.u32 %v6059, 7
      %v6061 = vsub.s32 %v6058, %v6060
      %v6062 = vrot.slane %v5559, %v6061
      %v6064 = vunpack.c.l.s4 1983009808
      %v6065 = vunpack.c.0.s8 %v6064
      %v6066 = vlaneseq
      %v6067 = vshrl.u32 %v6066, 7
      %v6068 = vsub.s32 %v6065, %v6067
      %v6069 = vrot.slane %v6055, %v6068
      %v6070 = vcombine.high %v6062, %v6062
      %v6071 = vcombine.high %v6069, %v6069
      %v6072 = vcombine.high %v5564, %v5564
      %v6074 = vunpack.c.l.s4 1983009808
      %v6075 = vunpack.c.0.s8 %v6074
      %v6076 = vlaneseq
      %v6077 = vshrl.u32 %v6076, 7
      %v6078 = vsub.s32 %v6075, %v6077
      %v6079 = vrot.slane %v5564, %v6078
      %v6081 = vunpack.c.l.s4 1983009808
      %v6082 = vunpack.c.0.s8 %v6081
      %v6083 = vlaneseq
      %v6084 = vshrl.u32 %v6083, 7
      %v6085 = vsub.s32 %v6082, %v6084
      %v6086 = vrot.slane %v6072, %v6085
      %v6087 = vcombine.high %v6079, %v6079
      %v6088 = vcombine.high %v6086, %v6086
      %v6089 = vcombine.high %v5569, %v5569
      %v6091 = vunpack.c.l.s4 1983009808
      %v6092 = vunpack.c.0.s8 %v6091
      %v6093 = vlaneseq
      %v6094 = vshrl.u32 %v6093, 7
      %v6095 = vsub.s32 %v6092, %v6094
      %v6096 = vrot.slane %v5569, %v6095
      %v6098 = vunpack.c.l.s4 1983009808
      %v6099 = vunpack.c.0.s8 %v6098
      %v6100 = vlaneseq
      %v6101 = vshrl.u32 %v6100, 7
      %v6102 = vsub.s32 %v6099, %v6101
      %v6103 = vrot.slane %v6089, %v6102
      %v6104 = vcombine.high %v6096, %v6096
      %v6105 = vcombine.high %v6103, %v6103
      %v6106 = vcombine.high %v5574, %v5574
      %v6108 = vunpack.c.l.s4 1983009808
      %v6109 = vunpack.c.0.s8 %v6108
      %v6110 = vlaneseq
      %v6111 = vshrl.u32 %v6110, 7
      %v6112 = vsub.s32 %v6109, %v6111
      %v6113 = vrot.slane %v5574, %v6112
      %v6115 = vunpack.c.l.s4 1983009808
      %v6116 = vunpack.c.0.s8 %v6115
      %v6117 = vlaneseq
      %v6118 = vshrl.u32 %v6117, 7
      %v6119 = vsub.s32 %v6116, %v6118
      %v6120 = vrot.slane %v6106, %v6119
      %v6121 = vcombine.high %v6113, %v6113
      %v6122 = vcombine.high %v6120, %v6120
      %v6123 = vcombine.high %v5579, %v5579
      %v6125 = vunpack.c.l.s4 1983009808
      %v6126 = vunpack.c.0.s8 %v6125
      %v6127 = vlaneseq
      %v6128 = vshrl.u32 %v6127, 7
      %v6129 = vsub.s32 %v6126, %v6128
      %v6130 = vrot.slane %v5579, %v6129
      %v6132 = vunpack.c.l.s4 1983009808
      %v6133 = vunpack.c.0.s8 %v6132
      %v6134 = vlaneseq
      %v6135 = vshrl.u32 %v6134, 7
      %v6136 = vsub.s32 %v6133, %v6135
      %v6137 = vrot.slane %v6123, %v6136
      %v6138 = vcombine.high %v6130, %v6130
      %v6139 = vcombine.high %v6137, %v6137
      %v6140 = vcombine.high %v5584, %v5584
      %v6142 = vunpack.c.l.s4 1983009808
      %v6143 = vunpack.c.0.s8 %v6142
      %v6144 = vlaneseq
      %v6145 = vshrl.u32 %v6144, 7
      %v6146 = vsub.s32 %v6143, %v6145
      %v6147 = vrot.slane %v5584, %v6146
      %v6149 = vunpack.c.l.s4 1983009808
      %v6150 = vunpack.c.0.s8 %v6149
      %v6151 = vlaneseq
      %v6152 = vshrl.u32 %v6151, 7
      %v6153 = vsub.s32 %v6150, %v6152
      %v6154 = vrot.slane %v6140, %v6153
      %v6155 = vcombine.high %v6147, %v6147
      %v6156 = vcombine.high %v6154, %v6154
      %v6157 = vcombine.high %v5589, %v5589
      %v6159 = vunpack.c.l.s4 1983009808
      %v6160 = vunpack.c.0.s8 %v6159
      %v6161 = vlaneseq
      %v6162 = vshrl.u32 %v6161, 7
      %v6163 = vsub.s32 %v6160, %v6162
      %v6164 = vrot.slane %v5589, %v6163
      %v6166 = vunpack.c.l.s4 1983009808
      %v6167 = vunpack.c.0.s8 %v6166
      %v6168 = vlaneseq
      %v6169 = vshrl.u32 %v6168, 7
      %v6170 = vsub.s32 %v6167, %v6169
      %v6171 = vrot.slane %v6157, %v6170
      %v6172 = vcombine.high %v6164, %v6164
      %v6173 = vcombine.high %v6171, %v6171
      %v6174 = vcombine.high %v5594, %v5594
      %v6176 = vunpack.c.l.s4 1983009808
      %v6177 = vunpack.c.0.s8 %v6176
      %v6178 = vlaneseq
      %v6179 = vshrl.u32 %v6178, 7
      %v6180 = vsub.s32 %v6177, %v6179
      %v6181 = vrot.slane %v5594, %v6180
      %v6183 = vunpack.c.l.s4 1983009808
      %v6184 = vunpack.c.0.s8 %v6183
      %v6185 = vlaneseq
      %v6186 = vshrl.u32 %v6185, 7
      %v6187 = vsub.s32 %v6184, %v6186
      %v6188 = vrot.slane %v6174, %v6187
      %v6189 = vcombine.high %v6181, %v6181
      %v6190 = vcombine.high %v6188, %v6188
      %v6191 = vcombine.high %v5599, %v5599
      %v6193 = vunpack.c.l.s4 1983009808
      %v6194 = vunpack.c.0.s8 %v6193
      %v6195 = vlaneseq
      %v6196 = vshrl.u32 %v6195, 7
      %v6197 = vsub.s32 %v6194, %v6196
      %v6198 = vrot.slane %v5599, %v6197
      %v6200 = vunpack.c.l.s4 1983009808
      %v6201 = vunpack.c.0.s8 %v6200
      %v6202 = vlaneseq
      %v6203 = vshrl.u32 %v6202, 7
      %v6204 = vsub.s32 %v6201, %v6203
      %v6205 = vrot.slane %v6191, %v6204
      %v6206 = vcombine.high %v6198, %v6198
      %v6207 = vcombine.high %v6205, %v6205
      %v6208 = vcombine.high %v5604, %v5604
      %v6210 = vunpack.c.l.s4 1983009808
      %v6211 = vunpack.c.0.s8 %v6210
      %v6212 = vlaneseq
      %v6213 = vshrl.u32 %v6212, 7
      %v6214 = vsub.s32 %v6211, %v6213
      %v6215 = vrot.slane %v5604, %v6214
      %v6217 = vunpack.c.l.s4 1983009808
      %v6218 = vunpack.c.0.s8 %v6217
      %v6219 = vlaneseq
      %v6220 = vshrl.u32 %v6219, 7
      %v6221 = vsub.s32 %v6218, %v6220
      %v6222 = vrot.slane %v6208, %v6221
      %v6223 = vcombine.high %v6215, %v6215
      %v6224 = vcombine.high %v6222, %v6222
      %v6225 = vcombine.high %v5609, %v5609
      %v6227 = vunpack.c.l.s4 1983009808
      %v6228 = vunpack.c.0.s8 %v6227
      %v6229 = vlaneseq
      %v6230 = vshrl.u32 %v6229, 7
      %v6231 = vsub.s32 %v6228, %v6230
      %v6232 = vrot.slane %v5609, %v6231
      %v6234 = vunpack.c.l.s4 1983009808
      %v6235 = vunpack.c.0.s8 %v6234
      %v6236 = vlaneseq
      %v6237 = vshrl.u32 %v6236, 7
      %v6238 = vsub.s32 %v6235, %v6237
      %v6239 = vrot.slane %v6225, %v6238
      %v6240 = vcombine.high %v6232, %v6232
      %v6241 = vcombine.high %v6239, %v6239
      %v6242 = vcombine.high %v5614, %v5614
      %v6244 = vunpack.c.l.s4 1983009808
      %v6245 = vunpack.c.0.s8 %v6244
      %v6246 = vlaneseq
      %v6247 = vshrl.u32 %v6246, 7
      %v6248 = vsub.s32 %v6245, %v6247
      %v6249 = vrot.slane %v5614, %v6248
      %v6251 = vunpack.c.l.s4 1983009808
      %v6252 = vunpack.c.0.s8 %v6251
      %v6253 = vlaneseq
      %v6254 = vshrl.u32 %v6253, 7
      %v6255 = vsub.s32 %v6252, %v6254
      %v6256 = vrot.slane %v6242, %v6255
      %v6257 = vcombine.high %v6249, %v6249
      %v6258 = vcombine.high %v6256, %v6256
      %v6259 = vcombine.high %v5619, %v5619
      %v6261 = vunpack.c.l.s4 1983009808
      %v6262 = vunpack.c.0.s8 %v6261
      %v6263 = vlaneseq
      %v6264 = vshrl.u32 %v6263, 7
      %v6265 = vsub.s32 %v6262, %v6264
      %v6266 = vrot.slane %v5619, %v6265
      %v6268 = vunpack.c.l.s4 1983009808
      %v6269 = vunpack.c.0.s8 %v6268
      %v6270 = vlaneseq
      %v6271 = vshrl.u32 %v6270, 7
      %v6272 = vsub.s32 %v6269, %v6271
      %v6273 = vrot.slane %v6259, %v6272
      %v6274 = vcombine.high %v6266, %v6266
      %v6275 = vcombine.high %v6273, %v6273
      %v6276 = vcombine.high %v5624, %v5624
      %v6278 = vunpack.c.l.s4 1983009808
      %v6279 = vunpack.c.0.s8 %v6278
      %v6280 = vlaneseq
      %v6281 = vshrl.u32 %v6280, 7
      %v6282 = vsub.s32 %v6279, %v6281
      %v6283 = vrot.slane %v5624, %v6282
      %v6285 = vunpack.c.l.s4 1983009808
      %v6286 = vunpack.c.0.s8 %v6285
      %v6287 = vlaneseq
      %v6288 = vshrl.u32 %v6287, 7
      %v6289 = vsub.s32 %v6286, %v6288
      %v6290 = vrot.slane %v6276, %v6289
      %v6291 = vcombine.high %v6283, %v6283
      %v6292 = vcombine.high %v6290, %v6290
      %v6293 = vcombine.high %v5629, %v5629
      %v6295 = vunpack.c.l.s4 1983009808
      %v6296 = vunpack.c.0.s8 %v6295
      %v6297 = vlaneseq
      %v6298 = vshrl.u32 %v6297, 7
      %v6299 = vsub.s32 %v6296, %v6298
      %v6300 = vrot.slane %v5629, %v6299
      %v6302 = vunpack.c.l.s4 1983009808
      %v6303 = vunpack.c.0.s8 %v6302
      %v6304 = vlaneseq
      %v6305 = vshrl.u32 %v6304, 7
      %v6306 = vsub.s32 %v6303, %v6305
      %v6307 = vrot.slane %v6293, %v6306
      %v6308 = vcombine.high %v6300, %v6300
      %v6309 = vcombine.high %v6307, %v6307
      %v6310 = vcombine.high %v5634, %v5634
      %v6312 = vunpack.c.l.s4 1983009808
      %v6313 = vunpack.c.0.s8 %v6312
      %v6314 = vlaneseq
      %v6315 = vshrl.u32 %v6314, 7
      %v6316 = vsub.s32 %v6313, %v6315
      %v6317 = vrot.slane %v5634, %v6316
      %v6319 = vunpack.c.l.s4 1983009808
      %v6320 = vunpack.c.0.s8 %v6319
      %v6321 = vlaneseq
      %v6322 = vshrl.u32 %v6321, 7
      %v6323 = vsub.s32 %v6320, %v6322
      %v6324 = vrot.slane %v6310, %v6323
      %v6325 = vcombine.high %v6317, %v6317
      %v6326 = vcombine.high %v6324, %v6324
      %v6327 = vcombine.high %v5639, %v5639
      %v6329 = vunpack.c.l.s4 1983009808
      %v6330 = vunpack.c.0.s8 %v6329
      %v6331 = vlaneseq
      %v6332 = vshrl.u32 %v6331, 7
      %v6333 = vsub.s32 %v6330, %v6332
      %v6334 = vrot.slane %v5639, %v6333
      %v6336 = vunpack.c.l.s4 1983009808
      %v6337 = vunpack.c.0.s8 %v6336
      %v6338 = vlaneseq
      %v6339 = vshrl.u32 %v6338, 7
      %v6340 = vsub.s32 %v6337, %v6339
      %v6341 = vrot.slane %v6327, %v6340
      %v6342 = vcombine.high %v6334, %v6334
      %v6343 = vcombine.high %v6341, %v6341
      %v6344 = vcombine.high %v5644, %v5644
      %v6346 = vunpack.c.l.s4 1983009808
      %v6347 = vunpack.c.0.s8 %v6346
      %v6348 = vlaneseq
      %v6349 = vshrl.u32 %v6348, 7
      %v6350 = vsub.s32 %v6347, %v6349
      %v6351 = vrot.slane %v5644, %v6350
      %v6353 = vunpack.c.l.s4 1983009808
      %v6354 = vunpack.c.0.s8 %v6353
      %v6355 = vlaneseq
      %v6356 = vshrl.u32 %v6355, 7
      %v6357 = vsub.s32 %v6354, %v6356
      %v6358 = vrot.slane %v6344, %v6357
      %v6359 = vcombine.high %v6351, %v6351
      %v6360 = vcombine.high %v6358, %v6358
      %v6361 = vcombine.high %v5649, %v5649
      %v6363 = vunpack.c.l.s4 1983009808
      %v6364 = vunpack.c.0.s8 %v6363
      %v6365 = vlaneseq
      %v6366 = vshrl.u32 %v6365, 7
      %v6367 = vsub.s32 %v6364, %v6366
      %v6368 = vrot.slane %v5649, %v6367
      %v6370 = vunpack.c.l.s4 1983009808
      %v6371 = vunpack.c.0.s8 %v6370
      %v6372 = vlaneseq
      %v6373 = vshrl.u32 %v6372, 7
      %v6374 = vsub.s32 %v6371, %v6373
      %v6375 = vrot.slane %v6361, %v6374
      %v6376 = vcombine.high %v6368, %v6368
      %v6377 = vcombine.high %v6375, %v6375
      %v6379 = vunpack.c.l.s4 1983009808
      %v6380 = vunpack.c.0.s8 %v6379
      %v6381 = vlaneseq
      %v6382 = vshrl.u32 %v6381, 7
      %v6383 = vsub.s32 %v6380, %v6382
      %v6384 = vrot.slane %v5654, %v6383
      %v6385 = vcombine.high %v6384, %v6384
      %v6548 = vadd.f32 %v4263, %v5705
      %v6549 = vadd.f32 %v4271, %v5713
      %v6550 = vadd.f32 %v4270, %v5712
      %v6551 = vadd.f32 %v4272, %v5714
      %v6552 = vadd.f32 %v4280, %v5722
      %v6553 = vadd.f32 %v4288, %v5730
      %v6554 = vadd.f32 %v4287, %v5729
      %v6555 = vadd.f32 %v4289, %v5731
      %v6556 = vadd.f32 %v4297, %v5739
      %v6557 = vadd.f32 %v4305, %v5747
      %v6558 = vadd.f32 %v4304, %v5746
      %v6559 = vadd.f32 %v4306, %v5748
      %v6560 = vadd.f32 %v4314, %v5756
      %v6561 = vadd.f32 %v4322, %v5764
      %v6562 = vadd.f32 %v4321, %v5763
      %v6563 = vadd.f32 %v4323, %v5765
      %v6564 = vadd.f32 %v4331, %v5773
      %v6565 = vadd.f32 %v4339, %v5781
      %v6566 = vadd.f32 %v4338, %v5780
      %v6567 = vadd.f32 %v4340, %v5782
      %v6568 = vadd.f32 %v4348, %v5790
      %v6569 = vadd.f32 %v4356, %v5798
      %v6570 = vadd.f32 %v4355, %v5797
      %v6571 = vadd.f32 %v4357, %v5799
      %v6572 = vadd.f32 %v4365, %v5807
      %v6573 = vadd.f32 %v4373, %v5815
      %v6574 = vadd.f32 %v4372, %v5814
      %v6575 = vadd.f32 %v4374, %v5816
      %v6576 = vadd.f32 %v4382, %v5824
      %v6577 = vadd.f32 %v4390, %v5832
      %v6578 = vadd.f32 %v4389, %v5831
      %v6579 = vadd.f32 %v4391, %v5833
      %v6580 = vadd.f32 %v4399, %v5841
      %v6581 = vadd.f32 %v4407, %v5849
      %v6582 = vadd.f32 %v4406, %v5848
      %v6583 = vadd.f32 %v4408, %v5850
      %v6584 = vadd.f32 %v4416, %v5858
      %v6585 = vadd.f32 %v4424, %v5866
      %v6586 = vadd.f32 %v4423, %v5865
      %v6587 = vadd.f32 %v4425, %v5867
      %v6588 = vadd.f32 %v4433, %v5875
      %v6589 = vadd.f32 %v4441, %v5883
      %v6590 = vadd.f32 %v4440, %v5882
      %v6591 = vadd.f32 %v4442, %v5884
      %v6592 = vadd.f32 %v4450, %v5892
      %v6593 = vadd.f32 %v4458, %v5900
      %v6594 = vadd.f32 %v4457, %v5899
      %v6595 = vadd.f32 %v4459, %v5901
      %v6596 = vadd.f32 %v4467, %v5909
      %v6597 = vadd.f32 %v4475, %v5917
      %v6598 = vadd.f32 %v4474, %v5916
      %v6599 = vadd.f32 %v4476, %v5918
      %v6600 = vadd.f32 %v4484, %v5926
      %v6601 = vadd.f32 %v4492, %v5934
      %v6602 = vadd.f32 %v4491, %v5933
      %v6603 = vadd.f32 %v4493, %v5935
      %v6604 = vadd.f32 %v4501, %v5943
      %v6605 = vadd.f32 %v4509, %v5951
      %v6606 = vadd.f32 %v4508, %v5950
      %v6607 = vadd.f32 %v4510, %v5952
      %v6608 = vadd.f32 %v4518, %v5960
      %v6609 = vadd.f32 %v4526, %v5968
      %v6610 = vadd.f32 %v4525, %v5967
      %v6611 = vadd.f32 %v4527, %v5969
      %v6612 = vadd.f32 %v4535, %v5977
      %v6613 = vadd.f32 %v4543, %v5985
      %v6614 = vadd.f32 %v4542, %v5984
      %v6615 = vadd.f32 %v4544, %v5986
      %v6616 = vadd.f32 %v4552, %v5994
      %v6617 = vadd.f32 %v4560, %v6002
      %v6618 = vadd.f32 %v4559, %v6001
      %v6619 = vadd.f32 %v4561, %v6003
      %v6620 = vadd.f32 %v4569, %v6011
      %v6621 = vadd.f32 %v4577, %v6019
      %v6622 = vadd.f32 %v4576, %v6018
      %v6623 = vadd.f32 %v4578, %v6020
      %v6624 = vadd.f32 %v4586, %v6028
      %v6625 = vadd.f32 %v4594, %v6036
      %v6626 = vadd.f32 %v4593, %v6035
      %v6627 = vadd.f32 %v4595, %v6037
      %v6628 = vadd.f32 %v4603, %v6045
      %v6629 = vadd.f32 %v4611, %v6053
      %v6630 = vadd.f32 %v4610, %v6052
      %v6631 = vadd.f32 %v4612, %v6054
      %v6632 = vadd.f32 %v4620, %v6062
      %v6633 = vadd.f32 %v4628, %v6070
      %v6634 = vadd.f32 %v4627, %v6069
      %v6635 = vadd.f32 %v4629, %v6071
      %v6636 = vadd.f32 %v4637, %v6079
      %v6637 = vadd.f32 %v4645, %v6087
      %v6638 = vadd.f32 %v4644, %v6086
      %v6639 = vadd.f32 %v4646, %v6088
      %v6640 = vadd.f32 %v4654, %v6096
      %v6641 = vadd.f32 %v4662, %v6104
      %v6642 = vadd.f32 %v4661, %v6103
      %v6643 = vadd.f32 %v4663, %v6105
      %v6644 = vadd.f32 %v4671, %v6113
      %v6645 = vadd.f32 %v4679, %v6121
      %v6646 = vadd.f32 %v4678, %v6120
      %v6647 = vadd.f32 %v4680, %v6122
      %v6648 = vadd.f32 %v4688, %v6130
      %v6649 = vadd.f32 %v4696, %v6138
      %v6650 = vadd.f32 %v4695, %v6137
      %v6651 = vadd.f32 %v4697, %v6139
      %v6652 = vadd.f32 %v4705, %v6147
      %v6653 = vadd.f32 %v4713, %v6155
      %v6654 = vadd.f32 %v4712, %v6154
      %v6655 = vadd.f32 %v4714, %v6156
      %v6656 = vadd.f32 %v4722, %v6164
      %v6657 = vadd.f32 %v4730, %v6172
      %v6658 = vadd.f32 %v4729, %v6171
      %v6659 = vadd.f32 %v4731, %v6173
      %v6660 = vadd.f32 %v4739, %v6181
      %v6661 = vadd.f32 %v4747, %v6189
      %v6662 = vadd.f32 %v4746, %v6188
      %v6663 = vadd.f32 %v4748, %v6190
      %v6664 = vadd.f32 %v4756, %v6198
      %v6665 = vadd.f32 %v4764, %v6206
      %v6666 = vadd.f32 %v4763, %v6205
      %v6667 = vadd.f32 %v4765, %v6207
      %v6668 = vadd.f32 %v4773, %v6215
      %v6669 = vadd.f32 %v4781, %v6223
      %v6670 = vadd.f32 %v4780, %v6222
      %v6671 = vadd.f32 %v4782, %v6224
      %v6672 = vadd.f32 %v4790, %v6232
      %v6673 = vadd.f32 %v4798, %v6240
      %v6674 = vadd.f32 %v4797, %v6239
      %v6675 = vadd.f32 %v4799, %v6241
      %v6676 = vadd.f32 %v4807, %v6249
      %v6677 = vadd.f32 %v4815, %v6257
      %v6678 = vadd.f32 %v4814, %v6256
      %v6679 = vadd.f32 %v4816, %v6258
      %v6680 = vadd.f32 %v4824, %v6266
      %v6681 = vadd.f32 %v4832, %v6274
      %v6682 = vadd.f32 %v4831, %v6273
      %v6683 = vadd.f32 %v4833, %v6275
      %v6684 = vadd.f32 %v4841, %v6283
      %v6685 = vadd.f32 %v4849, %v6291
      %v6686 = vadd.f32 %v4848, %v6290
      %v6687 = vadd.f32 %v4850, %v6292
      %v6688 = vadd.f32 %v4858, %v6300
      %v6689 = vadd.f32 %v4866, %v6308
      %v6690 = vadd.f32 %v4865, %v6307
      %v6691 = vadd.f32 %v4867, %v6309
      %v6692 = vadd.f32 %v4875, %v6317
      %v6693 = vadd.f32 %v4883, %v6325
      %v6694 = vadd.f32 %v4882, %v6324
      %v6695 = vadd.f32 %v4884, %v6326
      %v6696 = vadd.f32 %v4892, %v6334
      %v6697 = vadd.f32 %v4900, %v6342
      %v6698 = vadd.f32 %v4899, %v6341
      %v6699 = vadd.f32 %v4901, %v6343
      %v6700 = vadd.f32 %v4909, %v6351
      %v6701 = vadd.f32 %v4917, %v6359
      %v6702 = vadd.f32 %v4916, %v6358
      %v6703 = vadd.f32 %v4918, %v6360
      %v6704 = vadd.f32 %v4926, %v6368
      %v6705 = vadd.f32 %v4934, %v6376
      %v6706 = vadd.f32 %v4933, %v6375
      %v6707 = vadd.f32 %v4935, %v6377
      %v6708 = vadd.f32 %v4942, %v6384
      %v6709 = vadd.f32 %v4943, %v6385
      %v6710 = vld [vmem:[%s2] sm:$0x1]
      %v6712 = vlaneseq
      %v6713 = vshrl.u32 %v6712, 7
      %v6714 = vsub.s32 0, %v6713
      %v6715 = vrot.slane %v6710, %v6714
      %v6716 = vcombine.high %v6715, %v6715
      %v6718 = vunpack.c.l.s4 1983009808
      %v6719 = vunpack.c.0.s8 %v6718
      %v6720 = vlaneseq
      %v6721 = vshrl.u32 %v6720, 7
      %v6722 = vsub.s32 %v6719, %v6721
      %v6723 = vrot.slane %v6715, %v6722
      %v6725 = vunpack.c.l.s4 1983009808
      %v6726 = vunpack.c.0.s8 %v6725
      %v6727 = vlaneseq
      %v6728 = vshrl.u32 %v6727, 7
      %v6729 = vsub.s32 %v6726, %v6728
      %v6730 = vrot.slane %v6716, %v6729
      %v6731 = vcombine.high %v6723, %v6723
      %v6732 = vcombine.high %v6730, %v6730
      %v6737 = vadd.f32 %v6548, %v6723
      %v6738 = vadd.f32 %v6549, %v6731
      %v6739 = vadd.f32 %v6550, %v6730
      %v6740 = vadd.f32 %v6551, %v6732
      %v6741 = vadd.f32 %v6552, %v6723
      %v6742 = vadd.f32 %v6553, %v6731
      %v6743 = vadd.f32 %v6554, %v6730
      %v6744 = vadd.f32 %v6555, %v6732
      %v6745 = vadd.f32 %v6556, %v6723
      %v6746 = vadd.f32 %v6557, %v6723
      %v6747 = vadd.f32 %v6558, %v6731
      %v6748 = vadd.f32 %v6559, %v6730
      %v6749 = vadd.f32 %v6560, %v6732
      %v6750 = vadd.f32 %v6561, %v6723
      %v6751 = vadd.f32 %v6562, %v6731
      %v6752 = vadd.f32 %v6563, %v6730
      %v6753 = vadd.f32 %v6564, %v6732
      %v6754 = vadd.f32 %v6565, %v6723
      %v6755 = vadd.f32 %v6566, %v6723
      %v6756 = vadd.f32 %v6567, %v6731
      %v6757 = vadd.f32 %v6568, %v6730
      %v6758 = vadd.f32 %v6569, %v6732
      %v6759 = vadd.f32 %v6570, %v6723
      %v6760 = vadd.f32 %v6571, %v6731
      %v6761 = vadd.f32 %v6572, %v6730
      %v6762 = vadd.f32 %v6573, %v6732
      %v6763 = vadd.f32 %v6574, %v6723
      %v6764 = vadd.f32 %v6575, %v6723
      %v6765 = vadd.f32 %v6576, %v6731
      %v6766 = vadd.f32 %v6577, %v6730
      %v6767 = vadd.f32 %v6578, %v6732
      %v6768 = vadd.f32 %v6579, %v6723
      %v6769 = vadd.f32 %v6580, %v6731
      %v6770 = vadd.f32 %v6581, %v6730
      %v6771 = vadd.f32 %v6582, %v6732
      %v6772 = vadd.f32 %v6583, %v6723
      %v6773 = vadd.f32 %v6584, %v6723
      %v6774 = vadd.f32 %v6585, %v6731
      %v6775 = vadd.f32 %v6586, %v6730
      %v6776 = vadd.f32 %v6587, %v6732
      %v6777 = vadd.f32 %v6588, %v6723
      %v6778 = vadd.f32 %v6589, %v6731
      %v6779 = vadd.f32 %v6590, %v6730
      %v6780 = vadd.f32 %v6591, %v6732
      %v6781 = vadd.f32 %v6592, %v6723
      %v6782 = vadd.f32 %v6593, %v6723
      %v6783 = vadd.f32 %v6594, %v6731
      %v6784 = vadd.f32 %v6595, %v6730
      %v6785 = vadd.f32 %v6596, %v6732
      %v6786 = vadd.f32 %v6597, %v6723
      %v6787 = vadd.f32 %v6598, %v6731
      %v6788 = vadd.f32 %v6599, %v6730
      %v6789 = vadd.f32 %v6600, %v6732
      %v6790 = vadd.f32 %v6601, %v6723
      %v6791 = vadd.f32 %v6602, %v6723
      %v6792 = vadd.f32 %v6603, %v6731
      %v6793 = vadd.f32 %v6604, %v6730
      %v6794 = vadd.f32 %v6605, %v6732
      %v6795 = vadd.f32 %v6606, %v6723
      %v6796 = vadd.f32 %v6607, %v6731
      %v6797 = vadd.f32 %v6608, %v6730
      %v6798 = vadd.f32 %v6609, %v6732
      %v6799 = vadd.f32 %v6610, %v6723
      %v6800 = vadd.f32 %v6611, %v6723
      %v6801 = vadd.f32 %v6612, %v6731
      %v6802 = vadd.f32 %v6613, %v6730
      %v6803 = vadd.f32 %v6614, %v6732
      %v6804 = vadd.f32 %v6615, %v6723
      %v6805 = vadd.f32 %v6616, %v6731
      %v6806 = vadd.f32 %v6617, %v6730
      %v6807 = vadd.f32 %v6618, %v6732
      %v6808 = vadd.f32 %v6619, %v6723
      %v6809 = vadd.f32 %v6620, %v6723
      %v6810 = vadd.f32 %v6621, %v6731
      %v6811 = vadd.f32 %v6622, %v6730
      %v6812 = vadd.f32 %v6623, %v6732
      %v6813 = vadd.f32 %v6624, %v6723
      %v6814 = vadd.f32 %v6625, %v6731
      %v6815 = vadd.f32 %v6626, %v6730
      %v6816 = vadd.f32 %v6627, %v6732
      %v6817 = vadd.f32 %v6628, %v6723
      %v6818 = vadd.f32 %v6629, %v6723
      %v6819 = vadd.f32 %v6630, %v6731
      %v6820 = vadd.f32 %v6631, %v6730
      %v6821 = vadd.f32 %v6632, %v6732
      %v6822 = vadd.f32 %v6633, %v6723
      %v6823 = vadd.f32 %v6634, %v6731
      %v6824 = vadd.f32 %v6635, %v6730
      %v6825 = vadd.f32 %v6636, %v6732
      %v6826 = vadd.f32 %v6637, %v6723
      %v6827 = vadd.f32 %v6638, %v6723
      %v6828 = vadd.f32 %v6639, %v6731
      %v6829 = vadd.f32 %v6640, %v6730
      %v6830 = vadd.f32 %v6641, %v6732
      %v6831 = vadd.f32 %v6642, %v6723
      %v6832 = vadd.f32 %v6643, %v6731
      %v6833 = vadd.f32 %v6644, %v6730
      %v6834 = vadd.f32 %v6645, %v6732
      %v6835 = vadd.f32 %v6646, %v6723
      %v6836 = vadd.f32 %v6647, %v6723
      %v6837 = vadd.f32 %v6648, %v6731
      %v6838 = vadd.f32 %v6649, %v6730
      %v6839 = vadd.f32 %v6650, %v6732
      %v6840 = vadd.f32 %v6651, %v6723
      %v6841 = vadd.f32 %v6652, %v6731
      %v6842 = vadd.f32 %v6653, %v6730
      %v6843 = vadd.f32 %v6654, %v6732
      %v6844 = vadd.f32 %v6655, %v6723
      %v6845 = vadd.f32 %v6656, %v6723
      %v6846 = vadd.f32 %v6657, %v6731
      %v6847 = vadd.f32 %v6658, %v6730
      %v6848 = vadd.f32 %v6659, %v6732
      %v6849 = vadd.f32 %v6660, %v6723
      %v6850 = vadd.f32 %v6661, %v6731
      %v6851 = vadd.f32 %v6662, %v6730
      %v6852 = vadd.f32 %v6663, %v6732
      %v6853 = vadd.f32 %v6664, %v6723
      %v6854 = vadd.f32 %v6665, %v6723
      %v6855 = vadd.f32 %v6666, %v6731
      %v6856 = vadd.f32 %v6667, %v6730
      %v6857 = vadd.f32 %v6668, %v6732
      %v6858 = vadd.f32 %v6669, %v6723
      %v6859 = vadd.f32 %v6670, %v6731
      %v6860 = vadd.f32 %v6671, %v6730
      %v6861 = vadd.f32 %v6672, %v6732
      %v6862 = vadd.f32 %v6673, %v6723
      %v6863 = vadd.f32 %v6674, %v6723
      %v6864 = vadd.f32 %v6675, %v6731
      %v6865 = vadd.f32 %v6676, %v6730
      %v6866 = vadd.f32 %v6677, %v6732
      %v6867 = vadd.f32 %v6678, %v6723
      %v6868 = vadd.f32 %v6679, %v6731
      %v6869 = vadd.f32 %v6680, %v6730
      %v6870 = vadd.f32 %v6681, %v6732
      %v6871 = vadd.f32 %v6682, %v6723
      %v6872 = vadd.f32 %v6683, %v6723
      %v6873 = vadd.f32 %v6684, %v6731
      %v6874 = vadd.f32 %v6685, %v6730
      %v6875 = vadd.f32 %v6686, %v6732
      %v6876 = vadd.f32 %v6687, %v6723
      %v6877 = vadd.f32 %v6688, %v6731
      %v6878 = vadd.f32 %v6689, %v6730
      %v6879 = vadd.f32 %v6690, %v6732
      %v6880 = vadd.f32 %v6691, %v6723
      %v6881 = vadd.f32 %v6692, %v6723
      %v6882 = vadd.f32 %v6693, %v6731
      %v6883 = vadd.f32 %v6694, %v6730
      %v6884 = vadd.f32 %v6695, %v6732
      %v6885 = vadd.f32 %v6696, %v6723
      %v6886 = vadd.f32 %v6697, %v6731
      %v6887 = vadd.f32 %v6698, %v6730
      %v6888 = vadd.f32 %v6699, %v6732
      %v6889 = vadd.f32 %v6700, %v6723
      %v6890 = vadd.f32 %v6701, %v6723
      %v6891 = vadd.f32 %v6702, %v6731
      %v6892 = vadd.f32 %v6703, %v6730
      %v6893 = vadd.f32 %v6704, %v6732
      %v6894 = vadd.f32 %v6705, %v6723
      %v6895 = vadd.f32 %v6706, %v6731
      %v6896 = vadd.f32 %v6707, %v6730
      %v6897 = vadd.f32 %v6708, %v6732
      %v6898 = vadd.f32 %v6709, %v6723
      %v6899 = vmax.f32 %v6737, 0.0
      %v6900 = vmax.f32 %v6738, 0.0
      %v6901 = vmax.f32 %v6739, 0.0
      %v6902 = vmax.f32 %v6740, 0.0
      %v6903 = vmax.f32 %v6741, 0.0
      %v6904 = vmax.f32 %v6742, 0.0
      %v6905 = vmax.f32 %v6743, 0.0
      %v6906 = vmax.f32 %v6744, 0.0
      %v6907 = vmax.f32 %v6745, 0.0
      %v6908 = vmax.f32 %v6746, 0.0
      %v6909 = vmax.f32 %v6747, 0.0
      %v6910 = vmax.f32 %v6748, 0.0
      %v6911 = vmax.f32 %v6749, 0.0
      %v6912 = vmax.f32 %v6750, 0.0
      %v6913 = vmax.f32 %v6751, 0.0
      %v6914 = vmax.f32 %v6752, 0.0
      %v6915 = vmax.f32 %v6753, 0.0
      %v6916 = vmax.f32 %v6754, 0.0
      %v6917 = vmax.f32 %v6755, 0.0
      %v6918 = vmax.f32 %v6756, 0.0
      %v6919 = vmax.f32 %v6757, 0.0
      %v6920 = vmax.f32 %v6758, 0.0
      %v6921 = vmax.f32 %v6759, 0.0
      %v6922 = vmax.f32 %v6760, 0.0
      %v6923 = vmax.f32 %v6761, 0.0
      %v6924 = vmax.f32 %v6762, 0.0
      %v6925 = vmax.f32 %v6763, 0.0
      %v6926 = vmax.f32 %v6764, 0.0
      %v6927 = vmax.f32 %v6765, 0.0
      %v6928 = vmax.f32 %v6766, 0.0
      %v6929 = vmax.f32 %v6767, 0.0
      %v6930 = vmax.f32 %v6768, 0.0
      %v6931 = vmax.f32 %v6769, 0.0
      %v6932 = vmax.f32 %v6770, 0.0
      %v6933 = vmax.f32 %v6771, 0.0
      %v6934 = vmax.f32 %v6772, 0.0
      %v6935 = vmax.f32 %v6773, 0.0
      %v6936 = vmax.f32 %v6774, 0.0
      %v6937 = vmax.f32 %v6775, 0.0
      %v6938 = vmax.f32 %v6776, 0.0
      %v6939 = vmax.f32 %v6777, 0.0
      %v6940 = vmax.f32 %v6778, 0.0
      %v6941 = vmax.f32 %v6779, 0.0
      %v6942 = vmax.f32 %v6780, 0.0
      %v6943 = vmax.f32 %v6781, 0.0
      %v6944 = vmax.f32 %v6782, 0.0
      %v6945 = vmax.f32 %v6783, 0.0
      %v6946 = vmax.f32 %v6784, 0.0
      %v6947 = vmax.f32 %v6785, 0.0
      %v6948 = vmax.f32 %v6786, 0.0
      %v6949 = vmax.f32 %v6787, 0.0
      %v6950 = vmax.f32 %v6788, 0.0
      %v6951 = vmax.f32 %v6789, 0.0
      %v6952 = vmax.f32 %v6790, 0.0
      %v6953 = vmax.f32 %v6791, 0.0
      %v6954 = vmax.f32 %v6792, 0.0
      %v6955 = vmax.f32 %v6793, 0.0
      %v6956 = vmax.f32 %v6794, 0.0
      %v6957 = vmax.f32 %v6795, 0.0
      %v6958 = vmax.f32 %v6796, 0.0
      %v6959 = vmax.f32 %v6797, 0.0
      %v6960 = vmax.f32 %v6798, 0.0
      %v6961 = vmax.f32 %v6799, 0.0
      %v6962 = vmax.f32 %v6800, 0.0
      %v6963 = vmax.f32 %v6801, 0.0
      %v6964 = vmax.f32 %v6802, 0.0
      %v6965 = vmax.f32 %v6803, 0.0
      %v6966 = vmax.f32 %v6804, 0.0
      %v6967 = vmax.f32 %v6805, 0.0
      %v6968 = vmax.f32 %v6806, 0.0
      %v6969 = vmax.f32 %v6807, 0.0
      %v6970 = vmax.f32 %v6808, 0.0
      %v6971 = vmax.f32 %v6809, 0.0
      %v6972 = vmax.f32 %v6810, 0.0
      %v6973 = vmax.f32 %v6811, 0.0
      %v6974 = vmax.f32 %v6812, 0.0
      %v6975 = vmax.f32 %v6813, 0.0
      %v6976 = vmax.f32 %v6814, 0.0
      %v6977 = vmax.f32 %v6815, 0.0
      %v6978 = vmax.f32 %v6816, 0.0
      %v6979 = vmax.f32 %v6817, 0.0
      %v6980 = vmax.f32 %v6818, 0.0
      %v6981 = vmax.f32 %v6819, 0.0
      %v6982 = vmax.f32 %v6820, 0.0
      %v6983 = vmax.f32 %v6821, 0.0
      %v6984 = vmax.f32 %v6822, 0.0
      %v6985 = vmax.f32 %v6823, 0.0
      %v6986 = vmax.f32 %v6824, 0.0
      %v6987 = vmax.f32 %v6825, 0.0
      %v6988 = vmax.f32 %v6826, 0.0
      %v6989 = vmax.f32 %v6827, 0.0
      %v6990 = vmax.f32 %v6828, 0.0
      %v6991 = vmax.f32 %v6829, 0.0
      %v6992 = vmax.f32 %v6830, 0.0
      %v6993 = vmax.f32 %v6831, 0.0
      %v6994 = vmax.f32 %v6832, 0.0
      %v6995 = vmax.f32 %v6833, 0.0
      %v6996 = vmax.f32 %v6834, 0.0
      %v6997 = vmax.f32 %v6835, 0.0
      %v6998 = vmax.f32 %v6836, 0.0
      %v6999 = vmax.f32 %v6837, 0.0
      %v7000 = vmax.f32 %v6838, 0.0
      %v7001 = vmax.f32 %v6839, 0.0
      %v7002 = vmax.f32 %v6840, 0.0
      %v7003 = vmax.f32 %v6841, 0.0
      %v7004 = vmax.f32 %v6842, 0.0
      %v7005 = vmax.f32 %v6843, 0.0
      %v7006 = vmax.f32 %v6844, 0.0
      %v7007 = vmax.f32 %v6845, 0.0
      %v7008 = vmax.f32 %v6846, 0.0
      %v7009 = vmax.f32 %v6847, 0.0
      %v7010 = vmax.f32 %v6848, 0.0
      %v7011 = vmax.f32 %v6849, 0.0
      %v7012 = vmax.f32 %v6850, 0.0
      %v7013 = vmax.f32 %v6851, 0.0
      %v7014 = vmax.f32 %v6852, 0.0
      %v7015 = vmax.f32 %v6853, 0.0
      %v7016 = vmax.f32 %v6854, 0.0
      %v7017 = vmax.f32 %v6855, 0.0
      %v7018 = vmax.f32 %v6856, 0.0
      %v7019 = vmax.f32 %v6857, 0.0
      %v7020 = vmax.f32 %v6858, 0.0
      %v7021 = vmax.f32 %v6859, 0.0
      %v7022 = vmax.f32 %v6860, 0.0
      %v7023 = vmax.f32 %v6861, 0.0
      %v7024 = vmax.f32 %v6862, 0.0
      %v7025 = vmax.f32 %v6863, 0.0
      %v7026 = vmax.f32 %v6864, 0.0
      %v7027 = vmax.f32 %v6865, 0.0
      %v7028 = vmax.f32 %v6866, 0.0
      %v7029 = vmax.f32 %v6867, 0.0
      %v7030 = vmax.f32 %v6868, 0.0
      %v7031 = vmax.f32 %v6869, 0.0
      %v7032 = vmax.f32 %v6870, 0.0
      %v7033 = vmax.f32 %v6871, 0.0
      %v7034 = vmax.f32 %v6872, 0.0
      %v7035 = vmax.f32 %v6873, 0.0
      %v7036 = vmax.f32 %v6874, 0.0
      %v7037 = vmax.f32 %v6875, 0.0
      %v7038 = vmax.f32 %v6876, 0.0
      %v7039 = vmax.f32 %v6877, 0.0
      %v7040 = vmax.f32 %v6878, 0.0
      %v7041 = vmax.f32 %v6879, 0.0
      %v7042 = vmax.f32 %v6880, 0.0
      %v7043 = vmax.f32 %v6881, 0.0
      %v7044 = vmax.f32 %v6882, 0.0
      %v7045 = vmax.f32 %v6883, 0.0
      %v7046 = vmax.f32 %v6884, 0.0
      %v7047 = vmax.f32 %v6885, 0.0
      %v7048 = vmax.f32 %v6886, 0.0
      %v7049 = vmax.f32 %v6887, 0.0
      %v7050 = vmax.f32 %v6888, 0.0
      %v7051 = vmax.f32 %v6889, 0.0
      %v7052 = vmax.f32 %v6890, 0.0
      %v7053 = vmax.f32 %v6891, 0.0
      %v7054 = vmax.f32 %v6892, 0.0
      %v7055 = vmax.f32 %v6893, 0.0
      %v7056 = vmax.f32 %v6894, 0.0
      %v7057 = vmax.f32 %v6895, 0.0
      %v7058 = vmax.f32 %v6896, 0.0
      %v7059 = vmax.f32 %v6897, 0.0
      %v7060 = vmax.f32 %v6898, 0.0
      %v7061 = vstv %s250
      %v7062 = vadd.s32 %v7061, 1
      %v7063 = vadd.s32 %v7061, 2
      %v7064 = vadd.s32 %v7061, 3
      %v7065 = vadd.s32 %v7061, 4
      %v7066 = vadd.s32 %v7061, 5
      %v7067 = vadd.s32 %v7061, 6
      %v7068 = vadd.s32 %v7061, 7
      %v7069 = vadd.s32 %v7061, 8
      %v7070 = vadd.s32 %v7061, 9
      %v7071 = vadd.s32 %v7061, 10
      %v7072 = vadd.s32 %v7061, 11
      %v7073 = vadd.s32 %v7061, 12
      %v7074 = vadd.s32 %v7061, 13
      %v7075 = vadd.s32 %v7061, 14
      %v7076 = vadd.s32 %v7061, 15
      %v7077 = vadd.s32 %v7061, 16
      %v7078 = vadd.s32 %v7061, 17
      %v7079 = vlaneseq
      %v7080 = vshrl.u32 %v7079, 7
      %v7081 = vadd.s32 %v7080, 8
      %v7082 = vadd.s32 %v7080, 16
      %vm7083 = vcmp.ge.s32.totalorder %v7061, 1
      %vm7084 = vcmp.ge.s32.totalorder %v7062, 1
      %vm7085 = vcmp.ge.s32.totalorder %v7063, 1
      %vm7086 = vcmp.ge.s32.totalorder %v7064, 1
      %vm7087 = vcmp.ge.s32.totalorder %v7065, 1
      %vm7088 = vcmp.ge.s32.totalorder %v7066, 1
      %vm7089 = vcmp.ge.s32.totalorder %v7067, 1
      %vm7090 = vcmp.ge.s32.totalorder %v7068, 1
      %vm7091 = vcmp.ge.s32.totalorder %v7069, 1
      %vm7092 = vcmp.ge.s32.totalorder %v7070, 1
      %vm7093 = vcmp.ge.s32.totalorder %v7071, 1
      %vm7094 = vcmp.ge.s32.totalorder %v7072, 1
      %vm7095 = vcmp.ge.s32.totalorder %v7073, 1
      %vm7096 = vcmp.ge.s32.totalorder %v7074, 1
      %vm7097 = vcmp.ge.s32.totalorder %v7075, 1
      %vm7098 = vcmp.ge.s32.totalorder %v7076, 1
      %vm7099 = vcmp.ge.s32.totalorder %v7077, 1
      %vm7100 = vcmp.ge.s32.totalorder %v7078, 1
      %vm7101 = vcmp.le.s32.totalorder %v7061, 16
      %vm7102 = vcmp.le.s32.totalorder %v7062, 16
      %vm7103 = vcmp.le.s32.totalorder %v7063, 16
      %vm7104 = vcmp.le.s32.totalorder %v7064, 16
      %vm7105 = vcmp.le.s32.totalorder %v7065, 16
      %vm7106 = vcmp.le.s32.totalorder %v7066, 16
      %vm7107 = vcmp.le.s32.totalorder %v7067, 16
      %vm7108 = vcmp.le.s32.totalorder %v7068, 16
      %vm7109 = vcmp.le.s32.totalorder %v7069, 16
      %vm7110 = vcmp.le.s32.totalorder %v7070, 16
      %vm7111 = vcmp.le.s32.totalorder %v7071, 16
      %vm7112 = vcmp.le.s32.totalorder %v7072, 16
      %vm7113 = vcmp.le.s32.totalorder %v7073, 16
      %vm7114 = vcmp.le.s32.totalorder %v7074, 16
      %vm7115 = vcmp.le.s32.totalorder %v7075, 16
      %vm7116 = vcmp.le.s32.totalorder %v7076, 16
      %vm7117 = vcmp.le.s32.totalorder %v7077, 16
      %vm7118 = vcmp.le.s32.totalorder %v7078, 16
      %vm7119 = vmand %vm7083, %vm7101
      %vm7120 = vmand %vm7084, %vm7102
      %vm7121 = vmand %vm7085, %vm7103
      %vm7122 = vmand %vm7086, %vm7104
      %vm7123 = vmand %vm7087, %vm7105
      %vm7124 = vmand %vm7088, %vm7106
      %vm7125 = vmand %vm7089, %vm7107
      %vm7126 = vmand %vm7090, %vm7108
      %vm7127 = vmand %vm7091, %vm7109
      %vm7128 = vmand %vm7092, %vm7110
      %vm7129 = vmand %vm7093, %vm7111
      %vm7130 = vmand %vm7094, %vm7112
      %vm7131 = vmand %vm7095, %vm7113
      %vm7132 = vmand %vm7096, %vm7114
      %vm7133 = vmand %vm7097, %vm7115
      %vm7134 = vmand %vm7098, %vm7116
      %vm7135 = vmand %vm7099, %vm7117
      %vm7136 = vmand %vm7100, %vm7118
      %vm7137 = vcmp.ge.s32.totalorder %v7080, 1
      %vm7138 = vcmp.ge.s32.totalorder %v7081, 1
      %vm7139 = vcmp.ge.s32.totalorder %v7082, 1
      %vm7140 = vmand %vm7119, %vm7137
      %vm7141 = vmand %vm7119, %vm7138
      %vm7142 = vmand %vm7119, %vm7139
      %vm7143 = vmand %vm7120, %vm7137
      %vm7144 = vmand %vm7120, %vm7138
      %vm7145 = vmand %vm7120, %vm7139
      %vm7146 = vmand %vm7121, %vm7137
      %vm7147 = vmand %vm7121, %vm7138
      %vm7148 = vmand %vm7121, %vm7139
      %vm7149 = vmand %vm7122, %vm7137
      %vm7150 = vmand %vm7122, %vm7138
      %vm7151 = vmand %vm7122, %vm7139
      %vm7152 = vmand %vm7123, %vm7137
      %vm7153 = vmand %vm7123, %vm7138
      %vm7154 = vmand %vm7123, %vm7139
      %vm7155 = vmand %vm7124, %vm7137
      %vm7156 = vmand %vm7124, %vm7138
      %vm7157 = vmand %vm7124, %vm7139
      %vm7158 = vmand %vm7125, %vm7137
      %vm7159 = vmand %vm7125, %vm7138
      %vm7160 = vmand %vm7125, %vm7139
      %vm7161 = vmand %vm7126, %vm7137
      %vm7162 = vmand %vm7126, %vm7138
      %vm7163 = vmand %vm7126, %vm7139
      %vm7164 = vmand %vm7127, %vm7137
      %vm7165 = vmand %vm7127, %vm7138
      %vm7166 = vmand %vm7127, %vm7139
      %vm7167 = vmand %vm7128, %vm7137
      %vm7168 = vmand %vm7128, %vm7138
      %vm7169 = vmand %vm7128, %vm7139
      %vm7170 = vmand %vm7129, %vm7137
      %vm7171 = vmand %vm7129, %vm7138
      %vm7172 = vmand %vm7129, %vm7139
      %vm7173 = vmand %vm7130, %vm7137
      %vm7174 = vmand %vm7130, %vm7138
      %vm7175 = vmand %vm7130, %vm7139
      %vm7176 = vmand %vm7131, %vm7137
      %vm7177 = vmand %vm7131, %vm7138
      %vm7178 = vmand %vm7131, %vm7139
      %vm7179 = vmand %vm7132, %vm7137
      %vm7180 = vmand %vm7132, %vm7138
      %vm7181 = vmand %vm7132, %vm7139
      %vm7182 = vmand %vm7133, %vm7137
      %vm7183 = vmand %vm7133, %vm7138
      %vm7184 = vmand %vm7133, %vm7139
      %vm7185 = vmand %vm7134, %vm7137
      %vm7186 = vmand %vm7134, %vm7138
      %vm7187 = vmand %vm7134, %vm7139
      %vm7188 = vmand %vm7135, %vm7137
      %vm7189 = vmand %vm7135, %vm7138
      %vm7190 = vmand %vm7135, %vm7139
      %vm7191 = vmand %vm7136, %vm7137
      %vm7192 = vmand %vm7136, %vm7138
      %vm7193 = vmand %vm7136, %vm7139
      %vm7194 = vcmp.le.s32.totalorder %v7080, 16
      %vm7195 = vcmp.le.s32.totalorder %v7081, 16
      %vm7196 = vcmp.le.s32.totalorder %v7082, 16
      %vm7197 = vmand %vm7140, %vm7194
      %vm7198 = vmand %vm7141, %vm7195
      %vm7199 = vmand %vm7142, %vm7196
      %vm7200 = vmand %vm7143, %vm7194
      %vm7201 = vmand %vm7144, %vm7195
      %vm7202 = vmand %vm7145, %vm7196
      %vm7203 = vmand %vm7146, %vm7194
      %vm7204 = vmand %vm7147, %vm7195
      %vm7205 = vmand %vm7148, %vm7196
      %vm7206 = vmand %vm7149, %vm7194
      %vm7207 = vmand %vm7150, %vm7195
      %vm7208 = vmand %vm7151, %vm7196
      %vm7209 = vmand %vm7152, %vm7194
      %vm7210 = vmand %vm7153, %vm7195
      %vm7211 = vmand %vm7154, %vm7196
      %vm7212 = vmand %vm7155, %vm7194
      %vm7213 = vmand %vm7156, %vm7195
      %vm7214 = vmand %vm7157, %vm7196
      %vm7215 = vmand %vm7158, %vm7194
      %vm7216 = vmand %vm7159, %vm7195
      %vm7217 = vmand %vm7160, %vm7196
      %vm7218 = vmand %vm7161, %vm7194
      %vm7219 = vmand %vm7162, %vm7195
      %vm7220 = vmand %vm7163, %vm7196
      %vm7221 = vmand %vm7164, %vm7194
      %vm7222 = vmand %vm7165, %vm7195
      %vm7223 = vmand %vm7166, %vm7196
      %vm7224 = vmand %vm7167, %vm7194
      %vm7225 = vmand %vm7168, %vm7195
      %vm7226 = vmand %vm7169, %vm7196
      %vm7227 = vmand %vm7170, %vm7194
      %vm7228 = vmand %vm7171, %vm7195
      %vm7229 = vmand %vm7172, %vm7196
      %vm7230 = vmand %vm7173, %vm7194
      %vm7231 = vmand %vm7174, %vm7195
      %vm7232 = vmand %vm7175, %vm7196
      %vm7233 = vmand %vm7176, %vm7194
      %vm7234 = vmand %vm7177, %vm7195
      %vm7235 = vmand %vm7178, %vm7196
      %vm7236 = vmand %vm7179, %vm7194
      %vm7237 = vmand %vm7180, %vm7195
      %vm7238 = vmand %vm7181, %vm7196
      %vm7239 = vmand %vm7182, %vm7194
      %vm7240 = vmand %vm7183, %vm7195
      %vm7241 = vmand %vm7184, %vm7196
      %vm7242 = vmand %vm7185, %vm7194
      %vm7243 = vmand %vm7186, %vm7195
      %vm7244 = vmand %vm7187, %vm7196
      %vm7245 = vmand %vm7188, %vm7194
      %vm7246 = vmand %vm7189, %vm7195
      %vm7247 = vmand %vm7190, %vm7196
      %vm7248 = vmand %vm7191, %vm7194
      %vm7249 = vmand %vm7192, %vm7195
      %vm7250 = vmand %vm7193, %vm7196
      %v7413 = vcombine.low %v6899, %v6900
      %v7414 = vcombine.low %v6901, %v6902
      %v7416 = vunpack.c.l.s4 1983009808
      %v7417 = vunpack.c.0.s8 %v7416
      %v7418 = vlaneseq
      %v7419 = vshrl.u32 %v7418, 7
      %v7420 = vsub.s32 %v7417, %v7419
      %v7421 = vrot.slane %v7413, %v7420
      %v7423 = vunpack.c.l.s4 1983009808
      %v7424 = vunpack.c.0.s8 %v7423
      %v7425 = vlaneseq
      %v7426 = vshrl.u32 %v7425, 7
      %v7427 = vsub.s32 %v7424, %v7426
      %v7428 = vrot.slane %v7414, %v7427
      %v7429 = vcombine.low %v7421, %v7428
      %v7430 = vcombine.low %v6903, %v6904
      %v7431 = vcombine.low %v6905, %v6906
      %v7433 = vunpack.c.l.s4 1983009808
      %v7434 = vunpack.c.0.s8 %v7433
      %v7435 = vlaneseq
      %v7436 = vshrl.u32 %v7435, 7
      %v7437 = vsub.s32 %v7434, %v7436
      %v7438 = vrot.slane %v7430, %v7437
      %v7440 = vunpack.c.l.s4 1983009808
      %v7441 = vunpack.c.0.s8 %v7440
      %v7442 = vlaneseq
      %v7443 = vshrl.u32 %v7442, 7
      %v7444 = vsub.s32 %v7441, %v7443
      %v7445 = vrot.slane %v7431, %v7444
      %v7446 = vcombine.low %v7438, %v7445
      %v7448 = vunpack.c.l.s4 1983009808
      %v7449 = vunpack.c.0.s8 %v7448
      %v7450 = vlaneseq
      %v7451 = vshrl.u32 %v7450, 7
      %v7452 = vsub.s32 %v7449, %v7451
      %v7453 = vrot.slane %v6907, %v7452
      %v7454 = vcombine.low %v6908, %v6909
      %v7455 = vcombine.low %v6910, %v6911
      %v7457 = vunpack.c.l.s4 1983009808
      %v7458 = vunpack.c.0.s8 %v7457
      %v7459 = vlaneseq
      %v7460 = vshrl.u32 %v7459, 7
      %v7461 = vsub.s32 %v7458, %v7460
      %v7462 = vrot.slane %v7454, %v7461
      %v7464 = vunpack.c.l.s4 1983009808
      %v7465 = vunpack.c.0.s8 %v7464
      %v7466 = vlaneseq
      %v7467 = vshrl.u32 %v7466, 7
      %v7468 = vsub.s32 %v7465, %v7467
      %v7469 = vrot.slane %v7455, %v7468
      %v7470 = vcombine.low %v7462, %v7469
      %v7471 = vcombine.low %v6912, %v6913
      %v7472 = vcombine.low %v6914, %v6915
      %v7474 = vunpack.c.l.s4 1983009808
      %v7475 = vunpack.c.0.s8 %v7474
      %v7476 = vlaneseq
      %v7477 = vshrl.u32 %v7476, 7
      %v7478 = vsub.s32 %v7475, %v7477
      %v7479 = vrot.slane %v7471, %v7478
      %v7481 = vunpack.c.l.s4 1983009808
      %v7482 = vunpack.c.0.s8 %v7481
      %v7483 = vlaneseq
      %v7484 = vshrl.u32 %v7483, 7
      %v7485 = vsub.s32 %v7482, %v7484
      %v7486 = vrot.slane %v7472, %v7485
      %v7487 = vcombine.low %v7479, %v7486
      %v7489 = vunpack.c.l.s4 1983009808
      %v7490 = vunpack.c.0.s8 %v7489
      %v7491 = vlaneseq
      %v7492 = vshrl.u32 %v7491, 7
      %v7493 = vsub.s32 %v7490, %v7492
      %v7494 = vrot.slane %v6916, %v7493
      %v7495 = vcombine.low %v6917, %v6918
      %v7496 = vcombine.low %v6919, %v6920
      %v7498 = vunpack.c.l.s4 1983009808
      %v7499 = vunpack.c.0.s8 %v7498
      %v7500 = vlaneseq
      %v7501 = vshrl.u32 %v7500, 7
      %v7502 = vsub.s32 %v7499, %v7501
      %v7503 = vrot.slane %v7495, %v7502
      %v7505 = vunpack.c.l.s4 1983009808
      %v7506 = vunpack.c.0.s8 %v7505
      %v7507 = vlaneseq
      %v7508 = vshrl.u32 %v7507, 7
      %v7509 = vsub.s32 %v7506, %v7508
      %v7510 = vrot.slane %v7496, %v7509
      %v7511 = vcombine.low %v7503, %v7510
      %v7512 = vcombine.low %v6921, %v6922
      %v7513 = vcombine.low %v6923, %v6924
      %v7515 = vunpack.c.l.s4 1983009808
      %v7516 = vunpack.c.0.s8 %v7515
      %v7517 = vlaneseq
      %v7518 = vshrl.u32 %v7517, 7
      %v7519 = vsub.s32 %v7516, %v7518
      %v7520 = vrot.slane %v7512, %v7519
      %v7522 = vunpack.c.l.s4 1983009808
      %v7523 = vunpack.c.0.s8 %v7522
      %v7524 = vlaneseq
      %v7525 = vshrl.u32 %v7524, 7
      %v7526 = vsub.s32 %v7523, %v7525
      %v7527 = vrot.slane %v7513, %v7526
      %v7528 = vcombine.low %v7520, %v7527
      %v7530 = vunpack.c.l.s4 1983009808
      %v7531 = vunpack.c.0.s8 %v7530
      %v7532 = vlaneseq
      %v7533 = vshrl.u32 %v7532, 7
      %v7534 = vsub.s32 %v7531, %v7533
      %v7535 = vrot.slane %v6925, %v7534
      %v7536 = vcombine.low %v6926, %v6927
      %v7537 = vcombine.low %v6928, %v6929
      %v7539 = vunpack.c.l.s4 1983009808
      %v7540 = vunpack.c.0.s8 %v7539
      %v7541 = vlaneseq
      %v7542 = vshrl.u32 %v7541, 7
      %v7543 = vsub.s32 %v7540, %v7542
      %v7544 = vrot.slane %v7536, %v7543
      %v7546 = vunpack.c.l.s4 1983009808
      %v7547 = vunpack.c.0.s8 %v7546
      %v7548 = vlaneseq
      %v7549 = vshrl.u32 %v7548, 7
      %v7550 = vsub.s32 %v7547, %v7549
      %v7551 = vrot.slane %v7537, %v7550
      %v7552 = vcombine.low %v7544, %v7551
      %v7553 = vcombine.low %v6930, %v6931
      %v7554 = vcombine.low %v6932, %v6933
      %v7556 = vunpack.c.l.s4 1983009808
      %v7557 = vunpack.c.0.s8 %v7556
      %v7558 = vlaneseq
      %v7559 = vshrl.u32 %v7558, 7
      %v7560 = vsub.s32 %v7557, %v7559
      %v7561 = vrot.slane %v7553, %v7560
      %v7563 = vunpack.c.l.s4 1983009808
      %v7564 = vunpack.c.0.s8 %v7563
      %v7565 = vlaneseq
      %v7566 = vshrl.u32 %v7565, 7
      %v7567 = vsub.s32 %v7564, %v7566
      %v7568 = vrot.slane %v7554, %v7567
      %v7569 = vcombine.low %v7561, %v7568
      %v7571 = vunpack.c.l.s4 1983009808
      %v7572 = vunpack.c.0.s8 %v7571
      %v7573 = vlaneseq
      %v7574 = vshrl.u32 %v7573, 7
      %v7575 = vsub.s32 %v7572, %v7574
      %v7576 = vrot.slane %v6934, %v7575
      %v7577 = vcombine.low %v6935, %v6936
      %v7578 = vcombine.low %v6937, %v6938
      %v7580 = vunpack.c.l.s4 1983009808
      %v7581 = vunpack.c.0.s8 %v7580
      %v7582 = vlaneseq
      %v7583 = vshrl.u32 %v7582, 7
      %v7584 = vsub.s32 %v7581, %v7583
      %v7585 = vrot.slane %v7577, %v7584
      %v7587 = vunpack.c.l.s4 1983009808
      %v7588 = vunpack.c.0.s8 %v7587
      %v7589 = vlaneseq
      %v7590 = vshrl.u32 %v7589, 7
      %v7591 = vsub.s32 %v7588, %v7590
      %v7592 = vrot.slane %v7578, %v7591
      %v7593 = vcombine.low %v7585, %v7592
      %v7594 = vcombine.low %v6939, %v6940
      %v7595 = vcombine.low %v6941, %v6942
      %v7597 = vunpack.c.l.s4 1983009808
      %v7598 = vunpack.c.0.s8 %v7597
      %v7599 = vlaneseq
      %v7600 = vshrl.u32 %v7599, 7
      %v7601 = vsub.s32 %v7598, %v7600
      %v7602 = vrot.slane %v7594, %v7601
      %v7604 = vunpack.c.l.s4 1983009808
      %v7605 = vunpack.c.0.s8 %v7604
      %v7606 = vlaneseq
      %v7607 = vshrl.u32 %v7606, 7
      %v7608 = vsub.s32 %v7605, %v7607
      %v7609 = vrot.slane %v7595, %v7608
      %v7610 = vcombine.low %v7602, %v7609
      %v7612 = vunpack.c.l.s4 1983009808
      %v7613 = vunpack.c.0.s8 %v7612
      %v7614 = vlaneseq
      %v7615 = vshrl.u32 %v7614, 7
      %v7616 = vsub.s32 %v7613, %v7615
      %v7617 = vrot.slane %v6943, %v7616
      %v7618 = vcombine.low %v6944, %v6945
      %v7619 = vcombine.low %v6946, %v6947
      %v7621 = vunpack.c.l.s4 1983009808
      %v7622 = vunpack.c.0.s8 %v7621
      %v7623 = vlaneseq
      %v7624 = vshrl.u32 %v7623, 7
      %v7625 = vsub.s32 %v7622, %v7624
      %v7626 = vrot.slane %v7618, %v7625
      %v7628 = vunpack.c.l.s4 1983009808
      %v7629 = vunpack.c.0.s8 %v7628
      %v7630 = vlaneseq
      %v7631 = vshrl.u32 %v7630, 7
      %v7632 = vsub.s32 %v7629, %v7631
      %v7633 = vrot.slane %v7619, %v7632
      %v7634 = vcombine.low %v7626, %v7633
      %v7635 = vcombine.low %v6948, %v6949
      %v7636 = vcombine.low %v6950, %v6951
      %v7638 = vunpack.c.l.s4 1983009808
      %v7639 = vunpack.c.0.s8 %v7638
      %v7640 = vlaneseq
      %v7641 = vshrl.u32 %v7640, 7
      %v7642 = vsub.s32 %v7639, %v7641
      %v7643 = vrot.slane %v7635, %v7642
      %v7645 = vunpack.c.l.s4 1983009808
      %v7646 = vunpack.c.0.s8 %v7645
      %v7647 = vlaneseq
      %v7648 = vshrl.u32 %v7647, 7
      %v7649 = vsub.s32 %v7646, %v7648
      %v7650 = vrot.slane %v7636, %v7649
      %v7651 = vcombine.low %v7643, %v7650
      %v7653 = vunpack.c.l.s4 1983009808
      %v7654 = vunpack.c.0.s8 %v7653
      %v7655 = vlaneseq
      %v7656 = vshrl.u32 %v7655, 7
      %v7657 = vsub.s32 %v7654, %v7656
      %v7658 = vrot.slane %v6952, %v7657
      %v7659 = vcombine.low %v6953, %v6954
      %v7660 = vcombine.low %v6955, %v6956
      %v7662 = vunpack.c.l.s4 1983009808
      %v7663 = vunpack.c.0.s8 %v7662
      %v7664 = vlaneseq
      %v7665 = vshrl.u32 %v7664, 7
      %v7666 = vsub.s32 %v7663, %v7665
      %v7667 = vrot.slane %v7659, %v7666
      %v7669 = vunpack.c.l.s4 1983009808
      %v7670 = vunpack.c.0.s8 %v7669
      %v7671 = vlaneseq
      %v7672 = vshrl.u32 %v7671, 7
      %v7673 = vsub.s32 %v7670, %v7672
      %v7674 = vrot.slane %v7660, %v7673
      %v7675 = vcombine.low %v7667, %v7674
      %v7676 = vcombine.low %v6957, %v6958
      %v7677 = vcombine.low %v6959, %v6960
      %v7679 = vunpack.c.l.s4 1983009808
      %v7680 = vunpack.c.0.s8 %v7679
      %v7681 = vlaneseq
      %v7682 = vshrl.u32 %v7681, 7
      %v7683 = vsub.s32 %v7680, %v7682
      %v7684 = vrot.slane %v7676, %v7683
      %v7686 = vunpack.c.l.s4 1983009808
      %v7687 = vunpack.c.0.s8 %v7686
      %v7688 = vlaneseq
      %v7689 = vshrl.u32 %v7688, 7
      %v7690 = vsub.s32 %v7687, %v7689
      %v7691 = vrot.slane %v7677, %v7690
      %v7692 = vcombine.low %v7684, %v7691
      %v7694 = vunpack.c.l.s4 1983009808
      %v7695 = vunpack.c.0.s8 %v7694
      %v7696 = vlaneseq
      %v7697 = vshrl.u32 %v7696, 7
      %v7698 = vsub.s32 %v7695, %v7697
      %v7699 = vrot.slane %v6961, %v7698
      %v7700 = vcombine.low %v6962, %v6963
      %v7701 = vcombine.low %v6964, %v6965
      %v7703 = vunpack.c.l.s4 1983009808
      %v7704 = vunpack.c.0.s8 %v7703
      %v7705 = vlaneseq
      %v7706 = vshrl.u32 %v7705, 7
      %v7707 = vsub.s32 %v7704, %v7706
      %v7708 = vrot.slane %v7700, %v7707
      %v7710 = vunpack.c.l.s4 1983009808
      %v7711 = vunpack.c.0.s8 %v7710
      %v7712 = vlaneseq
      %v7713 = vshrl.u32 %v7712, 7
      %v7714 = vsub.s32 %v7711, %v7713
      %v7715 = vrot.slane %v7701, %v7714
      %v7716 = vcombine.low %v7708, %v7715
      %v7717 = vcombine.low %v6966, %v6967
      %v7718 = vcombine.low %v6968, %v6969
      %v7720 = vunpack.c.l.s4 1983009808
      %v7721 = vunpack.c.0.s8 %v7720
      %v7722 = vlaneseq
      %v7723 = vshrl.u32 %v7722, 7
      %v7724 = vsub.s32 %v7721, %v7723
      %v7725 = vrot.slane %v7717, %v7724
      %v7727 = vunpack.c.l.s4 1983009808
      %v7728 = vunpack.c.0.s8 %v7727
      %v7729 = vlaneseq
      %v7730 = vshrl.u32 %v7729, 7
      %v7731 = vsub.s32 %v7728, %v7730
      %v7732 = vrot.slane %v7718, %v7731
      %v7733 = vcombine.low %v7725, %v7732
      %v7735 = vunpack.c.l.s4 1983009808
      %v7736 = vunpack.c.0.s8 %v7735
      %v7737 = vlaneseq
      %v7738 = vshrl.u32 %v7737, 7
      %v7739 = vsub.s32 %v7736, %v7738
      %v7740 = vrot.slane %v6970, %v7739
      %v7741 = vcombine.low %v6971, %v6972
      %v7742 = vcombine.low %v6973, %v6974
      %v7744 = vunpack.c.l.s4 1983009808
      %v7745 = vunpack.c.0.s8 %v7744
      %v7746 = vlaneseq
      %v7747 = vshrl.u32 %v7746, 7
      %v7748 = vsub.s32 %v7745, %v7747
      %v7749 = vrot.slane %v7741, %v7748
      %v7751 = vunpack.c.l.s4 1983009808
      %v7752 = vunpack.c.0.s8 %v7751
      %v7753 = vlaneseq
      %v7754 = vshrl.u32 %v7753, 7
      %v7755 = vsub.s32 %v7752, %v7754
      %v7756 = vrot.slane %v7742, %v7755
      %v7757 = vcombine.low %v7749, %v7756
      %v7758 = vcombine.low %v6975, %v6976
      %v7759 = vcombine.low %v6977, %v6978
      %v7761 = vunpack.c.l.s4 1983009808
      %v7762 = vunpack.c.0.s8 %v7761
      %v7763 = vlaneseq
      %v7764 = vshrl.u32 %v7763, 7
      %v7765 = vsub.s32 %v7762, %v7764
      %v7766 = vrot.slane %v7758, %v7765
      %v7768 = vunpack.c.l.s4 1983009808
      %v7769 = vunpack.c.0.s8 %v7768
      %v7770 = vlaneseq
      %v7771 = vshrl.u32 %v7770, 7
      %v7772 = vsub.s32 %v7769, %v7771
      %v7773 = vrot.slane %v7759, %v7772
      %v7774 = vcombine.low %v7766, %v7773
      %v7776 = vunpack.c.l.s4 1983009808
      %v7777 = vunpack.c.0.s8 %v7776
      %v7778 = vlaneseq
      %v7779 = vshrl.u32 %v7778, 7
      %v7780 = vsub.s32 %v7777, %v7779
      %v7781 = vrot.slane %v6979, %v7780
      %v7782 = vcombine.low %v6980, %v6981
      %v7783 = vcombine.low %v6982, %v6983
      %v7785 = vunpack.c.l.s4 1983009808
      %v7786 = vunpack.c.0.s8 %v7785
      %v7787 = vlaneseq
      %v7788 = vshrl.u32 %v7787, 7
      %v7789 = vsub.s32 %v7786, %v7788
      %v7790 = vrot.slane %v7782, %v7789
      %v7792 = vunpack.c.l.s4 1983009808
      %v7793 = vunpack.c.0.s8 %v7792
      %v7794 = vlaneseq
      %v7795 = vshrl.u32 %v7794, 7
      %v7796 = vsub.s32 %v7793, %v7795
      %v7797 = vrot.slane %v7783, %v7796
      %v7798 = vcombine.low %v7790, %v7797
      %v7799 = vcombine.low %v6984, %v6985
      %v7800 = vcombine.low %v6986, %v6987
      %v7802 = vunpack.c.l.s4 1983009808
      %v7803 = vunpack.c.0.s8 %v7802
      %v7804 = vlaneseq
      %v7805 = vshrl.u32 %v7804, 7
      %v7806 = vsub.s32 %v7803, %v7805
      %v7807 = vrot.slane %v7799, %v7806
      %v7809 = vunpack.c.l.s4 1983009808
      %v7810 = vunpack.c.0.s8 %v7809
      %v7811 = vlaneseq
      %v7812 = vshrl.u32 %v7811, 7
      %v7813 = vsub.s32 %v7810, %v7812
      %v7814 = vrot.slane %v7800, %v7813
      %v7815 = vcombine.low %v7807, %v7814
      %v7817 = vunpack.c.l.s4 1983009808
      %v7818 = vunpack.c.0.s8 %v7817
      %v7819 = vlaneseq
      %v7820 = vshrl.u32 %v7819, 7
      %v7821 = vsub.s32 %v7818, %v7820
      %v7822 = vrot.slane %v6988, %v7821
      %v7823 = vcombine.low %v6989, %v6990
      %v7824 = vcombine.low %v6991, %v6992
      %v7826 = vunpack.c.l.s4 1983009808
      %v7827 = vunpack.c.0.s8 %v7826
      %v7828 = vlaneseq
      %v7829 = vshrl.u32 %v7828, 7
      %v7830 = vsub.s32 %v7827, %v7829
      %v7831 = vrot.slane %v7823, %v7830
      %v7833 = vunpack.c.l.s4 1983009808
      %v7834 = vunpack.c.0.s8 %v7833
      %v7835 = vlaneseq
      %v7836 = vshrl.u32 %v7835, 7
      %v7837 = vsub.s32 %v7834, %v7836
      %v7838 = vrot.slane %v7824, %v7837
      %v7839 = vcombine.low %v7831, %v7838
      %v7840 = vcombine.low %v6993, %v6994
      %v7841 = vcombine.low %v6995, %v6996
      %v7843 = vunpack.c.l.s4 1983009808
      %v7844 = vunpack.c.0.s8 %v7843
      %v7845 = vlaneseq
      %v7846 = vshrl.u32 %v7845, 7
      %v7847 = vsub.s32 %v7844, %v7846
      %v7848 = vrot.slane %v7840, %v7847
      %v7850 = vunpack.c.l.s4 1983009808
      %v7851 = vunpack.c.0.s8 %v7850
      %v7852 = vlaneseq
      %v7853 = vshrl.u32 %v7852, 7
      %v7854 = vsub.s32 %v7851, %v7853
      %v7855 = vrot.slane %v7841, %v7854
      %v7856 = vcombine.low %v7848, %v7855
      %v7858 = vunpack.c.l.s4 1983009808
      %v7859 = vunpack.c.0.s8 %v7858
      %v7860 = vlaneseq
      %v7861 = vshrl.u32 %v7860, 7
      %v7862 = vsub.s32 %v7859, %v7861
      %v7863 = vrot.slane %v6997, %v7862
      %v7864 = vcombine.low %v6998, %v6999
      %v7865 = vcombine.low %v7000, %v7001
      %v7867 = vunpack.c.l.s4 1983009808
      %v7868 = vunpack.c.0.s8 %v7867
      %v7869 = vlaneseq
      %v7870 = vshrl.u32 %v7869, 7
      %v7871 = vsub.s32 %v7868, %v7870
      %v7872 = vrot.slane %v7864, %v7871
      %v7874 = vunpack.c.l.s4 1983009808
      %v7875 = vunpack.c.0.s8 %v7874
      %v7876 = vlaneseq
      %v7877 = vshrl.u32 %v7876, 7
      %v7878 = vsub.s32 %v7875, %v7877
      %v7879 = vrot.slane %v7865, %v7878
      %v7880 = vcombine.low %v7872, %v7879
      %v7881 = vcombine.low %v7002, %v7003
      %v7882 = vcombine.low %v7004, %v7005
      %v7884 = vunpack.c.l.s4 1983009808
      %v7885 = vunpack.c.0.s8 %v7884
      %v7886 = vlaneseq
      %v7887 = vshrl.u32 %v7886, 7
      %v7888 = vsub.s32 %v7885, %v7887
      %v7889 = vrot.slane %v7881, %v7888
      %v7891 = vunpack.c.l.s4 1983009808
      %v7892 = vunpack.c.0.s8 %v7891
      %v7893 = vlaneseq
      %v7894 = vshrl.u32 %v7893, 7
      %v7895 = vsub.s32 %v7892, %v7894
      %v7896 = vrot.slane %v7882, %v7895
      %v7897 = vcombine.low %v7889, %v7896
      %v7899 = vunpack.c.l.s4 1983009808
      %v7900 = vunpack.c.0.s8 %v7899
      %v7901 = vlaneseq
      %v7902 = vshrl.u32 %v7901, 7
      %v7903 = vsub.s32 %v7900, %v7902
      %v7904 = vrot.slane %v7006, %v7903
      %v7905 = vcombine.low %v7007, %v7008
      %v7906 = vcombine.low %v7009, %v7010
      %v7908 = vunpack.c.l.s4 1983009808
      %v7909 = vunpack.c.0.s8 %v7908
      %v7910 = vlaneseq
      %v7911 = vshrl.u32 %v7910, 7
      %v7912 = vsub.s32 %v7909, %v7911
      %v7913 = vrot.slane %v7905, %v7912
      %v7915 = vunpack.c.l.s4 1983009808
      %v7916 = vunpack.c.0.s8 %v7915
      %v7917 = vlaneseq
      %v7918 = vshrl.u32 %v7917, 7
      %v7919 = vsub.s32 %v7916, %v7918
      %v7920 = vrot.slane %v7906, %v7919
      %v7921 = vcombine.low %v7913, %v7920
      %v7922 = vcombine.low %v7011, %v7012
      %v7923 = vcombine.low %v7013, %v7014
      %v7925 = vunpack.c.l.s4 1983009808
      %v7926 = vunpack.c.0.s8 %v7925
      %v7927 = vlaneseq
      %v7928 = vshrl.u32 %v7927, 7
      %v7929 = vsub.s32 %v7926, %v7928
      %v7930 = vrot.slane %v7922, %v7929
      %v7932 = vunpack.c.l.s4 1983009808
      %v7933 = vunpack.c.0.s8 %v7932
      %v7934 = vlaneseq
      %v7935 = vshrl.u32 %v7934, 7
      %v7936 = vsub.s32 %v7933, %v7935
      %v7937 = vrot.slane %v7923, %v7936
      %v7938 = vcombine.low %v7930, %v7937
      %v7940 = vunpack.c.l.s4 1983009808
      %v7941 = vunpack.c.0.s8 %v7940
      %v7942 = vlaneseq
      %v7943 = vshrl.u32 %v7942, 7
      %v7944 = vsub.s32 %v7941, %v7943
      %v7945 = vrot.slane %v7015, %v7944
      %v7946 = vcombine.low %v7016, %v7017
      %v7947 = vcombine.low %v7018, %v7019
      %v7949 = vunpack.c.l.s4 1983009808
      %v7950 = vunpack.c.0.s8 %v7949
      %v7951 = vlaneseq
      %v7952 = vshrl.u32 %v7951, 7
      %v7953 = vsub.s32 %v7950, %v7952
      %v7954 = vrot.slane %v7946, %v7953
      %v7956 = vunpack.c.l.s4 1983009808
      %v7957 = vunpack.c.0.s8 %v7956
      %v7958 = vlaneseq
      %v7959 = vshrl.u32 %v7958, 7
      %v7960 = vsub.s32 %v7957, %v7959
      %v7961 = vrot.slane %v7947, %v7960
      %v7962 = vcombine.low %v7954, %v7961
      %v7963 = vcombine.low %v7020, %v7021
      %v7964 = vcombine.low %v7022, %v7023
      %v7966 = vunpack.c.l.s4 1983009808
      %v7967 = vunpack.c.0.s8 %v7966
      %v7968 = vlaneseq
      %v7969 = vshrl.u32 %v7968, 7
      %v7970 = vsub.s32 %v7967, %v7969
      %v7971 = vrot.slane %v7963, %v7970
      %v7973 = vunpack.c.l.s4 1983009808
      %v7974 = vunpack.c.0.s8 %v7973
      %v7975 = vlaneseq
      %v7976 = vshrl.u32 %v7975, 7
      %v7977 = vsub.s32 %v7974, %v7976
      %v7978 = vrot.slane %v7964, %v7977
      %v7979 = vcombine.low %v7971, %v7978
      %v7981 = vunpack.c.l.s4 1983009808
      %v7982 = vunpack.c.0.s8 %v7981
      %v7983 = vlaneseq
      %v7984 = vshrl.u32 %v7983, 7
      %v7985 = vsub.s32 %v7982, %v7984
      %v7986 = vrot.slane %v7024, %v7985
      %v7987 = vcombine.low %v7025, %v7026
      %v7988 = vcombine.low %v7027, %v7028
      %v7990 = vunpack.c.l.s4 1983009808
      %v7991 = vunpack.c.0.s8 %v7990
      %v7992 = vlaneseq
      %v7993 = vshrl.u32 %v7992, 7
      %v7994 = vsub.s32 %v7991, %v7993
      %v7995 = vrot.slane %v7987, %v7994
      %v7997 = vunpack.c.l.s4 1983009808
      %v7998 = vunpack.c.0.s8 %v7997
      %v7999 = vlaneseq
      %v8000 = vshrl.u32 %v7999, 7
      %v8001 = vsub.s32 %v7998, %v8000
      %v8002 = vrot.slane %v7988, %v8001
      %v8003 = vcombine.low %v7995, %v8002
      %v8004 = vcombine.low %v7029, %v7030
      %v8005 = vcombine.low %v7031, %v7032
      %v8007 = vunpack.c.l.s4 1983009808
      %v8008 = vunpack.c.0.s8 %v8007
      %v8009 = vlaneseq
      %v8010 = vshrl.u32 %v8009, 7
      %v8011 = vsub.s32 %v8008, %v8010
      %v8012 = vrot.slane %v8004, %v8011
      %v8014 = vunpack.c.l.s4 1983009808
      %v8015 = vunpack.c.0.s8 %v8014
      %v8016 = vlaneseq
      %v8017 = vshrl.u32 %v8016, 7
      %v8018 = vsub.s32 %v8015, %v8017
      %v8019 = vrot.slane %v8005, %v8018
      %v8020 = vcombine.low %v8012, %v8019
      %v8022 = vunpack.c.l.s4 1983009808
      %v8023 = vunpack.c.0.s8 %v8022
      %v8024 = vlaneseq
      %v8025 = vshrl.u32 %v8024, 7
      %v8026 = vsub.s32 %v8023, %v8025
      %v8027 = vrot.slane %v7033, %v8026
      %v8028 = vcombine.low %v7034, %v7035
      %v8029 = vcombine.low %v7036, %v7037
      %v8031 = vunpack.c.l.s4 1983009808
      %v8032 = vunpack.c.0.s8 %v8031
      %v8033 = vlaneseq
      %v8034 = vshrl.u32 %v8033, 7
      %v8035 = vsub.s32 %v8032, %v8034
      %v8036 = vrot.slane %v8028, %v8035
      %v8038 = vunpack.c.l.s4 1983009808
      %v8039 = vunpack.c.0.s8 %v8038
      %v8040 = vlaneseq
      %v8041 = vshrl.u32 %v8040, 7
      %v8042 = vsub.s32 %v8039, %v8041
      %v8043 = vrot.slane %v8029, %v8042
      %v8044 = vcombine.low %v8036, %v8043
      %v8045 = vcombine.low %v7038, %v7039
      %v8046 = vcombine.low %v7040, %v7041
      %v8048 = vunpack.c.l.s4 1983009808
      %v8049 = vunpack.c.0.s8 %v8048
      %v8050 = vlaneseq
      %v8051 = vshrl.u32 %v8050, 7
      %v8052 = vsub.s32 %v8049, %v8051
      %v8053 = vrot.slane %v8045, %v8052
      %v8055 = vunpack.c.l.s4 1983009808
      %v8056 = vunpack.c.0.s8 %v8055
      %v8057 = vlaneseq
      %v8058 = vshrl.u32 %v8057, 7
      %v8059 = vsub.s32 %v8056, %v8058
      %v8060 = vrot.slane %v8046, %v8059
      %v8061 = vcombine.low %v8053, %v8060
      %v8063 = vunpack.c.l.s4 1983009808
      %v8064 = vunpack.c.0.s8 %v8063
      %v8065 = vlaneseq
      %v8066 = vshrl.u32 %v8065, 7
      %v8067 = vsub.s32 %v8064, %v8066
      %v8068 = vrot.slane %v7042, %v8067
      %v8069 = vcombine.low %v7043, %v7044
      %v8070 = vcombine.low %v7045, %v7046
      %v8072 = vunpack.c.l.s4 1983009808
      %v8073 = vunpack.c.0.s8 %v8072
      %v8074 = vlaneseq
      %v8075 = vshrl.u32 %v8074, 7
      %v8076 = vsub.s32 %v8073, %v8075
      %v8077 = vrot.slane %v8069, %v8076
      %v8079 = vunpack.c.l.s4 1983009808
      %v8080 = vunpack.c.0.s8 %v8079
      %v8081 = vlaneseq
      %v8082 = vshrl.u32 %v8081, 7
      %v8083 = vsub.s32 %v8080, %v8082
      %v8084 = vrot.slane %v8070, %v8083
      %v8085 = vcombine.low %v8077, %v8084
      %v8086 = vcombine.low %v7047, %v7048
      %v8087 = vcombine.low %v7049, %v7050
      %v8089 = vunpack.c.l.s4 1983009808
      %v8090 = vunpack.c.0.s8 %v8089
      %v8091 = vlaneseq
      %v8092 = vshrl.u32 %v8091, 7
      %v8093 = vsub.s32 %v8090, %v8092
      %v8094 = vrot.slane %v8086, %v8093
      %v8096 = vunpack.c.l.s4 1983009808
      %v8097 = vunpack.c.0.s8 %v8096
      %v8098 = vlaneseq
      %v8099 = vshrl.u32 %v8098, 7
      %v8100 = vsub.s32 %v8097, %v8099
      %v8101 = vrot.slane %v8087, %v8100
      %v8102 = vcombine.low %v8094, %v8101
      %v8104 = vunpack.c.l.s4 1983009808
      %v8105 = vunpack.c.0.s8 %v8104
      %v8106 = vlaneseq
      %v8107 = vshrl.u32 %v8106, 7
      %v8108 = vsub.s32 %v8105, %v8107
      %v8109 = vrot.slane %v7051, %v8108
      %v8110 = vcombine.low %v7052, %v7053
      %v8111 = vcombine.low %v7054, %v7055
      %v8113 = vunpack.c.l.s4 1983009808
      %v8114 = vunpack.c.0.s8 %v8113
      %v8115 = vlaneseq
      %v8116 = vshrl.u32 %v8115, 7
      %v8117 = vsub.s32 %v8114, %v8116
      %v8118 = vrot.slane %v8110, %v8117
      %v8120 = vunpack.c.l.s4 1983009808
      %v8121 = vunpack.c.0.s8 %v8120
      %v8122 = vlaneseq
      %v8123 = vshrl.u32 %v8122, 7
      %v8124 = vsub.s32 %v8121, %v8123
      %v8125 = vrot.slane %v8111, %v8124
      %v8126 = vcombine.low %v8118, %v8125
      %v8127 = vcombine.low %v7056, %v7057
      %v8128 = vcombine.low %v7058, %v7059
      %v8130 = vunpack.c.l.s4 1983009808
      %v8131 = vunpack.c.0.s8 %v8130
      %v8132 = vlaneseq
      %v8133 = vshrl.u32 %v8132, 7
      %v8134 = vsub.s32 %v8131, %v8133
      %v8135 = vrot.slane %v8127, %v8134
      %v8137 = vunpack.c.l.s4 1983009808
      %v8138 = vunpack.c.0.s8 %v8137
      %v8139 = vlaneseq
      %v8140 = vshrl.u32 %v8139, 7
      %v8141 = vsub.s32 %v8138, %v8140
      %v8142 = vrot.slane %v8128, %v8141
      %v8143 = vcombine.low %v8135, %v8142
      %v8145 = vunpack.c.l.s4 1983009808
      %v8146 = vunpack.c.0.s8 %v8145
      %v8147 = vlaneseq
      %v8148 = vshrl.u32 %v8147, 7
      %v8149 = vsub.s32 %v8146, %v8148
      %v8150 = vrot.slane %v7060, %v8149
      %v8205 = vsel %vm7197, %v7429, 0.0
      %v8206 = vsel %vm7198, %v7446, 0.0
      %v8207 = vsel %vm7199, %v7453, 0.0
      %v8208 = vsel %vm7200, %v7470, 0.0
      %v8209 = vsel %vm7201, %v7487, 0.0
      %v8210 = vsel %vm7202, %v7494, 0.0
      %v8211 = vsel %vm7203, %v7511, 0.0
      %v8212 = vsel %vm7204, %v7528, 0.0
      %v8213 = vsel %vm7205, %v7535, 0.0
      %v8214 = vsel %vm7206, %v7552, 0.0
      %v8215 = vsel %vm7207, %v7569, 0.0
      %v8216 = vsel %vm7208, %v7576, 0.0
      %v8217 = vsel %vm7209, %v7593, 0.0
      %v8218 = vsel %vm7210, %v7610, 0.0
      %v8219 = vsel %vm7211, %v7617, 0.0
      %v8220 = vsel %vm7212, %v7634, 0.0
      %v8221 = vsel %vm7213, %v7651, 0.0
      %v8222 = vsel %vm7214, %v7658, 0.0
      %v8223 = vsel %vm7215, %v7675, 0.0
      %v8224 = vsel %vm7216, %v7692, 0.0
      %v8225 = vsel %vm7217, %v7699, 0.0
      %v8226 = vsel %vm7218, %v7716, 0.0
      %v8227 = vsel %vm7219, %v7733, 0.0
      %v8228 = vsel %vm7220, %v7740, 0.0
      %v8229 = vsel %vm7221, %v7757, 0.0
      %v8230 = vsel %vm7222, %v7774, 0.0
      %v8231 = vsel %vm7223, %v7781, 0.0
      %v8232 = vsel %vm7224, %v7798, 0.0
      %v8233 = vsel %vm7225, %v7815, 0.0
      %v8234 = vsel %vm7226, %v7822, 0.0
      %v8235 = vsel %vm7227, %v7839, 0.0
      %v8236 = vsel %vm7228, %v7856, 0.0
      %v8237 = vsel %vm7229, %v7863, 0.0
      %v8238 = vsel %vm7230, %v7880, 0.0
      %v8239 = vsel %vm7231, %v7897, 0.0
      %v8240 = vsel %vm7232, %v7904, 0.0
      %v8241 = vsel %vm7233, %v7921, 0.0
      %v8242 = vsel %vm7234, %v7938, 0.0
      %v8243 = vsel %vm7235, %v7945, 0.0
      %v8244 = vsel %vm7236, %v7962, 0.0
      %v8245 = vsel %vm7237, %v7979, 0.0
      %v8246 = vsel %vm7238, %v7986, 0.0
      %v8247 = vsel %vm7239, %v8003, 0.0
      %v8248 = vsel %vm7240, %v8020, 0.0
      %v8249 = vsel %vm7241, %v8027, 0.0
      %v8250 = vsel %vm7242, %v8044, 0.0
      %v8251 = vsel %vm7243, %v8061, 0.0
      %v8252 = vsel %vm7244, %v8068, 0.0
      %v8253 = vsel %vm7245, %v8085, 0.0
      %v8254 = vsel %vm7246, %v8102, 0.0
      %v8255 = vsel %vm7247, %v8109, 0.0
      %v8256 = vsel %vm7248, %v8126, 0.0
      %v8257 = vsel %vm7249, %v8143, 0.0
      %v8258 = vsel %vm7250, %v8150, 0.0
      %v8307 = vrot.slane %v8205, 1
      %v8308 = vrot.slane %v8206, 1
      %v8309 = vsel %vm633, %v8307, %v8308
      %v8310 = vrot.slane %v8207, 1
      %v8311 = vsel %vm633, %v8308, %v8310
      %v8312 = vrot.slane %v8208, 1
      %v8313 = vrot.slane %v8209, 1
      %v8314 = vsel %vm633, %v8312, %v8313
      %v8315 = vrot.slane %v8210, 1
      %v8316 = vsel %vm633, %v8313, %v8315
      %v8317 = vrot.slane %v8211, 1
      %v8318 = vrot.slane %v8212, 1
      %v8319 = vsel %vm633, %v8317, %v8318
      %v8320 = vrot.slane %v8213, 1
      %v8321 = vsel %vm633, %v8318, %v8320
      %v8322 = vrot.slane %v8214, 1
      %v8323 = vrot.slane %v8215, 1
      %v8324 = vsel %vm633, %v8322, %v8323
      %v8325 = vrot.slane %v8216, 1
      %v8326 = vsel %vm633, %v8323, %v8325
      %v8327 = vrot.slane %v8217, 1
      %v8328 = vrot.slane %v8218, 1
      %v8329 = vsel %vm633, %v8327, %v8328
      %v8330 = vrot.slane %v8219, 1
      %v8331 = vsel %vm633, %v8328, %v8330
      %v8332 = vrot.slane %v8220, 1
      %v8333 = vrot.slane %v8221, 1
      %v8334 = vsel %vm633, %v8332, %v8333
      %v8335 = vrot.slane %v8222, 1
      %v8336 = vsel %vm633, %v8333, %v8335
      %v8337 = vrot.slane %v8223, 1
      %v8338 = vrot.slane %v8224, 1
      %v8339 = vsel %vm633, %v8337, %v8338
      %v8340 = vrot.slane %v8225, 1
      %v8341 = vsel %vm633, %v8338, %v8340
      %v8342 = vrot.slane %v8226, 1
      %v8343 = vrot.slane %v8227, 1
      %v8344 = vsel %vm633, %v8342, %v8343
      %v8345 = vrot.slane %v8228, 1
      %v8346 = vsel %vm633, %v8343, %v8345
      %v8347 = vrot.slane %v8229, 1
      %v8348 = vrot.slane %v8230, 1
      %v8349 = vsel %vm633, %v8347, %v8348
      %v8350 = vrot.slane %v8231, 1
      %v8351 = vsel %vm633, %v8348, %v8350
      %v8352 = vrot.slane %v8232, 1
      %v8353 = vrot.slane %v8233, 1
      %v8354 = vsel %vm633, %v8352, %v8353
      %v8355 = vrot.slane %v8234, 1
      %v8356 = vsel %vm633, %v8353, %v8355
      %v8357 = vrot.slane %v8235, 1
      %v8358 = vrot.slane %v8236, 1
      %v8359 = vsel %vm633, %v8357, %v8358
      %v8360 = vrot.slane %v8237, 1
      %v8361 = vsel %vm633, %v8358, %v8360
      %v8362 = vrot.slane %v8238, 1
      %v8363 = vrot.slane %v8239, 1
      %v8364 = vsel %vm633, %v8362, %v8363
      %v8365 = vrot.slane %v8240, 1
      %v8366 = vsel %vm633, %v8363, %v8365
      %v8367 = vrot.slane %v8241, 1
      %v8368 = vrot.slane %v8242, 1
      %v8369 = vsel %vm633, %v8367, %v8368
      %v8370 = vrot.slane %v8243, 1
      %v8371 = vsel %vm633, %v8368, %v8370
      %v8372 = vrot.slane %v8244, 1
      %v8373 = vrot.slane %v8245, 1
      %v8374 = vsel %vm633, %v8372, %v8373
      %v8375 = vrot.slane %v8246, 1
      %v8376 = vsel %vm633, %v8373, %v8375
      %v8377 = vrot.slane %v8247, 1
      %v8378 = vrot.slane %v8248, 1
      %v8379 = vsel %vm633, %v8377, %v8378
      %v8380 = vrot.slane %v8249, 1
      %v8381 = vsel %vm633, %v8378, %v8380
      %v8382 = vrot.slane %v8250, 1
      %v8383 = vrot.slane %v8251, 1
      %v8384 = vsel %vm633, %v8382, %v8383
      %v8385 = vrot.slane %v8252, 1
      %v8386 = vsel %vm633, %v8383, %v8385
      %8387 = vrot.lane.b32.xlu0 %v8309, 4
      %v8388 = vpop.permute.xlu0 %8387
      %8389 = vrot.lane.b32.xlu0 %v8311, 4
      %v8390 = vpop.permute.xlu0 %8389
      %8391 = vrot.lane.b32.xlu0 %v8314, 4
      %v8392 = vpop.permute.xlu0 %8391
      %8393 = vrot.lane.b32.xlu0 %v8316, 4
      %v8394 = vpop.permute.xlu0 %8393
      %8395 = vrot.lane.b32.xlu0 %v8319, 4
      %v8396 = vpop.permute.xlu0 %8395
      %8397 = vrot.lane.b32.xlu0 %v8321, 4
      %v8398 = vpop.permute.xlu0 %8397
      %8399 = vrot.lane.b32.xlu0 %v8324, 4
      %v8400 = vpop.permute.xlu0 %8399
      %8401 = vrot.lane.b32.xlu0 %v8326, 4
      %v8402 = vpop.permute.xlu0 %8401
      %8403 = vrot.lane.b32.xlu0 %v8329, 4
      %v8404 = vpop.permute.xlu0 %8403
      %8405 = vrot.lane.b32.xlu0 %v8331, 4
      %v8406 = vpop.permute.xlu0 %8405
      %8407 = vrot.lane.b32.xlu0 %v8334, 4
      %v8408 = vpop.permute.xlu0 %8407
      %8409 = vrot.lane.b32.xlu0 %v8336, 4
      %v8410 = vpop.permute.xlu0 %8409
      %8411 = vrot.lane.b32.xlu0 %v8339, 4
      %v8412 = vpop.permute.xlu0 %8411
      %8413 = vrot.lane.b32.xlu0 %v8341, 4
      %v8414 = vpop.permute.xlu0 %8413
      %8415 = vrot.lane.b32.xlu0 %v8344, 4
      %v8416 = vpop.permute.xlu0 %8415
      %8417 = vrot.lane.b32.xlu0 %v8346, 4
      %v8418 = vpop.permute.xlu0 %8417
      %8419 = vrot.lane.b32.xlu0 %v8349, 4
      %v8420 = vpop.permute.xlu0 %8419
      %8421 = vrot.lane.b32.xlu0 %v8351, 4
      %v8422 = vpop.permute.xlu0 %8421
      %8423 = vrot.lane.b32.xlu0 %v8354, 4
      %v8424 = vpop.permute.xlu0 %8423
      %8425 = vrot.lane.b32.xlu0 %v8356, 4
      %v8426 = vpop.permute.xlu0 %8425
      %8427 = vrot.lane.b32.xlu0 %v8359, 4
      %v8428 = vpop.permute.xlu0 %8427
      %8429 = vrot.lane.b32.xlu0 %v8361, 4
      %v8430 = vpop.permute.xlu0 %8429
      %8431 = vrot.lane.b32.xlu0 %v8364, 4
      %v8432 = vpop.permute.xlu0 %8431
      %8433 = vrot.lane.b32.xlu0 %v8366, 4
      %v8434 = vpop.permute.xlu0 %8433
      %8435 = vrot.lane.b32.xlu0 %v8369, 4
      %v8436 = vpop.permute.xlu0 %8435
      %8437 = vrot.lane.b32.xlu0 %v8371, 4
      %v8438 = vpop.permute.xlu0 %8437
      %8439 = vrot.lane.b32.xlu0 %v8374, 4
      %v8440 = vpop.permute.xlu0 %8439
      %8441 = vrot.lane.b32.xlu0 %v8376, 4
      %v8442 = vpop.permute.xlu0 %8441
      %8443 = vrot.lane.b32.xlu0 %v8379, 4
      %v8444 = vpop.permute.xlu0 %8443
      %8445 = vrot.lane.b32.xlu0 %v8381, 4
      %v8446 = vpop.permute.xlu0 %8445
      %8447 = vrot.lane.b32.xlu0 %v8384, 4
      %v8448 = vpop.permute.xlu0 %8447
      %8449 = vrot.lane.b32.xlu0 %v8386, 4
      %v8450 = vpop.permute.xlu0 %8449
      %v8483 = vrot.slane %v8205, 2
      %v8484 = vrot.slane %v8206, 2
      %v8485 = vsel %vm886, %v8483, %v8484
      %v8486 = vrot.slane %v8207, 2
      %v8487 = vsel %vm886, %v8484, %v8486
      %v8488 = vrot.slane %v8208, 2
      %v8489 = vrot.slane %v8209, 2
      %v8490 = vsel %vm886, %v8488, %v8489
      %v8491 = vrot.slane %v8210, 2
      %v8492 = vsel %vm886, %v8489, %v8491
      %v8493 = vrot.slane %v8211, 2
      %v8494 = vrot.slane %v8212, 2
      %v8495 = vsel %vm886, %v8493, %v8494
      %v8496 = vrot.slane %v8213, 2
      %v8497 = vsel %vm886, %v8494, %v8496
      %v8498 = vrot.slane %v8214, 2
      %v8499 = vrot.slane %v8215, 2
      %v8500 = vsel %vm886, %v8498, %v8499
      %v8501 = vrot.slane %v8216, 2
      %v8502 = vsel %vm886, %v8499, %v8501
      %v8503 = vrot.slane %v8217, 2
      %v8504 = vrot.slane %v8218, 2
      %v8505 = vsel %vm886, %v8503, %v8504
      %v8506 = vrot.slane %v8219, 2
      %v8507 = vsel %vm886, %v8504, %v8506
      %v8508 = vrot.slane %v8220, 2
      %v8509 = vrot.slane %v8221, 2
      %v8510 = vsel %vm886, %v8508, %v8509
      %v8511 = vrot.slane %v8222, 2
      %v8512 = vsel %vm886, %v8509, %v8511
      %v8513 = vrot.slane %v8223, 2
      %v8514 = vrot.slane %v8224, 2
      %v8515 = vsel %vm886, %v8513, %v8514
      %v8516 = vrot.slane %v8225, 2
      %v8517 = vsel %vm886, %v8514, %v8516
      %v8518 = vrot.slane %v8226, 2
      %v8519 = vrot.slane %v8227, 2
      %v8520 = vsel %vm886, %v8518, %v8519
      %v8521 = vrot.slane %v8228, 2
      %v8522 = vsel %vm886, %v8519, %v8521
      %v8523 = vrot.slane %v8229, 2
      %v8524 = vrot.slane %v8230, 2
      %v8525 = vsel %vm886, %v8523, %v8524
      %v8526 = vrot.slane %v8231, 2
      %v8527 = vsel %vm886, %v8524, %v8526
      %v8528 = vrot.slane %v8232, 2
      %v8529 = vrot.slane %v8233, 2
      %v8530 = vsel %vm886, %v8528, %v8529
      %v8531 = vrot.slane %v8234, 2
      %v8532 = vsel %vm886, %v8529, %v8531
      %v8533 = vrot.slane %v8235, 2
      %v8534 = vrot.slane %v8236, 2
      %v8535 = vsel %vm886, %v8533, %v8534
      %v8536 = vrot.slane %v8237, 2
      %v8537 = vsel %vm886, %v8534, %v8536
      %v8538 = vrot.slane %v8238, 2
      %v8539 = vrot.slane %v8239, 2
      %v8540 = vsel %vm886, %v8538, %v8539
      %v8541 = vrot.slane %v8240, 2
      %v8542 = vsel %vm886, %v8539, %v8541
      %v8543 = vrot.slane %v8241, 2
      %v8544 = vrot.slane %v8242, 2
      %v8545 = vsel %vm886, %v8543, %v8544
      %v8546 = vrot.slane %v8243, 2
      %v8547 = vsel %vm886, %v8544, %v8546
      %v8548 = vrot.slane %v8244, 2
      %v8549 = vrot.slane %v8245, 2
      %v8550 = vsel %vm886, %v8548, %v8549
      %v8551 = vrot.slane %v8246, 2
      %v8552 = vsel %vm886, %v8549, %v8551
      %v8553 = vrot.slane %v8247, 2
      %v8554 = vrot.slane %v8248, 2
      %v8555 = vsel %vm886, %v8553, %v8554
      %v8556 = vrot.slane %v8249, 2
      %v8557 = vsel %vm886, %v8554, %v8556
      %v8558 = vrot.slane %v8250, 2
      %v8559 = vrot.slane %v8251, 2
      %v8560 = vsel %vm886, %v8558, %v8559
      %v8561 = vrot.slane %v8252, 2
      %v8562 = vsel %vm886, %v8559, %v8561
      %8563 = vrot.lane.b32.xlu0 %v8485, 8
      %v8564 = vpop.permute.xlu0 %8563
      %8565 = vrot.lane.b32.xlu0 %v8487, 8
      %v8566 = vpop.permute.xlu0 %8565
      %8567 = vrot.lane.b32.xlu0 %v8490, 8
      %v8568 = vpop.permute.xlu0 %8567
      %8569 = vrot.lane.b32.xlu0 %v8492, 8
      %v8570 = vpop.permute.xlu0 %8569
      %8571 = vrot.lane.b32.xlu0 %v8495, 8
      %v8572 = vpop.permute.xlu0 %8571
      %8573 = vrot.lane.b32.xlu0 %v8497, 8
      %v8574 = vpop.permute.xlu0 %8573
      %8575 = vrot.lane.b32.xlu0 %v8500, 8
      %v8576 = vpop.permute.xlu0 %8575
      %8577 = vrot.lane.b32.xlu0 %v8502, 8
      %v8578 = vpop.permute.xlu0 %8577
      %8579 = vrot.lane.b32.xlu0 %v8505, 8
      %v8580 = vpop.permute.xlu0 %8579
      %8581 = vrot.lane.b32.xlu0 %v8507, 8
      %v8582 = vpop.permute.xlu0 %8581
      %8583 = vrot.lane.b32.xlu0 %v8510, 8
      %v8584 = vpop.permute.xlu0 %8583
      %8585 = vrot.lane.b32.xlu0 %v8512, 8
      %v8586 = vpop.permute.xlu0 %8585
      %8587 = vrot.lane.b32.xlu0 %v8515, 8
      %v8588 = vpop.permute.xlu0 %8587
      %8589 = vrot.lane.b32.xlu0 %v8517, 8
      %v8590 = vpop.permute.xlu0 %8589
      %8591 = vrot.lane.b32.xlu0 %v8520, 8
      %v8592 = vpop.permute.xlu0 %8591
      %8593 = vrot.lane.b32.xlu0 %v8522, 8
      %v8594 = vpop.permute.xlu0 %8593
      %8595 = vrot.lane.b32.xlu0 %v8525, 8
      %v8596 = vpop.permute.xlu0 %8595
      %8597 = vrot.lane.b32.xlu0 %v8527, 8
      %v8598 = vpop.permute.xlu0 %8597
      %8599 = vrot.lane.b32.xlu0 %v8530, 8
      %v8600 = vpop.permute.xlu0 %8599
      %8601 = vrot.lane.b32.xlu0 %v8532, 8
      %v8602 = vpop.permute.xlu0 %8601
      %8603 = vrot.lane.b32.xlu0 %v8535, 8
      %v8604 = vpop.permute.xlu0 %8603
      %8605 = vrot.lane.b32.xlu0 %v8537, 8
      %v8606 = vpop.permute.xlu0 %8605
      %8607 = vrot.lane.b32.xlu0 %v8540, 8
      %v8608 = vpop.permute.xlu0 %8607
      %8609 = vrot.lane.b32.xlu0 %v8542, 8
      %v8610 = vpop.permute.xlu0 %8609
      %8611 = vrot.lane.b32.xlu0 %v8545, 8
      %v8612 = vpop.permute.xlu0 %8611
      %8613 = vrot.lane.b32.xlu0 %v8547, 8
      %v8614 = vpop.permute.xlu0 %8613
      %8615 = vrot.lane.b32.xlu0 %v8550, 8
      %v8616 = vpop.permute.xlu0 %8615
      %8617 = vrot.lane.b32.xlu0 %v8552, 8
      %v8618 = vpop.permute.xlu0 %8617
      %8619 = vrot.lane.b32.xlu0 %v8555, 8
      %v8620 = vpop.permute.xlu0 %8619
      %8621 = vrot.lane.b32.xlu0 %v8557, 8
      %v8622 = vpop.permute.xlu0 %8621
      %8623 = vrot.lane.b32.xlu0 %v8560, 8
      %v8624 = vpop.permute.xlu0 %8623
      %8625 = vrot.lane.b32.xlu0 %v8562, 8
      %v8626 = vpop.permute.xlu0 %8625
      %v8659 = vsel %vm1139, %v8205, %v8388
      %v8660 = vsel %vm1139, %v8206, %v8390
      %v8661 = vsel %vm1139, %v8208, %v8392
      %v8662 = vsel %vm1139, %v8209, %v8394
      %v8663 = vsel %vm1139, %v8211, %v8396
      %v8664 = vsel %vm1139, %v8212, %v8398
      %v8665 = vsel %vm1139, %v8214, %v8400
      %v8666 = vsel %vm1139, %v8215, %v8402
      %v8667 = vsel %vm1139, %v8217, %v8404
      %v8668 = vsel %vm1139, %v8218, %v8406
      %v8669 = vsel %vm1139, %v8220, %v8408
      %v8670 = vsel %vm1139, %v8221, %v8410
      %v8671 = vsel %vm1139, %v8223, %v8412
      %v8672 = vsel %vm1139, %v8224, %v8414
      %v8673 = vsel %vm1139, %v8226, %v8416
      %v8674 = vsel %vm1139, %v8227, %v8418
      %v8675 = vsel %vm1139, %v8229, %v8420
      %v8676 = vsel %vm1139, %v8230, %v8422
      %v8677 = vsel %vm1139, %v8232, %v8424
      %v8678 = vsel %vm1139, %v8233, %v8426
      %v8679 = vsel %vm1139, %v8235, %v8428
      %v8680 = vsel %vm1139, %v8236, %v8430
      %v8681 = vsel %vm1139, %v8238, %v8432
      %v8682 = vsel %vm1139, %v8239, %v8434
      %v8683 = vsel %vm1139, %v8241, %v8436
      %v8684 = vsel %vm1139, %v8242, %v8438
      %v8685 = vsel %vm1139, %v8244, %v8440
      %v8686 = vsel %vm1139, %v8245, %v8442
      %v8687 = vsel %vm1139, %v8247, %v8444
      %v8688 = vsel %vm1139, %v8248, %v8446
      %v8689 = vsel %vm1139, %v8250, %v8448
      %v8690 = vsel %vm1139, %v8251, %v8450
      %v8691 = vsel %vm1194, %v8659, %v8564
      %v8692 = vsel %vm1194, %v8660, %v8566
      %v8693 = vsel %vm1194, %v8661, %v8568
      %v8694 = vsel %vm1194, %v8662, %v8570
      %v8695 = vsel %vm1194, %v8663, %v8572
      %v8696 = vsel %vm1194, %v8664, %v8574
      %v8697 = vsel %vm1194, %v8665, %v8576
      %v8698 = vsel %vm1194, %v8666, %v8578
      %v8699 = vsel %vm1194, %v8667, %v8580
      %v8700 = vsel %vm1194, %v8668, %v8582
      %v8701 = vsel %vm1194, %v8669, %v8584
      %v8702 = vsel %vm1194, %v8670, %v8586
      %v8703 = vsel %vm1194, %v8671, %v8588
      %v8704 = vsel %vm1194, %v8672, %v8590
      %v8705 = vsel %vm1194, %v8673, %v8592
      %v8706 = vsel %vm1194, %v8674, %v8594
      %v8707 = vsel %vm1194, %v8675, %v8596
      %v8708 = vsel %vm1194, %v8676, %v8598
      %v8709 = vsel %vm1194, %v8677, %v8600
      %v8710 = vsel %vm1194, %v8678, %v8602
      %v8711 = vsel %vm1194, %v8679, %v8604
      %v8712 = vsel %vm1194, %v8680, %v8606
      %v8713 = vsel %vm1194, %v8681, %v8608
      %v8714 = vsel %vm1194, %v8682, %v8610
      %v8715 = vsel %vm1194, %v8683, %v8612
      %v8716 = vsel %vm1194, %v8684, %v8614
      %v8717 = vsel %vm1194, %v8685, %v8616
      %v8718 = vsel %vm1194, %v8686, %v8618
      %v8719 = vsel %vm1194, %v8687, %v8620
      %v8720 = vsel %vm1194, %v8688, %v8622
      %v8721 = vsel %vm1194, %v8689, %v8624
      %v8722 = vsel %vm1194, %v8690, %v8626
      %v8723 = vld [vmem:[%s3] sm:$0xff]
      %v8724 = vld [vmem:[%s3 + $0x8] sm:$0xf]
      %v8728 = vrot.slane %v8253, 1
      %v8729 = vrot.slane %v8254, 1
      %v8730 = vsel %vm633, %v8728, %v8729
      %v8731 = vrot.slane %v8255, 1
      %v8732 = vsel %vm633, %v8729, %v8731
      %8733 = vrot.lane.b32.xlu0 %v8730, 4
      %v8734 = vpop.permute.xlu0 %8733
      %8735 = vrot.lane.b32.xlu0 %v8732, 4
      %v8736 = vpop.permute.xlu0 %8735
      %v8739 = vrot.slane %v8253, 2
      %v8740 = vrot.slane %v8254, 2
      %v8741 = vsel %vm886, %v8739, %v8740
      %v8742 = vrot.slane %v8255, 2
      %v8743 = vsel %vm886, %v8740, %v8742
      %8744 = vrot.lane.b32.xlu0 %v8741, 8
      %v8745 = vpop.permute.xlu0 %8744
      %8746 = vrot.lane.b32.xlu0 %v8743, 8
      %v8747 = vpop.permute.xlu0 %8746
      %v8750 = vsel %vm1139, %v8253, %v8734
      %v8751 = vsel %vm1139, %v8254, %v8736
      %v8752 = vsel %vm1194, %v8750, %v8745
      %v8753 = vsel %vm1194, %v8751, %v8747
      %s8754 = scalar_lea.vmem %s3, 16
      %v8755 = vld [vmem:[%s8754] sm:$0xff]
      %v8756 = vld [vmem:[%s8754 + $0x8] sm:$0xf]
      %v8758 = vsel %vm2771, %v8693, 0
      %v8761 = vsel %vm2771, %v8694, 0
      %v8764 = vsel %vm2771, %v8695, 0
      %v8767 = vsel %vm2771, %v8696, 0
      %v8770 = vsel %vm2771, %v8697, 0
      %v8773 = vsel %vm2771, %v8698, 0
      %v8776 = vsel %vm2771, %v8699, 0
      %v8779 = vsel %vm2771, %v8700, 0
      %v8782 = vsel %vm2771, %v8701, 0
      %v8785 = vsel %vm2771, %v8702, 0
      %v8788 = vsel %vm2771, %v8703, 0
      %v8791 = vsel %vm2771, %v8704, 0
      %v8794 = vsel %vm2771, %v8705, 0
      %v8797 = vsel %vm2771, %v8706, 0
      %v8800 = vsel %vm2771, %v8707, 0
      %v8803 = vsel %vm2771, %v8708, 0
      %v8806 = vsel %vm2771, %v8709, 0
      %v8809 = vsel %vm2771, %v8710, 0
      %v8812 = vsel %vm2771, %v8711, 0
      %v8815 = vsel %vm2771, %v8712, 0
      %v8818 = vsel %vm2771, %v8713, 0
      %v8821 = vsel %vm2771, %v8714, 0
      %v8824 = vsel %vm2771, %v8715, 0
      %v8827 = vsel %vm2771, %v8716, 0
      %v8830 = vsel %vm2771, %v8717, 0
      %v8833 = vsel %vm2771, %v8718, 0
      %v8836 = vsel %vm2771, %v8719, 0
      %v8839 = vsel %vm2771, %v8720, 0
      %v8842 = vsel %vm2771, %v8721, 0
      %v8845 = vsel %vm2771, %v8722, 0
      %v8848 = vsel %vm2771, %v8752, 0
      %v8851 = vsel %vm2771, %v8753, 0
      %v8854 = vsel %vm2854, %v8756, 0
      %8856 = vmatprep.subr.mxu0 0.0
      %8857 = vmatpush1.msra.mxu0 %v8755
      %8858 = vmatprep.subr.mxu0 0.0
      %8859 = vmatpush1.msra.mxu0 %v8854
      %8860 = vmatprep.subr.mxu0 0.0
      %8861 = vmatpush1.msra.mxu0 0.0
      %8862 = vmatprep.subr.mxu0 0.0
      %8863 = vmatpush1.msra.mxu0 0.0
      %8864 = vmatprep.subr.mxu0 0.0
      %8865 = vmatpush1.msra.mxu0 0.0
      %8866 = vmatprep.subr.mxu0 0.0
      %8867 = vmatpush1.msra.mxu0 0.0
      %8868 = vmatprep.subr.mxu0 0.0
      %8869 = vmatpush1.msra.mxu0 0.0
      %8870 = vmatprep.subr.mxu0 0.0
      %8871 = vmatpush1.msra.mxu0 0.0
      %8872 = vmatprep.subr.mxu0 0.0
      %8873 = vmatpush1.msra.mxu0 0.0
      %8874 = vmatprep.subr.mxu0 0.0
      %8875 = vmatpush1.msra.mxu0 0.0
      %8876 = vmatprep.subr.mxu0 0.0
      %8877 = vmatpush1.msra.mxu0 0.0
      %8878 = vmatprep.subr.mxu0 0.0
      %8879 = vmatpush1.msra.mxu0 0.0
      %8880 = vmatprep.subr.mxu0 0.0
      %8881 = vmatpush1.msra.mxu0 0.0
      %8882 = vmatprep.subr.mxu0 0.0
      %8883 = vmatpush1.msra.mxu0 0.0
      %8884 = vmatprep.subr.mxu0 0.0
      %8885 = vmatpush1.msra.mxu0 0.0
      %8886 = vmatprep.subr.mxu0 0.0
      %8887 = vmatpush1.msra.mxu0 0.0
      %8888 = vmatprep.subr.mxu0 0.0
      %8889 = vmatpush1.msra.mxu0 0.0
      %8890 = vmatprep.subr.mxu0 0.0
      %8891 = vmatpush1.msra.mxu0 0.0
      %8892 = vmatprep.subr.mxu0 0.0
      %8893 = vmatpush1.msra.mxu0 0.0
      %8894 = vmatprep.subr.mxu0 0.0
      %8895 = vmatpush1.msra.mxu0 0.0
      %8896 = vmatprep.subr.mxu0 0.0
      %8897 = vmatpush1.msra.mxu0 0.0
      %8898 = vmatprep.subr.mxu0 0.0
      %8899 = vmatpush1.msra.mxu0 0.0
      %8900 = vmatprep.subr.mxu0 0.0
      %8901 = vmatpush1.msra.mxu0 0.0
      %8902 = vmatprep.subr.mxu0 0.0
      %8903 = vmatpush1.msra.mxu0 0.0
      %8904 = vmatprep.subr.mxu0 0.0
      %8905 = vmatpush1.msra.mxu0 0.0
      %8906 = vmatprep.subr.mxu0 0.0
      %8907 = vmatpush1.msra.mxu0 0.0
      %8908 = vmatprep.subr.mxu0 0.0
      %8909 = vmatpush1.msra.mxu0 0.0
      %8910 = vmatprep.subr.mxu0 0.0
      %8911 = vmatpush1.msra.mxu0 0.0
      %8912 = vmatprep.subr.mxu0 0.0
      %8913 = vmatpush1.msra.mxu0 0.0
      %8914 = vmatprep.subr.mxu0 0.0
      %8915 = vmatpush1.msra.mxu0 0.0
      %8916 = vmatprep.subr.mxu0 0.0
      %8917 = vmatpush1.msra.mxu0 0.0
      %8918 = vmatprep.subr.mxu0 0.0
      %8919 = vmatpush1.msra.mxu0 0.0
      %8920 = vmatprep.mubr.f32.mxu0 0.0
      %8921 = vmatmul.mubr.f32.gmra.mrb[0].mxu0 %v8758
      %v8922 = vpop.f32.mrb[0].mxu0
      %v8923 = vadd.f32 0.0, %v8922
      %v8924 = vpop.f32.mrb[0].mxu0
      %8925 = vmatprep.mubr.f32.mxu0 0.0
      %8926 = vmatmul.mubr.f32.gmra.mrb[0].mxu0 %v8761
      %v8927 = vpop.f32.mrb[0].mxu0
      %v8928 = vadd.f32 0.0, %v8927
      %v8929 = vpop.f32.mrb[0].mxu0
      %8930 = vmatprep.mubr.f32.mxu0 0.0
      %8931 = vmatmul.mubr.f32.gmra.mrb[0].mxu0 %v8764
      %v8932 = vpop.f32.mrb[0].mxu0
      %v8933 = vadd.f32 0.0, %v8932
      %v8934 = vpop.f32.mrb[0].mxu0
      %8935 = vmatprep.mubr.f32.mxu0 0.0
      %8936 = vmatmul.mubr.f32.gmra.mrb[0].mxu0 %v8767
      %v8937 = vpop.f32.mrb[0].mxu0
      %v8938 = vadd.f32 0.0, %v8937
      %v8939 = vpop.f32.mrb[0].mxu0
      %8940 = vmatprep.mubr.f32.mxu0 0.0
      %8941 = vmatmul.mubr.f32.gmra.mrb[0].mxu0 %v8770
      %v8942 = vpop.f32.mrb[0].mxu0
      %v8943 = vadd.f32 0.0, %v8942
      %v8944 = vpop.f32.mrb[0].mxu0
      %8945 = vmatprep.mubr.f32.mxu0 0.0
      %8946 = vmatmul.mubr.f32.gmra.mrb[0].mxu0 %v8773
      %v8947 = vpop.f32.mrb[0].mxu0
      %v8948 = vadd.f32 0.0, %v8947
      %v8949 = vpop.f32.mrb[0].mxu0
      %8950 = vmatprep.mubr.f32.mxu0 0.0
      %8951 = vmatmul.mubr.f32.gmra.mrb[0].mxu0 %v8776
      %v8952 = vpop.f32.mrb[0].mxu0
      %v8953 = vadd.f32 0.0, %v8952
      %v8954 = vpop.f32.mrb[0].mxu0
      %8955 = vmatprep.mubr.f32.mxu0 0.0
      %8956 = vmatmul.mubr.f32.gmra.mrb[0].mxu0 %v8779
      %v8957 = vpop.f32.mrb[0].mxu0
      %v8958 = vadd.f32 0.0, %v8957
      %v8959 = vpop.f32.mrb[0].mxu0
      %8960 = vmatprep.mubr.f32.mxu0 0.0
      %8961 = vmatmul.mubr.f32.gmra.mrb[0].mxu0 %v8782
      %v8962 = vpop.f32.mrb[0].mxu0
      %v8963 = vadd.f32 0.0, %v8962
      %v8964 = vpop.f32.mrb[0].mxu0
      %8965 = vmatprep.mubr.f32.mxu0 0.0
      %8966 = vmatmul.mubr.f32.gmra.mrb[0].mxu0 %v8785
      %v8967 = vpop.f32.mrb[0].mxu0
      %v8968 = vadd.f32 0.0, %v8967
      %v8969 = vpop.f32.mrb[0].mxu0
      %8970 = vmatprep.mubr.f32.mxu0 0.0
      %8971 = vmatmul.mubr.f32.gmra.mrb[0].mxu0 %v8788
      %v8972 = vpop.f32.mrb[0].mxu0
      %v8973 = vadd.f32 0.0, %v8972
      %v8974 = vpop.f32.mrb[0].mxu0
      %8975 = vmatprep.mubr.f32.mxu0 0.0
      %8976 = vmatmul.mubr.f32.gmra.mrb[0].mxu0 %v8791
      %v8977 = vpop.f32.mrb[0].mxu0
      %v8978 = vadd.f32 0.0, %v8977
      %v8979 = vpop.f32.mrb[0].mxu0
      %8980 = vmatprep.mubr.f32.mxu0 0.0
      %8981 = vmatmul.mubr.f32.gmra.mrb[0].mxu0 %v8794
      %v8982 = vpop.f32.mrb[0].mxu0
      %v8983 = vadd.f32 0.0, %v8982
      %v8984 = vpop.f32.mrb[0].mxu0
      %8985 = vmatprep.mubr.f32.mxu0 0.0
      %8986 = vmatmul.mubr.f32.gmra.mrb[0].mxu0 %v8797
      %v8987 = vpop.f32.mrb[0].mxu0
      %v8988 = vadd.f32 0.0, %v8987
      %v8989 = vpop.f32.mrb[0].mxu0
      %8990 = vmatprep.mubr.f32.mxu0 0.0
      %8991 = vmatmul.mubr.f32.gmra.mrb[0].mxu0 %v8800
      %v8992 = vpop.f32.mrb[0].mxu0
      %v8993 = vadd.f32 0.0, %v8992
      %v8994 = vpop.f32.mrb[0].mxu0
      %8995 = vmatprep.mubr.f32.mxu0 0.0
      %8996 = vmatmul.mubr.f32.gmra.mrb[0].mxu0 %v8803
      %v8997 = vpop.f32.mrb[0].mxu0
      %v8998 = vadd.f32 0.0, %v8997
      %v8999 = vpop.f32.mrb[0].mxu0
      %9000 = vmatprep.mubr.f32.mxu0 0.0
      %9001 = vmatmul.mubr.f32.gmra.mrb[0].mxu0 %v8806
      %v9002 = vpop.f32.mrb[0].mxu0
      %v9003 = vadd.f32 0.0, %v9002
      %v9004 = vpop.f32.mrb[0].mxu0
      %9005 = vmatprep.mubr.f32.mxu0 0.0
      %9006 = vmatmul.mubr.f32.gmra.mrb[0].mxu0 %v8809
      %v9007 = vpop.f32.mrb[0].mxu0
      %v9008 = vadd.f32 0.0, %v9007
      %v9009 = vpop.f32.mrb[0].mxu0
      %9010 = vmatprep.mubr.f32.mxu0 0.0
      %9011 = vmatmul.mubr.f32.gmra.mrb[0].mxu0 %v8812
      %v9012 = vpop.f32.mrb[0].mxu0
      %v9013 = vadd.f32 0.0, %v9012
      %v9014 = vpop.f32.mrb[0].mxu0
      %9015 = vmatprep.mubr.f32.mxu0 0.0
      %9016 = vmatmul.mubr.f32.gmra.mrb[0].mxu0 %v8815
      %v9017 = vpop.f32.mrb[0].mxu0
      %v9018 = vadd.f32 0.0, %v9017
      %v9019 = vpop.f32.mrb[0].mxu0
      %9020 = vmatprep.mubr.f32.mxu0 0.0
      %9021 = vmatmul.mubr.f32.gmra.mrb[0].mxu0 %v8818
      %v9022 = vpop.f32.mrb[0].mxu0
      %v9023 = vadd.f32 0.0, %v9022
      %v9024 = vpop.f32.mrb[0].mxu0
      %9025 = vmatprep.mubr.f32.mxu0 0.0
      %9026 = vmatmul.mubr.f32.gmra.mrb[0].mxu0 %v8821
      %v9027 = vpop.f32.mrb[0].mxu0
      %v9028 = vadd.f32 0.0, %v9027
      %v9029 = vpop.f32.mrb[0].mxu0
      %9030 = vmatprep.mubr.f32.mxu0 0.0
      %9031 = vmatmul.mubr.f32.gmra.mrb[0].mxu0 %v8824
      %v9032 = vpop.f32.mrb[0].mxu0
      %v9033 = vadd.f32 0.0, %v9032
      %v9034 = vpop.f32.mrb[0].mxu0
      %9035 = vmatprep.mubr.f32.mxu0 0.0
      %9036 = vmatmul.mubr.f32.gmra.mrb[0].mxu0 %v8827
      %v9037 = vpop.f32.mrb[0].mxu0
      %v9038 = vadd.f32 0.0, %v9037
      %v9039 = vpop.f32.mrb[0].mxu0
      %9040 = vmatprep.mubr.f32.mxu0 0.0
      %9041 = vmatmul.mubr.f32.gmra.mrb[0].mxu0 %v8830
      %v9042 = vpop.f32.mrb[0].mxu0
      %v9043 = vadd.f32 0.0, %v9042
      %v9044 = vpop.f32.mrb[0].mxu0
      %9045 = vmatprep.mubr.f32.mxu0 0.0
      %9046 = vmatmul.mubr.f32.gmra.mrb[0].mxu0 %v8833
      %v9047 = vpop.f32.mrb[0].mxu0
      %v9048 = vadd.f32 0.0, %v9047
      %v9049 = vpop.f32.mrb[0].mxu0
      %9050 = vmatprep.mubr.f32.mxu0 0.0
      %9051 = vmatmul.mubr.f32.gmra.mrb[0].mxu0 %v8836
      %v9052 = vpop.f32.mrb[0].mxu0
      %v9053 = vadd.f32 0.0, %v9052
      %v9054 = vpop.f32.mrb[0].mxu0
      %9055 = vmatprep.mubr.f32.mxu0 0.0
      %9056 = vmatmul.mubr.f32.gmra.mrb[0].mxu0 %v8839
      %v9057 = vpop.f32.mrb[0].mxu0
      %v9058 = vadd.f32 0.0, %v9057
      %v9059 = vpop.f32.mrb[0].mxu0
      %9060 = vmatprep.mubr.f32.mxu0 0.0
      %9061 = vmatmul.mubr.f32.gmra.mrb[0].mxu0 %v8842
      %v9062 = vpop.f32.mrb[0].mxu0
      %v9063 = vadd.f32 0.0, %v9062
      %v9064 = vpop.f32.mrb[0].mxu0
      %9065 = vmatprep.mubr.f32.mxu0 0.0
      %9066 = vmatmul.mubr.f32.gmra.mrb[0].mxu0 %v8845
      %v9067 = vpop.f32.mrb[0].mxu0
      %v9068 = vadd.f32 0.0, %v9067
      %v9069 = vpop.f32.mrb[0].mxu0
      %9070 = vmatprep.mubr.f32.mxu0 0.0
      %9071 = vmatmul.mubr.f32.gmra.mrb[0].mxu0 %v8848
      %v9072 = vpop.f32.mrb[0].mxu0
      %v9073 = vadd.f32 0.0, %v9072
      %v9074 = vpop.f32.mrb[0].mxu0
      %9075 = vmatprep.mubr.f32.mxu0 0.0
      %9076 = vmatmul.mubr.f32.gmra.mrb[0].mxu0 %v8851
      %v9077 = vpop.f32.mrb[0].mxu0
      %v9078 = vadd.f32 0.0, %v9077
      %v9079 = vpop.f32.mrb[0].mxu0
      %9080 = vdwg.mxu0
      %v9082 = vsel %vm2771, %v8691, 0
      %v9085 = vsel %vm2771, %v8692, 0
      %v9088 = vsel %vm2854, %v8724, 0
      %9090 = vmatprep.subr.mxu0 0.0
      %9091 = vmatpush1.msra.mxu0 %v8723
      %9092 = vmatprep.subr.mxu0 0.0
      %9093 = vmatpush1.msra.mxu0 %v9088
      %9094 = vmatprep.subr.mxu0 0.0
      %9095 = vmatpush1.msra.mxu0 0.0
      %9096 = vmatprep.subr.mxu0 0.0
      %9097 = vmatpush1.msra.mxu0 0.0
      %9098 = vmatprep.subr.mxu0 0.0
      %9099 = vmatpush1.msra.mxu0 0.0
      %9100 = vmatprep.subr.mxu0 0.0
      %9101 = vmatpush1.msra.mxu0 0.0
      %9102 = vmatprep.subr.mxu0 0.0
      %9103 = vmatpush1.msra.mxu0 0.0
      %9104 = vmatprep.subr.mxu0 0.0
      %9105 = vmatpush1.msra.mxu0 0.0
      %9106 = vmatprep.subr.mxu0 0.0
      %9107 = vmatpush1.msra.mxu0 0.0
      %9108 = vmatprep.subr.mxu0 0.0
      %9109 = vmatpush1.msra.mxu0 0.0
      %9110 = vmatprep.subr.mxu0 0.0
      %9111 = vmatpush1.msra.mxu0 0.0
      %9112 = vmatprep.subr.mxu0 0.0
      %9113 = vmatpush1.msra.mxu0 0.0
      %9114 = vmatprep.subr.mxu0 0.0
      %9115 = vmatpush1.msra.mxu0 0.0
      %9116 = vmatprep.subr.mxu0 0.0
      %9117 = vmatpush1.msra.mxu0 0.0
      %9118 = vmatprep.subr.mxu0 0.0
      %9119 = vmatpush1.msra.mxu0 0.0
      %9120 = vmatprep.subr.mxu0 0.0
      %9121 = vmatpush1.msra.mxu0 0.0
      %9122 = vmatprep.subr.mxu0 0.0
      %9123 = vmatpush1.msra.mxu0 0.0
      %9124 = vmatprep.subr.mxu0 0.0
      %9125 = vmatpush1.msra.mxu0 0.0
      %9126 = vmatprep.subr.mxu0 0.0
      %9127 = vmatpush1.msra.mxu0 0.0
      %9128 = vmatprep.subr.mxu0 0.0
      %9129 = vmatpush1.msra.mxu0 0.0
      %9130 = vmatprep.subr.mxu0 0.0
      %9131 = vmatpush1.msra.mxu0 0.0
      %9132 = vmatprep.subr.mxu0 0.0
      %9133 = vmatpush1.msra.mxu0 0.0
      %9134 = vmatprep.subr.mxu0 0.0
      %9135 = vmatpush1.msra.mxu0 0.0
      %9136 = vmatprep.subr.mxu0 0.0
      %9137 = vmatpush1.msra.mxu0 0.0
      %9138 = vmatprep.subr.mxu0 0.0
      %9139 = vmatpush1.msra.mxu0 0.0
      %9140 = vmatprep.subr.mxu0 0.0
      %9141 = vmatpush1.msra.mxu0 0.0
      %9142 = vmatprep.subr.mxu0 0.0
      %9143 = vmatpush1.msra.mxu0 0.0
      %9144 = vmatprep.subr.mxu0 0.0
      %9145 = vmatpush1.msra.mxu0 0.0
      %9146 = vmatprep.subr.mxu0 0.0
      %9147 = vmatpush1.msra.mxu0 0.0
      %9148 = vmatprep.subr.mxu0 0.0
      %9149 = vmatpush1.msra.mxu0 0.0
      %9150 = vmatprep.subr.mxu0 0.0
      %9151 = vmatpush1.msra.mxu0 0.0
      %9152 = vmatprep.subr.mxu0 0.0
      %9153 = vmatpush1.msra.mxu0 0.0
      %9154 = vmatprep.mubr.f32.mxu0 0.0
      %9155 = vmatmul.mubr.f32.gmra.mrb[0].mxu0 %v9082
      %v9156 = vpop.f32.mrb[0].mxu0
      %v9157 = vadd.f32 %v8923, %v9156
      %v9158 = vpop.f32.mrb[0].mxu0
      %9159 = vmatprep.mubr.f32.mxu0 0.0
      %9160 = vmatmul.mubr.f32.gmra.mrb[0].mxu0 %v9085
      %v9161 = vpop.f32.mrb[0].mxu0
      %v9162 = vadd.f32 %v8928, %v9161
      %v9163 = vpop.f32.mrb[0].mxu0
      %9164 = vmatprep.mubr.f32.mxu0 0.0
      %9165 = vmatmul.mubr.f32.gmra.mrb[0].mxu0 %v8758
      %v9166 = vpop.f32.mrb[0].mxu0
      %v9167 = vadd.f32 %v8933, %v9166
      %v9168 = vpop.f32.mrb[0].mxu0
      %9169 = vmatprep.mubr.f32.mxu0 0.0
      %9170 = vmatmul.mubr.f32.gmra.mrb[0].mxu0 %v8761
      %v9171 = vpop.f32.mrb[0].mxu0
      %v9172 = vadd.f32 %v8938, %v9171
      %v9173 = vpop.f32.mrb[0].mxu0
      %9174 = vmatprep.mubr.f32.mxu0 0.0
      %9175 = vmatmul.mubr.f32.gmra.mrb[0].mxu0 %v8764
      %v9176 = vpop.f32.mrb[0].mxu0
      %v9177 = vadd.f32 %v8943, %v9176
      %v9178 = vpop.f32.mrb[0].mxu0
      %9179 = vmatprep.mubr.f32.mxu0 0.0
      %9180 = vmatmul.mubr.f32.gmra.mrb[0].mxu0 %v8767
      %v9181 = vpop.f32.mrb[0].mxu0
      %v9182 = vadd.f32 %v8948, %v9181
      %v9183 = vpop.f32.mrb[0].mxu0
      %9184 = vmatprep.mubr.f32.mxu0 0.0
      %9185 = vmatmul.mubr.f32.gmra.mrb[0].mxu0 %v8770
      %v9186 = vpop.f32.mrb[0].mxu0
      %v9187 = vadd.f32 %v8953, %v9186
      %v9188 = vpop.f32.mrb[0].mxu0
      %9189 = vmatprep.mubr.f32.mxu0 0.0
      %9190 = vmatmul.mubr.f32.gmra.mrb[0].mxu0 %v8773
      %v9191 = vpop.f32.mrb[0].mxu0
      %v9192 = vadd.f32 %v8958, %v9191
      %v9193 = vpop.f32.mrb[0].mxu0
      %9194 = vmatprep.mubr.f32.mxu0 0.0
      %9195 = vmatmul.mubr.f32.gmra.mrb[0].mxu0 %v8776
      %v9196 = vpop.f32.mrb[0].mxu0
      %v9197 = vadd.f32 %v8963, %v9196
      %v9198 = vpop.f32.mrb[0].mxu0
      %9199 = vmatprep.mubr.f32.mxu0 0.0
      %9200 = vmatmul.mubr.f32.gmra.mrb[0].mxu0 %v8779
      %v9201 = vpop.f32.mrb[0].mxu0
      %v9202 = vadd.f32 %v8968, %v9201
      %v9203 = vpop.f32.mrb[0].mxu0
      %9204 = vmatprep.mubr.f32.mxu0 0.0
      %9205 = vmatmul.mubr.f32.gmra.mrb[0].mxu0 %v8782
      %v9206 = vpop.f32.mrb[0].mxu0
      %v9207 = vadd.f32 %v8973, %v9206
      %v9208 = vpop.f32.mrb[0].mxu0
      %9209 = vmatprep.mubr.f32.mxu0 0.0
      %9210 = vmatmul.mubr.f32.gmra.mrb[0].mxu0 %v8785
      %v9211 = vpop.f32.mrb[0].mxu0
      %v9212 = vadd.f32 %v8978, %v9211
      %v9213 = vpop.f32.mrb[0].mxu0
      %9214 = vmatprep.mubr.f32.mxu0 0.0
      %9215 = vmatmul.mubr.f32.gmra.mrb[0].mxu0 %v8788
      %v9216 = vpop.f32.mrb[0].mxu0
      %v9217 = vadd.f32 %v8983, %v9216
      %v9218 = vpop.f32.mrb[0].mxu0
      %9219 = vmatprep.mubr.f32.mxu0 0.0
      %9220 = vmatmul.mubr.f32.gmra.mrb[0].mxu0 %v8791
      %v9221 = vpop.f32.mrb[0].mxu0
      %v9222 = vadd.f32 %v8988, %v9221
      %v9223 = vpop.f32.mrb[0].mxu0
      %9224 = vmatprep.mubr.f32.mxu0 0.0
      %9225 = vmatmul.mubr.f32.gmra.mrb[0].mxu0 %v8794
      %v9226 = vpop.f32.mrb[0].mxu0
      %v9227 = vadd.f32 %v8993, %v9226
      %v9228 = vpop.f32.mrb[0].mxu0
      %9229 = vmatprep.mubr.f32.mxu0 0.0
      %9230 = vmatmul.mubr.f32.gmra.mrb[0].mxu0 %v8797
      %v9231 = vpop.f32.mrb[0].mxu0
      %v9232 = vadd.f32 %v8998, %v9231
      %v9233 = vpop.f32.mrb[0].mxu0
      %9234 = vmatprep.mubr.f32.mxu0 0.0
      %9235 = vmatmul.mubr.f32.gmra.mrb[0].mxu0 %v8800
      %v9236 = vpop.f32.mrb[0].mxu0
      %v9237 = vadd.f32 %v9003, %v9236
      %v9238 = vpop.f32.mrb[0].mxu0
      %9239 = vmatprep.mubr.f32.mxu0 0.0
      %9240 = vmatmul.mubr.f32.gmra.mrb[0].mxu0 %v8803
      %v9241 = vpop.f32.mrb[0].mxu0
      %v9242 = vadd.f32 %v9008, %v9241
      %v9243 = vpop.f32.mrb[0].mxu0
      %9244 = vmatprep.mubr.f32.mxu0 0.0
      %9245 = vmatmul.mubr.f32.gmra.mrb[0].mxu0 %v8806
      %v9246 = vpop.f32.mrb[0].mxu0
      %v9247 = vadd.f32 %v9013, %v9246
      %v9248 = vpop.f32.mrb[0].mxu0
      %9249 = vmatprep.mubr.f32.mxu0 0.0
      %9250 = vmatmul.mubr.f32.gmra.mrb[0].mxu0 %v8809
      %v9251 = vpop.f32.mrb[0].mxu0
      %v9252 = vadd.f32 %v9018, %v9251
      %v9253 = vpop.f32.mrb[0].mxu0
      %9254 = vmatprep.mubr.f32.mxu0 0.0
      %9255 = vmatmul.mubr.f32.gmra.mrb[0].mxu0 %v8812
      %v9256 = vpop.f32.mrb[0].mxu0
      %v9257 = vadd.f32 %v9023, %v9256
      %v9258 = vpop.f32.mrb[0].mxu0
      %9259 = vmatprep.mubr.f32.mxu0 0.0
      %9260 = vmatmul.mubr.f32.gmra.mrb[0].mxu0 %v8815
      %v9261 = vpop.f32.mrb[0].mxu0
      %v9262 = vadd.f32 %v9028, %v9261
      %v9263 = vpop.f32.mrb[0].mxu0
      %9264 = vmatprep.mubr.f32.mxu0 0.0
      %9265 = vmatmul.mubr.f32.gmra.mrb[0].mxu0 %v8818
      %v9266 = vpop.f32.mrb[0].mxu0
      %v9267 = vadd.f32 %v9033, %v9266
      %v9268 = vpop.f32.mrb[0].mxu0
      %9269 = vmatprep.mubr.f32.mxu0 0.0
      %9270 = vmatmul.mubr.f32.gmra.mrb[0].mxu0 %v8821
      %v9271 = vpop.f32.mrb[0].mxu0
      %v9272 = vadd.f32 %v9038, %v9271
      %v9273 = vpop.f32.mrb[0].mxu0
      %9274 = vmatprep.mubr.f32.mxu0 0.0
      %9275 = vmatmul.mubr.f32.gmra.mrb[0].mxu0 %v8824
      %v9276 = vpop.f32.mrb[0].mxu0
      %v9277 = vadd.f32 %v9043, %v9276
      %v9278 = vpop.f32.mrb[0].mxu0
      %9279 = vmatprep.mubr.f32.mxu0 0.0
      %9280 = vmatmul.mubr.f32.gmra.mrb[0].mxu0 %v8827
      %v9281 = vpop.f32.mrb[0].mxu0
      %v9282 = vadd.f32 %v9048, %v9281
      %v9283 = vpop.f32.mrb[0].mxu0
      %9284 = vmatprep.mubr.f32.mxu0 0.0
      %9285 = vmatmul.mubr.f32.gmra.mrb[0].mxu0 %v8830
      %v9286 = vpop.f32.mrb[0].mxu0
      %v9287 = vadd.f32 %v9053, %v9286
      %v9288 = vpop.f32.mrb[0].mxu0
      %9289 = vmatprep.mubr.f32.mxu0 0.0
      %9290 = vmatmul.mubr.f32.gmra.mrb[0].mxu0 %v8833
      %v9291 = vpop.f32.mrb[0].mxu0
      %v9292 = vadd.f32 %v9058, %v9291
      %v9293 = vpop.f32.mrb[0].mxu0
      %9294 = vmatprep.mubr.f32.mxu0 0.0
      %9295 = vmatmul.mubr.f32.gmra.mrb[0].mxu0 %v8836
      %v9296 = vpop.f32.mrb[0].mxu0
      %v9297 = vadd.f32 %v9063, %v9296
      %v9298 = vpop.f32.mrb[0].mxu0
      %9299 = vmatprep.mubr.f32.mxu0 0.0
      %9300 = vmatmul.mubr.f32.gmra.mrb[0].mxu0 %v8839
      %v9301 = vpop.f32.mrb[0].mxu0
      %v9302 = vadd.f32 %v9068, %v9301
      %v9303 = vpop.f32.mrb[0].mxu0
      %9304 = vmatprep.mubr.f32.mxu0 0.0
      %9305 = vmatmul.mubr.f32.gmra.mrb[0].mxu0 %v8842
      %v9306 = vpop.f32.mrb[0].mxu0
      %v9307 = vadd.f32 %v9073, %v9306
      %v9308 = vpop.f32.mrb[0].mxu0
      %9309 = vmatprep.mubr.f32.mxu0 0.0
      %9310 = vmatmul.mubr.f32.gmra.mrb[0].mxu0 %v8845
      %v9311 = vpop.f32.mrb[0].mxu0
      %v9312 = vadd.f32 %v9078, %v9311
      %v9313 = vpop.f32.mrb[0].mxu0
      %9314 = vdwg.mxu0
      %v9318 = vrot.slane %v8256, 1
      %v9319 = vrot.slane %v8257, 1
      %v9320 = vsel %vm633, %v9318, %v9319
      %v9321 = vrot.slane %v8258, 1
      %v9322 = vsel %vm633, %v9319, %v9321
      %9323 = vrot.lane.b32.xlu0 %v9320, 4
      %v9324 = vpop.permute.xlu0 %9323
      %9325 = vrot.lane.b32.xlu0 %v9322, 4
      %v9326 = vpop.permute.xlu0 %9325
      %v9329 = vrot.slane %v8256, 2
      %v9330 = vrot.slane %v8257, 2
      %v9331 = vsel %vm886, %v9329, %v9330
      %v9332 = vrot.slane %v8258, 2
      %v9333 = vsel %vm886, %v9330, %v9332
      %9334 = vrot.lane.b32.xlu0 %v9331, 8
      %v9335 = vpop.permute.xlu0 %9334
      %9336 = vrot.lane.b32.xlu0 %v9333, 8
      %v9337 = vpop.permute.xlu0 %9336
      %v9340 = vsel %vm1139, %v8256, %v9324
      %v9341 = vsel %vm1139, %v8257, %v9326
      %v9342 = vsel %vm1194, %v9340, %v9335
      %v9343 = vsel %vm1194, %v9341, %v9337
      %s9344 = scalar_lea.vmem %s3, 32
      %v9345 = vld [vmem:[%s9344] sm:$0xff]
      %v9346 = vld [vmem:[%s9344 + $0x8] sm:$0xf]
      %v9348 = vsel %vm2771, %v9342, 0
      %v9351 = vsel %vm2771, %v9343, 0
      %v9354 = vsel %vm2854, %v9346, 0
      %9356 = vmatprep.subr.mxu0 0.0
      %9357 = vmatpush1.msra.mxu0 %v9345
      %9358 = vmatprep.subr.mxu0 0.0
      %9359 = vmatpush1.msra.mxu0 %v9354
      %9360 = vmatprep.subr.mxu0 0.0
      %9361 = vmatpush1.msra.mxu0 0.0
      %9362 = vmatprep.subr.mxu0 0.0
      %9363 = vmatpush1.msra.mxu0 0.0
      %9364 = vmatprep.subr.mxu0 0.0
      %9365 = vmatpush1.msra.mxu0 0.0
      %9366 = vmatprep.subr.mxu0 0.0
      %9367 = vmatpush1.msra.mxu0 0.0
      %9368 = vmatprep.subr.mxu0 0.0
      %9369 = vmatpush1.msra.mxu0 0.0
      %9370 = vmatprep.subr.mxu0 0.0
      %9371 = vmatpush1.msra.mxu0 0.0
      %9372 = vmatprep.subr.mxu0 0.0
      %9373 = vmatpush1.msra.mxu0 0.0
      %9374 = vmatprep.subr.mxu0 0.0
      %9375 = vmatpush1.msra.mxu0 0.0
      %9376 = vmatprep.subr.mxu0 0.0
      %9377 = vmatpush1.msra.mxu0 0.0
      %9378 = vmatprep.subr.mxu0 0.0
      %9379 = vmatpush1.msra.mxu0 0.0
      %9380 = vmatprep.subr.mxu0 0.0
      %9381 = vmatpush1.msra.mxu0 0.0
      %9382 = vmatprep.subr.mxu0 0.0
      %9383 = vmatpush1.msra.mxu0 0.0
      %9384 = vmatprep.subr.mxu0 0.0
      %9385 = vmatpush1.msra.mxu0 0.0
      %9386 = vmatprep.subr.mxu0 0.0
      %9387 = vmatpush1.msra.mxu0 0.0
      %9388 = vmatprep.subr.mxu0 0.0
      %9389 = vmatpush1.msra.mxu0 0.0
      %9390 = vmatprep.subr.mxu0 0.0
      %9391 = vmatpush1.msra.mxu0 0.0
      %9392 = vmatprep.subr.mxu0 0.0
      %9393 = vmatpush1.msra.mxu0 0.0
      %9394 = vmatprep.subr.mxu0 0.0
      %9395 = vmatpush1.msra.mxu0 0.0
      %9396 = vmatprep.subr.mxu0 0.0
      %9397 = vmatpush1.msra.mxu0 0.0
      %9398 = vmatprep.subr.mxu0 0.0
      %9399 = vmatpush1.msra.mxu0 0.0
      %9400 = vmatprep.subr.mxu0 0.0
      %9401 = vmatpush1.msra.mxu0 0.0
      %9402 = vmatprep.subr.mxu0 0.0
      %9403 = vmatpush1.msra.mxu0 0.0
      %9404 = vmatprep.subr.mxu0 0.0
      %9405 = vmatpush1.msra.mxu0 0.0
      %9406 = vmatprep.subr.mxu0 0.0
      %9407 = vmatpush1.msra.mxu0 0.0
      %9408 = vmatprep.subr.mxu0 0.0
      %9409 = vmatpush1.msra.mxu0 0.0
      %9410 = vmatprep.subr.mxu0 0.0
      %9411 = vmatpush1.msra.mxu0 0.0
      %9412 = vmatprep.subr.mxu0 0.0
      %9413 = vmatpush1.msra.mxu0 0.0
      %9414 = vmatprep.subr.mxu0 0.0
      %9415 = vmatpush1.msra.mxu0 0.0
      %9416 = vmatprep.subr.mxu0 0.0
      %9417 = vmatpush1.msra.mxu0 0.0
      %9418 = vmatprep.subr.mxu0 0.0
      %9419 = vmatpush1.msra.mxu0 0.0
      %9420 = vmatprep.mubr.f32.mxu0 0.0
      %9421 = vmatmul.mubr.f32.gmra.mrb[0].mxu0 %v8764
      %v9422 = vpop.f32.mrb[0].mxu0
      %v9423 = vadd.f32 0.0, %v9422
      %v9424 = vpop.f32.mrb[0].mxu0
      %9425 = vmatprep.mubr.f32.mxu0 0.0
      %9426 = vmatmul.mubr.f32.gmra.mrb[0].mxu0 %v8767
      %v9427 = vpop.f32.mrb[0].mxu0
      %v9428 = vadd.f32 0.0, %v9427
      %v9429 = vpop.f32.mrb[0].mxu0
      %9430 = vmatprep.mubr.f32.mxu0 0.0
      %9431 = vmatmul.mubr.f32.gmra.mrb[0].mxu0 %v8770
      %v9432 = vpop.f32.mrb[0].mxu0
      %v9433 = vadd.f32 0.0, %v9432
      %v9434 = vpop.f32.mrb[0].mxu0
      %9435 = vmatprep.mubr.f32.mxu0 0.0
      %9436 = vmatmul.mubr.f32.gmra.mrb[0].mxu0 %v8773
      %v9437 = vpop.f32.mrb[0].mxu0
      %v9438 = vadd.f32 0.0, %v9437
      %v9439 = vpop.f32.mrb[0].mxu0
      %9440 = vmatprep.mubr.f32.mxu0 0.0
      %9441 = vmatmul.mubr.f32.gmra.mrb[0].mxu0 %v8776
      %v9442 = vpop.f32.mrb[0].mxu0
      %v9443 = vadd.f32 0.0, %v9442
      %v9444 = vpop.f32.mrb[0].mxu0
      %9445 = vmatprep.mubr.f32.mxu0 0.0
      %9446 = vmatmul.mubr.f32.gmra.mrb[0].mxu0 %v8779
      %v9447 = vpop.f32.mrb[0].mxu0
      %v9448 = vadd.f32 0.0, %v9447
      %v9449 = vpop.f32.mrb[0].mxu0
      %9450 = vmatprep.mubr.f32.mxu0 0.0
      %9451 = vmatmul.mubr.f32.gmra.mrb[0].mxu0 %v8782
      %v9452 = vpop.f32.mrb[0].mxu0
      %v9453 = vadd.f32 0.0, %v9452
      %v9454 = vpop.f32.mrb[0].mxu0
      %9455 = vmatprep.mubr.f32.mxu0 0.0
      %9456 = vmatmul.mubr.f32.gmra.mrb[0].mxu0 %v8785
      %v9457 = vpop.f32.mrb[0].mxu0
      %v9458 = vadd.f32 0.0, %v9457
      %v9459 = vpop.f32.mrb[0].mxu0
      %9460 = vmatprep.mubr.f32.mxu0 0.0
      %9461 = vmatmul.mubr.f32.gmra.mrb[0].mxu0 %v8788
      %v9462 = vpop.f32.mrb[0].mxu0
      %v9463 = vadd.f32 0.0, %v9462
      %v9464 = vpop.f32.mrb[0].mxu0
      %9465 = vmatprep.mubr.f32.mxu0 0.0
      %9466 = vmatmul.mubr.f32.gmra.mrb[0].mxu0 %v8791
      %v9467 = vpop.f32.mrb[0].mxu0
      %v9468 = vadd.f32 0.0, %v9467
      %v9469 = vpop.f32.mrb[0].mxu0
      %9470 = vmatprep.mubr.f32.mxu0 0.0
      %9471 = vmatmul.mubr.f32.gmra.mrb[0].mxu0 %v8794
      %v9472 = vpop.f32.mrb[0].mxu0
      %v9473 = vadd.f32 0.0, %v9472
      %v9474 = vpop.f32.mrb[0].mxu0
      %9475 = vmatprep.mubr.f32.mxu0 0.0
      %9476 = vmatmul.mubr.f32.gmra.mrb[0].mxu0 %v8797
      %v9477 = vpop.f32.mrb[0].mxu0
      %v9478 = vadd.f32 0.0, %v9477
      %v9479 = vpop.f32.mrb[0].mxu0
      %9480 = vmatprep.mubr.f32.mxu0 0.0
      %9481 = vmatmul.mubr.f32.gmra.mrb[0].mxu0 %v8800
      %v9482 = vpop.f32.mrb[0].mxu0
      %v9483 = vadd.f32 0.0, %v9482
      %v9484 = vpop.f32.mrb[0].mxu0
      %9485 = vmatprep.mubr.f32.mxu0 0.0
      %9486 = vmatmul.mubr.f32.gmra.mrb[0].mxu0 %v8803
      %v9487 = vpop.f32.mrb[0].mxu0
      %v9488 = vadd.f32 0.0, %v9487
      %v9489 = vpop.f32.mrb[0].mxu0
      %9490 = vmatprep.mubr.f32.mxu0 0.0
      %9491 = vmatmul.mubr.f32.gmra.mrb[0].mxu0 %v8806
      %v9492 = vpop.f32.mrb[0].mxu0
      %v9493 = vadd.f32 0.0, %v9492
      %v9494 = vpop.f32.mrb[0].mxu0
      %9495 = vmatprep.mubr.f32.mxu0 0.0
      %9496 = vmatmul.mubr.f32.gmra.mrb[0].mxu0 %v8809
      %v9497 = vpop.f32.mrb[0].mxu0
      %v9498 = vadd.f32 0.0, %v9497
      %v9499 = vpop.f32.mrb[0].mxu0
      %9500 = vmatprep.mubr.f32.mxu0 0.0
      %9501 = vmatmul.mubr.f32.gmra.mrb[0].mxu0 %v8812
      %v9502 = vpop.f32.mrb[0].mxu0
      %v9503 = vadd.f32 0.0, %v9502
      %v9504 = vpop.f32.mrb[0].mxu0
      %9505 = vmatprep.mubr.f32.mxu0 0.0
      %9506 = vmatmul.mubr.f32.gmra.mrb[0].mxu0 %v8815
      %v9507 = vpop.f32.mrb[0].mxu0
      %v9508 = vadd.f32 0.0, %v9507
      %v9509 = vpop.f32.mrb[0].mxu0
      %9510 = vmatprep.mubr.f32.mxu0 0.0
      %9511 = vmatmul.mubr.f32.gmra.mrb[0].mxu0 %v8818
      %v9512 = vpop.f32.mrb[0].mxu0
      %v9513 = vadd.f32 0.0, %v9512
      %v9514 = vpop.f32.mrb[0].mxu0
      %9515 = vmatprep.mubr.f32.mxu0 0.0
      %9516 = vmatmul.mubr.f32.gmra.mrb[0].mxu0 %v8821
      %v9517 = vpop.f32.mrb[0].mxu0
      %v9518 = vadd.f32 0.0, %v9517
      %v9519 = vpop.f32.mrb[0].mxu0
      %9520 = vmatprep.mubr.f32.mxu0 0.0
      %9521 = vmatmul.mubr.f32.gmra.mrb[0].mxu0 %v8824
      %v9522 = vpop.f32.mrb[0].mxu0
      %v9523 = vadd.f32 0.0, %v9522
      %v9524 = vpop.f32.mrb[0].mxu0
      %9525 = vmatprep.mubr.f32.mxu0 0.0
      %9526 = vmatmul.mubr.f32.gmra.mrb[0].mxu0 %v8827
      %v9527 = vpop.f32.mrb[0].mxu0
      %v9528 = vadd.f32 0.0, %v9527
      %v9529 = vpop.f32.mrb[0].mxu0
      %9530 = vmatprep.mubr.f32.mxu0 0.0
      %9531 = vmatmul.mubr.f32.gmra.mrb[0].mxu0 %v8830
      %v9532 = vpop.f32.mrb[0].mxu0
      %v9533 = vadd.f32 0.0, %v9532
      %v9534 = vpop.f32.mrb[0].mxu0
      %9535 = vmatprep.mubr.f32.mxu0 0.0
      %9536 = vmatmul.mubr.f32.gmra.mrb[0].mxu0 %v8833
      %v9537 = vpop.f32.mrb[0].mxu0
      %v9538 = vadd.f32 0.0, %v9537
      %v9539 = vpop.f32.mrb[0].mxu0
      %9540 = vmatprep.mubr.f32.mxu0 0.0
      %9541 = vmatmul.mubr.f32.gmra.mrb[0].mxu0 %v8836
      %v9542 = vpop.f32.mrb[0].mxu0
      %v9543 = vadd.f32 0.0, %v9542
      %v9544 = vpop.f32.mrb[0].mxu0
      %9545 = vmatprep.mubr.f32.mxu0 0.0
      %9546 = vmatmul.mubr.f32.gmra.mrb[0].mxu0 %v8839
      %v9547 = vpop.f32.mrb[0].mxu0
      %v9548 = vadd.f32 0.0, %v9547
      %v9549 = vpop.f32.mrb[0].mxu0
      %9550 = vmatprep.mubr.f32.mxu0 0.0
      %9551 = vmatmul.mubr.f32.gmra.mrb[0].mxu0 %v8842
      %v9552 = vpop.f32.mrb[0].mxu0
      %v9553 = vadd.f32 0.0, %v9552
      %v9554 = vpop.f32.mrb[0].mxu0
      %9555 = vmatprep.mubr.f32.mxu0 0.0
      %9556 = vmatmul.mubr.f32.gmra.mrb[0].mxu0 %v8845
      %v9557 = vpop.f32.mrb[0].mxu0
      %v9558 = vadd.f32 0.0, %v9557
      %v9559 = vpop.f32.mrb[0].mxu0
      %9560 = vmatprep.mubr.f32.mxu0 0.0
      %9561 = vmatmul.mubr.f32.gmra.mrb[0].mxu0 %v8848
      %v9562 = vpop.f32.mrb[0].mxu0
      %v9563 = vadd.f32 0.0, %v9562
      %v9564 = vpop.f32.mrb[0].mxu0
      %9565 = vmatprep.mubr.f32.mxu0 0.0
      %9566 = vmatmul.mubr.f32.gmra.mrb[0].mxu0 %v8851
      %v9567 = vpop.f32.mrb[0].mxu0
      %v9568 = vadd.f32 0.0, %v9567
      %v9569 = vpop.f32.mrb[0].mxu0
      %9570 = vmatprep.mubr.f32.mxu0 0.0
      %9571 = vmatmul.mubr.f32.gmra.mrb[0].mxu0 %v9348
      %v9572 = vpop.f32.mrb[0].mxu0
      %v9573 = vadd.f32 0.0, %v9572
      %v9574 = vpop.f32.mrb[0].mxu0
      %9575 = vmatprep.mubr.f32.mxu0 0.0
      %9576 = vmatmul.mubr.f32.gmra.mrb[0].mxu0 %v9351
      %v9577 = vpop.f32.mrb[0].mxu0
      %v9578 = vadd.f32 0.0, %v9577
      %v9579 = vpop.f32.mrb[0].mxu0
      %9580 = vdwg.mxu0
      %v9581 = vadd.f32 %v9157, %v9423
      %v9582 = vadd.f32 %v9162, %v9428
      %v9583 = vadd.f32 %v9167, %v9433
      %v9584 = vadd.f32 %v9172, %v9438
      %v9585 = vadd.f32 %v9177, %v9443
      %v9586 = vadd.f32 %v9182, %v9448
      %v9587 = vadd.f32 %v9187, %v9453
      %v9588 = vadd.f32 %v9192, %v9458
      %v9589 = vadd.f32 %v9197, %v9463
      %v9590 = vadd.f32 %v9202, %v9468
      %v9591 = vadd.f32 %v9207, %v9473
      %v9592 = vadd.f32 %v9212, %v9478
      %v9593 = vadd.f32 %v9217, %v9483
      %v9594 = vadd.f32 %v9222, %v9488
      %v9595 = vadd.f32 %v9227, %v9493
      %v9596 = vadd.f32 %v9232, %v9498
      %v9597 = vadd.f32 %v9237, %v9503
      %v9598 = vadd.f32 %v9242, %v9508
      %v9599 = vadd.f32 %v9247, %v9513
      %v9600 = vadd.f32 %v9252, %v9518
      %v9601 = vadd.f32 %v9257, %v9523
      %v9602 = vadd.f32 %v9262, %v9528
      %v9603 = vadd.f32 %v9267, %v9533
      %v9604 = vadd.f32 %v9272, %v9538
      %v9605 = vadd.f32 %v9277, %v9543
      %v9606 = vadd.f32 %v9282, %v9548
      %v9607 = vadd.f32 %v9287, %v9553
      %v9608 = vadd.f32 %v9292, %v9558
      %v9609 = vadd.f32 %v9297, %v9563
      %v9610 = vadd.f32 %v9302, %v9568
      %v9611 = vadd.f32 %v9307, %v9573
      %v9612 = vadd.f32 %v9312, %v9578
      %v9613 = vld [vmem:[%s4] sm:$0x1]
      %v9615 = vlaneseq
      %v9616 = vshrl.u32 %v9615, 7
      %v9617 = vsub.s32 0, %v9616
      %v9618 = vrot.slane %v9613, %v9617
      %v9620 = vadd.f32 %v9581, %v9618
      %v9621 = vadd.f32 %v9582, %v9618
      %v9622 = vadd.f32 %v9583, %v9618
      %v9623 = vadd.f32 %v9584, %v9618
      %v9624 = vadd.f32 %v9585, %v9618
      %v9625 = vadd.f32 %v9586, %v9618
      %v9626 = vadd.f32 %v9587, %v9618
      %v9627 = vadd.f32 %v9588, %v9618
      %v9628 = vadd.f32 %v9589, %v9618
      %v9629 = vadd.f32 %v9590, %v9618
      %v9630 = vadd.f32 %v9591, %v9618
      %v9631 = vadd.f32 %v9592, %v9618
      %v9632 = vadd.f32 %v9593, %v9618
      %v9633 = vadd.f32 %v9594, %v9618
      %v9634 = vadd.f32 %v9595, %v9618
      %v9635 = vadd.f32 %v9596, %v9618
      %v9636 = vadd.f32 %v9597, %v9618
      %v9637 = vadd.f32 %v9598, %v9618
      %v9638 = vadd.f32 %v9599, %v9618
      %v9639 = vadd.f32 %v9600, %v9618
      %v9640 = vadd.f32 %v9601, %v9618
      %v9641 = vadd.f32 %v9602, %v9618
      %v9642 = vadd.f32 %v9603, %v9618
      %v9643 = vadd.f32 %v9604, %v9618
      %v9644 = vadd.f32 %v9605, %v9618
      %v9645 = vadd.f32 %v9606, %v9618
      %v9646 = vadd.f32 %v9607, %v9618
      %v9647 = vadd.f32 %v9608, %v9618
      %v9648 = vadd.f32 %v9609, %v9618
      %v9649 = vadd.f32 %v9610, %v9618
      %v9650 = vadd.f32 %v9611, %v9618
      %v9651 = vadd.f32 %v9612, %v9618
      %s9652 = smul.u32 %s250, 16
      %s9653 = scalar_lea.vmem %s238, %s9652
      %v9654 = vld [vmem:[%s9653] sm:$0xff]
      %v9655 = vld [vmem:[%s9653 + $0x8] sm:$0xff]
      %v9656 = vld [vmem:[%s9653 + $0x10] sm:$0xff]
      %v9657 = vld [vmem:[%s9653 + $0x18] sm:$0xff]
      %v9658 = vld [vmem:[%s9653 + $0x20] sm:$0xff]
      %v9659 = vld [vmem:[%s9653 + $0x28] sm:$0xff]
      %v9660 = vld [vmem:[%s9653 + $0x30] sm:$0xff]
      %v9661 = vld [vmem:[%s9653 + $0x38] sm:$0xff]
      %v9662 = vld [vmem:[%s9653 + $0x40] sm:$0xff]
      %v9663 = vld [vmem:[%s9653 + $0x48] sm:$0xff]
      %v9664 = vld [vmem:[%s9653 + $0x50] sm:$0xff]
      %v9665 = vld [vmem:[%s9653 + $0x58] sm:$0xff]
      %v9666 = vld [vmem:[%s9653 + $0x60] sm:$0xff]
      %v9667 = vld [vmem:[%s9653 + $0x68] sm:$0xff]
      %v9668 = vld [vmem:[%s9653 + $0x70] sm:$0xff]
      %v9669 = vld [vmem:[%s9653 + $0x78] sm:$0xff]
      %v9670 = vld [vmem:[%s9653 + $0x80] sm:$0xff]
      %v9671 = vld [vmem:[%s9653 + $0x88] sm:$0xff]
      %v9672 = vld [vmem:[%s9653 + $0x90] sm:$0xff]
      %v9673 = vld [vmem:[%s9653 + $0x98] sm:$0xff]
      %v9674 = vld [vmem:[%s9653 + $0xa0] sm:$0xff]
      %v9675 = vld [vmem:[%s9653 + $0xa8] sm:$0xff]
      %v9676 = vld [vmem:[%s9653 + $0xb0] sm:$0xff]
      %v9677 = vld [vmem:[%s9653 + $0xb8] sm:$0xff]
      %v9678 = vld [vmem:[%s9653 + $0xc0] sm:$0xff]
      %v9679 = vld [vmem:[%s9653 + $0xc8] sm:$0xff]
      %v9680 = vld [vmem:[%s9653 + $0xd0] sm:$0xff]
      %v9681 = vld [vmem:[%s9653 + $0xd8] sm:$0xff]
      %v9682 = vld [vmem:[%s9653 + $0xe0] sm:$0xff]
      %v9683 = vld [vmem:[%s9653 + $0xe8] sm:$0xff]
      %v9684 = vld [vmem:[%s9653 + $0xf0] sm:$0xff]
      %v9685 = vld [vmem:[%s9653 + $0xf8] sm:$0xff]
      %v9686 = vadd.f32 %v9620, %v9654
      %v9687 = vadd.f32 %v9621, %v9655
      %v9688 = vadd.f32 %v9622, %v9656
      %v9689 = vadd.f32 %v9623, %v9657
      %v9690 = vadd.f32 %v9624, %v9658
      %v9691 = vadd.f32 %v9625, %v9659
      %v9692 = vadd.f32 %v9626, %v9660
      %v9693 = vadd.f32 %v9627, %v9661
      %v9694 = vadd.f32 %v9628, %v9662
      %v9695 = vadd.f32 %v9629, %v9663
      %v9696 = vadd.f32 %v9630, %v9664
      %v9697 = vadd.f32 %v9631, %v9665
      %v9698 = vadd.f32 %v9632, %v9666
      %v9699 = vadd.f32 %v9633, %v9667
      %v9700 = vadd.f32 %v9634, %v9668
      %v9701 = vadd.f32 %v9635, %v9669
      %v9702 = vadd.f32 %v9636, %v9670
      %v9703 = vadd.f32 %v9637, %v9671
      %v9704 = vadd.f32 %v9638, %v9672
      %v9705 = vadd.f32 %v9639, %v9673
      %v9706 = vadd.f32 %v9640, %v9674
      %v9707 = vadd.f32 %v9641, %v9675
      %v9708 = vadd.f32 %v9642, %v9676
      %v9709 = vadd.f32 %v9643, %v9677
      %v9710 = vadd.f32 %v9644, %v9678
      %v9711 = vadd.f32 %v9645, %v9679
      %v9712 = vadd.f32 %v9646, %v9680
      %v9713 = vadd.f32 %v9647, %v9681
      %v9714 = vadd.f32 %v9648, %v9682
      %v9715 = vadd.f32 %v9649, %v9683
      %v9716 = vadd.f32 %v9650, %v9684
      %v9717 = vadd.f32 %v9651, %v9685
      %v9718 = vmax.f32 %v9686, 0.0
      %v9719 = vmax.f32 %v9687, 0.0
      %v9720 = vmax.f32 %v9688, 0.0
      %v9721 = vmax.f32 %v9689, 0.0
      %v9722 = vmax.f32 %v9690, 0.0
      %v9723 = vmax.f32 %v9691, 0.0
      %v9724 = vmax.f32 %v9692, 0.0
      %v9725 = vmax.f32 %v9693, 0.0
      %v9726 = vmax.f32 %v9694, 0.0
      %v9727 = vmax.f32 %v9695, 0.0
      %v9728 = vmax.f32 %v9696, 0.0
      %v9729 = vmax.f32 %v9697, 0.0
      %v9730 = vmax.f32 %v9698, 0.0
      %v9731 = vmax.f32 %v9699, 0.0
      %v9732 = vmax.f32 %v9700, 0.0
      %v9733 = vmax.f32 %v9701, 0.0
      %v9734 = vmax.f32 %v9702, 0.0
      %v9735 = vmax.f32 %v9703, 0.0
      %v9736 = vmax.f32 %v9704, 0.0
      %v9737 = vmax.f32 %v9705, 0.0
      %v9738 = vmax.f32 %v9706, 0.0
      %v9739 = vmax.f32 %v9707, 0.0
      %v9740 = vmax.f32 %v9708, 0.0
      %v9741 = vmax.f32 %v9709, 0.0
      %v9742 = vmax.f32 %v9710, 0.0
      %v9743 = vmax.f32 %v9711, 0.0
      %v9744 = vmax.f32 %v9712, 0.0
      %v9745 = vmax.f32 %v9713, 0.0
      %v9746 = vmax.f32 %v9714, 0.0
      %v9747 = vmax.f32 %v9715, 0.0
      %v9748 = vmax.f32 %v9716, 0.0
      %v9749 = vmax.f32 %v9717, 0.0
      %9750 = vst.msk [vmem:[%s248] sm:$0xff] %vm1139, %v9718
      %9751 = vst.msk [vmem:[%s248 + $0x8] sm:$0xff] %vm1139, %v9719
      %9752 = vst.msk [vmem:[%s248 + $0x10] sm:$0xff] %vm1139, %v9720
      %9753 = vst.msk [vmem:[%s248 + $0x18] sm:$0xff] %vm1139, %v9721
      %9754 = vst.msk [vmem:[%s248 + $0x20] sm:$0xff] %vm1139, %v9722
      %9755 = vst.msk [vmem:[%s248 + $0x28] sm:$0xff] %vm1139, %v9723
      %9756 = vst.msk [vmem:[%s248 + $0x30] sm:$0xff] %vm1139, %v9724
      %9757 = vst.msk [vmem:[%s248 + $0x38] sm:$0xff] %vm1139, %v9725
      %9758 = vst.msk [vmem:[%s248 + $0x40] sm:$0xff] %vm1139, %v9726
      %9759 = vst.msk [vmem:[%s248 + $0x48] sm:$0xff] %vm1139, %v9727
      %9760 = vst.msk [vmem:[%s248 + $0x50] sm:$0xff] %vm1139, %v9728
      %9761 = vst.msk [vmem:[%s248 + $0x58] sm:$0xff] %vm1139, %v9729
      %9762 = vst.msk [vmem:[%s248 + $0x60] sm:$0xff] %vm1139, %v9730
      %9763 = vst.msk [vmem:[%s248 + $0x68] sm:$0xff] %vm1139, %v9731
      %9764 = vst.msk [vmem:[%s248 + $0x70] sm:$0xff] %vm1139, %v9732
      %9765 = vst.msk [vmem:[%s248 + $0x78] sm:$0xff] %vm1139, %v9733
      %9766 = vst.msk [vmem:[%s248 + $0x80] sm:$0xff] %vm1139, %v9734
      %9767 = vst.msk [vmem:[%s248 + $0x88] sm:$0xff] %vm1139, %v9735
      %9768 = vst.msk [vmem:[%s248 + $0x90] sm:$0xff] %vm1139, %v9736
      %9769 = vst.msk [vmem:[%s248 + $0x98] sm:$0xff] %vm1139, %v9737
      %9770 = vst.msk [vmem:[%s248 + $0xa0] sm:$0xff] %vm1139, %v9738
      %9771 = vst.msk [vmem:[%s248 + $0xa8] sm:$0xff] %vm1139, %v9739
      %9772 = vst.msk [vmem:[%s248 + $0xb0] sm:$0xff] %vm1139, %v9740
      %9773 = vst.msk [vmem:[%s248 + $0xb8] sm:$0xff] %vm1139, %v9741
      %9774 = vst.msk [vmem:[%s248 + $0xc0] sm:$0xff] %vm1139, %v9742
      %9775 = vst.msk [vmem:[%s248 + $0xc8] sm:$0xff] %vm1139, %v9743
      %9776 = vst.msk [vmem:[%s248 + $0xd0] sm:$0xff] %vm1139, %v9744
      %9777 = vst.msk [vmem:[%s248 + $0xd8] sm:$0xff] %vm1139, %v9745
      %9778 = vst.msk [vmem:[%s248 + $0xe0] sm:$0xff] %vm1139, %v9746
      %9779 = vst.msk [vmem:[%s248 + $0xe8] sm:$0xff] %vm1139, %v9747
      %9780 = vst.msk [vmem:[%s248 + $0xf0] sm:$0xff] %vm1139, %v9748
      %9781 = vst.msk [vmem:[%s248 + $0xf8] sm:$0xff] %vm1139, %v9749
      %s9782 = smul.u32 16, %s21
      %p9783 = scmp.lt.s32.totalorder %s20, 1
      %s9784 = scalar_select %p9783, %s20, 1
      %p9785 = scmp.lt.s32.totalorder %s9782, 15
      %s9786 = scalar_select %p9785, %s9782, 15
      %s9787 = smul.addr %s9786, 2
      %s9788 = smul.addr %s9784, 32
      %s9789 = sadd.s32 %s9787, %s9788
      %s9790 = smul.addr %s9789, 8
      %s9791 = scalar_lea.vmem %s5, %s9790
      // Predicated region
      $region45: #{basic_block_forward_nhwc.1} parent=39 // pred_check
        %p9792 = pneg %p158
      $region46: #{basic_block_forward_nhwc.1} parent=39 // pred_check_branch
        %9794 = sbr.rel (%p9792) target = $region48
      $region47: #{basic_block_forward_nhwc.1} parent=39 // pred_region
        %s9795 = smul.u32 16, %s21
      $region48: #{basic_block_forward_nhwc.1} parent=39 // pred_fallthru
        _
    $region40: #{basic_block_forward_nhwc.1} parent=5 // pred_fallthru
      _
    %p9796 = scmp.le.s32.totalorder 2, %s11
    // Predicated region
    $region49: #{basic_block_forward_nhwc.1} parent=5 // pred_check
      %p9797 = pneg %p9796
    $region50: #{basic_block_forward_nhwc.1} parent=5 // pred_check_branch
      %9799 = sbr.rel (%p9797) target = $region52
    $region51: #{basic_block_forward_nhwc.1} parent=5 // pred_region
      %s9800 = ssub.s32 %s11, 2
      // Predicated region
      $region53: #{basic_block_forward_nhwc.1} parent=51 // pred_check
        %p9801 = pneg %p164
      $region54: #{basic_block_forward_nhwc.1} parent=51 // pred_check_branch
        %9803 = sbr.rel (%p9801) target = $region56
      $region55: #{basic_block_forward_nhwc.1} parent=51 // pred_region
        %s9804 = smul.u32 16, %s23
        %p9805 = scmp.lt.s32.totalorder %s22, 1
        %s9806 = scalar_select %p9805, %s22, 1
        %p9807 = scmp.lt.s32.totalorder %s9804, 15
        %s9808 = scalar_select %p9807, %s9804, 15
        %s9809 = smul.addr %s9808, 2
        %s9810 = smul.addr %s9806, 32
        %s9811 = sadd.s32 %s9809, %s9810
        %s9812 = smul.addr %s9811, 8
        %s9813 = scalar_lea.vmem %s5, %s9812
      $region56: #{basic_block_forward_nhwc.1} parent=51 // pred_fallthru
        _
    $region52: #{basic_block_forward_nhwc.1} parent=5 // pred_fallthru
      _
  $region6: #{basic_block_forward_nhwc.1} parent=0 // loop_footer
    %s15 = sadd.s32 1, %s11
  $region7: #{basic_block_forward_nhwc.1} parent=0 // loop_footer_branch
    %10 = sbr.rel target = $region3
  $region8: #{basic_block_forward_nhwc.1} parent=0 // loop_exit
    _

</llo_original>
